<compile_context>
chip_gen: v7x
topology: tpu7x:2x2x1
jax: 0.10.0
libtpu: 0.0.40
codegen_flags: <defaults>
</compile_context>

<pallas_src>
import functools

import jax
import jax.numpy as jnp
from jax.experimental import pallas as pl
from jax.experimental.pallas import tpu as pltpu

LRELU_SLOPE = 0.2
IN_EPS = 1e-5


# ----------------------------------------------------------------------------
# Pallas kernel: one discriminator block for one batch element.
#   conv (4 shifted matmuls / row) + bias [+ InstanceNorm] + LeakyReLU
#   [+ fused final 1-channel conv]
# ----------------------------------------------------------------------------
def _layer_kernel(*refs, use_norm, fuse_final):
    if fuse_final:
        (x_ref, w_ref, b_ref, w5_ref, o_ref,
         conv_buf, ssum_ref, ssq_ref, pad_buf) = refs
    elif use_norm:
        x_ref, w_ref, b_ref, o_ref, conv_buf, ssum_ref, ssq_ref = refs
        w5_ref = pad_buf = None
    else:
        x_ref, w_ref, b_ref, o_ref = refs
        w5_ref = conv_buf = ssum_ref = ssq_ref = pad_buf = None

    c_out = w_ref.shape[2]
    ho = o_ref.shape[1]
    wo = o_ref.shape[2]
    bias = b_ref[...]                                    # (1, c_out) f32

    def lrelu(v):
        return jnp.where(v > 0, v, LRELU_SLOPE * v)

    def conv_row(h):
        # Output row h of the stride-2 4x4 conv, as 4 shifted bf16 matmuls
        # over the space-to-depth input (f32 accumulation on the MXU).
        acc = jnp.zeros((wo, c_out), jnp.float32)
        for ab in range(4):
            sa, sb = ab // 2, ab % 2
            lhs = x_ref[0, h + sa, pl.ds(sb, wo), :]     # (wo, 4*c_in) bf16
            acc = acc + jnp.dot(lhs, w_ref[ab],
                                preferred_element_type=jnp.float32)
        return acc + bias

    if not use_norm:
        def body(h, c):
            o_ref[0, h] = lrelu(conv_row(h)).astype(o_ref.dtype)
            return c
        jax.lax.fori_loop(0, ho, body, 0)
        return

    # ---- pass 1: conv rows + one-pass InstanceNorm stats (sum, sum-of-sq) ---
    ssum_ref[...] = jnp.zeros_like(ssum_ref)
    ssq_ref[...] = jnp.zeros_like(ssq_ref)

    def body1(h, c):
        acc = conv_row(h)
        conv_buf[h] = acc
        ssum_ref[...] += jnp.sum(acc, axis=0, keepdims=True)
        ssq_ref[...] += jnp.sum(acc * acc, axis=0, keepdims=True)
        return c
    jax.lax.fori_loop(0, ho, body1, 0)

    inv_p = 1.0 / float(ho * wo)
    mean = ssum_ref[...] * inv_p                         # (1, c_out) f32
    var = ssq_ref[...] * inv_p - mean * mean
    scale = jax.lax.rsqrt(var + IN_EPS)
    shift = -mean * scale

    if fuse_final:
        pad_buf[...] = jnp.zeros_like(pad_buf)

    # ---- pass 2: normalize + LeakyReLU --------------------------------------
    def body2(h, c):
        v = lrelu(conv_buf[h] * scale + shift)
        if fuse_final:
            # ZeroPad2d((1,0,1,0)) + conv pad=1  ->  top/left offset = 2
            pad_buf[2 + h, pl.ds(2, wo), :] = v
        else:
            o_ref[0, h] = v.astype(o_ref.dtype)
        return c
    jax.lax.fori_loop(0, ho, body2, 0)

    if not fuse_final:
        return

    # ---- pass 3: fused output layer (4x4 conv, stride 1, no bias) -----------
    c5 = o_ref.shape[3]

    def body3(h, c):
        acc = jnp.zeros((wo, c5), jnp.float32)
        for di in range(4):
            for dj in range(4):
                lhs = pad_buf[h + di, pl.ds(dj, wo), :].astype(jnp.bfloat16)
                acc = acc + jnp.dot(lhs, w5_ref[di * 4 + dj],
                                    preferred_element_type=jnp.float32)
        o_ref[0, h] = acc.astype(o_ref.dtype)
        return c
    jax.lax.fori_loop(0, ho, body3, 0)


# ----------------------------------------------------------------------------
# pallas_call wrapper for one discriminator block
# ----------------------------------------------------------------------------
def _disc_layer(xs, wr, bias, w5=None, *, use_norm):
    """xs: (N, Ho+1, Wo+1, 4*Cin) bf16 (pad-1 + space-to-depth input)."""
    n, hs, ws, k4 = xs.shape
    ho, wo = hs - 1, ws - 1
    c_out = wr.shape[-1]
    fuse_final = w5 is not None

    kernel = functools.partial(_layer_kernel, use_norm=use_norm,
                               fuse_final=fuse_final)

    in_specs = [
        pl.BlockSpec((1, hs, ws, k4), lambda i: (i, 0, 0, 0)),
        pl.BlockSpec((4, k4, c_out), lambda i: (0, 0, 0)),
        pl.BlockSpec((1, c_out), lambda i: (0, 0)),
    ]
    inputs = [xs, wr, bias.reshape(1, c_out).astype(jnp.float32)]

    scratch = []
    if use_norm:
        scratch += [pltpu.VMEM((ho, wo, c_out), jnp.float32),   # conv rows
                    pltpu.VMEM((1, c_out), jnp.float32),        # sum
                    pltpu.VMEM((1, c_out), jnp.float32)]        # sum of sq
    if fuse_final:
        c5 = w5.shape[-1]
        in_specs.append(pl.BlockSpec((16, c_out, c5), lambda i: (0, 0, 0)))
        inputs.append(w5)
        scratch.append(pltpu.VMEM((ho + 3, wo + 3, c_out), jnp.float32))
        out_c, out_dtype = c5, jnp.float32
    else:
        out_c, out_dtype = c_out, jnp.bfloat16

    return pl.pallas_call(
        kernel,
        out_shape=jax.ShapeDtypeStruct((n, ho, wo, out_c), out_dtype),
        grid=(n,),
        in_specs=in_specs,
        out_specs=pl.BlockSpec((1, ho, wo, out_c), lambda i: (i, 0, 0, 0)),
        scratch_shapes=scratch,
        compiler_params=pltpu.CompilerParams(
            dimension_semantics=("parallel",)),
    )(*inputs)


# ----------------------------------------------------------------------------
# Wrapper-side data movement (no duplication): pad + space-to-depth, weights
# ----------------------------------------------------------------------------
def _space_to_depth(x):
    n, h, w, c = x.shape
    x = x.reshape(n, h // 2, 2, w // 2, 2, c)
    x = x.transpose(0, 1, 3, 2, 4, 5)
    return x.reshape(n, h // 2, w // 2, 4 * c)


def _prep_input(x):
    """Pad H/W by 1 then space-to-depth (factor 2): the stride-2 4x4 conv
    becomes a stride-1 2x2 conv with 4*C input channels (same element count)."""
    xp = jnp.pad(x, ((0, 0), (1, 1), (1, 1), (0, 0)))
    return _space_to_depth(xp)


def _rearrange_conv_w(w_hwio):
    """(4,4,Cin,Cout) HWIO -> (4, 4*Cin, Cout) matching _prep_input layout."""
    cin, cout = w_hwio.shape[2], w_hwio.shape[3]
    w = w_hwio.reshape(2, 2, 2, 2, cin, cout)    # (a, p, b, q, cin, cout)
    w = w.transpose(0, 2, 1, 3, 4, 5)            # (a, b, p, q, cin, cout)
    return w.reshape(4, 4 * cin, cout)


def _rearrange_final_w(w_hwio, lanes=128):
    """(4,4,Cin,1) -> (16, Cin, lanes); channel 0 holds the real output."""
    kh, kw, cin, cout = w_hwio.shape
    w = w_hwio.reshape(kh * kw, cin, cout)
    return jnp.pad(w, ((0, 0), (0, 0), (0, lanes - cout)))


# ----------------------------------------------------------------------------
# Parameters (deterministic synthetic init; shapes match the PyTorch module)
# ----------------------------------------------------------------------------
def init_params(key, n_in_channels=3, n_fmaps=32):
    layer_dims = [
        (n_in_channels * 2, n_fmaps),      # layer1
        (n_fmaps, n_fmaps * 2),            # layer2
        (n_fmaps * 2, n_fmaps * 4),        # layer3
        (n_fmaps * 4, n_fmaps * 8),        # layer4
        (n_fmaps * 8, 1),                  # output layer (bias=False)
    ]
    params = {}
    keys = jax.random.split(key, 2 * len(layer_dims))
    for i, (cin, cout) in enumerate(layer_dims, start=1):
        fan_in = cin * 16  # 4x4 kernel
        # HWIO weight (== transpose(2,3,1,0) of PyTorch's OIHW weight)
        w = jax.random.normal(keys[2 * i - 2], (4, 4, cin, cout),
                              jnp.float32) / jnp.sqrt(float(fan_in))
        params[f"w{i}_hwio"] = w
        if i < 5:
            params[f"b{i}"] = jax.random.normal(
                keys[2 * i - 1], (cout,), jnp.float32) * 0.01
            params[f"w{i}r"] = _rearrange_conv_w(w).astype(jnp.bfloat16)
        else:
            params["w5r"] = _rearrange_final_w(w).astype(jnp.bfloat16)
    return params


# ----------------------------------------------------------------------------
# Forward pass (matches Pix2PixPatchGANDiscriminator.forward)
# ----------------------------------------------------------------------------
def discriminator_forward(params, x, y):
    # x, y: NCHW (PyTorch layout) -> NHWC; channel concat == torch.cat(dim=1)
    x = jnp.transpose(x, (0, 2, 3, 1))
    y = jnp.transpose(y, (0, 2, 3, 1))
    h = jnp.concatenate([x, y], axis=-1).astype(jnp.bfloat16)
    assert h.shape[1] % 16 == 0 and h.shape[2] % 16 == 0

    # layer1: Conv(4, s2, p1) + LeakyReLU
    h = _disc_layer(_prep_input(h), params["w1r"], params["b1"],
                    use_norm=False)
    # layer2..3: Conv(4, s2, p1) + InstanceNorm + LeakyReLU
    h = _disc_layer(_prep_input(h), params["w2r"], params["b2"],
                    use_norm=True)
    h = _disc_layer(_prep_input(h), params["w3r"], params["b3"],
                    use_norm=True)
    # layer4 + fused output layer (ZeroPad2d((1,0,1,0)) + Conv(4, s1, p1))
    o = _disc_layer(_prep_input(h), params["w4r"], params["b4"],
                    w5=params["w5r"], use_norm=True)
    return o[..., 0].reshape(-1)                 # == output.view(-1)


# ----------------------------------------------------------------------------
# Independent XLA-conv reference with the same bf16 operand quantization
# (verifies conv/s2d/padding/norm indexing; bf16 rounding is by design).
# ----------------------------------------------------------------------------
def reference_forward(params, x, y):
    x = jnp.transpose(x, (0, 2, 3, 1))
    y = jnp.transpose(y, (0, 2, 3, 1))
    h = jnp.concatenate([x, y], axis=-1).astype(jnp.bfloat16)
    dn = ("NHWC", "HWIO", "NHWC")

    def conv(a, w, stride, pad):
        return jax.lax.conv_general_dilated(
            a.astype(jnp.bfloat16), w.astype(jnp.bfloat16),
            (stride, stride), pad, dimension_numbers=dn,
            preferred_element_type=jnp.float32)

    def inorm(a):
        m = jnp.mean(a, axis=(1, 2), keepdims=True)
        v = jnp.mean(jnp.square(a - m), axis=(1, 2), keepdims=True)
        return (a - m) * jax.lax.rsqrt(v + IN_EPS)

    def lrelu(a):
        return jnp.where(a > 0, a, LRELU_SLOPE * a)

    h = lrelu(conv(h, params["w1_hwio"], 2, ((1, 1), (1, 1))) + params["b1"])
    h = h.astype(jnp.bfloat16)
    for i in (2, 3, 4):
        z = conv(h, params[f"w{i}_hwio"], 2, ((1, 1), (1, 1))) + params[f"b{i}"]
        h = lrelu(inorm(z)).astype(jnp.bfloat16)
    h = conv(h, params["w5_hwio"], 1, ((2, 1), (2, 1)))
    return h.reshape(-1)


if __name__ == "__main__":
    key = jax.random.PRNGKey(0)
    kx, ky, kp = jax.random.split(key, 3)

    # small shapes: batch=2, n_in_channels=3 (module default), spatial=32
    N, C, H, W = 2, 3, 32, 32
    x = jax.random.normal(kx, (N, C, H, W), jnp.float32)
    y = jax.random.normal(ky, (N, C, H, W), jnp.float32)
    params = init_params(kp, n_in_channels=C, n_fmaps=32)

    out = jax.block_until_ready(jax.jit(discriminator_forward)(params, x, y))
    assert out.shape == (N * (H // 16) * (W // 16),), out.shape

    ref = jax.block_until_ready(reference_forward(params, x, y))
    rel_err = float(jnp.max(jnp.abs(out - ref)) /
                    (jnp.max(jnp.abs(ref)) + 1e-6))
    if rel_err > 2e-2:
        raise AssertionError(f"kernel/reference mismatch, rel_err={rel_err}")

    print("KERNEL_OK")
</pallas_src>

<mosaic_0001>
module attributes {stable_mosaic.version = 11 : i64} {
  func.func @_layer_kernel(%arg0: i32, %arg1: memref<1x17x17x24xbf16, #tpu.memory_space<vmem>>, %arg2: memref<4x24x32xbf16, #tpu.memory_space<vmem>>, %arg3: memref<1x32xf32, #tpu.memory_space<vmem>>, %arg4: memref<1x16x16x32xbf16, #tpu.memory_space<vmem>>) attributes {dimension_semantics = [#tpu.dimension_semantics<parallel>], iteration_bounds = array<i64: 2>, scalar_prefetch = 0 : i64, scratch_operands = 0 : i64, tpu.core_type = #tpu.core_type<tc>, window_params = [{transform_indices = @transform_0, window_bounds = array<i64: 1, 17, 17, 24>}, {pipeline_mode = #tpu.pipeline_mode<synchronous>, transform_indices = @transform_1, window_bounds = array<i64: 4, 24, 32>}, {pipeline_mode = #tpu.pipeline_mode<synchronous>, transform_indices = @transform_2, window_bounds = array<i64: 1, 32>}, {transform_indices = @transform_3, window_bounds = array<i64: 1, 16, 16, 32>}]} {
    %c0 = arith.constant 0 : index
    %c0_0 = arith.constant 0 : index
    %0 = vector.load %arg3[%c0, %c0_0] : memref<1x32xf32, #tpu.memory_space<vmem>>, vector<1x32xf32>
    %c0_i32 = arith.constant 0 : i32
    %c16_i32 = arith.constant 16 : i32
    %1 = arith.addi %c0_i32, %c16_i32 : i32
    %c1_i32 = arith.constant 1 : i32
    scf.for %arg5 = %c0_i32 to %1 step %c1_i32  : i32 {
      %cst = arith.constant 0.000000e+00 : f32
      %2 = vector.broadcast %cst : f32 to vector<16x32xf32>
      %c0_i32_2 = arith.constant 0 : i32
      %3 = arith.addi %arg5, %c0_i32_2 : i32
      %c0_3 = arith.constant 0 : index
      %4 = arith.index_cast %3 : i32 to index
      %c0_4 = arith.constant 0 : index
      %c0_5 = arith.constant 0 : index
      %5 = vector.load %arg1[%c0_3, %4, %c0_4, %c0_5] : memref<1x17x17x24xbf16, #tpu.memory_space<vmem>>, vector<1x1x16x24xbf16>
      %6 = vector.shape_cast %5 : vector<1x1x16x24xbf16> to vector<16x24xbf16>
      %c0_6 = arith.constant 0 : index
      %c0_7 = arith.constant 0 : index
      %c0_8 = arith.constant 0 : index
      %7 = vector.load %arg2[%c0_6, %c0_7, %c0_8] : memref<4x24x32xbf16, #tpu.memory_space<vmem>>, vector<1x24x32xbf16>
      %8 = vector.shape_cast %7 : vector<1x24x32xbf16> to vector<24x32xbf16>
      %cst_9 = arith.constant dense<0.000000e+00> : vector<16x32xf32>
      %9 = tpu.matmul %6, %8, %cst_9 {dimension_numbers = #tpu.dot_dimension_numbers<[1], [0], [0], [1], [0, 0, 1, 1], [], []>} : vector<16x24xbf16>, vector<24x32xbf16>, vector<16x32xf32> -> vector<16x32xf32>
      %10 = arith.addf %2, %9 : vector<16x32xf32>
      %c0_i32_10 = arith.constant 0 : i32
      %11 = arith.addi %arg5, %c0_i32_10 : i32
      %c0_11 = arith.constant 0 : index
      %12 = arith.index_cast %11 : i32 to index
      %c1 = arith.constant 1 : index
      %c0_12 = arith.constant 0 : index
      %13 = vector.load %arg1[%c0_11, %12, %c1, %c0_12] : memref<1x17x17x24xbf16, #tpu.memory_space<vmem>>, vector<1x1x16x24xbf16>
      %14 = vector.shape_cast %13 : vector<1x1x16x24xbf16> to vector<16x24xbf16>
      %c1_13 = arith.constant 1 : index
      %c0_14 = arith.constant 0 : index
      %c0_15 = arith.constant 0 : index
      %15 = vector.load %arg2[%c1_13, %c0_14, %c0_15] : memref<4x24x32xbf16, #tpu.memory_space<vmem>>, vector<1x24x32xbf16>
      %16 = vector.shape_cast %15 : vector<1x24x32xbf16> to vector<24x32xbf16>
      %cst_16 = arith.constant dense<0.000000e+00> : vector<16x32xf32>
      %17 = tpu.matmul %14, %16, %cst_16 {dimension_numbers = #tpu.dot_dimension_numbers<[1], [0], [0], [1], [0, 0, 1, 1], [], []>} : vector<16x24xbf16>, vector<24x32xbf16>, vector<16x32xf32> -> vector<16x32xf32>
      %18 = arith.addf %10, %17 : vector<16x32xf32>
      %c1_i32_17 = arith.constant 1 : i32
      %19 = arith.addi %arg5, %c1_i32_17 : i32
      %c0_18 = arith.constant 0 : index
      %20 = arith.index_cast %19 : i32 to index
      %c0_19 = arith.constant 0 : index
      %c0_20 = arith.constant 0 : index
      %21 = vector.load %arg1[%c0_18, %20, %c0_19, %c0_20] : memref<1x17x17x24xbf16, #tpu.memory_space<vmem>>, vector<1x1x16x24xbf16>
      %22 = vector.shape_cast %21 : vector<1x1x16x24xbf16> to vector<16x24xbf16>
      %c2 = arith.constant 2 : index
      %c0_21 = arith.constant 0 : index
      %c0_22 = arith.constant 0 : index
      %23 = vector.load %arg2[%c2, %c0_21, %c0_22] : memref<4x24x32xbf16, #tpu.memory_space<vmem>>, vector<1x24x32xbf16>
      %24 = vector.shape_cast %23 : vector<1x24x32xbf16> to vector<24x32xbf16>
      %cst_23 = arith.constant dense<0.000000e+00> : vector<16x32xf32>
      %25 = tpu.matmul %22, %24, %cst_23 {dimension_numbers = #tpu.dot_dimension_numbers<[1], [0], [0], [1], [0, 0, 1, 1], [], []>} : vector<16x24xbf16>, vector<24x32xbf16>, vector<16x32xf32> -> vector<16x32xf32>
      %26 = arith.addf %18, %25 : vector<16x32xf32>
      %c1_i32_24 = arith.constant 1 : i32
      %27 = arith.addi %arg5, %c1_i32_24 : i32
      %c0_25 = arith.constant 0 : index
      %28 = arith.index_cast %27 : i32 to index
      %c1_26 = arith.constant 1 : index
      %c0_27 = arith.constant 0 : index
      %29 = vector.load %arg1[%c0_25, %28, %c1_26, %c0_27] : memref<1x17x17x24xbf16, #tpu.memory_space<vmem>>, vector<1x1x16x24xbf16>
      %30 = vector.shape_cast %29 : vector<1x1x16x24xbf16> to vector<16x24xbf16>
      %c3 = arith.constant 3 : index
      %c0_28 = arith.constant 0 : index
      %c0_29 = arith.constant 0 : index
      %31 = vector.load %arg2[%c3, %c0_28, %c0_29] : memref<4x24x32xbf16, #tpu.memory_space<vmem>>, vector<1x24x32xbf16>
      %32 = vector.shape_cast %31 : vector<1x24x32xbf16> to vector<24x32xbf16>
      %cst_30 = arith.constant dense<0.000000e+00> : vector<16x32xf32>
      %33 = tpu.matmul %30, %32, %cst_30 {dimension_numbers = #tpu.dot_dimension_numbers<[1], [0], [0], [1], [0, 0, 1, 1], [], []>} : vector<16x24xbf16>, vector<24x32xbf16>, vector<16x32xf32> -> vector<16x32xf32>
      %34 = arith.addf %26, %33 : vector<16x32xf32>
      %35 = vector.broadcast %0 : vector<1x32xf32> to vector<16x32xf32>
      %36 = arith.addf %34, %35 : vector<16x32xf32>
      %cst_31 = arith.constant 0.000000e+00 : f32
      %37 = vector.broadcast %cst_31 : f32 to vector<16x32xf32>
      %38 = arith.cmpf ogt, %36, %37 : vector<16x32xf32>
      %cst_32 = arith.constant 2.000000e-01 : f32
      %39 = vector.broadcast %cst_32 : f32 to vector<16x32xf32>
      %40 = arith.mulf %39, %36 : vector<16x32xf32>
      %41 = arith.select %38, %36, %40 : vector<16x32xi1>, vector<16x32xf32>
      %42 = arith.truncf %41 : vector<16x32xf32> to vector<16x32xbf16>
      %c0_33 = arith.constant 0 : index
      %43 = arith.index_cast %arg5 : i32 to index
      %c0_34 = arith.constant 0 : index
      %c0_35 = arith.constant 0 : index
      %44 = vector.load %arg4[%c0_33, %43, %c0_34, %c0_35] : memref<1x16x16x32xbf16, #tpu.memory_space<vmem>>, vector<1x1x16x32xbf16>
      %45 = vector.shape_cast %44 : vector<1x1x16x32xbf16> to vector<16x32xbf16>
      %46 = vector.shape_cast %42 : vector<16x32xbf16> to vector<1x1x16x32xbf16>
      tpu.vector_store %arg4[%c0_33, %43, %c0_34, %c0_35], %46 {strides = array<i32>} : memref<1x16x16x32xbf16, #tpu.memory_space<vmem>>, vector<1x1x16x32xbf16>,
    }
    %c16_i32_1 = arith.constant 16 : i32
    return
  }
  func.func @transform_0(%arg0: i32) -> (i32, i32, i32, i32) {
    %c0_i32 = arith.constant 0 : i32
    %c0_i32_0 = arith.constant 0 : i32
    %c0_i32_1 = arith.constant 0 : i32
    %c0_i32_2 = arith.constant 0 : i32
    return %arg0, %c0_i32, %c0_i32_0, %c0_i32_1 : i32, i32, i32, i32
  }
  func.func @transform_1(%arg0: i32) -> (i32, i32, i32) {
    %c0_i32 = arith.constant 0 : i32
    %c0_i32_0 = arith.constant 0 : i32
    %c0_i32_1 = arith.constant 0 : i32
    %c0_i32_2 = arith.constant 0 : i32
    return %c0_i32, %c0_i32_0, %c0_i32_1 : i32, i32, i32
  }
  func.func @transform_2(%arg0: i32) -> (i32, i32) {
    %c0_i32 = arith.constant 0 : i32
    %c0_i32_0 = arith.constant 0 : i32
    %c0_i32_1 = arith.constant 0 : i32
    return %c0_i32, %c0_i32_0 : i32, i32
  }
  func.func @transform_3(%arg0: i32) -> (i32, i32, i32, i32) {
    %c0_i32 = arith.constant 0 : i32
    %c0_i32_0 = arith.constant 0 : i32
    %c0_i32_1 = arith.constant 0 : i32
    %c0_i32_2 = arith.constant 0 : i32
    return %arg0, %c0_i32, %c0_i32_0, %c0_i32_1 : i32, i32, i32, i32
  }
}

module attributes {stable_mosaic.version = 11 : i64} {
  func.func @_layer_kernel(%arg0: i32, %arg1: memref<1x9x9x128xbf16, #tpu.memory_space<vmem>>, %arg2: memref<4x128x64xbf16, #tpu.memory_space<vmem>>, %arg3: memref<1x64xf32, #tpu.memory_space<vmem>>, %arg4: memref<1x8x8x64xbf16, #tpu.memory_space<vmem>>, %arg5: memref<8x8x64xf32, #tpu.memory_space<vmem>>, %arg6: memref<1x64xf32, #tpu.memory_space<vmem>>, %arg7: memref<1x64xf32, #tpu.memory_space<vmem>>) attributes {dimension_semantics = [#tpu.dimension_semantics<parallel>], iteration_bounds = array<i64: 2>, scalar_prefetch = 0 : i64, scratch_operands = 3 : i64, tpu.core_type = #tpu.core_type<tc>, window_params = [{transform_indices = @transform_0, window_bounds = array<i64: 1, 9, 9, 128>}, {pipeline_mode = #tpu.pipeline_mode<synchronous>, transform_indices = @transform_1, window_bounds = array<i64: 4, 128, 64>}, {pipeline_mode = #tpu.pipeline_mode<synchronous>, transform_indices = @transform_2, window_bounds = array<i64: 1, 64>}, {transform_indices = @transform_3, window_bounds = array<i64: 1, 8, 8, 64>}]} {
    %c0 = arith.constant 0 : index
    %c0_0 = arith.constant 0 : index
    %0 = vector.load %arg3[%c0, %c0_0] : memref<1x64xf32, #tpu.memory_space<vmem>>, vector<1x64xf32>
    %cst = arith.constant 0.000000e+00 : f32
    %1 = vector.broadcast %cst : f32 to vector<1x64xf32>
    %c0_1 = arith.constant 0 : index
    %c0_2 = arith.constant 0 : index
    %2 = vector.load %arg6[%c0_1, %c0_2] : memref<1x64xf32, #tpu.memory_space<vmem>>, vector<1x64xf32>
    tpu.vector_store %arg6[%c0_1, %c0_2], %1 {strides = array<i32>} : memref<1x64xf32, #tpu.memory_space<vmem>>, vector<1x64xf32>,
    %cst_3 = arith.constant 0.000000e+00 : f32
    %3 = vector.broadcast %cst_3 : f32 to vector<1x64xf32>
    %c0_4 = arith.constant 0 : index
    %c0_5 = arith.constant 0 : index
    %4 = vector.load %arg7[%c0_4, %c0_5] : memref<1x64xf32, #tpu.memory_space<vmem>>, vector<1x64xf32>
    tpu.vector_store %arg7[%c0_4, %c0_5], %3 {strides = array<i32>} : memref<1x64xf32, #tpu.memory_space<vmem>>, vector<1x64xf32>,
    %c0_i32 = arith.constant 0 : i32
    %c8_i32 = arith.constant 8 : i32
    %5 = arith.addi %c0_i32, %c8_i32 : i32
    %c1_i32 = arith.constant 1 : i32
    scf.for %arg8 = %c0_i32 to %5 step %c1_i32  : i32 {
      %cst_19 = arith.constant 0.000000e+00 : f32
      %21 = vector.broadcast %cst_19 : f32 to vector<8x64xf32>
      %c0_i32_20 = arith.constant 0 : i32
      %22 = arith.addi %arg8, %c0_i32_20 : i32
      %c0_21 = arith.constant 0 : index
      %23 = arith.index_cast %22 : i32 to index
      %c0_22 = arith.constant 0 : index
      %c0_23 = arith.constant 0 : index
      %24 = vector.load %arg1[%c0_21, %23, %c0_22, %c0_23] : memref<1x9x9x128xbf16, #tpu.memory_space<vmem>>, vector<1x1x8x128xbf16>
      %25 = vector.shape_cast %24 : vector<1x1x8x128xbf16> to vector<8x128xbf16>
      %c0_24 = arith.constant 0 : index
      %c0_25 = arith.constant 0 : index
      %c0_26 = arith.constant 0 : index
      %26 = vector.load %arg2[%c0_24, %c0_25, %c0_26] : memref<4x128x64xbf16, #tpu.memory_space<vmem>>, vector<1x128x64xbf16>
      %27 = vector.shape_cast %26 : vector<1x128x64xbf16> to vector<128x64xbf16>
      %cst_27 = arith.constant dense<0.000000e+00> : vector<8x64xf32>
      %28 = tpu.matmul %25, %27, %cst_27 {dimension_numbers = #tpu.dot_dimension_numbers<[1], [0], [0], [1], [0, 0, 1, 1], [], []>} : vector<8x128xbf16>, vector<128x64xbf16>, vector<8x64xf32> -> vector<8x64xf32>
      %29 = arith.addf %21, %28 : vector<8x64xf32>
      %c0_i32_28 = arith.constant 0 : i32
      %30 = arith.addi %arg8, %c0_i32_28 : i32
      %c0_29 = arith.constant 0 : index
      %31 = arith.index_cast %30 : i32 to index
      %c1 = arith.constant 1 : index
      %c0_30 = arith.constant 0 : index
      %32 = vector.load %arg1[%c0_29, %31, %c1, %c0_30] : memref<1x9x9x128xbf16, #tpu.memory_space<vmem>>, vector<1x1x8x128xbf16>
      %33 = vector.shape_cast %32 : vector<1x1x8x128xbf16> to vector<8x128xbf16>
      %c1_31 = arith.constant 1 : index
      %c0_32 = arith.constant 0 : index
      %c0_33 = arith.constant 0 : index
      %34 = vector.load %arg2[%c1_31, %c0_32, %c0_33] : memref<4x128x64xbf16, #tpu.memory_space<vmem>>, vector<1x128x64xbf16>
      %35 = vector.shape_cast %34 : vector<1x128x64xbf16> to vector<128x64xbf16>
      %cst_34 = arith.constant dense<0.000000e+00> : vector<8x64xf32>
      %36 = tpu.matmul %33, %35, %cst_34 {dimension_numbers = #tpu.dot_dimension_numbers<[1], [0], [0], [1], [0, 0, 1, 1], [], []>} : vector<8x128xbf16>, vector<128x64xbf16>, vector<8x64xf32> -> vector<8x64xf32>
      %37 = arith.addf %29, %36 : vector<8x64xf32>
      %c1_i32_35 = arith.constant 1 : i32
      %38 = arith.addi %arg8, %c1_i32_35 : i32
      %c0_36 = arith.constant 0 : index
      %39 = arith.index_cast %38 : i32 to index
      %c0_37 = arith.constant 0 : index
      %c0_38 = arith.constant 0 : index
      %40 = vector.load %arg1[%c0_36, %39, %c0_37, %c0_38] : memref<1x9x9x128xbf16, #tpu.memory_space<vmem>>, vector<1x1x8x128xbf16>
      %41 = vector.shape_cast %40 : vector<1x1x8x128xbf16> to vector<8x128xbf16>
      %c2 = arith.constant 2 : index
      %c0_39 = arith.constant 0 : index
      %c0_40 = arith.constant 0 : index
      %42 = vector.load %arg2[%c2, %c0_39, %c0_40] : memref<4x128x64xbf16, #tpu.memory_space<vmem>>, vector<1x128x64xbf16>
      %43 = vector.shape_cast %42 : vector<1x128x64xbf16> to vector<128x64xbf16>
      %cst_41 = arith.constant dense<0.000000e+00> : vector<8x64xf32>
      %44 = tpu.matmul %41, %43, %cst_41 {dimension_numbers = #tpu.dot_dimension_numbers<[1], [0], [0], [1], [0, 0, 1, 1], [], []>} : vector<8x128xbf16>, vector<128x64xbf16>, vector<8x64xf32> -> vector<8x64xf32>
      %45 = arith.addf %37, %44 : vector<8x64xf32>
      %c1_i32_42 = arith.constant 1 : i32
      %46 = arith.addi %arg8, %c1_i32_42 : i32
      %c0_43 = arith.constant 0 : index
      %47 = arith.index_cast %46 : i32 to index
      %c1_44 = arith.constant 1 : index
      %c0_45 = arith.constant 0 : index
      %48 = vector.load %arg1[%c0_43, %47, %c1_44, %c0_45] : memref<1x9x9x128xbf16, #tpu.memory_space<vmem>>, vector<1x1x8x128xbf16>
      %49 = vector.shape_cast %48 : vector<1x1x8x128xbf16> to vector<8x128xbf16>
      %c3 = arith.constant 3 : index
      %c0_46 = arith.constant 0 : index
      %c0_47 = arith.constant 0 : index
      %50 = vector.load %arg2[%c3, %c0_46, %c0_47] : memref<4x128x64xbf16, #tpu.memory_space<vmem>>, vector<1x128x64xbf16>
      %51 = vector.shape_cast %50 : vector<1x128x64xbf16> to vector<128x64xbf16>
      %cst_48 = arith.constant dense<0.000000e+00> : vector<8x64xf32>
      %52 = tpu.matmul %49, %51, %cst_48 {dimension_numbers = #tpu.dot_dimension_numbers<[1], [0], [0], [1], [0, 0, 1, 1], [], []>} : vector<8x128xbf16>, vector<128x64xbf16>, vector<8x64xf32> -> vector<8x64xf32>
      %53 = arith.addf %45, %52 : vector<8x64xf32>
      %54 = vector.broadcast %0 : vector<1x64xf32> to vector<8x64xf32>
      %55 = arith.addf %53, %54 : vector<8x64xf32>
      %56 = arith.index_cast %arg8 : i32 to index
      %c0_49 = arith.constant 0 : index
      %c0_50 = arith.constant 0 : index
      %57 = vector.load %arg5[%56, %c0_49, %c0_50] : memref<8x8x64xf32, #tpu.memory_space<vmem>>, vector<1x8x64xf32>
      %58 = vector.shape_cast %57 : vector<1x8x64xf32> to vector<8x64xf32>
      %59 = vector.shape_cast %55 : vector<8x64xf32> to vector<1x8x64xf32>
      tpu.vector_store %arg5[%56, %c0_49, %c0_50], %59 {strides = array<i32>} : memref<8x8x64xf32, #tpu.memory_space<vmem>>, vector<1x8x64xf32>,
      %c0_51 = arith.constant 0 : index
      %c0_52 = arith.constant 0 : index
      %60 = vector.load %arg6[%c0_51, %c0_52] : memref<1x64xf32, #tpu.memory_space<vmem>>, vector<1x64xf32>
      %cst_53 = arith.constant dense<0.000000e+00> : vector<64xf32>
      %61 = vector.multi_reduction <add>, %55, %cst_53 [0] : vector<8x64xf32> to vector<64xf32>
      %62 = vector.shape_cast %61 : vector<64xf32> to vector<1x64xf32>
      %63 = arith.addf %60, %62 : vector<1x64xf32>
      %c0_54 = arith.constant 0 : index
      %c0_55 = arith.constant 0 : index
      %64 = vector.load %arg6[%c0_54, %c0_55] : memref<1x64xf32, #tpu.memory_space<vmem>>, vector<1x64xf32>
      tpu.vector_store %arg6[%c0_54, %c0_55], %63 {strides = array<i32>} : memref<1x64xf32, #tpu.memory_space<vmem>>, vector<1x64xf32>,
      %c0_56 = arith.constant 0 : index
      %c0_57 = arith.constant 0 : index
      %65 = vector.load %arg7[%c0_56, %c0_57] : memref<1x64xf32, #tpu.memory_space<vmem>>, vector<1x64xf32>
      %66 = arith.mulf %55, %55 : vector<8x64xf32>
      %cst_58 = arith.constant dense<0.000000e+00> : vector<64xf32>
      %67 = vector.multi_reduction <add>, %66, %cst_58 [0] : vector<8x64xf32> to vector<64xf32>
      %68 = vector.shape_cast %67 : vector<64xf32> to vector<1x64xf32>
      %69 = arith.addf %65, %68 : vector<1x64xf32>
      %c0_59 = arith.constant 0 : index
      %c0_60 = arith.constant 0 : index
      %70 = vector.load %arg7[%c0_59, %c0_60] : memref<1x64xf32, #tpu.memory_space<vmem>>, vector<1x64xf32>
      tpu.vector_store %arg7[%c0_59, %c0_60], %69 {strides = array<i32>} : memref<1x64xf32, #tpu.memory_space<vmem>>, vector<1x64xf32>,
    }
    %c8_i32_6 = arith.constant 8 : i32
    %c0_7 = arith.constant 0 : index
    %c0_8 = arith.constant 0 : index
    %6 = vector.load %arg6[%c0_7, %c0_8] : memref<1x64xf32, #tpu.memory_space<vmem>>, vector<1x64xf32>
    %cst_9 = arith.constant 1.562500e-02 : f32
    %7 = vector.broadcast %cst_9 : f32 to vector<1x64xf32>
    %8 = arith.mulf %6, %7 : vector<1x64xf32>
    %c0_10 = arith.constant 0 : index
    %c0_11 = arith.constant 0 : index
    %9 = vector.load %arg7[%c0_10, %c0_11] : memref<1x64xf32, #tpu.memory_space<vmem>>, vector<1x64xf32>
    %cst_12 = arith.constant 1.562500e-02 : f32
    %10 = vector.broadcast %cst_12 : f32 to vector<1x64xf32>
    %11 = arith.mulf %9, %10 : vector<1x64xf32>
    %12 = arith.mulf %8, %8 : vector<1x64xf32>
    %13 = arith.subf %11, %12 : vector<1x64xf32>
    %cst_13 = arith.constant 9.99999974E-6 : f32
    %14 = vector.broadcast %cst_13 : f32 to vector<1x64xf32>
    %15 = arith.addf %13, %14 : vector<1x64xf32>
    %16 = math.rsqrt %15 : vector<1x64xf32>
    %cst_14 = arith.constant 0.000000e+00 : f32
    %17 = vector.broadcast %cst_14 : f32 to vector<1x64xf32>
    %18 = arith.subf %17, %8 : vector<1x64xf32>
    %19 = arith.mulf %18, %16 : vector<1x64xf32>
    %c0_i32_15 = arith.constant 0 : i32
    %c8_i32_16 = arith.constant 8 : i32
    %20 = arith.addi %c0_i32_15, %c8_i32_16 : i32
    %c1_i32_17 = arith.constant 1 : i32
    scf.for %arg8 = %c0_i32_15 to %20 step %c1_i32_17  : i32 {
      %21 = arith.index_cast %arg8 : i32 to index
      %c0_19 = arith.constant 0 : index
      %c0_20 = arith.constant 0 : index
      %22 = vector.load %arg5[%21, %c0_19, %c0_20] : memref<8x8x64xf32, #tpu.memory_space<vmem>>, vector<1x8x64xf32>
      %23 = vector.shape_cast %22 : vector<1x8x64xf32> to vector<8x64xf32>
      %24 = vector.broadcast %16 : vector<1x64xf32> to vector<8x64xf32>
      %25 = arith.mulf %23, %24 : vector<8x64xf32>
      %26 = vector.broadcast %19 : vector<1x64xf32> to vector<8x64xf32>
      %27 = arith.addf %25, %26 : vector<8x64xf32>
      %cst_21 = arith.constant 0.000000e+00 : f32
      %28 = vector.broadcast %cst_21 : f32 to vector<8x64xf32>
      %29 = arith.cmpf ogt, %27, %28 : vector<8x64xf32>
      %cst_22 = arith.constant 2.000000e-01 : f32
      %30 = vector.broadcast %cst_22 : f32 to vector<8x64xf32>
      %31 = arith.mulf %30, %27 : vector<8x64xf32>
      %32 = arith.select %29, %27, %31 : vector<8x64xi1>, vector<8x64xf32>
      %33 = arith.truncf %32 : vector<8x64xf32> to vector<8x64xbf16>
      %c0_23 = arith.constant 0 : index
      %34 = arith.index_cast %arg8 : i32 to index
      %c0_24 = arith.constant 0 : index
      %c0_25 = arith.constant 0 : index
      %35 = vector.load %arg4[%c0_23, %34, %c0_24, %c0_25] : memref<1x8x8x64xbf16, #tpu.memory_space<vmem>>, vector<1x1x8x64xbf16>
      %36 = vector.shape_cast %35 : vector<1x1x8x64xbf16> to vector<8x64xbf16>
      %37 = vector.shape_cast %33 : vector<8x64xbf16> to vector<1x1x8x64xbf16>
      tpu.vector_store %arg4[%c0_23, %34, %c0_24, %c0_25], %37 {strides = array<i32>} : memref<1x8x8x64xbf16, #tpu.memory_space<vmem>>, vector<1x1x8x64xbf16>,
    }
    %c8_i32_18 = arith.constant 8 : i32
    return
  }
  func.func @transform_0(%arg0: i32) -> (i32, i32, i32, i32) {
    %c0_i32 = arith.constant 0 : i32
    %c0_i32_0 = arith.constant 0 : i32
    %c0_i32_1 = arith.constant 0 : i32
    %c0_i32_2 = arith.constant 0 : i32
    return %arg0, %c0_i32, %c0_i32_0, %c0_i32_1 : i32, i32, i32, i32
  }
  func.func @transform_1(%arg0: i32) -> (i32, i32, i32) {
    %c0_i32 = arith.constant 0 : i32
    %c0_i32_0 = arith.constant 0 : i32
    %c0_i32_1 = arith.constant 0 : i32
    %c0_i32_2 = arith.constant 0 : i32
    return %c0_i32, %c0_i32_0, %c0_i32_1 : i32, i32, i32
  }
  func.func @transform_2(%arg0: i32) -> (i32, i32) {
    %c0_i32 = arith.constant 0 : i32
    %c0_i32_0 = arith.constant 0 : i32
    %c0_i32_1 = arith.constant 0 : i32
    return %c0_i32, %c0_i32_0 : i32, i32
  }
  func.func @transform_3(%arg0: i32) -> (i32, i32, i32, i32) {
    %c0_i32 = arith.constant 0 : i32
    %c0_i32_0 = arith.constant 0 : i32
    %c0_i32_1 = arith.constant 0 : i32
    %c0_i32_2 = arith.constant 0 : i32
    return %arg0, %c0_i32, %c0_i32_0, %c0_i32_1 : i32, i32, i32, i32
  }
}

module attributes {stable_mosaic.version = 11 : i64} {
  func.func @_layer_kernel(%arg0: i32, %arg1: memref<1x5x5x256xbf16, #tpu.memory_space<vmem>>, %arg2: memref<4x256x128xbf16, #tpu.memory_space<vmem>>, %arg3: memref<1x128xf32, #tpu.memory_space<vmem>>, %arg4: memref<1x4x4x128xbf16, #tpu.memory_space<vmem>>, %arg5: memref<4x4x128xf32, #tpu.memory_space<vmem>>, %arg6: memref<1x128xf32, #tpu.memory_space<vmem>>, %arg7: memref<1x128xf32, #tpu.memory_space<vmem>>) attributes {dimension_semantics = [#tpu.dimension_semantics<parallel>], iteration_bounds = array<i64: 2>, scalar_prefetch = 0 : i64, scratch_operands = 3 : i64, tpu.core_type = #tpu.core_type<tc>, window_params = [{transform_indices = @transform_0, window_bounds = array<i64: 1, 5, 5, 256>}, {pipeline_mode = #tpu.pipeline_mode<synchronous>, transform_indices = @transform_1, window_bounds = array<i64: 4, 256, 128>}, {pipeline_mode = #tpu.pipeline_mode<synchronous>, transform_indices = @transform_2, window_bounds = array<i64: 1, 128>}, {transform_indices = @transform_3, window_bounds = array<i64: 1, 4, 4, 128>}]} {
    %c0 = arith.constant 0 : index
    %c0_0 = arith.constant 0 : index
    %0 = vector.load %arg3[%c0, %c0_0] : memref<1x128xf32, #tpu.memory_space<vmem>>, vector<1x128xf32>
    %cst = arith.constant 0.000000e+00 : f32
    %1 = vector.broadcast %cst : f32 to vector<1x128xf32>
    %c0_1 = arith.constant 0 : index
    %c0_2 = arith.constant 0 : index
    %2 = vector.load %arg6[%c0_1, %c0_2] : memref<1x128xf32, #tpu.memory_space<vmem>>, vector<1x128xf32>
    tpu.vector_store %arg6[%c0_1, %c0_2], %1 {strides = array<i32>} : memref<1x128xf32, #tpu.memory_space<vmem>>, vector<1x128xf32>,
    %cst_3 = arith.constant 0.000000e+00 : f32
    %3 = vector.broadcast %cst_3 : f32 to vector<1x128xf32>
    %c0_4 = arith.constant 0 : index
    %c0_5 = arith.constant 0 : index
    %4 = vector.load %arg7[%c0_4, %c0_5] : memref<1x128xf32, #tpu.memory_space<vmem>>, vector<1x128xf32>
    tpu.vector_store %arg7[%c0_4, %c0_5], %3 {strides = array<i32>} : memref<1x128xf32, #tpu.memory_space<vmem>>, vector<1x128xf32>,
    %c0_i32 = arith.constant 0 : i32
    %c4_i32 = arith.constant 4 : i32
    %5 = arith.addi %c0_i32, %c4_i32 : i32
    %c1_i32 = arith.constant 1 : i32
    scf.for %arg8 = %c0_i32 to %5 step %c1_i32  : i32 {
      %cst_19 = arith.constant 0.000000e+00 : f32
      %21 = vector.broadcast %cst_19 : f32 to vector<4x128xf32>
      %c0_i32_20 = arith.constant 0 : i32
      %22 = arith.addi %arg8, %c0_i32_20 : i32
      %c0_21 = arith.constant 0 : index
      %23 = arith.index_cast %22 : i32 to index
      %c0_22 = arith.constant 0 : index
      %c0_23 = arith.constant 0 : index
      %24 = vector.load %arg1[%c0_21, %23, %c0_22, %c0_23] : memref<1x5x5x256xbf16, #tpu.memory_space<vmem>>, vector<1x1x4x256xbf16>
      %25 = vector.shape_cast %24 : vector<1x1x4x256xbf16> to vector<4x256xbf16>
      %c0_24 = arith.constant 0 : index
      %c0_25 = arith.constant 0 : index
      %c0_26 = arith.constant 0 : index
      %26 = vector.load %arg2[%c0_24, %c0_25, %c0_26] : memref<4x256x128xbf16, #tpu.memory_space<vmem>>, vector<1x256x128xbf16>
      %27 = vector.shape_cast %26 : vector<1x256x128xbf16> to vector<256x128xbf16>
      %cst_27 = arith.constant dense<0.000000e+00> : vector<4x128xf32>
      %28 = tpu.matmul %25, %27, %cst_27 {dimension_numbers = #tpu.dot_dimension_numbers<[1], [0], [0], [1], [0, 0, 1, 1], [], []>} : vector<4x256xbf16>, vector<256x128xbf16>, vector<4x128xf32> -> vector<4x128xf32>
      %29 = arith.addf %21, %28 : vector<4x128xf32>
      %c0_i32_28 = arith.constant 0 : i32
      %30 = arith.addi %arg8, %c0_i32_28 : i32
      %c0_29 = arith.constant 0 : index
      %31 = arith.index_cast %30 : i32 to index
      %c1 = arith.constant 1 : index
      %c0_30 = arith.constant 0 : index
      %32 = vector.load %arg1[%c0_29, %31, %c1, %c0_30] : memref<1x5x5x256xbf16, #tpu.memory_space<vmem>>, vector<1x1x4x256xbf16>
      %33 = vector.shape_cast %32 : vector<1x1x4x256xbf16> to vector<4x256xbf16>
      %c1_31 = arith.constant 1 : index
      %c0_32 = arith.constant 0 : index
      %c0_33 = arith.constant 0 : index
      %34 = vector.load %arg2[%c1_31, %c0_32, %c0_33] : memref<4x256x128xbf16, #tpu.memory_space<vmem>>, vector<1x256x128xbf16>
      %35 = vector.shape_cast %34 : vector<1x256x128xbf16> to vector<256x128xbf16>
      %cst_34 = arith.constant dense<0.000000e+00> : vector<4x128xf32>
      %36 = tpu.matmul %33, %35, %cst_34 {dimension_numbers = #tpu.dot_dimension_numbers<[1], [0], [0], [1], [0, 0, 1, 1], [], []>} : vector<4x256xbf16>, vector<256x128xbf16>, vector<4x128xf32> -> vector<4x128xf32>
      %37 = arith.addf %29, %36 : vector<4x128xf32>
      %c1_i32_35 = arith.constant 1 : i32
      %38 = arith.addi %arg8, %c1_i32_35 : i32
      %c0_36 = arith.constant 0 : index
      %39 = arith.index_cast %38 : i32 to index
      %c0_37 = arith.constant 0 : index
      %c0_38 = arith.constant 0 : index
      %40 = vector.load %arg1[%c0_36, %39, %c0_37, %c0_38] : memref<1x5x5x256xbf16, #tpu.memory_space<vmem>>, vector<1x1x4x256xbf16>
      %41 = vector.shape_cast %40 : vector<1x1x4x256xbf16> to vector<4x256xbf16>
      %c2 = arith.constant 2 : index
      %c0_39 = arith.constant 0 : index
      %c0_40 = arith.constant 0 : index
      %42 = vector.load %arg2[%c2, %c0_39, %c0_40] : memref<4x256x128xbf16, #tpu.memory_space<vmem>>, vector<1x256x128xbf16>
      %43 = vector.shape_cast %42 : vector<1x256x128xbf16> to vector<256x128xbf16>
      %cst_41 = arith.constant dense<0.000000e+00> : vector<4x128xf32>
      %44 = tpu.matmul %41, %43, %cst_41 {dimension_numbers = #tpu.dot_dimension_numbers<[1], [0], [0], [1], [0, 0, 1, 1], [], []>} : vector<4x256xbf16>, vector<256x128xbf16>, vector<4x128xf32> -> vector<4x128xf32>
      %45 = arith.addf %37, %44 : vector<4x128xf32>
      %c1_i32_42 = arith.constant 1 : i32
      %46 = arith.addi %arg8, %c1_i32_42 : i32
      %c0_43 = arith.constant 0 : index
      %47 = arith.index_cast %46 : i32 to index
      %c1_44 = arith.constant 1 : index
      %c0_45 = arith.constant 0 : index
      %48 = vector.load %arg1[%c0_43, %47, %c1_44, %c0_45] : memref<1x5x5x256xbf16, #tpu.memory_space<vmem>>, vector<1x1x4x256xbf16>
      %49 = vector.shape_cast %48 : vector<1x1x4x256xbf16> to vector<4x256xbf16>
      %c3 = arith.constant 3 : index
      %c0_46 = arith.constant 0 : index
      %c0_47 = arith.constant 0 : index
      %50 = vector.load %arg2[%c3, %c0_46, %c0_47] : memref<4x256x128xbf16, #tpu.memory_space<vmem>>, vector<1x256x128xbf16>
      %51 = vector.shape_cast %50 : vector<1x256x128xbf16> to vector<256x128xbf16>
      %cst_48 = arith.constant dense<0.000000e+00> : vector<4x128xf32>
      %52 = tpu.matmul %49, %51, %cst_48 {dimension_numbers = #tpu.dot_dimension_numbers<[1], [0], [0], [1], [0, 0, 1, 1], [], []>} : vector<4x256xbf16>, vector<256x128xbf16>, vector<4x128xf32> -> vector<4x128xf32>
      %53 = arith.addf %45, %52 : vector<4x128xf32>
      %54 = vector.broadcast %0 : vector<1x128xf32> to vector<4x128xf32>
      %55 = arith.addf %53, %54 : vector<4x128xf32>
      %56 = arith.index_cast %arg8 : i32 to index
      %c0_49 = arith.constant 0 : index
      %c0_50 = arith.constant 0 : index
      %57 = vector.load %arg5[%56, %c0_49, %c0_50] : memref<4x4x128xf32, #tpu.memory_space<vmem>>, vector<1x4x128xf32>
      %58 = vector.shape_cast %57 : vector<1x4x128xf32> to vector<4x128xf32>
      %59 = vector.shape_cast %55 : vector<4x128xf32> to vector<1x4x128xf32>
      tpu.vector_store %arg5[%56, %c0_49, %c0_50], %59 {strides = array<i32>} : memref<4x4x128xf32, #tpu.memory_space<vmem>>, vector<1x4x128xf32>,
      %c0_51 = arith.constant 0 : index
      %c0_52 = arith.constant 0 : index
      %60 = vector.load %arg6[%c0_51, %c0_52] : memref<1x128xf32, #tpu.memory_space<vmem>>, vector<1x128xf32>
      %cst_53 = arith.constant dense<0.000000e+00> : vector<128xf32>
      %61 = vector.multi_reduction <add>, %55, %cst_53 [0] : vector<4x128xf32> to vector<128xf32>
      %62 = vector.shape_cast %61 : vector<128xf32> to vector<1x128xf32>
      %63 = arith.addf %60, %62 : vector<1x128xf32>
      %c0_54 = arith.constant 0 : index
      %c0_55 = arith.constant 0 : index
      %64 = vector.load %arg6[%c0_54, %c0_55] : memref<1x128xf32, #tpu.memory_space<vmem>>, vector<1x128xf32>
      tpu.vector_store %arg6[%c0_54, %c0_55], %63 {strides = array<i32>} : memref<1x128xf32, #tpu.memory_space<vmem>>, vector<1x128xf32>,
      %c0_56 = arith.constant 0 : index
      %c0_57 = arith.constant 0 : index
      %65 = vector.load %arg7[%c0_56, %c0_57] : memref<1x128xf32, #tpu.memory_space<vmem>>, vector<1x128xf32>
      %66 = arith.mulf %55, %55 : vector<4x128xf32>
      %cst_58 = arith.constant dense<0.000000e+00> : vector<128xf32>
      %67 = vector.multi_reduction <add>, %66, %cst_58 [0] : vector<4x128xf32> to vector<128xf32>
      %68 = vector.shape_cast %67 : vector<128xf32> to vector<1x128xf32>
      %69 = arith.addf %65, %68 : vector<1x128xf32>
      %c0_59 = arith.constant 0 : index
      %c0_60 = arith.constant 0 : index
      %70 = vector.load %arg7[%c0_59, %c0_60] : memref<1x128xf32, #tpu.memory_space<vmem>>, vector<1x128xf32>
      tpu.vector_store %arg7[%c0_59, %c0_60], %69 {strides = array<i32>} : memref<1x128xf32, #tpu.memory_space<vmem>>, vector<1x128xf32>,
    }
    %c4_i32_6 = arith.constant 4 : i32
    %c0_7 = arith.constant 0 : index
    %c0_8 = arith.constant 0 : index
    %6 = vector.load %arg6[%c0_7, %c0_8] : memref<1x128xf32, #tpu.memory_space<vmem>>, vector<1x128xf32>
    %cst_9 = arith.constant 6.250000e-02 : f32
    %7 = vector.broadcast %cst_9 : f32 to vector<1x128xf32>
    %8 = arith.mulf %6, %7 : vector<1x128xf32>
    %c0_10 = arith.constant 0 : index
    %c0_11 = arith.constant 0 : index
    %9 = vector.load %arg7[%c0_10, %c0_11] : memref<1x128xf32, #tpu.memory_space<vmem>>, vector<1x128xf32>
    %cst_12 = arith.constant 6.250000e-02 : f32
    %10 = vector.broadcast %cst_12 : f32 to vector<1x128xf32>
    %11 = arith.mulf %9, %10 : vector<1x128xf32>
    %12 = arith.mulf %8, %8 : vector<1x128xf32>
    %13 = arith.subf %11, %12 : vector<1x128xf32>
    %cst_13 = arith.constant 9.99999974E-6 : f32
    %14 = vector.broadcast %cst_13 : f32 to vector<1x128xf32>
    %15 = arith.addf %13, %14 : vector<1x128xf32>
    %16 = math.rsqrt %15 : vector<1x128xf32>
    %cst_14 = arith.constant 0.000000e+00 : f32
    %17 = vector.broadcast %cst_14 : f32 to vector<1x128xf32>
    %18 = arith.subf %17, %8 : vector<1x128xf32>
    %19 = arith.mulf %18, %16 : vector<1x128xf32>
    %c0_i32_15 = arith.constant 0 : i32
    %c4_i32_16 = arith.constant 4 : i32
    %20 = arith.addi %c0_i32_15, %c4_i32_16 : i32
    %c1_i32_17 = arith.constant 1 : i32
    scf.for %arg8 = %c0_i32_15 to %20 step %c1_i32_17  : i32 {
      %21 = arith.index_cast %arg8 : i32 to index
      %c0_19 = arith.constant 0 : index
      %c0_20 = arith.constant 0 : index
      %22 = vector.load %arg5[%21, %c0_19, %c0_20] : memref<4x4x128xf32, #tpu.memory_space<vmem>>, vector<1x4x128xf32>
      %23 = vector.shape_cast %22 : vector<1x4x128xf32> to vector<4x128xf32>
      %24 = vector.broadcast %16 : vector<1x128xf32> to vector<4x128xf32>
      %25 = arith.mulf %23, %24 : vector<4x128xf32>
      %26 = vector.broadcast %19 : vector<1x128xf32> to vector<4x128xf32>
      %27 = arith.addf %25, %26 : vector<4x128xf32>
      %cst_21 = arith.constant 0.000000e+00 : f32
      %28 = vector.broadcast %cst_21 : f32 to vector<4x128xf32>
      %29 = arith.cmpf ogt, %27, %28 : vector<4x128xf32>
      %cst_22 = arith.constant 2.000000e-01 : f32
      %30 = vector.broadcast %cst_22 : f32 to vector<4x128xf32>
      %31 = arith.mulf %30, %27 : vector<4x128xf32>
      %32 = arith.select %29, %27, %31 : vector<4x128xi1>, vector<4x128xf32>
      %33 = arith.truncf %32 : vector<4x128xf32> to vector<4x128xbf16>
      %c0_23 = arith.constant 0 : index
      %34 = arith.index_cast %arg8 : i32 to index
      %c0_24 = arith.constant 0 : index
      %c0_25 = arith.constant 0 : index
      %35 = vector.load %arg4[%c0_23, %34, %c0_24, %c0_25] : memref<1x4x4x128xbf16, #tpu.memory_space<vmem>>, vector<1x1x4x128xbf16>
      %36 = vector.shape_cast %35 : vector<1x1x4x128xbf16> to vector<4x128xbf16>
      %37 = vector.shape_cast %33 : vector<4x128xbf16> to vector<1x1x4x128xbf16>
      tpu.vector_store %arg4[%c0_23, %34, %c0_24, %c0_25], %37 {strides = array<i32>} : memref<1x4x4x128xbf16, #tpu.memory_space<vmem>>, vector<1x1x4x128xbf16>,
    }
    %c4_i32_18 = arith.constant 4 : i32
    return
  }
  func.func @transform_0(%arg0: i32) -> (i32, i32, i32, i32) {
    %c0_i32 = arith.constant 0 : i32
    %c0_i32_0 = arith.constant 0 : i32
    %c0_i32_1 = arith.constant 0 : i32
    %c0_i32_2 = arith.constant 0 : i32
    return %arg0, %c0_i32, %c0_i32_0, %c0_i32_1 : i32, i32, i32, i32
  }
  func.func @transform_1(%arg0: i32) -> (i32, i32, i32) {
    %c0_i32 = arith.constant 0 : i32
    %c0_i32_0 = arith.constant 0 : i32
    %c0_i32_1 = arith.constant 0 : i32
    %c0_i32_2 = arith.constant 0 : i32
    return %c0_i32, %c0_i32_0, %c0_i32_1 : i32, i32, i32
  }
  func.func @transform_2(%arg0: i32) -> (i32, i32) {
    %c0_i32 = arith.constant 0 : i32
    %c0_i32_0 = arith.constant 0 : i32
    %c0_i32_1 = arith.constant 0 : i32
    return %c0_i32, %c0_i32_0 : i32, i32
  }
  func.func @transform_3(%arg0: i32) -> (i32, i32, i32, i32) {
    %c0_i32 = arith.constant 0 : i32
    %c0_i32_0 = arith.constant 0 : i32
    %c0_i32_1 = arith.constant 0 : i32
    %c0_i32_2 = arith.constant 0 : i32
    return %arg0, %c0_i32, %c0_i32_0, %c0_i32_1 : i32, i32, i32, i32
  }
}

module attributes {stable_mosaic.version = 11 : i64} {
  func.func @_layer_kernel(%arg0: i32, %arg1: memref<1x3x3x512xbf16, #tpu.memory_space<vmem>>, %arg2: memref<4x512x256xbf16, #tpu.memory_space<vmem>>, %arg3: memref<1x256xf32, #tpu.memory_space<vmem>>, %arg4: memref<16x256x128xbf16, #tpu.memory_space<vmem>>, %arg5: memref<1x2x2x128xf32, #tpu.memory_space<vmem>>, %arg6: memref<2x2x256xf32, #tpu.memory_space<vmem>>, %arg7: memref<1x256xf32, #tpu.memory_space<vmem>>, %arg8: memref<1x256xf32, #tpu.memory_space<vmem>>, %arg9: memref<5x5x256xf32, #tpu.memory_space<vmem>>) attributes {dimension_semantics = [#tpu.dimension_semantics<parallel>], iteration_bounds = array<i64: 2>, scalar_prefetch = 0 : i64, scratch_operands = 4 : i64, tpu.core_type = #tpu.core_type<tc>, window_params = [{transform_indices = @transform_0, window_bounds = array<i64: 1, 3, 3, 512>}, {pipeline_mode = #tpu.pipeline_mode<synchronous>, transform_indices = @transform_1, window_bounds = array<i64: 4, 512, 256>}, {pipeline_mode = #tpu.pipeline_mode<synchronous>, transform_indices = @transform_2, window_bounds = array<i64: 1, 256>}, {pipeline_mode = #tpu.pipeline_mode<synchronous>, transform_indices = @transform_3, window_bounds = array<i64: 16, 256, 128>}, {transform_indices = @transform_4, window_bounds = array<i64: 1, 2, 2, 128>}]} {
    %c0 = arith.constant 0 : index
    %c0_0 = arith.constant 0 : index
    %0 = vector.load %arg3[%c0, %c0_0] : memref<1x256xf32, #tpu.memory_space<vmem>>, vector<1x256xf32>
    %cst = arith.constant 0.000000e+00 : f32
    %1 = vector.broadcast %cst : f32 to vector<1x256xf32>
    %c0_1 = arith.constant 0 : index
    %c0_2 = arith.constant 0 : index
    %2 = vector.load %arg7[%c0_1, %c0_2] : memref<1x256xf32, #tpu.memory_space<vmem>>, vector<1x256xf32>
    tpu.vector_store %arg7[%c0_1, %c0_2], %1 {strides = array<i32>} : memref<1x256xf32, #tpu.memory_space<vmem>>, vector<1x256xf32>,
    %cst_3 = arith.constant 0.000000e+00 : f32
    %3 = vector.broadcast %cst_3 : f32 to vector<1x256xf32>
    %c0_4 = arith.constant 0 : index
    %c0_5 = arith.constant 0 : index
    %4 = vector.load %arg8[%c0_4, %c0_5] : memref<1x256xf32, #tpu.memory_space<vmem>>, vector<1x256xf32>
    tpu.vector_store %arg8[%c0_4, %c0_5], %3 {strides = array<i32>} : memref<1x256xf32, #tpu.memory_space<vmem>>, vector<1x256xf32>,
    %c0_i32 = arith.constant 0 : i32
    %c2_i32 = arith.constant 2 : i32
    %5 = arith.addi %c0_i32, %c2_i32 : i32
    %c1_i32 = arith.constant 1 : i32
    scf.for %arg10 = %c0_i32 to %5 step %c1_i32  : i32 {
      %cst_27 = arith.constant 0.000000e+00 : f32
      %24 = vector.broadcast %cst_27 : f32 to vector<2x256xf32>
      %c0_i32_28 = arith.constant 0 : i32
      %25 = arith.addi %arg10, %c0_i32_28 : i32
      %c0_29 = arith.constant 0 : index
      %26 = arith.index_cast %25 : i32 to index
      %c0_30 = arith.constant 0 : index
      %c0_31 = arith.constant 0 : index
      %27 = vector.load %arg1[%c0_29, %26, %c0_30, %c0_31] : memref<1x3x3x512xbf16, #tpu.memory_space<vmem>>, vector<1x1x2x512xbf16>
      %28 = vector.shape_cast %27 : vector<1x1x2x512xbf16> to vector<2x512xbf16>
      %c0_32 = arith.constant 0 : index
      %c0_33 = arith.constant 0 : index
      %c0_34 = arith.constant 0 : index
      %29 = vector.load %arg2[%c0_32, %c0_33, %c0_34] : memref<4x512x256xbf16, #tpu.memory_space<vmem>>, vector<1x512x256xbf16>
      %30 = vector.shape_cast %29 : vector<1x512x256xbf16> to vector<512x256xbf16>
      %cst_35 = arith.constant dense<0.000000e+00> : vector<2x256xf32>
      %31 = tpu.matmul %28, %30, %cst_35 {dimension_numbers = #tpu.dot_dimension_numbers<[1], [0], [0], [1], [0, 0, 1, 1], [], []>} : vector<2x512xbf16>, vector<512x256xbf16>, vector<2x256xf32> -> vector<2x256xf32>
      %32 = arith.addf %24, %31 : vector<2x256xf32>
      %c0_i32_36 = arith.constant 0 : i32
      %33 = arith.addi %arg10, %c0_i32_36 : i32
      %c0_37 = arith.constant 0 : index
      %34 = arith.index_cast %33 : i32 to index
      %c1 = arith.constant 1 : index
      %c0_38 = arith.constant 0 : index
      %35 = vector.load %arg1[%c0_37, %34, %c1, %c0_38] : memref<1x3x3x512xbf16, #tpu.memory_space<vmem>>, vector<1x1x2x512xbf16>
      %36 = vector.shape_cast %35 : vector<1x1x2x512xbf16> to vector<2x512xbf16>
      %c1_39 = arith.constant 1 : index
      %c0_40 = arith.constant 0 : index
      %c0_41 = arith.constant 0 : index
      %37 = vector.load %arg2[%c1_39, %c0_40, %c0_41] : memref<4x512x256xbf16, #tpu.memory_space<vmem>>, vector<1x512x256xbf16>
      %38 = vector.shape_cast %37 : vector<1x512x256xbf16> to vector<512x256xbf16>
      %cst_42 = arith.constant dense<0.000000e+00> : vector<2x256xf32>
      %39 = tpu.matmul %36, %38, %cst_42 {dimension_numbers = #tpu.dot_dimension_numbers<[1], [0], [0], [1], [0, 0, 1, 1], [], []>} : vector<2x512xbf16>, vector<512x256xbf16>, vector<2x256xf32> -> vector<2x256xf32>
      %40 = arith.addf %32, %39 : vector<2x256xf32>
      %c1_i32_43 = arith.constant 1 : i32
      %41 = arith.addi %arg10, %c1_i32_43 : i32
      %c0_44 = arith.constant 0 : index
      %42 = arith.index_cast %41 : i32 to index
      %c0_45 = arith.constant 0 : index
      %c0_46 = arith.constant 0 : index
      %43 = vector.load %arg1[%c0_44, %42, %c0_45, %c0_46] : memref<1x3x3x512xbf16, #tpu.memory_space<vmem>>, vector<1x1x2x512xbf16>
      %44 = vector.shape_cast %43 : vector<1x1x2x512xbf16> to vector<2x512xbf16>
      %c2 = arith.constant 2 : index
      %c0_47 = arith.constant 0 : index
      %c0_48 = arith.constant 0 : index
      %45 = vector.load %arg2[%c2, %c0_47, %c0_48] : memref<4x512x256xbf16, #tpu.memory_space<vmem>>, vector<1x512x256xbf16>
      %46 = vector.shape_cast %45 : vector<1x512x256xbf16> to vector<512x256xbf16>
      %cst_49 = arith.constant dense<0.000000e+00> : vector<2x256xf32>
      %47 = tpu.matmul %44, %46, %cst_49 {dimension_numbers = #tpu.dot_dimension_numbers<[1], [0], [0], [1], [0, 0, 1, 1], [], []>} : vector<2x512xbf16>, vector<512x256xbf16>, vector<2x256xf32> -> vector<2x256xf32>
      %48 = arith.addf %40, %47 : vector<2x256xf32>
      %c1_i32_50 = arith.constant 1 : i32
      %49 = arith.addi %arg10, %c1_i32_50 : i32
      %c0_51 = arith.constant 0 : index
      %50 = arith.index_cast %49 : i32 to index
      %c1_52 = arith.constant 1 : index
      %c0_53 = arith.constant 0 : index
      %51 = vector.load %arg1[%c0_51, %50, %c1_52, %c0_53] : memref<1x3x3x512xbf16, #tpu.memory_space<vmem>>, vector<1x1x2x512xbf16>
      %52 = vector.shape_cast %51 : vector<1x1x2x512xbf16> to vector<2x512xbf16>
      %c3 = arith.constant 3 : index
      %c0_54 = arith.constant 0 : index
      %c0_55 = arith.constant 0 : index
      %53 = vector.load %arg2[%c3, %c0_54, %c0_55] : memref<4x512x256xbf16, #tpu.memory_space<vmem>>, vector<1x512x256xbf16>
      %54 = vector.shape_cast %53 : vector<1x512x256xbf16> to vector<512x256xbf16>
      %cst_56 = arith.constant dense<0.000000e+00> : vector<2x256xf32>
      %55 = tpu.matmul %52, %54, %cst_56 {dimension_numbers = #tpu.dot_dimension_numbers<[1], [0], [0], [1], [0, 0, 1, 1], [], []>} : vector<2x512xbf16>, vector<512x256xbf16>, vector<2x256xf32> -> vector<2x256xf32>
      %56 = arith.addf %48, %55 : vector<2x256xf32>
      %57 = vector.broadcast %0 : vector<1x256xf32> to vector<2x256xf32>
      %58 = arith.addf %56, %57 : vector<2x256xf32>
      %59 = arith.index_cast %arg10 : i32 to index
      %c0_57 = arith.constant 0 : index
      %c0_58 = arith.constant 0 : index
      %60 = vector.load %arg6[%59, %c0_57, %c0_58] : memref<2x2x256xf32, #tpu.memory_space<vmem>>, vector<1x2x256xf32>
      %61 = vector.shape_cast %60 : vector<1x2x256xf32> to vector<2x256xf32>
      %62 = vector.shape_cast %58 : vector<2x256xf32> to vector<1x2x256xf32>
      tpu.vector_store %arg6[%59, %c0_57, %c0_58], %62 {strides = array<i32>} : memref<2x2x256xf32, #tpu.memory_space<vmem>>, vector<1x2x256xf32>,
      %c0_59 = arith.constant 0 : index
      %c0_60 = arith.constant 0 : index
      %63 = vector.load %arg7[%c0_59, %c0_60] : memref<1x256xf32, #tpu.memory_space<vmem>>, vector<1x256xf32>
      %cst_61 = arith.constant dense<0.000000e+00> : vector<256xf32>
      %64 = vector.multi_reduction <add>, %58, %cst_61 [0] : vector<2x256xf32> to vector<256xf32>
      %65 = vector.shape_cast %64 : vector<256xf32> to vector<1x256xf32>
      %66 = arith.addf %63, %65 : vector<1x256xf32>
      %c0_62 = arith.constant 0 : index
      %c0_63 = arith.constant 0 : index
      %67 = vector.load %arg7[%c0_62, %c0_63] : memref<1x256xf32, #tpu.memory_space<vmem>>, vector<1x256xf32>
      tpu.vector_store %arg7[%c0_62, %c0_63], %66 {strides = array<i32>} : memref<1x256xf32, #tpu.memory_space<vmem>>, vector<1x256xf32>,
      %c0_64 = arith.constant 0 : index
      %c0_65 = arith.constant 0 : index
      %68 = vector.load %arg8[%c0_64, %c0_65] : memref<1x256xf32, #tpu.memory_space<vmem>>, vector<1x256xf32>
      %69 = arith.mulf %58, %58 : vector<2x256xf32>
      %cst_66 = arith.constant dense<0.000000e+00> : vector<256xf32>
      %70 = vector.multi_reduction <add>, %69, %cst_66 [0] : vector<2x256xf32> to vector<256xf32>
      %71 = vector.shape_cast %70 : vector<256xf32> to vector<1x256xf32>
      %72 = arith.addf %68, %71 : vector<1x256xf32>
      %c0_67 = arith.constant 0 : index
      %c0_68 = arith.constant 0 : index
      %73 = vector.load %arg8[%c0_67, %c0_68] : memref<1x256xf32, #tpu.memory_space<vmem>>, vector<1x256xf32>
      tpu.vector_store %arg8[%c0_67, %c0_68], %72 {strides = array<i32>} : memref<1x256xf32, #tpu.memory_space<vmem>>, vector<1x256xf32>,
    }
    %c2_i32_6 = arith.constant 2 : i32
    %c0_7 = arith.constant 0 : index
    %c0_8 = arith.constant 0 : index
    %6 = vector.load %arg7[%c0_7, %c0_8] : memref<1x256xf32, #tpu.memory_space<vmem>>, vector<1x256xf32>
    %cst_9 = arith.constant 2.500000e-01 : f32
    %7 = vector.broadcast %cst_9 : f32 to vector<1x256xf32>
    %8 = arith.mulf %6, %7 : vector<1x256xf32>
    %c0_10 = arith.constant 0 : index
    %c0_11 = arith.constant 0 : index
    %9 = vector.load %arg8[%c0_10, %c0_11] : memref<1x256xf32, #tpu.memory_space<vmem>>, vector<1x256xf32>
    %cst_12 = arith.constant 2.500000e-01 : f32
    %10 = vector.broadcast %cst_12 : f32 to vector<1x256xf32>
    %11 = arith.mulf %9, %10 : vector<1x256xf32>
    %12 = arith.mulf %8, %8 : vector<1x256xf32>
    %13 = arith.subf %11, %12 : vector<1x256xf32>
    %cst_13 = arith.constant 9.99999974E-6 : f32
    %14 = vector.broadcast %cst_13 : f32 to vector<1x256xf32>
    %15 = arith.addf %13, %14 : vector<1x256xf32>
    %16 = math.rsqrt %15 : vector<1x256xf32>
    %cst_14 = arith.constant 0.000000e+00 : f32
    %17 = vector.broadcast %cst_14 : f32 to vector<1x256xf32>
    %18 = arith.subf %17, %8 : vector<1x256xf32>
    %19 = arith.mulf %18, %16 : vector<1x256xf32>
    %cst_15 = arith.constant 0.000000e+00 : f32
    %20 = vector.broadcast %cst_15 : f32 to vector<5x5x256xf32>
    %c0_16 = arith.constant 0 : index
    %c0_17 = arith.constant 0 : index
    %c0_18 = arith.constant 0 : index
    %21 = vector.load %arg9[%c0_16, %c0_17, %c0_18] : memref<5x5x256xf32, #tpu.memory_space<vmem>>, vector<5x5x256xf32>
    tpu.vector_store %arg9[%c0_16, %c0_17, %c0_18], %20 {strides = array<i32>} : memref<5x5x256xf32, #tpu.memory_space<vmem>>, vector<5x5x256xf32>,
    %c0_i32_19 = arith.constant 0 : i32
    %c2_i32_20 = arith.constant 2 : i32
    %22 = arith.addi %c0_i32_19, %c2_i32_20 : i32
    %c1_i32_21 = arith.constant 1 : i32
    scf.for %arg10 = %c0_i32_19 to %22 step %c1_i32_21  : i32 {
      %24 = arith.index_cast %arg10 : i32 to index
      %c0_27 = arith.constant 0 : index
      %c0_28 = arith.constant 0 : index
      %25 = vector.load %arg6[%24, %c0_27, %c0_28] : memref<2x2x256xf32, #tpu.memory_space<vmem>>, vector<1x2x256xf32>
      %26 = vector.shape_cast %25 : vector<1x2x256xf32> to vector<2x256xf32>
      %27 = vector.broadcast %16 : vector<1x256xf32> to vector<2x256xf32>
      %28 = arith.mulf %26, %27 : vector<2x256xf32>
      %29 = vector.broadcast %19 : vector<1x256xf32> to vector<2x256xf32>
      %30 = arith.addf %28, %29 : vector<2x256xf32>
      %cst_29 = arith.constant 0.000000e+00 : f32
      %31 = vector.broadcast %cst_29 : f32 to vector<2x256xf32>
      %32 = arith.cmpf ogt, %30, %31 : vector<2x256xf32>
      %cst_30 = arith.constant 2.000000e-01 : f32
      %33 = vector.broadcast %cst_30 : f32 to vector<2x256xf32>
      %34 = arith.mulf %33, %30 : vector<2x256xf32>
      %35 = arith.select %32, %30, %34 : vector<2x256xi1>, vector<2x256xf32>
      %c2_i32_31 = arith.constant 2 : i32
      %36 = arith.addi %c2_i32_31, %arg10 : i32
      %37 = arith.index_cast %36 : i32 to index
      %c2 = arith.constant 2 : index
      %c0_32 = arith.constant 0 : index
      %38 = vector.load %arg9[%37, %c2, %c0_32] : memref<5x5x256xf32, #tpu.memory_space<vmem>>, vector<1x2x256xf32>
      %39 = vector.shape_cast %38 : vector<1x2x256xf32> to vector<2x256xf32>
      %40 = vector.shape_cast %35 : vector<2x256xf32> to vector<1x2x256xf32>
      tpu.vector_store %arg9[%37, %c2, %c0_32], %40 {strides = array<i32>} : memref<5x5x256xf32, #tpu.memory_space<vmem>>, vector<1x2x256xf32>,
    }
    %c2_i32_22 = arith.constant 2 : i32
    %c0_i32_23 = arith.constant 0 : i32
    %c2_i32_24 = arith.constant 2 : i32
    %23 = arith.addi %c0_i32_23, %c2_i32_24 : i32
    %c1_i32_25 = arith.constant 1 : i32
    scf.for %arg10 = %c0_i32_23 to %23 step %c1_i32_25  : i32 {
      %cst_27 = arith.constant 0.000000e+00 : f32
      %24 = vector.broadcast %cst_27 : f32 to vector<2x128xf32>
      %c0_i32_28 = arith.constant 0 : i32
      %25 = arith.addi %arg10, %c0_i32_28 : i32
      %26 = arith.index_cast %25 : i32 to index
      %c0_29 = arith.constant 0 : index
      %c0_30 = arith.constant 0 : index
      %27 = vector.load %arg9[%26, %c0_29, %c0_30] : memref<5x5x256xf32, #tpu.memory_space<vmem>>, vector<1x2x256xf32>
      %28 = vector.shape_cast %27 : vector<1x2x256xf32> to vector<2x256xf32>
      %29 = arith.truncf %28 : vector<2x256xf32> to vector<2x256xbf16>
      %c0_31 = arith.constant 0 : index
      %c0_32 = arith.constant 0 : index
      %c0_33 = arith.constant 0 : index
      %30 = vector.load %arg4[%c0_31, %c0_32, %c0_33] : memref<16x256x128xbf16, #tpu.memory_space<vmem>>, vector<1x256x128xbf16>
      %31 = vector.shape_cast %30 : vector<1x256x128xbf16> to vector<256x128xbf16>
      %cst_34 = arith.constant dense<0.000000e+00> : vector<2x128xf32>
      %32 = tpu.matmul %29, %31, %cst_34 {dimension_numbers = #tpu.dot_dimension_numbers<[1], [0], [0], [1], [0, 0, 1, 1], [], []>} : vector<2x256xbf16>, vector<256x128xbf16>, vector<2x128xf32> -> vector<2x128xf32>
      %33 = arith.addf %24, %32 : vector<2x128xf32>
      %c0_i32_35 = arith.constant 0 : i32
      %34 = arith.addi %arg10, %c0_i32_35 : i32
      %35 = arith.index_cast %34 : i32 to index
      %c1 = arith.constant 1 : index
      %c0_36 = arith.constant 0 : index
      %36 = vector.load %arg9[%35, %c1, %c0_36] : memref<5x5x256xf32, #tpu.memory_space<vmem>>, vector<1x2x256xf32>
      %37 = vector.shape_cast %36 : vector<1x2x256xf32> to vector<2x256xf32>
      %38 = arith.truncf %37 : vector<2x256xf32> to vector<2x256xbf16>
      %c1_37 = arith.constant 1 : index
      %c0_38 = arith.constant 0 : index
      %c0_39 = arith.constant 0 : index
      %39 = vector.load %arg4[%c1_37, %c0_38, %c0_39] : memref<16x256x128xbf16, #tpu.memory_space<vmem>>, vector<1x256x128xbf16>
      %40 = vector.shape_cast %39 : vector<1x256x128xbf16> to vector<256x128xbf16>
      %cst_40 = arith.constant dense<0.000000e+00> : vector<2x128xf32>
      %41 = tpu.matmul %38, %40, %cst_40 {dimension_numbers = #tpu.dot_dimension_numbers<[1], [0], [0], [1], [0, 0, 1, 1], [], []>} : vector<2x256xbf16>, vector<256x128xbf16>, vector<2x128xf32> -> vector<2x128xf32>
      %42 = arith.addf %33, %41 : vector<2x128xf32>
      %c0_i32_41 = arith.constant 0 : i32
      %43 = arith.addi %arg10, %c0_i32_41 : i32
      %44 = arith.index_cast %43 : i32 to index
      %c2 = arith.constant 2 : index
      %c0_42 = arith.constant 0 : index
      %45 = vector.load %arg9[%44, %c2, %c0_42] : memref<5x5x256xf32, #tpu.memory_space<vmem>>, vector<1x2x256xf32>
      %46 = vector.shape_cast %45 : vector<1x2x256xf32> to vector<2x256xf32>
      %47 = arith.truncf %46 : vector<2x256xf32> to vector<2x256xbf16>
      %c2_43 = arith.constant 2 : index
      %c0_44 = arith.constant 0 : index
      %c0_45 = arith.constant 0 : index
      %48 = vector.load %arg4[%c2_43, %c0_44, %c0_45] : memref<16x256x128xbf16, #tpu.memory_space<vmem>>, vector<1x256x128xbf16>
      %49 = vector.shape_cast %48 : vector<1x256x128xbf16> to vector<256x128xbf16>
      %cst_46 = arith.constant dense<0.000000e+00> : vector<2x128xf32>
      %50 = tpu.matmul %47, %49, %cst_46 {dimension_numbers = #tpu.dot_dimension_numbers<[1], [0], [0], [1], [0, 0, 1, 1], [], []>} : vector<2x256xbf16>, vector<256x128xbf16>, vector<2x128xf32> -> vector<2x128xf32>
      %51 = arith.addf %42, %50 : vector<2x128xf32>
      %c0_i32_47 = arith.constant 0 : i32
      %52 = arith.addi %arg10, %c0_i32_47 : i32
      %53 = arith.index_cast %52 : i32 to index
      %c3 = arith.constant 3 : index
      %c0_48 = arith.constant 0 : index
      %54 = vector.load %arg9[%53, %c3, %c0_48] : memref<5x5x256xf32, #tpu.memory_space<vmem>>, vector<1x2x256xf32>
      %55 = vector.shape_cast %54 : vector<1x2x256xf32> to vector<2x256xf32>
      %56 = arith.truncf %55 : vector<2x256xf32> to vector<2x256xbf16>
      %c3_49 = arith.constant 3 : index
      %c0_50 = arith.constant 0 : index
      %c0_51 = arith.constant 0 : index
      %57 = vector.load %arg4[%c3_49, %c0_50, %c0_51] : memref<16x256x128xbf16, #tpu.memory_space<vmem>>, vector<1x256x128xbf16>
      %58 = vector.shape_cast %57 : vector<1x256x128xbf16> to vector<256x128xbf16>
      %cst_52 = arith.constant dense<0.000000e+00> : vector<2x128xf32>
      %59 = tpu.matmul %56, %58, %cst_52 {dimension_numbers = #tpu.dot_dimension_numbers<[1], [0], [0], [1], [0, 0, 1, 1], [], []>} : vector<2x256xbf16>, vector<256x128xbf16>, vector<2x128xf32> -> vector<2x128xf32>
      %60 = arith.addf %51, %59 : vector<2x128xf32>
      %c1_i32_53 = arith.constant 1 : i32
      %61 = arith.addi %arg10, %c1_i32_53 : i32
      %62 = arith.index_cast %61 : i32 to index
      %c0_54 = arith.constant 0 : index
      %c0_55 = arith.constant 0 : index
      %63 = vector.load %arg9[%62, %c0_54, %c0_55] : memref<5x5x256xf32, #tpu.memory_space<vmem>>, vector<1x2x256xf32>
      %64 = vector.shape_cast %63 : vector<1x2x256xf32> to vector<2x256xf32>
      %65 = arith.truncf %64 : vector<2x256xf32> to vector<2x256xbf16>
      %c4 = arith.constant 4 : index
      %c0_56 = arith.constant 0 : index
      %c0_57 = arith.constant 0 : index
      %66 = vector.load %arg4[%c4, %c0_56, %c0_57] : memref<16x256x128xbf16, #tpu.memory_space<vmem>>, vector<1x256x128xbf16>
      %67 = vector.shape_cast %66 : vector<1x256x128xbf16> to vector<256x128xbf16>
      %cst_58 = arith.constant dense<0.000000e+00> : vector<2x128xf32>
      %68 = tpu.matmul %65, %67, %cst_58 {dimension_numbers = #tpu.dot_dimension_numbers<[1], [0], [0], [1], [0, 0, 1, 1], [], []>} : vector<2x256xbf16>, vector<256x128xbf16>, vector<2x128xf32> -> vector<2x128xf32>
      %69 = arith.addf %60, %68 : vector<2x128xf32>
      %c1_i32_59 = arith.constant 1 : i32
      %70 = arith.addi %arg10, %c1_i32_59 : i32
      %71 = arith.index_cast %70 : i32 to index
      %c1_60 = arith.constant 1 : index
      %c0_61 = arith.constant 0 : index
      %72 = vector.load %arg9[%71, %c1_60, %c0_61] : memref<5x5x256xf32, #tpu.memory_space<vmem>>, vector<1x2x256xf32>
      %73 = vector.shape_cast %72 : vector<1x2x256xf32> to vector<2x256xf32>
      %74 = arith.truncf %73 : vector<2x256xf32> to vector<2x256xbf16>
      %c5 = arith.constant 5 : index
      %c0_62 = arith.constant 0 : index
      %c0_63 = arith.constant 0 : index
      %75 = vector.load %arg4[%c5, %c0_62, %c0_63] : memref<16x256x128xbf16, #tpu.memory_space<vmem>>, vector<1x256x128xbf16>
      %76 = vector.shape_cast %75 : vector<1x256x128xbf16> to vector<256x128xbf16>
      %cst_64 = arith.constant dense<0.000000e+00> : vector<2x128xf32>
      %77 = tpu.matmul %74, %76, %cst_64 {dimension_numbers = #tpu.dot_dimension_numbers<[1], [0], [0], [1], [0, 0, 1, 1], [], []>} : vector<2x256xbf16>, vector<256x128xbf16>, vector<2x128xf32> -> vector<2x128xf32>
      %78 = arith.addf %69, %77 : vector<2x128xf32>
      %c1_i32_65 = arith.constant 1 : i32
      %79 = arith.addi %arg10, %c1_i32_65 : i32
      %80 = arith.index_cast %79 : i32 to index
      %c2_66 = arith.constant 2 : index
      %c0_67 = arith.constant 0 : index
      %81 = vector.load %arg9[%80, %c2_66, %c0_67] : memref<5x5x256xf32, #tpu.memory_space<vmem>>, vector<1x2x256xf32>
      %82 = vector.shape_cast %81 : vector<1x2x256xf32> to vector<2x256xf32>
      %83 = arith.truncf %82 : vector<2x256xf32> to vector<2x256xbf16>
      %c6 = arith.constant 6 : index
      %c0_68 = arith.constant 0 : index
      %c0_69 = arith.constant 0 : index
      %84 = vector.load %arg4[%c6, %c0_68, %c0_69] : memref<16x256x128xbf16, #tpu.memory_space<vmem>>, vector<1x256x128xbf16>
      %85 = vector.shape_cast %84 : vector<1x256x128xbf16> to vector<256x128xbf16>
      %cst_70 = arith.constant dense<0.000000e+00> : vector<2x128xf32>
      %86 = tpu.matmul %83, %85, %cst_70 {dimension_numbers = #tpu.dot_dimension_numbers<[1], [0], [0], [1], [0, 0, 1, 1], [], []>} : vector<2x256xbf16>, vector<256x128xbf16>, vector<2x128xf32> -> vector<2x128xf32>
      %87 = arith.addf %78, %86 : vector<2x128xf32>
      %c1_i32_71 = arith.constant 1 : i32
      %88 = arith.addi %arg10, %c1_i32_71 : i32
      %89 = arith.index_cast %88 : i32 to index
      %c3_72 = arith.constant 3 : index
      %c0_73 = arith.constant 0 : index
      %90 = vector.load %arg9[%89, %c3_72, %c0_73] : memref<5x5x256xf32, #tpu.memory_space<vmem>>, vector<1x2x256xf32>
      %91 = vector.shape_cast %90 : vector<1x2x256xf32> to vector<2x256xf32>
      %92 = arith.truncf %91 : vector<2x256xf32> to vector<2x256xbf16>
      %c7 = arith.constant 7 : index
      %c0_74 = arith.constant 0 : index
      %c0_75 = arith.constant 0 : index
      %93 = vector.load %arg4[%c7, %c0_74, %c0_75] : memref<16x256x128xbf16, #tpu.memory_space<vmem>>, vector<1x256x128xbf16>
      %94 = vector.shape_cast %93 : vector<1x256x128xbf16> to vector<256x128xbf16>
      %cst_76 = arith.constant dense<0.000000e+00> : vector<2x128xf32>
      %95 = tpu.matmul %92, %94, %cst_76 {dimension_numbers = #tpu.dot_dimension_numbers<[1], [0], [0], [1], [0, 0, 1, 1], [], []>} : vector<2x256xbf16>, vector<256x128xbf16>, vector<2x128xf32> -> vector<2x128xf32>
      %96 = arith.addf %87, %95 : vector<2x128xf32>
      %c2_i32_77 = arith.constant 2 : i32
      %97 = arith.addi %arg10, %c2_i32_77 : i32
      %98 = arith.index_cast %97 : i32 to index
      %c0_78 = arith.constant 0 : index
      %c0_79 = arith.constant 0 : index
      %99 = vector.load %arg9[%98, %c0_78, %c0_79] : memref<5x5x256xf32, #tpu.memory_space<vmem>>, vector<1x2x256xf32>
      %100 = vector.shape_cast %99 : vector<1x2x256xf32> to vector<2x256xf32>
      %101 = arith.truncf %100 : vector<2x256xf32> to vector<2x256xbf16>
      %c8 = arith.constant 8 : index
      %c0_80 = arith.constant 0 : index
      %c0_81 = arith.constant 0 : index
      %102 = vector.load %arg4[%c8, %c0_80, %c0_81] : memref<16x256x128xbf16, #tpu.memory_space<vmem>>, vector<1x256x128xbf16>
      %103 = vector.shape_cast %102 : vector<1x256x128xbf16> to vector<256x128xbf16>
      %cst_82 = arith.constant dense<0.000000e+00> : vector<2x128xf32>
      %104 = tpu.matmul %101, %103, %cst_82 {dimension_numbers = #tpu.dot_dimension_numbers<[1], [0], [0], [1], [0, 0, 1, 1], [], []>} : vector<2x256xbf16>, vector<256x128xbf16>, vector<2x128xf32> -> vector<2x128xf32>
      %105 = arith.addf %96, %104 : vector<2x128xf32>
      %c2_i32_83 = arith.constant 2 : i32
      %106 = arith.addi %arg10, %c2_i32_83 : i32
      %107 = arith.index_cast %106 : i32 to index
      %c1_84 = arith.constant 1 : index
      %c0_85 = arith.constant 0 : index
      %108 = vector.load %arg9[%107, %c1_84, %c0_85] : memref<5x5x256xf32, #tpu.memory_space<vmem>>, vector<1x2x256xf32>
      %109 = vector.shape_cast %108 : vector<1x2x256xf32> to vector<2x256xf32>
      %110 = arith.truncf %109 : vector<2x256xf32> to vector<2x256xbf16>
      %c9 = arith.constant 9 : index
      %c0_86 = arith.constant 0 : index
      %c0_87 = arith.constant 0 : index
      %111 = vector.load %arg4[%c9, %c0_86, %c0_87] : memref<16x256x128xbf16, #tpu.memory_space<vmem>>, vector<1x256x128xbf16>
      %112 = vector.shape_cast %111 : vector<1x256x128xbf16> to vector<256x128xbf16>
      %cst_88 = arith.constant dense<0.000000e+00> : vector<2x128xf32>
      %113 = tpu.matmul %110, %112, %cst_88 {dimension_numbers = #tpu.dot_dimension_numbers<[1], [0], [0], [1], [0, 0, 1, 1], [], []>} : vector<2x256xbf16>, vector<256x128xbf16>, vector<2x128xf32> -> vector<2x128xf32>
      %114 = arith.addf %105, %113 : vector<2x128xf32>
      %c2_i32_89 = arith.constant 2 : i32
      %115 = arith.addi %arg10, %c2_i32_89 : i32
      %116 = arith.index_cast %115 : i32 to index
      %c2_90 = arith.constant 2 : index
      %c0_91 = arith.constant 0 : index
      %117 = vector.load %arg9[%116, %c2_90, %c0_91] : memref<5x5x256xf32, #tpu.memory_space<vmem>>, vector<1x2x256xf32>
      %118 = vector.shape_cast %117 : vector<1x2x256xf32> to vector<2x256xf32>
      %119 = arith.truncf %118 : vector<2x256xf32> to vector<2x256xbf16>
      %c10 = arith.constant 10 : index
      %c0_92 = arith.constant 0 : index
      %c0_93 = arith.constant 0 : index
      %120 = vector.load %arg4[%c10, %c0_92, %c0_93] : memref<16x256x128xbf16, #tpu.memory_space<vmem>>, vector<1x256x128xbf16>
      %121 = vector.shape_cast %120 : vector<1x256x128xbf16> to vector<256x128xbf16>
      %cst_94 = arith.constant dense<0.000000e+00> : vector<2x128xf32>
      %122 = tpu.matmul %119, %121, %cst_94 {dimension_numbers = #tpu.dot_dimension_numbers<[1], [0], [0], [1], [0, 0, 1, 1], [], []>} : vector<2x256xbf16>, vector<256x128xbf16>, vector<2x128xf32> -> vector<2x128xf32>
      %123 = arith.addf %114, %122 : vector<2x128xf32>
      %c2_i32_95 = arith.constant 2 : i32
      %124 = arith.addi %arg10, %c2_i32_95 : i32
      %125 = arith.index_cast %124 : i32 to index
      %c3_96 = arith.constant 3 : index
      %c0_97 = arith.constant 0 : index
      %126 = vector.load %arg9[%125, %c3_96, %c0_97] : memref<5x5x256xf32, #tpu.memory_space<vmem>>, vector<1x2x256xf32>
      %127 = vector.shape_cast %126 : vector<1x2x256xf32> to vector<2x256xf32>
      %128 = arith.truncf %127 : vector<2x256xf32> to vector<2x256xbf16>
      %c11 = arith.constant 11 : index
      %c0_98 = arith.constant 0 : index
      %c0_99 = arith.constant 0 : index
      %129 = vector.load %arg4[%c11, %c0_98, %c0_99] : memref<16x256x128xbf16, #tpu.memory_space<vmem>>, vector<1x256x128xbf16>
      %130 = vector.shape_cast %129 : vector<1x256x128xbf16> to vector<256x128xbf16>
      %cst_100 = arith.constant dense<0.000000e+00> : vector<2x128xf32>
      %131 = tpu.matmul %128, %130, %cst_100 {dimension_numbers = #tpu.dot_dimension_numbers<[1], [0], [0], [1], [0, 0, 1, 1], [], []>} : vector<2x256xbf16>, vector<256x128xbf16>, vector<2x128xf32> -> vector<2x128xf32>
      %132 = arith.addf %123, %131 : vector<2x128xf32>
      %c3_i32 = arith.constant 3 : i32
      %133 = arith.addi %arg10, %c3_i32 : i32
      %134 = arith.index_cast %133 : i32 to index
      %c0_101 = arith.constant 0 : index
      %c0_102 = arith.constant 0 : index
      %135 = vector.load %arg9[%134, %c0_101, %c0_102] : memref<5x5x256xf32, #tpu.memory_space<vmem>>, vector<1x2x256xf32>
      %136 = vector.shape_cast %135 : vector<1x2x256xf32> to vector<2x256xf32>
      %137 = arith.truncf %136 : vector<2x256xf32> to vector<2x256xbf16>
      %c12 = arith.constant 12 : index
      %c0_103 = arith.constant 0 : index
      %c0_104 = arith.constant 0 : index
      %138 = vector.load %arg4[%c12, %c0_103, %c0_104] : memref<16x256x128xbf16, #tpu.memory_space<vmem>>, vector<1x256x128xbf16>
      %139 = vector.shape_cast %138 : vector<1x256x128xbf16> to vector<256x128xbf16>
      %cst_105 = arith.constant dense<0.000000e+00> : vector<2x128xf32>
      %140 = tpu.matmul %137, %139, %cst_105 {dimension_numbers = #tpu.dot_dimension_numbers<[1], [0], [0], [1], [0, 0, 1, 1], [], []>} : vector<2x256xbf16>, vector<256x128xbf16>, vector<2x128xf32> -> vector<2x128xf32>
      %141 = arith.addf %132, %140 : vector<2x128xf32>
      %c3_i32_106 = arith.constant 3 : i32
      %142 = arith.addi %arg10, %c3_i32_106 : i32
      %143 = arith.index_cast %142 : i32 to index
      %c1_107 = arith.constant 1 : index
      %c0_108 = arith.constant 0 : index
      %144 = vector.load %arg9[%143, %c1_107, %c0_108] : memref<5x5x256xf32, #tpu.memory_space<vmem>>, vector<1x2x256xf32>
      %145 = vector.shape_cast %144 : vector<1x2x256xf32> to vector<2x256xf32>
      %146 = arith.truncf %145 : vector<2x256xf32> to vector<2x256xbf16>
      %c13 = arith.constant 13 : index
      %c0_109 = arith.constant 0 : index
      %c0_110 = arith.constant 0 : index
      %147 = vector.load %arg4[%c13, %c0_109, %c0_110] : memref<16x256x128xbf16, #tpu.memory_space<vmem>>, vector<1x256x128xbf16>
      %148 = vector.shape_cast %147 : vector<1x256x128xbf16> to vector<256x128xbf16>
      %cst_111 = arith.constant dense<0.000000e+00> : vector<2x128xf32>
      %149 = tpu.matmul %146, %148, %cst_111 {dimension_numbers = #tpu.dot_dimension_numbers<[1], [0], [0], [1], [0, 0, 1, 1], [], []>} : vector<2x256xbf16>, vector<256x128xbf16>, vector<2x128xf32> -> vector<2x128xf32>
      %150 = arith.addf %141, %149 : vector<2x128xf32>
      %c3_i32_112 = arith.constant 3 : i32
      %151 = arith.addi %arg10, %c3_i32_112 : i32
      %152 = arith.index_cast %151 : i32 to index
      %c2_113 = arith.constant 2 : index
      %c0_114 = arith.constant 0 : index
      %153 = vector.load %arg9[%152, %c2_113, %c0_114] : memref<5x5x256xf32, #tpu.memory_space<vmem>>, vector<1x2x256xf32>
      %154 = vector.shape_cast %153 : vector<1x2x256xf32> to vector<2x256xf32>
      %155 = arith.truncf %154 : vector<2x256xf32> to vector<2x256xbf16>
      %c14 = arith.constant 14 : index
      %c0_115 = arith.constant 0 : index
      %c0_116 = arith.constant 0 : index
      %156 = vector.load %arg4[%c14, %c0_115, %c0_116] : memref<16x256x128xbf16, #tpu.memory_space<vmem>>, vector<1x256x128xbf16>
      %157 = vector.shape_cast %156 : vector<1x256x128xbf16> to vector<256x128xbf16>
      %cst_117 = arith.constant dense<0.000000e+00> : vector<2x128xf32>
      %158 = tpu.matmul %155, %157, %cst_117 {dimension_numbers = #tpu.dot_dimension_numbers<[1], [0], [0], [1], [0, 0, 1, 1], [], []>} : vector<2x256xbf16>, vector<256x128xbf16>, vector<2x128xf32> -> vector<2x128xf32>
      %159 = arith.addf %150, %158 : vector<2x128xf32>
      %c3_i32_118 = arith.constant 3 : i32
      %160 = arith.addi %arg10, %c3_i32_118 : i32
      %161 = arith.index_cast %160 : i32 to index
      %c3_119 = arith.constant 3 : index
      %c0_120 = arith.constant 0 : index
      %162 = vector.load %arg9[%161, %c3_119, %c0_120] : memref<5x5x256xf32, #tpu.memory_space<vmem>>, vector<1x2x256xf32>
      %163 = vector.shape_cast %162 : vector<1x2x256xf32> to vector<2x256xf32>
      %164 = arith.truncf %163 : vector<2x256xf32> to vector<2x256xbf16>
      %c15 = arith.constant 15 : index
      %c0_121 = arith.constant 0 : index
      %c0_122 = arith.constant 0 : index
      %165 = vector.load %arg4[%c15, %c0_121, %c0_122] : memref<16x256x128xbf16, #tpu.memory_space<vmem>>, vector<1x256x128xbf16>
      %166 = vector.shape_cast %165 : vector<1x256x128xbf16> to vector<256x128xbf16>
      %cst_123 = arith.constant dense<0.000000e+00> : vector<2x128xf32>
      %167 = tpu.matmul %164, %166, %cst_123 {dimension_numbers = #tpu.dot_dimension_numbers<[1], [0], [0], [1], [0, 0, 1, 1], [], []>} : vector<2x256xbf16>, vector<256x128xbf16>, vector<2x128xf32> -> vector<2x128xf32>
      %168 = arith.addf %159, %167 : vector<2x128xf32>
      %c0_124 = arith.constant 0 : index
      %169 = arith.index_cast %arg10 : i32 to index
      %c0_125 = arith.constant 0 : index
      %c0_126 = arith.constant 0 : index
      %170 = vector.load %arg5[%c0_124, %169, %c0_125, %c0_126] : memref<1x2x2x128xf32, #tpu.memory_space<vmem>>, vector<1x1x2x128xf32>
      %171 = vector.shape_cast %170 : vector<1x1x2x128xf32> to vector<2x128xf32>
      %172 = vector.shape_cast %168 : vector<2x128xf32> to vector<1x1x2x128xf32>
      tpu.vector_store %arg5[%c0_124, %169, %c0_125, %c0_126], %172 {strides = array<i32>} : memref<1x2x2x128xf32, #tpu.memory_space<vmem>>, vector<1x1x2x128xf32>,
    }
    %c2_i32_26 = arith.constant 2 : i32
    return
  }
  func.func @transform_0(%arg0: i32) -> (i32, i32, i32, i32) {
    %c0_i32 = arith.constant 0 : i32
    %c0_i32_0 = arith.constant 0 : i32
    %c0_i32_1 = arith.constant 0 : i32
    %c0_i32_2 = arith.constant 0 : i32
    return %arg0, %c0_i32, %c0_i32_0, %c0_i32_1 : i32, i32, i32, i32
  }
  func.func @transform_1(%arg0: i32) -> (i32, i32, i32) {
    %c0_i32 = arith.constant 0 : i32
    %c0_i32_0 = arith.constant 0 : i32
    %c0_i32_1 = arith.constant 0 : i32
    %c0_i32_2 = arith.constant 0 : i32
    return %c0_i32, %c0_i32_0, %c0_i32_1 : i32, i32, i32
  }
  func.func @transform_2(%arg0: i32) -> (i32, i32) {
    %c0_i32 = arith.constant 0 : i32
    %c0_i32_0 = arith.constant 0 : i32
    %c0_i32_1 = arith.constant 0 : i32
    return %c0_i32, %c0_i32_0 : i32, i32
  }
  func.func @transform_3(%arg0: i32) -> (i32, i32, i32) {
    %c0_i32 = arith.constant 0 : i32
    %c0_i32_0 = arith.constant 0 : i32
    %c0_i32_1 = arith.constant 0 : i32
    %c0_i32_2 = arith.constant 0 : i32
    return %c0_i32, %c0_i32_0, %c0_i32_1 : i32, i32, i32
  }
  func.func @transform_4(%arg0: i32) -> (i32, i32, i32, i32) {
    %c0_i32 = arith.constant 0 : i32
    %c0_i32_0 = arith.constant 0 : i32
    %c0_i32_1 = arith.constant 0 : i32
    %c0_i32_2 = arith.constant 0 : i32
    return %arg0, %c0_i32, %c0_i32_0, %c0_i32_1 : i32, i32, i32, i32
  }
}

</mosaic_0001>

<llo_original>
// kernel: discriminator_forward.4
$region0: #{discriminator_forward.4}
  #allocation0 [shape = 'u32[]', space=smem, size = 0x4, offset = 0x4, fixed_abs, tag = 'smem constant byte address 0x4 - core index']
  #allocation1 [shape = 'u32[144,128]{1,0:T(1,128)}', space=vmem, size = 0x12000, scoped, tag = 'internal scratch']
  %s0 = inlined_call_operand.vmem [shape: bf16[2,17,17,24], index: 0, kind: input, shape index: {}]
  %s1 = inlined_call_operand.vmem [shape: bf16[4,24,32], index: 1, kind: input, shape index: {}]
  %s2 = inlined_call_operand.vmem [shape: f32[1,32], index: 2, kind: input, shape index: {}]
  %s3 = inlined_call_operand.vmem [shape: bf16[2,16,16,32], index: 3, kind: output, shape index: {}]
  %s4 = sld [smem:[#allocation0]]
  $region52: #{discriminator_forward.4} parent=0
    _
  %s6 = ssub.s32 1, %s4
  %s7 = scalar_select 0, %s6, %s4
  loop: start=0, step=1, limit=4
  $region2: #{discriminator_forward.4} parent=0 // loop_pre_header
    _
  $region3: #{discriminator_forward.4} parent=0 // loop_header
    %s9 = sphi 0, %s13
    %p10 = scmp.ge.s32.totalorder %s9, 4
    %s19 = sphi 0, %s21
    %s22 = sphi 0, %s19
    %s23 = sphi 0, %s22
    %s39 = sphi 0, %s23
    %s43 = sphi 0, %s43
    %s45 = sphi 0, %s43
    %s46 = sphi 0, %s45
    %s60 = sphi 0, %s46
    %s64 = sphi 0, %s64
    %s66 = sphi 0, %s64
    %s67 = sphi 0, %s66
    %s81 = sphi 0, %s67
    %s87 = sphi 0, %s89
    %s90 = sphi 0, %s87
    %s91 = sphi 0, %s90
    %s107 = sphi 0, %s91
  $region4: #{discriminator_forward.4} parent=0 // loop_header_branch
    %12 = sbr.rel (%p10) target = $region8
  $region5: #{discriminator_forward.4} parent=0 // loop_body
    %s14 = ssub.s32 %s9, 1
    %s15 = ssub.s32 %s9, 2
    %s16 = sadd.s32 %s9, 1
    %s17 = ssub.s32 %s9, %s16
    %p18 = scmp.eq.s32.totalorder %s17, 0
    %s20 = sadd.s32 %s19, 1
    %s21 = scalar_select %p18, %s19, %s20
    %p24 = pneg %p18
    %p25 = scmp.eq.s32.totalorder %s9, 1
    %p26 = por %p24, %p25
    %p27 = scmp.ne.s32.totalorder %s19, %s22
    %p28 = scmp.eq.s32.totalorder %s9, 0
    %p29 = por %p27, %p28
    %p30 = scmp.ne.s32.totalorder %s19, %s22
    %p31 = scmp.eq.s32.totalorder %s14, 1
    %p32 = por %p30, %p31
    %p33 = scmp.ne.s32.totalorder %s22, %s23
    %p34 = scmp.eq.s32.totalorder %s14, 0
    %p35 = por %p33, %p34
    %p36 = scmp.ne.s32.totalorder %s22, %s23
    %p37 = scmp.eq.s32.totalorder %s15, 1
    %p38 = por %p36, %p37
    %p40 = scmp.ne.s32.totalorder %s23, %s39
    %p41 = scmp.eq.s32.totalorder %s15, 0
    %p42 = por %p40, %p41
    %s44 = sadd.s32 %s43, 1
    %p47 = scmp.eq.s32.totalorder %s9, 1
    %p48 = scmp.ne.s32.totalorder %s43, %s45
    %p49 = scmp.eq.s32.totalorder %s9, 0
    %p50 = por %p48, %p49
    %p51 = scmp.ne.s32.totalorder %s43, %s45
    %p52 = scmp.eq.s32.totalorder %s14, 1
    %p53 = por %p51, %p52
    %p54 = scmp.ne.s32.totalorder %s45, %s46
    %p55 = scmp.eq.s32.totalorder %s14, 0
    %p56 = por %p54, %p55
    %p57 = scmp.ne.s32.totalorder %s45, %s46
    %p58 = scmp.eq.s32.totalorder %s15, 1
    %p59 = por %p57, %p58
    %p61 = scmp.ne.s32.totalorder %s46, %s60
    %p62 = scmp.eq.s32.totalorder %s15, 0
    %p63 = por %p61, %p62
    %s65 = sadd.s32 %s64, 1
    %p68 = scmp.eq.s32.totalorder %s9, 1
    %p69 = scmp.ne.s32.totalorder %s64, %s66
    %p70 = scmp.eq.s32.totalorder %s9, 0
    %p71 = por %p69, %p70
    %p72 = scmp.ne.s32.totalorder %s64, %s66
    %p73 = scmp.eq.s32.totalorder %s14, 1
    %p74 = por %p72, %p73
    %p75 = scmp.ne.s32.totalorder %s66, %s67
    %p76 = scmp.eq.s32.totalorder %s14, 0
    %p77 = por %p75, %p76
    %p78 = scmp.ne.s32.totalorder %s66, %s67
    %p79 = scmp.eq.s32.totalorder %s15, 1
    %p80 = por %p78, %p79
    %p82 = scmp.ne.s32.totalorder %s67, %s81
    %p83 = scmp.eq.s32.totalorder %s15, 0
    %p84 = por %p82, %p83
    %s85 = ssub.s32 %s9, %s16
    %p86 = scmp.eq.s32.totalorder %s85, 0
    %s88 = sadd.s32 %s87, 1
    %s89 = scalar_select %p86, %s87, %s88
    %p92 = pneg %p86
    %p93 = scmp.eq.s32.totalorder %s9, 1
    %p94 = por %p92, %p93
    %p95 = scmp.ne.s32.totalorder %s87, %s90
    %p96 = scmp.eq.s32.totalorder %s9, 0
    %p97 = por %p95, %p96
    %p98 = scmp.ne.s32.totalorder %s87, %s90
    %p99 = scmp.eq.s32.totalorder %s14, 1
    %p100 = por %p98, %p99
    %p101 = scmp.ne.s32.totalorder %s90, %s91
    %p102 = scmp.eq.s32.totalorder %s14, 0
    %p103 = por %p101, %p102
    %p104 = scmp.ne.s32.totalorder %s90, %s91
    %p105 = scmp.eq.s32.totalorder %s15, 1
    %p106 = por %p104, %p105
    %p108 = scmp.ne.s32.totalorder %s91, %s107
    %p109 = scmp.eq.s32.totalorder %s15, 0
    %p110 = por %p108, %p109
    %p111 = scmp.le.s32.totalorder 1, %s9
    %p112 = scmp.lt.s32.totalorder %s9, 3
    %p113 = pnand %p111, %p112
    %p114 = pneg %p113
    // Predicated region
    $region9: #{discriminator_forward.4} parent=5 // pred_check
      _
    $region10: #{discriminator_forward.4} parent=5 // pred_check_branch
      %116 = sbr.rel (%p113) target = $region12
    $region11: #{discriminator_forward.4} parent=5 // pred_region
      %s117 = ssub.s32 %s9, 1
      // Predicated region
      $region13: #{discriminator_forward.4} parent=11 // pred_check
        %p118 = pneg %p56
      $region14: #{discriminator_forward.4} parent=11 // pred_check_branch
        %120 = sbr.rel (%p118) target = $region16
      $region15: #{discriminator_forward.4} parent=11 // pred_region
        _
      $region16: #{discriminator_forward.4} parent=11 // pred_fallthru
        _
      // Predicated region
      $region17: #{discriminator_forward.4} parent=11 // pred_check
        %p121 = pneg %p77
      $region18: #{discriminator_forward.4} parent=11 // pred_check_branch
        %123 = sbr.rel (%p121) target = $region20
      $region19: #{discriminator_forward.4} parent=11 // pred_region
        _
      $region20: #{discriminator_forward.4} parent=11 // pred_fallthru
        _
    $region12: #{discriminator_forward.4} parent=5 // pred_fallthru
      _
    %p124 = scmp.lt.s32.totalorder %s9, 2
    // Predicated region
    $region21: #{discriminator_forward.4} parent=5 // pred_check
      %p125 = pneg %p124
    $region22: #{discriminator_forward.4} parent=5 // pred_check_branch
      %127 = sbr.rel (%p125) target = $region24
    $region23: #{discriminator_forward.4} parent=5 // pred_region
      // Predicated region
      $region25: #{discriminator_forward.4} parent=23 // pred_check
        %p128 = pneg %p29
      $region26: #{discriminator_forward.4} parent=23 // pred_check_branch
        %130 = sbr.rel (%p128) target = $region28
      $region27: #{discriminator_forward.4} parent=23 // pred_region
        %p131 = scmp.lt.s32.totalorder %s9, 1
        %s132 = scalar_select %p131, %s9, 1
        %s133 = smul.addr %s132, 51
        %s134 = smul.addr %s133, 4
        %s135 = scalar_lea.vmem %s0, %s134
      $region28: #{discriminator_forward.4} parent=23 // pred_fallthru
        _
    $region24: #{discriminator_forward.4} parent=5 // pred_fallthru
      _
    %p136 = scmp.le.s32.totalorder 1, %s9
    %p137 = scmp.lt.s32.totalorder %s9, 3
    %p138 = pnand %p136, %p137
    %p139 = pneg %p138
    // Predicated region
    $region29: #{discriminator_forward.4} parent=5 // pred_check
      _
    $region30: #{discriminator_forward.4} parent=5 // pred_check_branch
      %141 = sbr.rel (%p138) target = $region32
    $region31: #{discriminator_forward.4} parent=5 // pred_region
      %s142 = ssub.s32 %s9, 1
      %p143 = scmp.lt.s32.totalorder %s14, 1
      %s144 = scalar_select %p143, %s14, 1
      %s145 = smul.addr %s144, 51
      %s146 = smul.addr %s145, 4
      %s147 = scalar_lea.vmem %s0, %s146
      %p148 = pneg %p35
      %p149 = pneg %p32
      %p150 = pneg %p56
      %p151 = pneg %p53
      %p152 = pneg %p77
      %p153 = pneg %p74
      %p154 = pneg %p103
      %p155 = pneg %p100
      %p156 = scmp.lt.s32.totalorder %s14, 1
      %s157 = scalar_select %p156, %s14, 1
      %s158 = smul.addr %s157, 32
      %s159 = smul.addr %s158, 4
      %s160 = scalar_lea.vmem %s3, %s159
      %p161 = scmp.lt.s32.totalorder %s14, 1
      %s162 = scalar_select %p161, %s14, 1
      %s163 = smul.addr %s162, 51
      %s164 = smul.addr %s163, 4
      %s165 = scalar_lea.vmem %s0, %s164
      %p166 = scmp.lt.s32.totalorder %s14, 1
      %s167 = scalar_select %p166, %s14, 1
      %s168 = smul.addr %s167, 32
      %s169 = smul.addr %s168, 4
      %s170 = scalar_lea.vmem %s3, %s169
      %v172 = vld [vmem:[%s2] sm:$0x1]
      loop: start=0, step=1, limit=16
      $region33: #{discriminator_forward.4} parent=31 // loop_pre_header
        _
      $region34: #{discriminator_forward.4} parent=31 // loop_header
        %s174 = sphi 0, %s178
        %p175 = scmp.ge.s32.totalorder %s174, 16
      $region35: #{discriminator_forward.4} parent=31 // loop_header_branch
        %177 = sbr.rel (%p175) target = $region39
      $region36: #{discriminator_forward.4} parent=31 // loop_body
        %s179 = smul.u32 %s174, 3
        %s180 = smul.addr %s179, 4
        %s181 = scalar_lea.vmem %s165, %s180
        %v182 = vld [vmem:[%s181] sm:$0xf]
        %v183 = vld [vmem:[%s181 + $0x4] sm:$0xf]
        %v184 = vld [vmem:[%s1] sm:$0xf]
        %v185 = vld [vmem:[%s1 + $0x4] sm:$0xf]
        %v186 = vld [vmem:[%s1 + $0x8] sm:$0xf]
        %v187 = vld [vmem:[%s181 + $0x8] sm:$0x1]
        %s188 = scalar_lea.vmem %s1, 12
        %v189 = vld [vmem:[%s188] sm:$0xf]
        %v190 = vld [vmem:[%s188 + $0x4] sm:$0xf]
        %v191 = vld [vmem:[%s188 + $0x8] sm:$0xf]
        %v195 = vunpack.c.l.b16 %v182
        %v196 = vunpack.c.l.b16 %v183
        %v197 = vunpack.c.l.b16 %v187
        %v198 = vpack.c.b16 %v196, %v195
        %v199 = vpack.c.b16 %v197, %v197
        %vm200 = vsmask.f32 7424
        %v202 = vshrl.u32 %v198, 16
        %v204 = vshll.u32 %v198, 16
        %v206 = vrot.slane %v204, 1
        %v207 = vor.u32 %v202, %v206
        %v209 = vshll.u32 %v199, 16
        %v211 = vrot.slane %v209, 1
        %v212 = vsel %vm200, %v207, %v211
        %v216 = vunpack.c.l.b16 %v189
        %v217 = vunpack.c.l.b16 %v190
        %v218 = vunpack.c.l.b16 %v191
        %v219 = vpack.c.b16 %v217, %v216
        %v220 = vpack.c.b16 %v218, %v218
        %vm222 = vcmask 195584
        %v224 = vsel %vm222, %v212, 0
        %vm226 = vcmask 1043456
        %v228 = vsel %vm226, %v220, 0
        %230 = vmatprep.subr.bf16.mxu0 0
        %231 = vmatpush1.bf16.msra.mxu0 %v219
        %232 = vmatprep.subr.bf16.mxu0 0
        %233 = vmatpush1.bf16.msra.mxu0 %v228
        %234 = vmatprep.subr.bf16.mxu0 0
        %235 = vmatpush1.bf16.msra.mxu0 0
        %236 = vmatprep.subr.bf16.mxu0 0
        %237 = vmatpush1.bf16.msra.mxu0 0
        %238 = vmatprep.subr.bf16.mxu0 0
        %239 = vmatpush1.bf16.msra.mxu0 0
        %240 = vmatprep.subr.bf16.mxu0 0
        %241 = vmatpush1.bf16.msra.mxu0 0
        %242 = vmatprep.subr.bf16.mxu0 0
        %243 = vmatpush1.bf16.msra.mxu0 0
        %244 = vmatprep.subr.bf16.mxu0 0
        %245 = vmatpush1.bf16.msra.mxu0 0
        %246 = vmatprep.subr.bf16.mxu0 0
        %247 = vmatpush1.bf16.msra.mxu0 0
        %248 = vmatprep.subr.bf16.mxu0 0
        %249 = vmatpush1.bf16.msra.mxu0 0
        %250 = vmatprep.subr.bf16.mxu0 0
        %251 = vmatpush1.bf16.msra.mxu0 0
        %252 = vmatprep.subr.bf16.mxu0 0
        %253 = vmatpush1.bf16.msra.mxu0 0
        %254 = vmatprep.subr.bf16.mxu0 0
        %255 = vmatpush1.bf16.msra.mxu0 0
        %256 = vmatprep.subr.bf16.mxu0 0
        %257 = vmatpush1.bf16.msra.mxu0 0
        %258 = vmatprep.subr.bf16.mxu0 0
        %259 = vmatpush1.bf16.msra.mxu0 0
        %260 = vmatprep.subr.bf16.mxu0 0
        %261 = vmatpush1.bf16.msra.mxu0 0
        %262 = vmatprep.mubr.bf16.mxu0 0
        %263 = vmatmul.mubr.bf16.gmra.mrb[0].mxu0 %v224
        %v264 = vpop.f32.mrb[0].mxu0
        %v265 = vadd.f32 0.0, %v264
        %v266 = vpop.f32.mrb[0].mxu0
        %v267 = vpop.f32.mrb[0].mxu0
        %v268 = vadd.f32 0.0, %v267
        %v269 = vpop.f32.mrb[0].mxu0
        %270 = vdwg.mxu0
        %v274 = vunpack.c.l.b16 %v184
        %v275 = vunpack.c.l.b16 %v185
        %v276 = vunpack.c.l.b16 %v186
        %v277 = vpack.c.b16 %v275, %v274
        %v278 = vpack.c.b16 %v276, %v276
        %v280 = vsel %vm222, %v198, 0
        %v283 = vsel %vm226, %v278, 0
        %285 = vmatprep.subr.bf16.mxu0 0
        %286 = vmatpush1.bf16.msra.mxu0 %v277
        %287 = vmatprep.subr.bf16.mxu0 0
        %288 = vmatpush1.bf16.msra.mxu0 %v283
        %289 = vmatprep.subr.bf16.mxu0 0
        %290 = vmatpush1.bf16.msra.mxu0 0
        %291 = vmatprep.subr.bf16.mxu0 0
        %292 = vmatpush1.bf16.msra.mxu0 0
        %293 = vmatprep.subr.bf16.mxu0 0
        %294 = vmatpush1.bf16.msra.mxu0 0
        %295 = vmatprep.subr.bf16.mxu0 0
        %296 = vmatpush1.bf16.msra.mxu0 0
        %297 = vmatprep.subr.bf16.mxu0 0
        %298 = vmatpush1.bf16.msra.mxu0 0
        %299 = vmatprep.subr.bf16.mxu0 0
        %300 = vmatpush1.bf16.msra.mxu0 0
        %301 = vmatprep.subr.bf16.mxu0 0
        %302 = vmatpush1.bf16.msra.mxu0 0
        %303 = vmatprep.subr.bf16.mxu0 0
        %304 = vmatpush1.bf16.msra.mxu0 0
        %305 = vmatprep.subr.bf16.mxu0 0
        %306 = vmatpush1.bf16.msra.mxu0 0
        %307 = vmatprep.subr.bf16.mxu0 0
        %308 = vmatpush1.bf16.msra.mxu0 0
        %309 = vmatprep.subr.bf16.mxu0 0
        %310 = vmatpush1.bf16.msra.mxu0 0
        %311 = vmatprep.subr.bf16.mxu0 0
        %312 = vmatpush1.bf16.msra.mxu0 0
        %313 = vmatprep.subr.bf16.mxu0 0
        %314 = vmatpush1.bf16.msra.mxu0 0
        %315 = vmatprep.subr.bf16.mxu0 0
        %316 = vmatpush1.bf16.msra.mxu0 0
        %317 = vmatprep.mubr.bf16.mxu0 0
        %318 = vmatmul.mubr.bf16.gmra.mrb[0].mxu0 %v280
        %v319 = vpop.f32.mrb[0].mxu0
        %v320 = vadd.f32 %v265, %v319
        %v321 = vpop.f32.mrb[0].mxu0
        %v322 = vpop.f32.mrb[0].mxu0
        %v323 = vadd.f32 %v268, %v322
        %v324 = vpop.f32.mrb[0].mxu0
        %325 = vdwg.mxu0
        %s326 = sadd.s32 %s174, 1
        %s327 = smul.u32 %s326, 3
        %s328 = smul.addr %s327, 4
        %s329 = scalar_lea.vmem %s165, %s328
        %v330 = vld [vmem:[%s329] sm:$0xf]
        %v331 = vld [vmem:[%s329 + $0x4] sm:$0xf]
        %s332 = scalar_lea.vmem %s1, 24
        %v333 = vld [vmem:[%s332] sm:$0xf]
        %v334 = vld [vmem:[%s332 + $0x4] sm:$0xf]
        %v335 = vld [vmem:[%s332 + $0x8] sm:$0xf]
        %v338 = vunpack.c.l.b16 %v330
        %v339 = vunpack.c.l.b16 %v331
        %v340 = vpack.c.b16 %v339, %v338
        %v344 = vunpack.c.l.b16 %v333
        %v345 = vunpack.c.l.b16 %v334
        %v346 = vunpack.c.l.b16 %v335
        %v347 = vpack.c.b16 %v345, %v344
        %v348 = vpack.c.b16 %v346, %v346
        %v351 = vsel %vm222, %v340, 0
        %v354 = vsel %vm226, %v348, 0
        %356 = vmatprep.subr.bf16.mxu0 0
        %357 = vmatpush1.bf16.msra.mxu0 %v347
        %358 = vmatprep.subr.bf16.mxu0 0
        %359 = vmatpush1.bf16.msra.mxu0 %v354
        %360 = vmatprep.subr.bf16.mxu0 0
        %361 = vmatpush1.bf16.msra.mxu0 0
        %362 = vmatprep.subr.bf16.mxu0 0
        %363 = vmatpush1.bf16.msra.mxu0 0
        %364 = vmatprep.subr.bf16.mxu0 0
        %365 = vmatpush1.bf16.msra.mxu0 0
        %366 = vmatprep.subr.bf16.mxu0 0
        %367 = vmatpush1.bf16.msra.mxu0 0
        %368 = vmatprep.subr.bf16.mxu0 0
        %369 = vmatpush1.bf16.msra.mxu0 0
        %370 = vmatprep.subr.bf16.mxu0 0
        %371 = vmatpush1.bf16.msra.mxu0 0
        %372 = vmatprep.subr.bf16.mxu0 0
        %373 = vmatpush1.bf16.msra.mxu0 0
        %374 = vmatprep.subr.bf16.mxu0 0
        %375 = vmatpush1.bf16.msra.mxu0 0
        %376 = vmatprep.subr.bf16.mxu0 0
        %377 = vmatpush1.bf16.msra.mxu0 0
        %378 = vmatprep.subr.bf16.mxu0 0
        %379 = vmatpush1.bf16.msra.mxu0 0
        %380 = vmatprep.subr.bf16.mxu0 0
        %381 = vmatpush1.bf16.msra.mxu0 0
        %382 = vmatprep.subr.bf16.mxu0 0
        %383 = vmatpush1.bf16.msra.mxu0 0
        %384 = vmatprep.subr.bf16.mxu0 0
        %385 = vmatpush1.bf16.msra.mxu0 0
        %386 = vmatprep.subr.bf16.mxu0 0
        %387 = vmatpush1.bf16.msra.mxu0 0
        %388 = vmatprep.mubr.bf16.mxu0 0
        %389 = vmatmul.mubr.bf16.gmra.mrb[0].mxu0 %v351
        %v390 = vpop.f32.mrb[0].mxu0
        %v391 = vadd.f32 0.0, %v390
        %v392 = vpop.f32.mrb[0].mxu0
        %v393 = vpop.f32.mrb[0].mxu0
        %v394 = vadd.f32 0.0, %v393
        %v395 = vpop.f32.mrb[0].mxu0
        %396 = vdwg.mxu0
        %v397 = vadd.f32 %v320, %v391
        %v398 = vadd.f32 %v323, %v394
        %v399 = vld [vmem:[%s329] sm:$0xf]
        %v400 = vld [vmem:[%s329 + $0x4] sm:$0xf]
        %v401 = vld [vmem:[%s329 + $0x8] sm:$0x1]
        %s402 = scalar_lea.vmem %s1, 36
        %v403 = vld [vmem:[%s402] sm:$0xf]
        %v404 = vld [vmem:[%s402 + $0x4] sm:$0xf]
        %v405 = vld [vmem:[%s402 + $0x8] sm:$0xf]
        %v409 = vunpack.c.l.b16 %v399
        %v410 = vunpack.c.l.b16 %v400
        %v411 = vunpack.c.l.b16 %v401
        %v412 = vpack.c.b16 %v410, %v409
        %v413 = vpack.c.b16 %v411, %v411
        %v415 = vshrl.u32 %v412, 16
        %v417 = vshll.u32 %v412, 16
        %v419 = vrot.slane %v417, 1
        %v420 = vor.u32 %v415, %v419
        %v422 = vshll.u32 %v413, 16
        %v424 = vrot.slane %v422, 1
        %v425 = vsel %vm200, %v420, %v424
        %v429 = vunpack.c.l.b16 %v403
        %v430 = vunpack.c.l.b16 %v404
        %v431 = vunpack.c.l.b16 %v405
        %v432 = vpack.c.b16 %v430, %v429
        %v433 = vpack.c.b16 %v431, %v431
        %v436 = vsel %vm222, %v425, 0
        %v439 = vsel %vm226, %v433, 0
        %441 = vmatprep.subr.bf16.mxu0 0
        %442 = vmatpush1.bf16.msra.mxu0 %v432
        %443 = vmatprep.subr.bf16.mxu0 0
        %444 = vmatpush1.bf16.msra.mxu0 %v439
        %445 = vmatprep.subr.bf16.mxu0 0
        %446 = vmatpush1.bf16.msra.mxu0 0
        %447 = vmatprep.subr.bf16.mxu0 0
        %448 = vmatpush1.bf16.msra.mxu0 0
        %449 = vmatprep.subr.bf16.mxu0 0
        %450 = vmatpush1.bf16.msra.mxu0 0
        %451 = vmatprep.subr.bf16.mxu0 0
        %452 = vmatpush1.bf16.msra.mxu0 0
        %453 = vmatprep.subr.bf16.mxu0 0
        %454 = vmatpush1.bf16.msra.mxu0 0
        %455 = vmatprep.subr.bf16.mxu0 0
        %456 = vmatpush1.bf16.msra.mxu0 0
        %457 = vmatprep.subr.bf16.mxu0 0
        %458 = vmatpush1.bf16.msra.mxu0 0
        %459 = vmatprep.subr.bf16.mxu0 0
        %460 = vmatpush1.bf16.msra.mxu0 0
        %461 = vmatprep.subr.bf16.mxu0 0
        %462 = vmatpush1.bf16.msra.mxu0 0
        %463 = vmatprep.subr.bf16.mxu0 0
        %464 = vmatpush1.bf16.msra.mxu0 0
        %465 = vmatprep.subr.bf16.mxu0 0
        %466 = vmatpush1.bf16.msra.mxu0 0
        %467 = vmatprep.subr.bf16.mxu0 0
        %468 = vmatpush1.bf16.msra.mxu0 0
        %469 = vmatprep.subr.bf16.mxu0 0
        %470 = vmatpush1.bf16.msra.mxu0 0
        %471 = vmatprep.subr.bf16.mxu0 0
        %472 = vmatpush1.bf16.msra.mxu0 0
        %473 = vmatprep.mubr.bf16.mxu0 0
        %474 = vmatmul.mubr.bf16.gmra.mrb[0].mxu0 %v436
        %v475 = vpop.f32.mrb[0].mxu0
        %v476 = vadd.f32 0.0, %v475
        %v477 = vpop.f32.mrb[0].mxu0
        %v478 = vpop.f32.mrb[0].mxu0
        %v479 = vadd.f32 0.0, %v478
        %v480 = vpop.f32.mrb[0].mxu0
        %481 = vdwg.mxu0
        %v482 = vadd.f32 %v397, %v476
        %v483 = vadd.f32 %v398, %v479
        %v485 = vlaneseq
        %v486 = vshrl.u32 %v485, 7
        %v487 = vsub.s32 0, %v486
        %v488 = vrot.slane %v172, %v487
        %v490 = vadd.f32 %v482, %v488
        %v491 = vadd.f32 %v483, %v488
        %vm492 = vcmp.gt.f32.partialorder %v490, 0.0
        %vm493 = vcmp.gt.f32.partialorder %v491, 0.0
        %v494 = vmul.f32 %v490, 0.2
        %v495 = vmul.f32 %v491, 0.2
        %v496 = vsel %vm492, %v490, %v494
        %v497 = vsel %vm493, %v491, %v495
        %v498 = vpack.c.bf16 %v497, %v496
        %v500 = vunpack.c.l.b16 %v498
        %v501 = vunpack.c.h.b16 %v498
        %v502 = vpack.c.b16 %v500, %v500
        %v503 = vpack.c.b16 %v501, %v501
        %s506 = smul.u32 %s174, 2
        %s507 = smul.addr %s506, 4
        %s508 = scalar_lea.vmem %s170, %s507
        %vm509 = vcmask 257024
        %510 = vst.msk [vmem:[%s508] sm:$0xf] %vm509, %v502
        %511 = vst.msk [vmem:[%s508 + $0x4] sm:$0xf] %vm509, %v503
      $region37: #{discriminator_forward.4} parent=31 // loop_footer
        %s178 = sadd.s32 1, %s174
      $region38: #{discriminator_forward.4} parent=31 // loop_footer_branch
        %173 = sbr.rel target = $region34
      $region39: #{discriminator_forward.4} parent=31 // loop_exit
        _
      %p512 = scmp.lt.s32.totalorder %s14, 1
      %s513 = scalar_select %p512, %s14, 1
      %s514 = smul.addr %s513, 32
      %s515 = smul.addr %s514, 4
      %s516 = scalar_lea.vmem %s3, %s515
      // Predicated region
      $region40: #{discriminator_forward.4} parent=31 // pred_check
        %p517 = pneg %p100
      $region41: #{discriminator_forward.4} parent=31 // pred_check_branch
        %519 = sbr.rel (%p517) target = $region43
      $region42: #{discriminator_forward.4} parent=31 // pred_region
        _
      $region43: #{discriminator_forward.4} parent=31 // pred_fallthru
        _
    $region32: #{discriminator_forward.4} parent=5 // pred_fallthru
      _
    %p520 = scmp.le.s32.totalorder 2, %s9
    // Predicated region
    $region44: #{discriminator_forward.4} parent=5 // pred_check
      %p521 = pneg %p520
    $region45: #{discriminator_forward.4} parent=5 // pred_check_branch
      %523 = sbr.rel (%p521) target = $region47
    $region46: #{discriminator_forward.4} parent=5 // pred_region
      %s524 = ssub.s32 %s9, 2
      // Predicated region
      $region48: #{discriminator_forward.4} parent=46 // pred_check
        %p525 = pneg %p106
      $region49: #{discriminator_forward.4} parent=46 // pred_check_branch
        %527 = sbr.rel (%p525) target = $region51
      $region50: #{discriminator_forward.4} parent=46 // pred_region
        %p528 = scmp.lt.s32.totalorder %s15, 1
        %s529 = scalar_select %p528, %s15, 1
        %s530 = smul.addr %s529, 32
        %s531 = smul.addr %s530, 4
        %s532 = scalar_lea.vmem %s3, %s531
      $region51: #{discriminator_forward.4} parent=46 // pred_fallthru
        _
    $region47: #{discriminator_forward.4} parent=5 // pred_fallthru
      _
  $region6: #{discriminator_forward.4} parent=0 // loop_footer
    %s13 = sadd.s32 1, %s9
  $region7: #{discriminator_forward.4} parent=0 // loop_footer_branch
    %8 = sbr.rel target = $region3
  $region8: #{discriminator_forward.4} parent=0 // loop_exit
    _

// kernel: discriminator_forward.5
$region0: #{discriminator_forward.5}
  #allocation0 [shape = 'u32[]', space=smem, size = 0x4, offset = 0x4, fixed_abs, tag = 'smem constant byte address 0x4 - core index']
  #allocation1 [shape = 'u32[144,128]{1,0:T(1,128)}', space=vmem, size = 0x12000, scoped, tag = 'internal scratch']
  #allocation2 [shape = 'f32[8,8,64]{2,1,0:T(8,128)}', space=vmem, size = 0x8000, scoped, tag = 'scratch operand']
  #allocation3 [shape = 'f32[1,64]{1,0:T(1,128)}', space=vmem, size = 0x200, scoped, tag = 'scratch operand']
  #allocation4 [shape = 'f32[1,64]{1,0:T(1,128)}', space=vmem, size = 0x200, scoped, tag = 'scratch operand']
  %s0 = inlined_call_operand.vmem [shape: bf16[2,9,9,128], index: 0, kind: input, shape index: {}]
  %s1 = inlined_call_operand.vmem [shape: bf16[4,128,64], index: 1, kind: input, shape index: {}]
  %s2 = inlined_call_operand.vmem [shape: f32[1,64], index: 2, kind: input, shape index: {}]
  %s3 = inlined_call_operand.vmem [shape: bf16[2,8,8,64], index: 3, kind: output, shape index: {}]
  %s4 = sld [smem:[#allocation0]]
  $region59: #{discriminator_forward.5} parent=0
    _
  %s6 = ssub.s32 1, %s4
  %s7 = scalar_select 0, %s6, %s4
  loop: start=0, step=1, limit=4
  $region2: #{discriminator_forward.5} parent=0 // loop_pre_header
    _
  $region3: #{discriminator_forward.5} parent=0 // loop_header
    %s9 = sphi 0, %s13
    %p10 = scmp.ge.s32.totalorder %s9, 4
    %s19 = sphi 0, %s21
    %s22 = sphi 0, %s19
    %s23 = sphi 0, %s22
    %s39 = sphi 0, %s23
    %s43 = sphi 0, %s43
    %s45 = sphi 0, %s43
    %s46 = sphi 0, %s45
    %s60 = sphi 0, %s46
    %s64 = sphi 0, %s64
    %s66 = sphi 0, %s64
    %s67 = sphi 0, %s66
    %s81 = sphi 0, %s67
    %s87 = sphi 0, %s89
    %s90 = sphi 0, %s87
    %s91 = sphi 0, %s90
    %s107 = sphi 0, %s91
  $region4: #{discriminator_forward.5} parent=0 // loop_header_branch
    %12 = sbr.rel (%p10) target = $region8
  $region5: #{discriminator_forward.5} parent=0 // loop_body
    %s14 = ssub.s32 %s9, 1
    %s15 = ssub.s32 %s9, 2
    %s16 = sadd.s32 %s9, 1
    %s17 = ssub.s32 %s9, %s16
    %p18 = scmp.eq.s32.totalorder %s17, 0
    %s20 = sadd.s32 %s19, 1
    %s21 = scalar_select %p18, %s19, %s20
    %p24 = pneg %p18
    %p25 = scmp.eq.s32.totalorder %s9, 1
    %p26 = por %p24, %p25
    %p27 = scmp.ne.s32.totalorder %s19, %s22
    %p28 = scmp.eq.s32.totalorder %s9, 0
    %p29 = por %p27, %p28
    %p30 = scmp.ne.s32.totalorder %s19, %s22
    %p31 = scmp.eq.s32.totalorder %s14, 1
    %p32 = por %p30, %p31
    %p33 = scmp.ne.s32.totalorder %s22, %s23
    %p34 = scmp.eq.s32.totalorder %s14, 0
    %p35 = por %p33, %p34
    %p36 = scmp.ne.s32.totalorder %s22, %s23
    %p37 = scmp.eq.s32.totalorder %s15, 1
    %p38 = por %p36, %p37
    %p40 = scmp.ne.s32.totalorder %s23, %s39
    %p41 = scmp.eq.s32.totalorder %s15, 0
    %p42 = por %p40, %p41
    %s44 = sadd.s32 %s43, 1
    %p47 = scmp.eq.s32.totalorder %s9, 1
    %p48 = scmp.ne.s32.totalorder %s43, %s45
    %p49 = scmp.eq.s32.totalorder %s9, 0
    %p50 = por %p48, %p49
    %p51 = scmp.ne.s32.totalorder %s43, %s45
    %p52 = scmp.eq.s32.totalorder %s14, 1
    %p53 = por %p51, %p52
    %p54 = scmp.ne.s32.totalorder %s45, %s46
    %p55 = scmp.eq.s32.totalorder %s14, 0
    %p56 = por %p54, %p55
    %p57 = scmp.ne.s32.totalorder %s45, %s46
    %p58 = scmp.eq.s32.totalorder %s15, 1
    %p59 = por %p57, %p58
    %p61 = scmp.ne.s32.totalorder %s46, %s60
    %p62 = scmp.eq.s32.totalorder %s15, 0
    %p63 = por %p61, %p62
    %s65 = sadd.s32 %s64, 1
    %p68 = scmp.eq.s32.totalorder %s9, 1
    %p69 = scmp.ne.s32.totalorder %s64, %s66
    %p70 = scmp.eq.s32.totalorder %s9, 0
    %p71 = por %p69, %p70
    %p72 = scmp.ne.s32.totalorder %s64, %s66
    %p73 = scmp.eq.s32.totalorder %s14, 1
    %p74 = por %p72, %p73
    %p75 = scmp.ne.s32.totalorder %s66, %s67
    %p76 = scmp.eq.s32.totalorder %s14, 0
    %p77 = por %p75, %p76
    %p78 = scmp.ne.s32.totalorder %s66, %s67
    %p79 = scmp.eq.s32.totalorder %s15, 1
    %p80 = por %p78, %p79
    %p82 = scmp.ne.s32.totalorder %s67, %s81
    %p83 = scmp.eq.s32.totalorder %s15, 0
    %p84 = por %p82, %p83
    %s85 = ssub.s32 %s9, %s16
    %p86 = scmp.eq.s32.totalorder %s85, 0
    %s88 = sadd.s32 %s87, 1
    %s89 = scalar_select %p86, %s87, %s88
    %p92 = pneg %p86
    %p93 = scmp.eq.s32.totalorder %s9, 1
    %p94 = por %p92, %p93
    %p95 = scmp.ne.s32.totalorder %s87, %s90
    %p96 = scmp.eq.s32.totalorder %s9, 0
    %p97 = por %p95, %p96
    %p98 = scmp.ne.s32.totalorder %s87, %s90
    %p99 = scmp.eq.s32.totalorder %s14, 1
    %p100 = por %p98, %p99
    %p101 = scmp.ne.s32.totalorder %s90, %s91
    %p102 = scmp.eq.s32.totalorder %s14, 0
    %p103 = por %p101, %p102
    %p104 = scmp.ne.s32.totalorder %s90, %s91
    %p105 = scmp.eq.s32.totalorder %s15, 1
    %p106 = por %p104, %p105
    %p108 = scmp.ne.s32.totalorder %s91, %s107
    %p109 = scmp.eq.s32.totalorder %s15, 0
    %p110 = por %p108, %p109
    %p111 = scmp.le.s32.totalorder 1, %s9
    %p112 = scmp.lt.s32.totalorder %s9, 3
    %p113 = pnand %p111, %p112
    %p114 = pneg %p113
    // Predicated region
    $region9: #{discriminator_forward.5} parent=5 // pred_check
      _
    $region10: #{discriminator_forward.5} parent=5 // pred_check_branch
      %116 = sbr.rel (%p113) target = $region12
    $region11: #{discriminator_forward.5} parent=5 // pred_region
      %s117 = ssub.s32 %s9, 1
      // Predicated region
      $region13: #{discriminator_forward.5} parent=11 // pred_check
        %p118 = pneg %p56
      $region14: #{discriminator_forward.5} parent=11 // pred_check_branch
        %120 = sbr.rel (%p118) target = $region16
      $region15: #{discriminator_forward.5} parent=11 // pred_region
        _
      $region16: #{discriminator_forward.5} parent=11 // pred_fallthru
        _
      // Predicated region
      $region17: #{discriminator_forward.5} parent=11 // pred_check
        %p121 = pneg %p77
      $region18: #{discriminator_forward.5} parent=11 // pred_check_branch
        %123 = sbr.rel (%p121) target = $region20
      $region19: #{discriminator_forward.5} parent=11 // pred_region
        _
      $region20: #{discriminator_forward.5} parent=11 // pred_fallthru
        _
    $region12: #{discriminator_forward.5} parent=5 // pred_fallthru
      _
    %p124 = scmp.lt.s32.totalorder %s9, 2
    // Predicated region
    $region21: #{discriminator_forward.5} parent=5 // pred_check
      %p125 = pneg %p124
    $region22: #{discriminator_forward.5} parent=5 // pred_check_branch
      %127 = sbr.rel (%p125) target = $region24
    $region23: #{discriminator_forward.5} parent=5 // pred_region
      // Predicated region
      $region25: #{discriminator_forward.5} parent=23 // pred_check
        %p128 = pneg %p29
      $region26: #{discriminator_forward.5} parent=23 // pred_check_branch
        %130 = sbr.rel (%p128) target = $region28
      $region27: #{discriminator_forward.5} parent=23 // pred_region
        %p131 = scmp.lt.s32.totalorder %s9, 1
        %s132 = scalar_select %p131, %s9, 1
        %s133 = smul.addr %s132, 18
        %s134 = smul.addr %s133, 4
        %s135 = scalar_lea.vmem %s0, %s134
      $region28: #{discriminator_forward.5} parent=23 // pred_fallthru
        _
    $region24: #{discriminator_forward.5} parent=5 // pred_fallthru
      _
    %p136 = scmp.le.s32.totalorder 1, %s9
    %p137 = scmp.lt.s32.totalorder %s9, 3
    %p138 = pnand %p136, %p137
    %p139 = pneg %p138
    // Predicated region
    $region29: #{discriminator_forward.5} parent=5 // pred_check
      _
    $region30: #{discriminator_forward.5} parent=5 // pred_check_branch
      %141 = sbr.rel (%p138) target = $region32
    $region31: #{discriminator_forward.5} parent=5 // pred_region
      %s142 = ssub.s32 %s9, 1
      %p143 = scmp.lt.s32.totalorder %s14, 1
      %s144 = scalar_select %p143, %s14, 1
      %s145 = smul.addr %s144, 18
      %s146 = smul.addr %s145, 4
      %s147 = scalar_lea.vmem %s0, %s146
      %p148 = pneg %p35
      %p149 = pneg %p32
      %p150 = pneg %p56
      %p151 = pneg %p53
      %p152 = pneg %p77
      %p153 = pneg %p74
      %p154 = pneg %p103
      %p155 = pneg %p100
      %p156 = scmp.lt.s32.totalorder %s14, 1
      %s157 = scalar_select %p156, %s14, 1
      %s158 = smul.addr %s157, 8
      %s159 = smul.addr %s158, 4
      %s160 = scalar_lea.vmem %s3, %s159
      %p161 = scmp.lt.s32.totalorder %s14, 1
      %s162 = scalar_select %p161, %s14, 1
      %s163 = smul.addr %s162, 18
      %s164 = smul.addr %s163, 4
      %s165 = scalar_lea.vmem %s0, %s164
      %p166 = scmp.lt.s32.totalorder %s14, 1
      %s167 = scalar_select %p166, %s14, 1
      %s168 = smul.addr %s167, 8
      %s169 = smul.addr %s168, 4
      %s170 = scalar_lea.vmem %s3, %s169
      %v172 = vld [vmem:[%s2] sm:$0x1]
      %vm173 = vcmask 516096
      %174 = vst.msk [vmem:[#allocation3] sm:$0x1] %vm173, 0.0
      %175 = vst.msk [vmem:[#allocation4] sm:$0x1] %vm173, 0.0
      loop: start=0, step=1, limit=8
      $region33: #{discriminator_forward.5} parent=31 // loop_pre_header
        _
      $region34: #{discriminator_forward.5} parent=31 // loop_header
        %s177 = sphi 0, %s181
        %p178 = scmp.ge.s32.totalorder %s177, 8
      $region35: #{discriminator_forward.5} parent=31 // loop_header_branch
        %180 = sbr.rel (%p178) target = $region39
      $region36: #{discriminator_forward.5} parent=31 // loop_body
        %s182 = smul.u32 %s177, 2
        %s183 = smul.addr %s182, 4
        %s184 = scalar_lea.vmem %s165, %s183
        %v185 = vld [vmem:[%s184] sm:$0xf]
        %v186 = vld [vmem:[%s1] sm:$0xf]
        %v187 = vld [vmem:[%s1 + $0x4] sm:$0xf]
        %v188 = vld [vmem:[%s1 + $0x8] sm:$0xf]
        %v189 = vld [vmem:[%s1 + $0xc] sm:$0xf]
        %v190 = vld [vmem:[%s1 + $0x10] sm:$0xf]
        %v191 = vld [vmem:[%s1 + $0x14] sm:$0xf]
        %v192 = vld [vmem:[%s1 + $0x18] sm:$0xf]
        %v193 = vld [vmem:[%s1 + $0x1c] sm:$0xf]
        %v194 = vld [vmem:[%s1 + $0x20] sm:$0xf]
        %v195 = vld [vmem:[%s1 + $0x24] sm:$0xf]
        %v196 = vld [vmem:[%s1 + $0x28] sm:$0xf]
        %v197 = vld [vmem:[%s1 + $0x2c] sm:$0xf]
        %v198 = vld [vmem:[%s1 + $0x30] sm:$0xf]
        %v199 = vld [vmem:[%s1 + $0x34] sm:$0xf]
        %v200 = vld [vmem:[%s1 + $0x38] sm:$0xf]
        %v201 = vld [vmem:[%s1 + $0x3c] sm:$0xf]
        %v202 = vld [vmem:[%s184 + $0x4] sm:$0x1]
        %s203 = scalar_lea.vmem %s1, 64
        %v204 = vld [vmem:[%s203] sm:$0xf]
        %v205 = vld [vmem:[%s203 + $0x4] sm:$0xf]
        %v206 = vld [vmem:[%s203 + $0x8] sm:$0xf]
        %v207 = vld [vmem:[%s203 + $0xc] sm:$0xf]
        %v208 = vld [vmem:[%s203 + $0x10] sm:$0xf]
        %v209 = vld [vmem:[%s203 + $0x14] sm:$0xf]
        %v210 = vld [vmem:[%s203 + $0x18] sm:$0xf]
        %v211 = vld [vmem:[%s203 + $0x1c] sm:$0xf]
        %v212 = vld [vmem:[%s203 + $0x20] sm:$0xf]
        %v213 = vld [vmem:[%s203 + $0x24] sm:$0xf]
        %v214 = vld [vmem:[%s203 + $0x28] sm:$0xf]
        %v215 = vld [vmem:[%s203 + $0x2c] sm:$0xf]
        %v216 = vld [vmem:[%s203 + $0x30] sm:$0xf]
        %v217 = vld [vmem:[%s203 + $0x34] sm:$0xf]
        %v218 = vld [vmem:[%s203 + $0x38] sm:$0xf]
        %v219 = vld [vmem:[%s203 + $0x3c] sm:$0xf]
        %v222 = vunpack.c.l.b16 %v185
        %v223 = vunpack.c.l.b16 %v202
        %v224 = vpack.c.b16 %v223, %v222
        %v226 = vshrl.u32 %v224, 16
        %v228 = vshll.u32 %v224, 16
        %v230 = vrot.slane %v228, 1
        %v231 = vor.u32 %v226, %v230
        %v249 = vunpack.c.l.b16 %v204
        %v250 = vunpack.c.l.b16 %v205
        %v251 = vunpack.c.l.b16 %v206
        %v252 = vunpack.c.l.b16 %v207
        %v253 = vunpack.c.l.b16 %v208
        %v254 = vunpack.c.l.b16 %v209
        %v255 = vunpack.c.l.b16 %v210
        %v256 = vunpack.c.l.b16 %v211
        %v257 = vunpack.c.l.b16 %v212
        %v258 = vunpack.c.l.b16 %v213
        %v259 = vunpack.c.l.b16 %v214
        %v260 = vunpack.c.l.b16 %v215
        %v261 = vunpack.c.l.b16 %v216
        %v262 = vunpack.c.l.b16 %v217
        %v263 = vunpack.c.l.b16 %v218
        %v264 = vunpack.c.l.b16 %v219
        %v265 = vpack.c.b16 %v250, %v249
        %v266 = vpack.c.b16 %v252, %v251
        %v267 = vpack.c.b16 %v254, %v253
        %v268 = vpack.c.b16 %v256, %v255
        %v269 = vpack.c.b16 %v258, %v257
        %v270 = vpack.c.b16 %v260, %v259
        %v271 = vpack.c.b16 %v262, %v261
        %v272 = vpack.c.b16 %v264, %v263
        %281 = vmatprep.subr.bf16.mxu0 0
        %282 = vmatpush1.bf16.msra.mxu0 %v265
        %283 = vmatprep.subr.bf16.mxu0 0
        %284 = vmatpush1.bf16.msra.mxu0 %v266
        %285 = vmatprep.subr.bf16.mxu0 0
        %286 = vmatpush1.bf16.msra.mxu0 %v267
        %287 = vmatprep.subr.bf16.mxu0 0
        %288 = vmatpush1.bf16.msra.mxu0 %v268
        %289 = vmatprep.subr.bf16.mxu0 0
        %290 = vmatpush1.bf16.msra.mxu0 %v269
        %291 = vmatprep.subr.bf16.mxu0 0
        %292 = vmatpush1.bf16.msra.mxu0 %v270
        %293 = vmatprep.subr.bf16.mxu0 0
        %294 = vmatpush1.bf16.msra.mxu0 %v271
        %295 = vmatprep.subr.bf16.mxu0 0
        %296 = vmatpush1.bf16.msra.mxu0 %v272
        %297 = vmatprep.subr.bf16.mxu0 0
        %298 = vmatpush1.bf16.msra.mxu0 0
        %299 = vmatprep.subr.bf16.mxu0 0
        %300 = vmatpush1.bf16.msra.mxu0 0
        %301 = vmatprep.subr.bf16.mxu0 0
        %302 = vmatpush1.bf16.msra.mxu0 0
        %303 = vmatprep.subr.bf16.mxu0 0
        %304 = vmatpush1.bf16.msra.mxu0 0
        %305 = vmatprep.subr.bf16.mxu0 0
        %306 = vmatpush1.bf16.msra.mxu0 0
        %307 = vmatprep.subr.bf16.mxu0 0
        %308 = vmatpush1.bf16.msra.mxu0 0
        %309 = vmatprep.subr.bf16.mxu0 0
        %310 = vmatpush1.bf16.msra.mxu0 0
        %311 = vmatprep.subr.bf16.mxu0 0
        %312 = vmatpush1.bf16.msra.mxu0 0
        %313 = vmatprep.mubr.bf16.mxu0 0
        %314 = vmatmul.mubr.bf16.gmra.mrb[0].mxu0 %v231
        %v315 = vpop.f32.mrb[0].mxu0
        %v316 = vadd.f32 0.0, %v315
        %v317 = vpop.f32.mrb[0].mxu0
        %v318 = vpop.f32.mrb[0].mxu0
        %v319 = vpop.f32.mrb[0].mxu0
        %320 = vdwg.mxu0
        %v337 = vunpack.c.l.b16 %v186
        %v338 = vunpack.c.l.b16 %v187
        %v339 = vunpack.c.l.b16 %v188
        %v340 = vunpack.c.l.b16 %v189
        %v341 = vunpack.c.l.b16 %v190
        %v342 = vunpack.c.l.b16 %v191
        %v343 = vunpack.c.l.b16 %v192
        %v344 = vunpack.c.l.b16 %v193
        %v345 = vunpack.c.l.b16 %v194
        %v346 = vunpack.c.l.b16 %v195
        %v347 = vunpack.c.l.b16 %v196
        %v348 = vunpack.c.l.b16 %v197
        %v349 = vunpack.c.l.b16 %v198
        %v350 = vunpack.c.l.b16 %v199
        %v351 = vunpack.c.l.b16 %v200
        %v352 = vunpack.c.l.b16 %v201
        %v353 = vpack.c.b16 %v338, %v337
        %v354 = vpack.c.b16 %v340, %v339
        %v355 = vpack.c.b16 %v342, %v341
        %v356 = vpack.c.b16 %v344, %v343
        %v357 = vpack.c.b16 %v346, %v345
        %v358 = vpack.c.b16 %v348, %v347
        %v359 = vpack.c.b16 %v350, %v349
        %v360 = vpack.c.b16 %v352, %v351
        %369 = vmatprep.subr.bf16.mxu0 0
        %370 = vmatpush1.bf16.msra.mxu0 %v353
        %371 = vmatprep.subr.bf16.mxu0 0
        %372 = vmatpush1.bf16.msra.mxu0 %v354
        %373 = vmatprep.subr.bf16.mxu0 0
        %374 = vmatpush1.bf16.msra.mxu0 %v355
        %375 = vmatprep.subr.bf16.mxu0 0
        %376 = vmatpush1.bf16.msra.mxu0 %v356
        %377 = vmatprep.subr.bf16.mxu0 0
        %378 = vmatpush1.bf16.msra.mxu0 %v357
        %379 = vmatprep.subr.bf16.mxu0 0
        %380 = vmatpush1.bf16.msra.mxu0 %v358
        %381 = vmatprep.subr.bf16.mxu0 0
        %382 = vmatpush1.bf16.msra.mxu0 %v359
        %383 = vmatprep.subr.bf16.mxu0 0
        %384 = vmatpush1.bf16.msra.mxu0 %v360
        %385 = vmatprep.subr.bf16.mxu0 0
        %386 = vmatpush1.bf16.msra.mxu0 0
        %387 = vmatprep.subr.bf16.mxu0 0
        %388 = vmatpush1.bf16.msra.mxu0 0
        %389 = vmatprep.subr.bf16.mxu0 0
        %390 = vmatpush1.bf16.msra.mxu0 0
        %391 = vmatprep.subr.bf16.mxu0 0
        %392 = vmatpush1.bf16.msra.mxu0 0
        %393 = vmatprep.subr.bf16.mxu0 0
        %394 = vmatpush1.bf16.msra.mxu0 0
        %395 = vmatprep.subr.bf16.mxu0 0
        %396 = vmatpush1.bf16.msra.mxu0 0
        %397 = vmatprep.subr.bf16.mxu0 0
        %398 = vmatpush1.bf16.msra.mxu0 0
        %399 = vmatprep.subr.bf16.mxu0 0
        %400 = vmatpush1.bf16.msra.mxu0 0
        %401 = vmatprep.mubr.bf16.mxu0 0
        %402 = vmatmul.mubr.bf16.gmra.mrb[0].mxu0 %v185
        %v403 = vpop.f32.mrb[0].mxu0
        %v404 = vadd.f32 %v316, %v403
        %v405 = vpop.f32.mrb[0].mxu0
        %v406 = vpop.f32.mrb[0].mxu0
        %v407 = vpop.f32.mrb[0].mxu0
        %408 = vdwg.mxu0
        %s409 = sadd.s32 %s177, 1
        %s410 = smul.u32 %s409, 2
        %s411 = smul.addr %s410, 4
        %s412 = scalar_lea.vmem %s165, %s411
        %v413 = vld [vmem:[%s412] sm:$0xf]
        %s414 = scalar_lea.vmem %s1, 128
        %v415 = vld [vmem:[%s414] sm:$0xf]
        %v416 = vld [vmem:[%s414 + $0x4] sm:$0xf]
        %v417 = vld [vmem:[%s414 + $0x8] sm:$0xf]
        %v418 = vld [vmem:[%s414 + $0xc] sm:$0xf]
        %v419 = vld [vmem:[%s414 + $0x10] sm:$0xf]
        %v420 = vld [vmem:[%s414 + $0x14] sm:$0xf]
        %v421 = vld [vmem:[%s414 + $0x18] sm:$0xf]
        %v422 = vld [vmem:[%s414 + $0x1c] sm:$0xf]
        %v423 = vld [vmem:[%s414 + $0x20] sm:$0xf]
        %v424 = vld [vmem:[%s414 + $0x24] sm:$0xf]
        %v425 = vld [vmem:[%s414 + $0x28] sm:$0xf]
        %v426 = vld [vmem:[%s414 + $0x2c] sm:$0xf]
        %v427 = vld [vmem:[%s414 + $0x30] sm:$0xf]
        %v428 = vld [vmem:[%s414 + $0x34] sm:$0xf]
        %v429 = vld [vmem:[%s414 + $0x38] sm:$0xf]
        %v430 = vld [vmem:[%s414 + $0x3c] sm:$0xf]
        %v447 = vunpack.c.l.b16 %v415
        %v448 = vunpack.c.l.b16 %v416
        %v449 = vunpack.c.l.b16 %v417
        %v450 = vunpack.c.l.b16 %v418
        %v451 = vunpack.c.l.b16 %v419
        %v452 = vunpack.c.l.b16 %v420
        %v453 = vunpack.c.l.b16 %v421
        %v454 = vunpack.c.l.b16 %v422
        %v455 = vunpack.c.l.b16 %v423
        %v456 = vunpack.c.l.b16 %v424
        %v457 = vunpack.c.l.b16 %v425
        %v458 = vunpack.c.l.b16 %v426
        %v459 = vunpack.c.l.b16 %v427
        %v460 = vunpack.c.l.b16 %v428
        %v461 = vunpack.c.l.b16 %v429
        %v462 = vunpack.c.l.b16 %v430
        %v463 = vpack.c.b16 %v448, %v447
        %v464 = vpack.c.b16 %v450, %v449
        %v465 = vpack.c.b16 %v452, %v451
        %v466 = vpack.c.b16 %v454, %v453
        %v467 = vpack.c.b16 %v456, %v455
        %v468 = vpack.c.b16 %v458, %v457
        %v469 = vpack.c.b16 %v460, %v459
        %v470 = vpack.c.b16 %v462, %v461
        %479 = vmatprep.subr.bf16.mxu0 0
        %480 = vmatpush1.bf16.msra.mxu0 %v463
        %481 = vmatprep.subr.bf16.mxu0 0
        %482 = vmatpush1.bf16.msra.mxu0 %v464
        %483 = vmatprep.subr.bf16.mxu0 0
        %484 = vmatpush1.bf16.msra.mxu0 %v465
        %485 = vmatprep.subr.bf16.mxu0 0
        %486 = vmatpush1.bf16.msra.mxu0 %v466
        %487 = vmatprep.subr.bf16.mxu0 0
        %488 = vmatpush1.bf16.msra.mxu0 %v467
        %489 = vmatprep.subr.bf16.mxu0 0
        %490 = vmatpush1.bf16.msra.mxu0 %v468
        %491 = vmatprep.subr.bf16.mxu0 0
        %492 = vmatpush1.bf16.msra.mxu0 %v469
        %493 = vmatprep.subr.bf16.mxu0 0
        %494 = vmatpush1.bf16.msra.mxu0 %v470
        %495 = vmatprep.subr.bf16.mxu0 0
        %496 = vmatpush1.bf16.msra.mxu0 0
        %497 = vmatprep.subr.bf16.mxu0 0
        %498 = vmatpush1.bf16.msra.mxu0 0
        %499 = vmatprep.subr.bf16.mxu0 0
        %500 = vmatpush1.bf16.msra.mxu0 0
        %501 = vmatprep.subr.bf16.mxu0 0
        %502 = vmatpush1.bf16.msra.mxu0 0
        %503 = vmatprep.subr.bf16.mxu0 0
        %504 = vmatpush1.bf16.msra.mxu0 0
        %505 = vmatprep.subr.bf16.mxu0 0
        %506 = vmatpush1.bf16.msra.mxu0 0
        %507 = vmatprep.subr.bf16.mxu0 0
        %508 = vmatpush1.bf16.msra.mxu0 0
        %509 = vmatprep.subr.bf16.mxu0 0
        %510 = vmatpush1.bf16.msra.mxu0 0
        %511 = vmatprep.mubr.bf16.mxu0 0
        %512 = vmatmul.mubr.bf16.gmra.mrb[0].mxu0 %v413
        %v513 = vpop.f32.mrb[0].mxu0
        %v514 = vadd.f32 0.0, %v513
        %v515 = vpop.f32.mrb[0].mxu0
        %v516 = vpop.f32.mrb[0].mxu0
        %v517 = vpop.f32.mrb[0].mxu0
        %518 = vdwg.mxu0
        %v519 = vadd.f32 %v404, %v514
        %v520 = vld [vmem:[%s412] sm:$0xf]
        %v521 = vld [vmem:[%s412 + $0x4] sm:$0x1]
        %s522 = scalar_lea.vmem %s1, 192
        %v523 = vld [vmem:[%s522] sm:$0xf]
        %v524 = vld [vmem:[%s522 + $0x4] sm:$0xf]
        %v525 = vld [vmem:[%s522 + $0x8] sm:$0xf]
        %v526 = vld [vmem:[%s522 + $0xc] sm:$0xf]
        %v527 = vld [vmem:[%s522 + $0x10] sm:$0xf]
        %v528 = vld [vmem:[%s522 + $0x14] sm:$0xf]
        %v529 = vld [vmem:[%s522 + $0x18] sm:$0xf]
        %v530 = vld [vmem:[%s522 + $0x1c] sm:$0xf]
        %v531 = vld [vmem:[%s522 + $0x20] sm:$0xf]
        %v532 = vld [vmem:[%s522 + $0x24] sm:$0xf]
        %v533 = vld [vmem:[%s522 + $0x28] sm:$0xf]
        %v534 = vld [vmem:[%s522 + $0x2c] sm:$0xf]
        %v535 = vld [vmem:[%s522 + $0x30] sm:$0xf]
        %v536 = vld [vmem:[%s522 + $0x34] sm:$0xf]
        %v537 = vld [vmem:[%s522 + $0x38] sm:$0xf]
        %v538 = vld [vmem:[%s522 + $0x3c] sm:$0xf]
        %v541 = vunpack.c.l.b16 %v520
        %v542 = vunpack.c.l.b16 %v521
        %v543 = vpack.c.b16 %v542, %v541
        %v545 = vshrl.u32 %v543, 16
        %v547 = vshll.u32 %v543, 16
        %v549 = vrot.slane %v547, 1
        %v550 = vor.u32 %v545, %v549
        %v568 = vunpack.c.l.b16 %v523
        %v569 = vunpack.c.l.b16 %v524
        %v570 = vunpack.c.l.b16 %v525
        %v571 = vunpack.c.l.b16 %v526
        %v572 = vunpack.c.l.b16 %v527
        %v573 = vunpack.c.l.b16 %v528
        %v574 = vunpack.c.l.b16 %v529
        %v575 = vunpack.c.l.b16 %v530
        %v576 = vunpack.c.l.b16 %v531
        %v577 = vunpack.c.l.b16 %v532
        %v578 = vunpack.c.l.b16 %v533
        %v579 = vunpack.c.l.b16 %v534
        %v580 = vunpack.c.l.b16 %v535
        %v581 = vunpack.c.l.b16 %v536
        %v582 = vunpack.c.l.b16 %v537
        %v583 = vunpack.c.l.b16 %v538
        %v584 = vpack.c.b16 %v569, %v568
        %v585 = vpack.c.b16 %v571, %v570
        %v586 = vpack.c.b16 %v573, %v572
        %v587 = vpack.c.b16 %v575, %v574
        %v588 = vpack.c.b16 %v577, %v576
        %v589 = vpack.c.b16 %v579, %v578
        %v590 = vpack.c.b16 %v581, %v580
        %v591 = vpack.c.b16 %v583, %v582
        %600 = vmatprep.subr.bf16.mxu0 0
        %601 = vmatpush1.bf16.msra.mxu0 %v584
        %602 = vmatprep.subr.bf16.mxu0 0
        %603 = vmatpush1.bf16.msra.mxu0 %v585
        %604 = vmatprep.subr.bf16.mxu0 0
        %605 = vmatpush1.bf16.msra.mxu0 %v586
        %606 = vmatprep.subr.bf16.mxu0 0
        %607 = vmatpush1.bf16.msra.mxu0 %v587
        %608 = vmatprep.subr.bf16.mxu0 0
        %609 = vmatpush1.bf16.msra.mxu0 %v588
        %610 = vmatprep.subr.bf16.mxu0 0
        %611 = vmatpush1.bf16.msra.mxu0 %v589
        %612 = vmatprep.subr.bf16.mxu0 0
        %613 = vmatpush1.bf16.msra.mxu0 %v590
        %614 = vmatprep.subr.bf16.mxu0 0
        %615 = vmatpush1.bf16.msra.mxu0 %v591
        %616 = vmatprep.subr.bf16.mxu0 0
        %617 = vmatpush1.bf16.msra.mxu0 0
        %618 = vmatprep.subr.bf16.mxu0 0
        %619 = vmatpush1.bf16.msra.mxu0 0
        %620 = vmatprep.subr.bf16.mxu0 0
        %621 = vmatpush1.bf16.msra.mxu0 0
        %622 = vmatprep.subr.bf16.mxu0 0
        %623 = vmatpush1.bf16.msra.mxu0 0
        %624 = vmatprep.subr.bf16.mxu0 0
        %625 = vmatpush1.bf16.msra.mxu0 0
        %626 = vmatprep.subr.bf16.mxu0 0
        %627 = vmatpush1.bf16.msra.mxu0 0
        %628 = vmatprep.subr.bf16.mxu0 0
        %629 = vmatpush1.bf16.msra.mxu0 0
        %630 = vmatprep.subr.bf16.mxu0 0
        %631 = vmatpush1.bf16.msra.mxu0 0
        %632 = vmatprep.mubr.bf16.mxu0 0
        %633 = vmatmul.mubr.bf16.gmra.mrb[0].mxu0 %v550
        %v634 = vpop.f32.mrb[0].mxu0
        %v635 = vadd.f32 0.0, %v634
        %v636 = vpop.f32.mrb[0].mxu0
        %v637 = vpop.f32.mrb[0].mxu0
        %v638 = vpop.f32.mrb[0].mxu0
        %639 = vdwg.mxu0
        %v640 = vadd.f32 %v519, %v635
        %v642 = vlaneseq
        %v643 = vshrl.u32 %v642, 7
        %v644 = vsub.s32 0, %v643
        %v645 = vrot.slane %v172, %v644
        %v647 = vadd.f32 %v640, %v645
        %s648 = smul.u32 %s177, 8
        %s649 = scalar_lea.vmem [#allocation2], %s648
        %vm650 = vcmask 523264
        %651 = vst.msk [vmem:[%s649] sm:$0xff] %vm650, %v647
        %v652 = vld [vmem:[#allocation3] sm:$0x1]
        %v653 = vsel %vm650, %v647, 0.0
        %v654 = vrot.slane %v653, 4
        %v655 = vadd.f32 %v653, %v654
        %v656 = vrot.slane %v655, 2
        %v657 = vadd.f32 %v655, %v656
        %v658 = vrot.slane %v657, 1
        %v659 = vadd.f32 %v657, %v658
        %v660 = vadd.f32 %v652, %v659
        %661 = vst.msk [vmem:[#allocation3] sm:$0x1] %vm173, %v660
        %v662 = vld [vmem:[#allocation4] sm:$0x1]
        %v663 = vmul.f32 %v647, %v647
        %v664 = vsel %vm650, %v663, 0.0
        %v665 = vrot.slane %v664, 4
        %v666 = vadd.f32 %v664, %v665
        %v667 = vrot.slane %v666, 2
        %v668 = vadd.f32 %v666, %v667
        %v669 = vrot.slane %v668, 1
        %v670 = vadd.f32 %v668, %v669
        %v671 = vadd.f32 %v662, %v670
        %672 = vst.msk [vmem:[#allocation4] sm:$0x1] %vm173, %v671
      $region37: #{discriminator_forward.5} parent=31 // loop_footer
        %s181 = sadd.s32 1, %s177
      $region38: #{discriminator_forward.5} parent=31 // loop_footer_branch
        %176 = sbr.rel target = $region34
      $region39: #{discriminator_forward.5} parent=31 // loop_exit
        _
      %v673 = vld [vmem:[#allocation3] sm:$0x1]
      %v674 = vmul.f32 %v673, 0.015625
      %v675 = vld [vmem:[#allocation4] sm:$0x1]
      %v676 = vmul.f32 %v675, 0.015625
      %v677 = vmul.f32 %v674, %v674
      %v678 = vsub.f32 %v676, %v677
      %v679 = vadd.f32 %v678, 1e-05
      %v680 = vrsqrt.pop %v679
      %v681 = vsub.f32 0.0, %v674
      %v682 = vmul.f32 %v681, %v680
      loop: start=0, step=1, limit=8
      $region40: #{discriminator_forward.5} parent=31 // loop_pre_header
        _
      $region41: #{discriminator_forward.5} parent=31 // loop_header
        %s684 = sphi 0, %s688
        %p685 = scmp.ge.s32.totalorder %s684, 8
      $region42: #{discriminator_forward.5} parent=31 // loop_header_branch
        %687 = sbr.rel (%p685) target = $region46
      $region43: #{discriminator_forward.5} parent=31 // loop_body
        %s689 = smul.u32 %s684, 8
        %s690 = scalar_lea.vmem [#allocation2], %s689
        %v691 = vld [vmem:[%s690] sm:$0xff]
        %v693 = vlaneseq
        %v694 = vshrl.u32 %v693, 7
        %v695 = vsub.s32 0, %v694
        %v696 = vrot.slane %v680, %v695
        %v698 = vmul.f32 %v691, %v696
        %v700 = vlaneseq
        %v701 = vshrl.u32 %v700, 7
        %v702 = vsub.s32 0, %v701
        %v703 = vrot.slane %v682, %v702
        %v705 = vadd.f32 %v698, %v703
        %vm706 = vcmp.gt.f32.partialorder %v705, 0.0
        %v707 = vmul.f32 %v705, 0.2
        %v708 = vsel %vm706, %v705, %v707
        %v709 = vpack.c.bf16 %v708, %v708
        %s710 = smul.addr %s684, 4
        %s711 = scalar_lea.vmem %s170, %s710
        %vm712 = vcmask 519168
        %713 = vst.msk [vmem:[%s711] sm:$0xf] %vm712, %v709
      $region44: #{discriminator_forward.5} parent=31 // loop_footer
        %s688 = sadd.s32 1, %s684
      $region45: #{discriminator_forward.5} parent=31 // loop_footer_branch
        %683 = sbr.rel target = $region41
      $region46: #{discriminator_forward.5} parent=31 // loop_exit
        _
      %p714 = scmp.lt.s32.totalorder %s14, 1
      %s715 = scalar_select %p714, %s14, 1
      %s716 = smul.addr %s715, 8
      %s717 = smul.addr %s716, 4
      %s718 = scalar_lea.vmem %s3, %s717
      // Predicated region
      $region47: #{discriminator_forward.5} parent=31 // pred_check
        %p719 = pneg %p100
      $region48: #{discriminator_forward.5} parent=31 // pred_check_branch
        %721 = sbr.rel (%p719) target = $region50
      $region49: #{discriminator_forward.5} parent=31 // pred_region
        _
      $region50: #{discriminator_forward.5} parent=31 // pred_fallthru
        _
    $region32: #{discriminator_forward.5} parent=5 // pred_fallthru
      _
    %p722 = scmp.le.s32.totalorder 2, %s9
    // Predicated region
    $region51: #{discriminator_forward.5} parent=5 // pred_check
      %p723 = pneg %p722
    $region52: #{discriminator_forward.5} parent=5 // pred_check_branch
      %725 = sbr.rel (%p723) target = $region54
    $region53: #{discriminator_forward.5} parent=5 // pred_region
      %s726 = ssub.s32 %s9, 2
      // Predicated region
      $region55: #{discriminator_forward.5} parent=53 // pred_check
        %p727 = pneg %p106
      $region56: #{discriminator_forward.5} parent=53 // pred_check_branch
        %729 = sbr.rel (%p727) target = $region58
      $region57: #{discriminator_forward.5} parent=53 // pred_region
        %p730 = scmp.lt.s32.totalorder %s15, 1
        %s731 = scalar_select %p730, %s15, 1
        %s732 = smul.addr %s731, 8
        %s733 = smul.addr %s732, 4
        %s734 = scalar_lea.vmem %s3, %s733
      $region58: #{discriminator_forward.5} parent=53 // pred_fallthru
        _
    $region54: #{discriminator_forward.5} parent=5 // pred_fallthru
      _
  $region6: #{discriminator_forward.5} parent=0 // loop_footer
    %s13 = sadd.s32 1, %s9
  $region7: #{discriminator_forward.5} parent=0 // loop_footer_branch
    %8 = sbr.rel target = $region3
  $region8: #{discriminator_forward.5} parent=0 // loop_exit
    _

// kernel: squeeze.1
$region0: #{squeeze.1}
  %s0 = inlined_call_operand.vmem [shape: f32[2,2,2], index: 0, kind: input, shape index: {}]
  %s1 = inlined_call_operand.hbm [shape: f32[8], index: 1, kind: output, shape index: {}]
  $region1: #{squeeze.1} parent=0
    #allocation0 [shape = 'u8[512]{0}', space=vmem, size = 0x400, scoped, tag = 'operand span for operand 1']
    #allocation1 [shape = 's32[1]{0}', space=sflag, size = 0x4, scoped, tag = 'scoped memory for squeeze.1']
    #allocation2 [shape = 'u8[4096]{0}', space=vmem, size = 0x1000, scoped, tag = 'scoped mem for output reshape']
    #allocation3 [shape = 'u8[8192]{0}', space=vmem, size = 0x2000, scoped, tag = 'scoped mem for input reshape']
    %2 = vsyncpa [#allocation1], 0
    %s4 = sshllo.u32 0, 2
    %s5 = scalar_lea.vmem %s0, 2
    %v6 = vld [vmem:[%s5] sm:%s4]
    %s7 = scalar_lea.vmem [#allocation3], 8
    %8 = vst [vmem:[%s7] sm:%s4] %v6
    %v9 = vld [vmem:[%s0] sm:%s4]
    %10 = vst [vmem:[#allocation3] sm:%s4] %v9
    %v11 = vld [vmem:[#allocation3] sm:$0x1]
    %vm12 = vcmask 15360
    %13 = vst.msk [vmem:[#allocation2] sm:$0x1] %vm12, %v11
    %s14 = scalar_lea.vmem [#allocation3], 9
    %v15 = vld [vmem:[%s14] sm:$0x1]
    %16 = vrot.lane.b32.xlu0 %v15, 6
    %v17 = vpop.permute.xlu0 %16
    %vm18 = vcmask 64560
    %19 = vst.msk [vmem:[#allocation2] sm:$0x1] %vm18, %v17
    %s20 = scalar_lea.vmem [#allocation3], 8
    %v21 = vld [vmem:[%s20] sm:$0x1]
    %22 = vrot.lane.b32.xlu0 %v21, 4
    %v23 = vpop.permute.xlu0 %22
    %vm24 = vcmask 48160
    %25 = vst.msk [vmem:[#allocation2] sm:$0x1] %vm24, %v23
    %s26 = scalar_lea.vmem [#allocation3], 1
    %v27 = vld [vmem:[%s26] sm:$0x1]
    %28 = vrot.lane.b32.xlu0 %v27, 2
    %v29 = vpop.permute.xlu0 %28
    %vm30 = vcmask 31760
    %31 = vst.msk [vmem:[#allocation2] sm:$0x1] %vm30, %v29
    %s33 = sshllo.u32 0, 1
    %v35 = vld [vmem:[#allocation2] sm:%s33]
    %s36 = sshllo.u32 0, 1
    %37 = vst [vmem:[#allocation0] sm:%s36] %v35
    %s39 = ssub.s32 16, 16
    %40 = vsyncadd [#allocation1], %s39
    %s42 = sshll.u32 [#allocation0], 4
    %s43 = int_to_ptr.vmem [resolvable:$true] %s42
    %45 = dma.vmem_to_hbm [thread:$0]  %s43, 16, %s1, [#allocation1]
    %46 = dma.done [#allocation1], 16
    %47 = vsyncpa [#allocation1], 1

// kernel: discriminator_forward.6
$region0: #{discriminator_forward.6}
  #allocation0 [shape = 'u32[]', space=smem, size = 0x4, offset = 0x4, fixed_abs, tag = 'smem constant byte address 0x4 - core index']
  #allocation1 [shape = 'u32[144,128]{1,0:T(1,128)}', space=vmem, size = 0x12000, scoped, tag = 'internal scratch']
  #allocation2 [shape = 'f32[4,4,128]{2,1,0:T(4,128)}', space=vmem, size = 0x2000, scoped, tag = 'scratch operand']
  #allocation3 [shape = 'f32[1,128]{1,0:T(1,128)}', space=vmem, size = 0x200, scoped, tag = 'scratch operand']
  #allocation4 [shape = 'f32[1,128]{1,0:T(1,128)}', space=vmem, size = 0x200, scoped, tag = 'scratch operand']
  %s0 = inlined_call_operand.vmem [shape: bf16[2,5,5,256], index: 0, kind: input, shape index: {}]
  %s1 = inlined_call_operand.vmem [shape: bf16[4,256,128], index: 1, kind: input, shape index: {}]
  %s2 = inlined_call_operand.vmem [shape: f32[1,128], index: 2, kind: input, shape index: {}]
  %s3 = inlined_call_operand.vmem [shape: bf16[2,4,4,128], index: 3, kind: output, shape index: {}]
  %s4 = sld [smem:[#allocation0]]
  $region59: #{discriminator_forward.6} parent=0
    _
  %s6 = ssub.s32 1, %s4
  %s7 = scalar_select 0, %s6, %s4
  loop: start=0, step=1, limit=4
  $region2: #{discriminator_forward.6} parent=0 // loop_pre_header
    _
  $region3: #{discriminator_forward.6} parent=0 // loop_header
    %s9 = sphi 0, %s13
    %p10 = scmp.ge.s32.totalorder %s9, 4
    %s19 = sphi 0, %s21
    %s22 = sphi 0, %s19
    %s23 = sphi 0, %s22
    %s39 = sphi 0, %s23
    %s43 = sphi 0, %s43
    %s45 = sphi 0, %s43
    %s46 = sphi 0, %s45
    %s60 = sphi 0, %s46
    %s64 = sphi 0, %s64
    %s66 = sphi 0, %s64
    %s67 = sphi 0, %s66
    %s81 = sphi 0, %s67
    %s87 = sphi 0, %s89
    %s90 = sphi 0, %s87
    %s91 = sphi 0, %s90
    %s107 = sphi 0, %s91
  $region4: #{discriminator_forward.6} parent=0 // loop_header_branch
    %12 = sbr.rel (%p10) target = $region8
  $region5: #{discriminator_forward.6} parent=0 // loop_body
    %s14 = ssub.s32 %s9, 1
    %s15 = ssub.s32 %s9, 2
    %s16 = sadd.s32 %s9, 1
    %s17 = ssub.s32 %s9, %s16
    %p18 = scmp.eq.s32.totalorder %s17, 0
    %s20 = sadd.s32 %s19, 1
    %s21 = scalar_select %p18, %s19, %s20
    %p24 = pneg %p18
    %p25 = scmp.eq.s32.totalorder %s9, 1
    %p26 = por %p24, %p25
    %p27 = scmp.ne.s32.totalorder %s19, %s22
    %p28 = scmp.eq.s32.totalorder %s9, 0
    %p29 = por %p27, %p28
    %p30 = scmp.ne.s32.totalorder %s19, %s22
    %p31 = scmp.eq.s32.totalorder %s14, 1
    %p32 = por %p30, %p31
    %p33 = scmp.ne.s32.totalorder %s22, %s23
    %p34 = scmp.eq.s32.totalorder %s14, 0
    %p35 = por %p33, %p34
    %p36 = scmp.ne.s32.totalorder %s22, %s23
    %p37 = scmp.eq.s32.totalorder %s15, 1
    %p38 = por %p36, %p37
    %p40 = scmp.ne.s32.totalorder %s23, %s39
    %p41 = scmp.eq.s32.totalorder %s15, 0
    %p42 = por %p40, %p41
    %s44 = sadd.s32 %s43, 1
    %p47 = scmp.eq.s32.totalorder %s9, 1
    %p48 = scmp.ne.s32.totalorder %s43, %s45
    %p49 = scmp.eq.s32.totalorder %s9, 0
    %p50 = por %p48, %p49
    %p51 = scmp.ne.s32.totalorder %s43, %s45
    %p52 = scmp.eq.s32.totalorder %s14, 1
    %p53 = por %p51, %p52
    %p54 = scmp.ne.s32.totalorder %s45, %s46
    %p55 = scmp.eq.s32.totalorder %s14, 0
    %p56 = por %p54, %p55
    %p57 = scmp.ne.s32.totalorder %s45, %s46
    %p58 = scmp.eq.s32.totalorder %s15, 1
    %p59 = por %p57, %p58
    %p61 = scmp.ne.s32.totalorder %s46, %s60
    %p62 = scmp.eq.s32.totalorder %s15, 0
    %p63 = por %p61, %p62
    %s65 = sadd.s32 %s64, 1
    %p68 = scmp.eq.s32.totalorder %s9, 1
    %p69 = scmp.ne.s32.totalorder %s64, %s66
    %p70 = scmp.eq.s32.totalorder %s9, 0
    %p71 = por %p69, %p70
    %p72 = scmp.ne.s32.totalorder %s64, %s66
    %p73 = scmp.eq.s32.totalorder %s14, 1
    %p74 = por %p72, %p73
    %p75 = scmp.ne.s32.totalorder %s66, %s67
    %p76 = scmp.eq.s32.totalorder %s14, 0
    %p77 = por %p75, %p76
    %p78 = scmp.ne.s32.totalorder %s66, %s67
    %p79 = scmp.eq.s32.totalorder %s15, 1
    %p80 = por %p78, %p79
    %p82 = scmp.ne.s32.totalorder %s67, %s81
    %p83 = scmp.eq.s32.totalorder %s15, 0
    %p84 = por %p82, %p83
    %s85 = ssub.s32 %s9, %s16
    %p86 = scmp.eq.s32.totalorder %s85, 0
    %s88 = sadd.s32 %s87, 1
    %s89 = scalar_select %p86, %s87, %s88
    %p92 = pneg %p86
    %p93 = scmp.eq.s32.totalorder %s9, 1
    %p94 = por %p92, %p93
    %p95 = scmp.ne.s32.totalorder %s87, %s90
    %p96 = scmp.eq.s32.totalorder %s9, 0
    %p97 = por %p95, %p96
    %p98 = scmp.ne.s32.totalorder %s87, %s90
    %p99 = scmp.eq.s32.totalorder %s14, 1
    %p100 = por %p98, %p99
    %p101 = scmp.ne.s32.totalorder %s90, %s91
    %p102 = scmp.eq.s32.totalorder %s14, 0
    %p103 = por %p101, %p102
    %p104 = scmp.ne.s32.totalorder %s90, %s91
    %p105 = scmp.eq.s32.totalorder %s15, 1
    %p106 = por %p104, %p105
    %p108 = scmp.ne.s32.totalorder %s91, %s107
    %p109 = scmp.eq.s32.totalorder %s15, 0
    %p110 = por %p108, %p109
    %p111 = scmp.le.s32.totalorder 1, %s9
    %p112 = scmp.lt.s32.totalorder %s9, 3
    %p113 = pnand %p111, %p112
    %p114 = pneg %p113
    // Predicated region
    $region9: #{discriminator_forward.6} parent=5 // pred_check
      _
    $region10: #{discriminator_forward.6} parent=5 // pred_check_branch
      %116 = sbr.rel (%p113) target = $region12
    $region11: #{discriminator_forward.6} parent=5 // pred_region
      %s117 = ssub.s32 %s9, 1
      // Predicated region
      $region13: #{discriminator_forward.6} parent=11 // pred_check
        %p118 = pneg %p56
      $region14: #{discriminator_forward.6} parent=11 // pred_check_branch
        %120 = sbr.rel (%p118) target = $region16
      $region15: #{discriminator_forward.6} parent=11 // pred_region
        _
      $region16: #{discriminator_forward.6} parent=11 // pred_fallthru
        _
      // Predicated region
      $region17: #{discriminator_forward.6} parent=11 // pred_check
        %p121 = pneg %p77
      $region18: #{discriminator_forward.6} parent=11 // pred_check_branch
        %123 = sbr.rel (%p121) target = $region20
      $region19: #{discriminator_forward.6} parent=11 // pred_region
        _
      $region20: #{discriminator_forward.6} parent=11 // pred_fallthru
        _
    $region12: #{discriminator_forward.6} parent=5 // pred_fallthru
      _
    %p124 = scmp.lt.s32.totalorder %s9, 2
    // Predicated region
    $region21: #{discriminator_forward.6} parent=5 // pred_check
      %p125 = pneg %p124
    $region22: #{discriminator_forward.6} parent=5 // pred_check_branch
      %127 = sbr.rel (%p125) target = $region24
    $region23: #{discriminator_forward.6} parent=5 // pred_region
      // Predicated region
      $region25: #{discriminator_forward.6} parent=23 // pred_check
        %p128 = pneg %p29
      $region26: #{discriminator_forward.6} parent=23 // pred_check_branch
        %130 = sbr.rel (%p128) target = $region28
      $region27: #{discriminator_forward.6} parent=23 // pred_region
        %p131 = scmp.lt.s32.totalorder %s9, 1
        %s132 = scalar_select %p131, %s9, 1
        %s133 = smul.addr %s132, 10
        %s134 = smul.addr %s133, 4
        %s135 = scalar_lea.vmem %s0, %s134
      $region28: #{discriminator_forward.6} parent=23 // pred_fallthru
        _
    $region24: #{discriminator_forward.6} parent=5 // pred_fallthru
      _
    %p136 = scmp.le.s32.totalorder 1, %s9
    %p137 = scmp.lt.s32.totalorder %s9, 3
    %p138 = pnand %p136, %p137
    %p139 = pneg %p138
    // Predicated region
    $region29: #{discriminator_forward.6} parent=5 // pred_check
      _
    $region30: #{discriminator_forward.6} parent=5 // pred_check_branch
      %141 = sbr.rel (%p138) target = $region32
    $region31: #{discriminator_forward.6} parent=5 // pred_region
      %s142 = ssub.s32 %s9, 1
      %p143 = scmp.lt.s32.totalorder %s14, 1
      %s144 = scalar_select %p143, %s14, 1
      %s145 = smul.addr %s144, 10
      %s146 = smul.addr %s145, 4
      %s147 = scalar_lea.vmem %s0, %s146
      %p148 = pneg %p35
      %p149 = pneg %p32
      %p150 = pneg %p56
      %p151 = pneg %p53
      %p152 = pneg %p77
      %p153 = pneg %p74
      %p154 = pneg %p103
      %p155 = pneg %p100
      %p156 = scmp.lt.s32.totalorder %s14, 1
      %s157 = scalar_select %p156, %s14, 1
      %s158 = smul.addr %s157, 4
      %s159 = smul.addr %s158, 2
      %s160 = scalar_lea.vmem %s3, %s159
      %p161 = scmp.lt.s32.totalorder %s14, 1
      %s162 = scalar_select %p161, %s14, 1
      %s163 = smul.addr %s162, 10
      %s164 = smul.addr %s163, 4
      %s165 = scalar_lea.vmem %s0, %s164
      %p166 = scmp.lt.s32.totalorder %s14, 1
      %s167 = scalar_select %p166, %s14, 1
      %s168 = smul.addr %s167, 4
      %s169 = smul.addr %s168, 2
      %s170 = scalar_lea.vmem %s3, %s169
      %v172 = vld [vmem:[%s2] sm:$0x1]
      %173 = vst [vmem:[#allocation3] sm:$0x1] 0.0
      %174 = vst [vmem:[#allocation4] sm:$0x1] 0.0
      loop: start=0, step=1, limit=4
      $region33: #{discriminator_forward.6} parent=31 // loop_pre_header
        _
      $region34: #{discriminator_forward.6} parent=31 // loop_header
        %s176 = sphi 0, %s180
        %p177 = scmp.ge.s32.totalorder %s176, 4
      $region35: #{discriminator_forward.6} parent=31 // loop_header_branch
        %179 = sbr.rel (%p177) target = $region39
      $region36: #{discriminator_forward.6} parent=31 // loop_body
        %s181 = smul.u32 %s176, 2
        %s182 = smul.addr %s181, 4
        %s183 = scalar_lea.vmem %s165, %s182
        %v184 = vld [vmem:[%s183] sm:$0x33]
        %v185 = vld [vmem:[%s1] sm:$0xf]
        %v186 = vld [vmem:[%s1 + $0x4] sm:$0xf]
        %v187 = vld [vmem:[%s1 + $0x8] sm:$0xf]
        %v188 = vld [vmem:[%s1 + $0xc] sm:$0xf]
        %v189 = vld [vmem:[%s1 + $0x10] sm:$0xf]
        %v190 = vld [vmem:[%s1 + $0x14] sm:$0xf]
        %v191 = vld [vmem:[%s1 + $0x18] sm:$0xf]
        %v192 = vld [vmem:[%s1 + $0x1c] sm:$0xf]
        %v193 = vld [vmem:[%s1 + $0x20] sm:$0xf]
        %v194 = vld [vmem:[%s1 + $0x24] sm:$0xf]
        %v195 = vld [vmem:[%s1 + $0x28] sm:$0xf]
        %v196 = vld [vmem:[%s1 + $0x2c] sm:$0xf]
        %v197 = vld [vmem:[%s1 + $0x30] sm:$0xf]
        %v198 = vld [vmem:[%s1 + $0x34] sm:$0xf]
        %v199 = vld [vmem:[%s1 + $0x38] sm:$0xf]
        %v200 = vld [vmem:[%s1 + $0x3c] sm:$0xf]
        %v201 = vld [vmem:[%s1 + $0x40] sm:$0xf]
        %v202 = vld [vmem:[%s1 + $0x44] sm:$0xf]
        %v203 = vld [vmem:[%s1 + $0x48] sm:$0xf]
        %v204 = vld [vmem:[%s1 + $0x4c] sm:$0xf]
        %v205 = vld [vmem:[%s1 + $0x50] sm:$0xf]
        %v206 = vld [vmem:[%s1 + $0x54] sm:$0xf]
        %v207 = vld [vmem:[%s1 + $0x58] sm:$0xf]
        %v208 = vld [vmem:[%s1 + $0x5c] sm:$0xf]
        %v209 = vld [vmem:[%s1 + $0x60] sm:$0xf]
        %v210 = vld [vmem:[%s1 + $0x64] sm:$0xf]
        %v211 = vld [vmem:[%s1 + $0x68] sm:$0xf]
        %v212 = vld [vmem:[%s1 + $0x6c] sm:$0xf]
        %v213 = vld [vmem:[%s1 + $0x70] sm:$0xf]
        %v214 = vld [vmem:[%s1 + $0x74] sm:$0xf]
        %v215 = vld [vmem:[%s1 + $0x78] sm:$0xf]
        %v216 = vld [vmem:[%s1 + $0x7c] sm:$0xf]
        %v217 = vld [vmem:[%s183] sm:$0x77]
        %s218 = scalar_lea.vmem %s1, 128
        %v219 = vld [vmem:[%s218] sm:$0xf]
        %v220 = vld [vmem:[%s218 + $0x4] sm:$0xf]
        %v221 = vld [vmem:[%s218 + $0x8] sm:$0xf]
        %v222 = vld [vmem:[%s218 + $0xc] sm:$0xf]
        %v223 = vld [vmem:[%s218 + $0x10] sm:$0xf]
        %v224 = vld [vmem:[%s218 + $0x14] sm:$0xf]
        %v225 = vld [vmem:[%s218 + $0x18] sm:$0xf]
        %v226 = vld [vmem:[%s218 + $0x1c] sm:$0xf]
        %v227 = vld [vmem:[%s218 + $0x20] sm:$0xf]
        %v228 = vld [vmem:[%s218 + $0x24] sm:$0xf]
        %v229 = vld [vmem:[%s218 + $0x28] sm:$0xf]
        %v230 = vld [vmem:[%s218 + $0x2c] sm:$0xf]
        %v231 = vld [vmem:[%s218 + $0x30] sm:$0xf]
        %v232 = vld [vmem:[%s218 + $0x34] sm:$0xf]
        %v233 = vld [vmem:[%s218 + $0x38] sm:$0xf]
        %v234 = vld [vmem:[%s218 + $0x3c] sm:$0xf]
        %v235 = vld [vmem:[%s218 + $0x40] sm:$0xf]
        %v236 = vld [vmem:[%s218 + $0x44] sm:$0xf]
        %v237 = vld [vmem:[%s218 + $0x48] sm:$0xf]
        %v238 = vld [vmem:[%s218 + $0x4c] sm:$0xf]
        %v239 = vld [vmem:[%s218 + $0x50] sm:$0xf]
        %v240 = vld [vmem:[%s218 + $0x54] sm:$0xf]
        %v241 = vld [vmem:[%s218 + $0x58] sm:$0xf]
        %v242 = vld [vmem:[%s218 + $0x5c] sm:$0xf]
        %v243 = vld [vmem:[%s218 + $0x60] sm:$0xf]
        %v244 = vld [vmem:[%s218 + $0x64] sm:$0xf]
        %v245 = vld [vmem:[%s218 + $0x68] sm:$0xf]
        %v246 = vld [vmem:[%s218 + $0x6c] sm:$0xf]
        %v247 = vld [vmem:[%s218 + $0x70] sm:$0xf]
        %v248 = vld [vmem:[%s218 + $0x74] sm:$0xf]
        %v249 = vld [vmem:[%s218 + $0x78] sm:$0xf]
        %v250 = vld [vmem:[%s218 + $0x7c] sm:$0xf]
        %v252 = vunpack.c.l.b16 %v217
        %v253 = vunpack.c.h.b16 %v217
        %v254 = vpack.c.b16 %v252, %v252
        %v255 = vpack.c.b16 %v253, %v253
        %v257 = vshrl.u32 %v254, 16
        %v259 = vshll.u32 %v254, 16
        %v261 = vrot.slane %v259, 1
        %v262 = vor.u32 %v257, %v261
        %v264 = vshrl.u32 %v255, 16
        %v266 = vshll.u32 %v255, 16
        %v268 = vrot.slane %v266, 1
        %v269 = vor.u32 %v264, %v268
        %v304 = vunpack.c.l.b16 %v219
        %v305 = vunpack.c.l.b16 %v220
        %v306 = vunpack.c.l.b16 %v221
        %v307 = vunpack.c.l.b16 %v222
        %v308 = vunpack.c.l.b16 %v223
        %v309 = vunpack.c.l.b16 %v224
        %v310 = vunpack.c.l.b16 %v225
        %v311 = vunpack.c.l.b16 %v226
        %v312 = vunpack.c.l.b16 %v227
        %v313 = vunpack.c.l.b16 %v228
        %v314 = vunpack.c.l.b16 %v229
        %v315 = vunpack.c.l.b16 %v230
        %v316 = vunpack.c.l.b16 %v231
        %v317 = vunpack.c.l.b16 %v232
        %v318 = vunpack.c.l.b16 %v233
        %v319 = vunpack.c.l.b16 %v234
        %v320 = vunpack.c.l.b16 %v235
        %v321 = vunpack.c.l.b16 %v236
        %v322 = vunpack.c.l.b16 %v237
        %v323 = vunpack.c.l.b16 %v238
        %v324 = vunpack.c.l.b16 %v239
        %v325 = vunpack.c.l.b16 %v240
        %v326 = vunpack.c.l.b16 %v241
        %v327 = vunpack.c.l.b16 %v242
        %v328 = vunpack.c.l.b16 %v243
        %v329 = vunpack.c.l.b16 %v244
        %v330 = vunpack.c.l.b16 %v245
        %v331 = vunpack.c.l.b16 %v246
        %v332 = vunpack.c.l.b16 %v247
        %v333 = vunpack.c.l.b16 %v248
        %v334 = vunpack.c.l.b16 %v249
        %v335 = vunpack.c.l.b16 %v250
        %v336 = vpack.c.b16 %v305, %v304
        %v337 = vpack.c.b16 %v307, %v306
        %v338 = vpack.c.b16 %v309, %v308
        %v339 = vpack.c.b16 %v311, %v310
        %v340 = vpack.c.b16 %v313, %v312
        %v341 = vpack.c.b16 %v315, %v314
        %v342 = vpack.c.b16 %v317, %v316
        %v343 = vpack.c.b16 %v319, %v318
        %v344 = vpack.c.b16 %v321, %v320
        %v345 = vpack.c.b16 %v323, %v322
        %v346 = vpack.c.b16 %v325, %v324
        %v347 = vpack.c.b16 %v327, %v326
        %v348 = vpack.c.b16 %v329, %v328
        %v349 = vpack.c.b16 %v331, %v330
        %v350 = vpack.c.b16 %v333, %v332
        %v351 = vpack.c.b16 %v335, %v334
        %368 = vmatprep.subr.bf16.mxu0 0
        %369 = vmatpush1.bf16.msra.mxu0 %v336
        %370 = vmatprep.subr.bf16.mxu0 0
        %371 = vmatpush1.bf16.msra.mxu0 %v337
        %372 = vmatprep.subr.bf16.mxu0 0
        %373 = vmatpush1.bf16.msra.mxu0 %v338
        %374 = vmatprep.subr.bf16.mxu0 0
        %375 = vmatpush1.bf16.msra.mxu0 %v339
        %376 = vmatprep.subr.bf16.mxu0 0
        %377 = vmatpush1.bf16.msra.mxu0 %v340
        %378 = vmatprep.subr.bf16.mxu0 0
        %379 = vmatpush1.bf16.msra.mxu0 %v341
        %380 = vmatprep.subr.bf16.mxu0 0
        %381 = vmatpush1.bf16.msra.mxu0 %v342
        %382 = vmatprep.subr.bf16.mxu0 0
        %383 = vmatpush1.bf16.msra.mxu0 %v343
        %384 = vmatprep.subr.bf16.mxu0 0
        %385 = vmatpush1.bf16.msra.mxu0 %v344
        %386 = vmatprep.subr.bf16.mxu0 0
        %387 = vmatpush1.bf16.msra.mxu0 %v345
        %388 = vmatprep.subr.bf16.mxu0 0
        %389 = vmatpush1.bf16.msra.mxu0 %v346
        %390 = vmatprep.subr.bf16.mxu0 0
        %391 = vmatpush1.bf16.msra.mxu0 %v347
        %392 = vmatprep.subr.bf16.mxu0 0
        %393 = vmatpush1.bf16.msra.mxu0 %v348
        %394 = vmatprep.subr.bf16.mxu0 0
        %395 = vmatpush1.bf16.msra.mxu0 %v349
        %396 = vmatprep.subr.bf16.mxu0 0
        %397 = vmatpush1.bf16.msra.mxu0 %v350
        %398 = vmatprep.subr.bf16.mxu0 0
        %399 = vmatpush1.bf16.msra.mxu0 %v351
        %400 = vmatprep.mubr.bf16.mxu0 %v269
        %401 = vmatmul.mubr.bf16.gmra.mrb[0].mxu0 %v262
        %v402 = vpop.f32.mrb[0].mxu0
        %v403 = vadd.f32 0.0, %v402
        %v404 = vpop.f32.mrb[0].mxu0
        %v405 = vpop.f32.mrb[0].mxu0
        %v406 = vpop.f32.mrb[0].mxu0
        %407 = vdwg.mxu0
        %v409 = vunpack.c.l.b16 %v184
        %v410 = vunpack.c.h.b16 %v184
        %v411 = vpack.c.b16 %v409, %v409
        %v412 = vpack.c.b16 %v410, %v410
        %v447 = vunpack.c.l.b16 %v185
        %v448 = vunpack.c.l.b16 %v186
        %v449 = vunpack.c.l.b16 %v187
        %v450 = vunpack.c.l.b16 %v188
        %v451 = vunpack.c.l.b16 %v189
        %v452 = vunpack.c.l.b16 %v190
        %v453 = vunpack.c.l.b16 %v191
        %v454 = vunpack.c.l.b16 %v192
        %v455 = vunpack.c.l.b16 %v193
        %v456 = vunpack.c.l.b16 %v194
        %v457 = vunpack.c.l.b16 %v195
        %v458 = vunpack.c.l.b16 %v196
        %v459 = vunpack.c.l.b16 %v197
        %v460 = vunpack.c.l.b16 %v198
        %v461 = vunpack.c.l.b16 %v199
        %v462 = vunpack.c.l.b16 %v200
        %v463 = vunpack.c.l.b16 %v201
        %v464 = vunpack.c.l.b16 %v202
        %v465 = vunpack.c.l.b16 %v203
        %v466 = vunpack.c.l.b16 %v204
        %v467 = vunpack.c.l.b16 %v205
        %v468 = vunpack.c.l.b16 %v206
        %v469 = vunpack.c.l.b16 %v207
        %v470 = vunpack.c.l.b16 %v208
        %v471 = vunpack.c.l.b16 %v209
        %v472 = vunpack.c.l.b16 %v210
        %v473 = vunpack.c.l.b16 %v211
        %v474 = vunpack.c.l.b16 %v212
        %v475 = vunpack.c.l.b16 %v213
        %v476 = vunpack.c.l.b16 %v214
        %v477 = vunpack.c.l.b16 %v215
        %v478 = vunpack.c.l.b16 %v216
        %v479 = vpack.c.b16 %v448, %v447
        %v480 = vpack.c.b16 %v450, %v449
        %v481 = vpack.c.b16 %v452, %v451
        %v482 = vpack.c.b16 %v454, %v453
        %v483 = vpack.c.b16 %v456, %v455
        %v484 = vpack.c.b16 %v458, %v457
        %v485 = vpack.c.b16 %v460, %v459
        %v486 = vpack.c.b16 %v462, %v461
        %v487 = vpack.c.b16 %v464, %v463
        %v488 = vpack.c.b16 %v466, %v465
        %v489 = vpack.c.b16 %v468, %v467
        %v490 = vpack.c.b16 %v470, %v469
        %v491 = vpack.c.b16 %v472, %v471
        %v492 = vpack.c.b16 %v474, %v473
        %v493 = vpack.c.b16 %v476, %v475
        %v494 = vpack.c.b16 %v478, %v477
        %511 = vmatprep.subr.bf16.mxu0 0
        %512 = vmatpush1.bf16.msra.mxu0 %v479
        %513 = vmatprep.subr.bf16.mxu0 0
        %514 = vmatpush1.bf16.msra.mxu0 %v480
        %515 = vmatprep.subr.bf16.mxu0 0
        %516 = vmatpush1.bf16.msra.mxu0 %v481
        %517 = vmatprep.subr.bf16.mxu0 0
        %518 = vmatpush1.bf16.msra.mxu0 %v482
        %519 = vmatprep.subr.bf16.mxu0 0
        %520 = vmatpush1.bf16.msra.mxu0 %v483
        %521 = vmatprep.subr.bf16.mxu0 0
        %522 = vmatpush1.bf16.msra.mxu0 %v484
        %523 = vmatprep.subr.bf16.mxu0 0
        %524 = vmatpush1.bf16.msra.mxu0 %v485
        %525 = vmatprep.subr.bf16.mxu0 0
        %526 = vmatpush1.bf16.msra.mxu0 %v486
        %527 = vmatprep.subr.bf16.mxu0 0
        %528 = vmatpush1.bf16.msra.mxu0 %v487
        %529 = vmatprep.subr.bf16.mxu0 0
        %530 = vmatpush1.bf16.msra.mxu0 %v488
        %531 = vmatprep.subr.bf16.mxu0 0
        %532 = vmatpush1.bf16.msra.mxu0 %v489
        %533 = vmatprep.subr.bf16.mxu0 0
        %534 = vmatpush1.bf16.msra.mxu0 %v490
        %535 = vmatprep.subr.bf16.mxu0 0
        %536 = vmatpush1.bf16.msra.mxu0 %v491
        %537 = vmatprep.subr.bf16.mxu0 0
        %538 = vmatpush1.bf16.msra.mxu0 %v492
        %539 = vmatprep.subr.bf16.mxu0 0
        %540 = vmatpush1.bf16.msra.mxu0 %v493
        %541 = vmatprep.subr.bf16.mxu0 0
        %542 = vmatpush1.bf16.msra.mxu0 %v494
        %543 = vmatprep.mubr.bf16.mxu0 %v412
        %544 = vmatmul.mubr.bf16.gmra.mrb[0].mxu0 %v411
        %v545 = vpop.f32.mrb[0].mxu0
        %v546 = vadd.f32 %v403, %v545
        %v547 = vpop.f32.mrb[0].mxu0
        %v548 = vpop.f32.mrb[0].mxu0
        %v549 = vpop.f32.mrb[0].mxu0
        %550 = vdwg.mxu0
        %s551 = sadd.s32 %s176, 1
        %s552 = smul.u32 %s551, 2
        %s553 = smul.addr %s552, 4
        %s554 = scalar_lea.vmem %s165, %s553
        %v555 = vld [vmem:[%s554] sm:$0x33]
        %s556 = scalar_lea.vmem %s1, 256
        %v557 = vld [vmem:[%s556] sm:$0xf]
        %v558 = vld [vmem:[%s556 + $0x4] sm:$0xf]
        %v559 = vld [vmem:[%s556 + $0x8] sm:$0xf]
        %v560 = vld [vmem:[%s556 + $0xc] sm:$0xf]
        %v561 = vld [vmem:[%s556 + $0x10] sm:$0xf]
        %v562 = vld [vmem:[%s556 + $0x14] sm:$0xf]
        %v563 = vld [vmem:[%s556 + $0x18] sm:$0xf]
        %v564 = vld [vmem:[%s556 + $0x1c] sm:$0xf]
        %v565 = vld [vmem:[%s556 + $0x20] sm:$0xf]
        %v566 = vld [vmem:[%s556 + $0x24] sm:$0xf]
        %v567 = vld [vmem:[%s556 + $0x28] sm:$0xf]
        %v568 = vld [vmem:[%s556 + $0x2c] sm:$0xf]
        %v569 = vld [vmem:[%s556 + $0x30] sm:$0xf]
        %v570 = vld [vmem:[%s556 + $0x34] sm:$0xf]
        %v571 = vld [vmem:[%s556 + $0x38] sm:$0xf]
        %v572 = vld [vmem:[%s556 + $0x3c] sm:$0xf]
        %v573 = vld [vmem:[%s556 + $0x40] sm:$0xf]
        %v574 = vld [vmem:[%s556 + $0x44] sm:$0xf]
        %v575 = vld [vmem:[%s556 + $0x48] sm:$0xf]
        %v576 = vld [vmem:[%s556 + $0x4c] sm:$0xf]
        %v577 = vld [vmem:[%s556 + $0x50] sm:$0xf]
        %v578 = vld [vmem:[%s556 + $0x54] sm:$0xf]
        %v579 = vld [vmem:[%s556 + $0x58] sm:$0xf]
        %v580 = vld [vmem:[%s556 + $0x5c] sm:$0xf]
        %v581 = vld [vmem:[%s556 + $0x60] sm:$0xf]
        %v582 = vld [vmem:[%s556 + $0x64] sm:$0xf]
        %v583 = vld [vmem:[%s556 + $0x68] sm:$0xf]
        %v584 = vld [vmem:[%s556 + $0x6c] sm:$0xf]
        %v585 = vld [vmem:[%s556 + $0x70] sm:$0xf]
        %v586 = vld [vmem:[%s556 + $0x74] sm:$0xf]
        %v587 = vld [vmem:[%s556 + $0x78] sm:$0xf]
        %v588 = vld [vmem:[%s556 + $0x7c] sm:$0xf]
        %v590 = vunpack.c.l.b16 %v555
        %v591 = vunpack.c.h.b16 %v555
        %v592 = vpack.c.b16 %v590, %v590
        %v593 = vpack.c.b16 %v591, %v591
        %v628 = vunpack.c.l.b16 %v557
        %v629 = vunpack.c.l.b16 %v558
        %v630 = vunpack.c.l.b16 %v559
        %v631 = vunpack.c.l.b16 %v560
        %v632 = vunpack.c.l.b16 %v561
        %v633 = vunpack.c.l.b16 %v562
        %v634 = vunpack.c.l.b16 %v563
        %v635 = vunpack.c.l.b16 %v564
        %v636 = vunpack.c.l.b16 %v565
        %v637 = vunpack.c.l.b16 %v566
        %v638 = vunpack.c.l.b16 %v567
        %v639 = vunpack.c.l.b16 %v568
        %v640 = vunpack.c.l.b16 %v569
        %v641 = vunpack.c.l.b16 %v570
        %v642 = vunpack.c.l.b16 %v571
        %v643 = vunpack.c.l.b16 %v572
        %v644 = vunpack.c.l.b16 %v573
        %v645 = vunpack.c.l.b16 %v574
        %v646 = vunpack.c.l.b16 %v575
        %v647 = vunpack.c.l.b16 %v576
        %v648 = vunpack.c.l.b16 %v577
        %v649 = vunpack.c.l.b16 %v578
        %v650 = vunpack.c.l.b16 %v579
        %v651 = vunpack.c.l.b16 %v580
        %v652 = vunpack.c.l.b16 %v581
        %v653 = vunpack.c.l.b16 %v582
        %v654 = vunpack.c.l.b16 %v583
        %v655 = vunpack.c.l.b16 %v584
        %v656 = vunpack.c.l.b16 %v585
        %v657 = vunpack.c.l.b16 %v586
        %v658 = vunpack.c.l.b16 %v587
        %v659 = vunpack.c.l.b16 %v588
        %v660 = vpack.c.b16 %v629, %v628
        %v661 = vpack.c.b16 %v631, %v630
        %v662 = vpack.c.b16 %v633, %v632
        %v663 = vpack.c.b16 %v635, %v634
        %v664 = vpack.c.b16 %v637, %v636
        %v665 = vpack.c.b16 %v639, %v638
        %v666 = vpack.c.b16 %v641, %v640
        %v667 = vpack.c.b16 %v643, %v642
        %v668 = vpack.c.b16 %v645, %v644
        %v669 = vpack.c.b16 %v647, %v646
        %v670 = vpack.c.b16 %v649, %v648
        %v671 = vpack.c.b16 %v651, %v650
        %v672 = vpack.c.b16 %v653, %v652
        %v673 = vpack.c.b16 %v655, %v654
        %v674 = vpack.c.b16 %v657, %v656
        %v675 = vpack.c.b16 %v659, %v658
        %692 = vmatprep.subr.bf16.mxu0 0
        %693 = vmatpush1.bf16.msra.mxu0 %v660
        %694 = vmatprep.subr.bf16.mxu0 0
        %695 = vmatpush1.bf16.msra.mxu0 %v661
        %696 = vmatprep.subr.bf16.mxu0 0
        %697 = vmatpush1.bf16.msra.mxu0 %v662
        %698 = vmatprep.subr.bf16.mxu0 0
        %699 = vmatpush1.bf16.msra.mxu0 %v663
        %700 = vmatprep.subr.bf16.mxu0 0
        %701 = vmatpush1.bf16.msra.mxu0 %v664
        %702 = vmatprep.subr.bf16.mxu0 0
        %703 = vmatpush1.bf16.msra.mxu0 %v665
        %704 = vmatprep.subr.bf16.mxu0 0
        %705 = vmatpush1.bf16.msra.mxu0 %v666
        %706 = vmatprep.subr.bf16.mxu0 0
        %707 = vmatpush1.bf16.msra.mxu0 %v667
        %708 = vmatprep.subr.bf16.mxu0 0
        %709 = vmatpush1.bf16.msra.mxu0 %v668
        %710 = vmatprep.subr.bf16.mxu0 0
        %711 = vmatpush1.bf16.msra.mxu0 %v669
        %712 = vmatprep.subr.bf16.mxu0 0
        %713 = vmatpush1.bf16.msra.mxu0 %v670
        %714 = vmatprep.subr.bf16.mxu0 0
        %715 = vmatpush1.bf16.msra.mxu0 %v671
        %716 = vmatprep.subr.bf16.mxu0 0
        %717 = vmatpush1.bf16.msra.mxu0 %v672
        %718 = vmatprep.subr.bf16.mxu0 0
        %719 = vmatpush1.bf16.msra.mxu0 %v673
        %720 = vmatprep.subr.bf16.mxu0 0
        %721 = vmatpush1.bf16.msra.mxu0 %v674
        %722 = vmatprep.subr.bf16.mxu0 0
        %723 = vmatpush1.bf16.msra.mxu0 %v675
        %724 = vmatprep.mubr.bf16.mxu0 %v593
        %725 = vmatmul.mubr.bf16.gmra.mrb[0].mxu0 %v592
        %v726 = vpop.f32.mrb[0].mxu0
        %v727 = vadd.f32 0.0, %v726
        %v728 = vpop.f32.mrb[0].mxu0
        %v729 = vpop.f32.mrb[0].mxu0
        %v730 = vpop.f32.mrb[0].mxu0
        %731 = vdwg.mxu0
        %v732 = vadd.f32 %v546, %v727
        %v733 = vld [vmem:[%s554] sm:$0x77]
        %s734 = scalar_lea.vmem %s1, 384
        %v735 = vld [vmem:[%s734] sm:$0xf]
        %v736 = vld [vmem:[%s734 + $0x4] sm:$0xf]
        %v737 = vld [vmem:[%s734 + $0x8] sm:$0xf]
        %v738 = vld [vmem:[%s734 + $0xc] sm:$0xf]
        %v739 = vld [vmem:[%s734 + $0x10] sm:$0xf]
        %v740 = vld [vmem:[%s734 + $0x14] sm:$0xf]
        %v741 = vld [vmem:[%s734 + $0x18] sm:$0xf]
        %v742 = vld [vmem:[%s734 + $0x1c] sm:$0xf]
        %v743 = vld [vmem:[%s734 + $0x20] sm:$0xf]
        %v744 = vld [vmem:[%s734 + $0x24] sm:$0xf]
        %v745 = vld [vmem:[%s734 + $0x28] sm:$0xf]
        %v746 = vld [vmem:[%s734 + $0x2c] sm:$0xf]
        %v747 = vld [vmem:[%s734 + $0x30] sm:$0xf]
        %v748 = vld [vmem:[%s734 + $0x34] sm:$0xf]
        %v749 = vld [vmem:[%s734 + $0x38] sm:$0xf]
        %v750 = vld [vmem:[%s734 + $0x3c] sm:$0xf]
        %v751 = vld [vmem:[%s734 + $0x40] sm:$0xf]
        %v752 = vld [vmem:[%s734 + $0x44] sm:$0xf]
        %v753 = vld [vmem:[%s734 + $0x48] sm:$0xf]
        %v754 = vld [vmem:[%s734 + $0x4c] sm:$0xf]
        %v755 = vld [vmem:[%s734 + $0x50] sm:$0xf]
        %v756 = vld [vmem:[%s734 + $0x54] sm:$0xf]
        %v757 = vld [vmem:[%s734 + $0x58] sm:$0xf]
        %v758 = vld [vmem:[%s734 + $0x5c] sm:$0xf]
        %v759 = vld [vmem:[%s734 + $0x60] sm:$0xf]
        %v760 = vld [vmem:[%s734 + $0x64] sm:$0xf]
        %v761 = vld [vmem:[%s734 + $0x68] sm:$0xf]
        %v762 = vld [vmem:[%s734 + $0x6c] sm:$0xf]
        %v763 = vld [vmem:[%s734 + $0x70] sm:$0xf]
        %v764 = vld [vmem:[%s734 + $0x74] sm:$0xf]
        %v765 = vld [vmem:[%s734 + $0x78] sm:$0xf]
        %v766 = vld [vmem:[%s734 + $0x7c] sm:$0xf]
        %v768 = vunpack.c.l.b16 %v733
        %v769 = vunpack.c.h.b16 %v733
        %v770 = vpack.c.b16 %v768, %v768
        %v771 = vpack.c.b16 %v769, %v769
        %v773 = vshrl.u32 %v770, 16
        %v775 = vshll.u32 %v770, 16
        %v777 = vrot.slane %v775, 1
        %v778 = vor.u32 %v773, %v777
        %v780 = vshrl.u32 %v771, 16
        %v782 = vshll.u32 %v771, 16
        %v784 = vrot.slane %v782, 1
        %v785 = vor.u32 %v780, %v784
        %v820 = vunpack.c.l.b16 %v735
        %v821 = vunpack.c.l.b16 %v736
        %v822 = vunpack.c.l.b16 %v737
        %v823 = vunpack.c.l.b16 %v738
        %v824 = vunpack.c.l.b16 %v739
        %v825 = vunpack.c.l.b16 %v740
        %v826 = vunpack.c.l.b16 %v741
        %v827 = vunpack.c.l.b16 %v742
        %v828 = vunpack.c.l.b16 %v743
        %v829 = vunpack.c.l.b16 %v744
        %v830 = vunpack.c.l.b16 %v745
        %v831 = vunpack.c.l.b16 %v746
        %v832 = vunpack.c.l.b16 %v747
        %v833 = vunpack.c.l.b16 %v748
        %v834 = vunpack.c.l.b16 %v749
        %v835 = vunpack.c.l.b16 %v750
        %v836 = vunpack.c.l.b16 %v751
        %v837 = vunpack.c.l.b16 %v752
        %v838 = vunpack.c.l.b16 %v753
        %v839 = vunpack.c.l.b16 %v754
        %v840 = vunpack.c.l.b16 %v755
        %v841 = vunpack.c.l.b16 %v756
        %v842 = vunpack.c.l.b16 %v757
        %v843 = vunpack.c.l.b16 %v758
        %v844 = vunpack.c.l.b16 %v759
        %v845 = vunpack.c.l.b16 %v760
        %v846 = vunpack.c.l.b16 %v761
        %v847 = vunpack.c.l.b16 %v762
        %v848 = vunpack.c.l.b16 %v763
        %v849 = vunpack.c.l.b16 %v764
        %v850 = vunpack.c.l.b16 %v765
        %v851 = vunpack.c.l.b16 %v766
        %v852 = vpack.c.b16 %v821, %v820
        %v853 = vpack.c.b16 %v823, %v822
        %v854 = vpack.c.b16 %v825, %v824
        %v855 = vpack.c.b16 %v827, %v826
        %v856 = vpack.c.b16 %v829, %v828
        %v857 = vpack.c.b16 %v831, %v830
        %v858 = vpack.c.b16 %v833, %v832
        %v859 = vpack.c.b16 %v835, %v834
        %v860 = vpack.c.b16 %v837, %v836
        %v861 = vpack.c.b16 %v839, %v838
        %v862 = vpack.c.b16 %v841, %v840
        %v863 = vpack.c.b16 %v843, %v842
        %v864 = vpack.c.b16 %v845, %v844
        %v865 = vpack.c.b16 %v847, %v846
        %v866 = vpack.c.b16 %v849, %v848
        %v867 = vpack.c.b16 %v851, %v850
        %884 = vmatprep.subr.bf16.mxu0 0
        %885 = vmatpush1.bf16.msra.mxu0 %v852
        %886 = vmatprep.subr.bf16.mxu0 0
        %887 = vmatpush1.bf16.msra.mxu0 %v853
        %888 = vmatprep.subr.bf16.mxu0 0
        %889 = vmatpush1.bf16.msra.mxu0 %v854
        %890 = vmatprep.subr.bf16.mxu0 0
        %891 = vmatpush1.bf16.msra.mxu0 %v855
        %892 = vmatprep.subr.bf16.mxu0 0
        %893 = vmatpush1.bf16.msra.mxu0 %v856
        %894 = vmatprep.subr.bf16.mxu0 0
        %895 = vmatpush1.bf16.msra.mxu0 %v857
        %896 = vmatprep.subr.bf16.mxu0 0
        %897 = vmatpush1.bf16.msra.mxu0 %v858
        %898 = vmatprep.subr.bf16.mxu0 0
        %899 = vmatpush1.bf16.msra.mxu0 %v859
        %900 = vmatprep.subr.bf16.mxu0 0
        %901 = vmatpush1.bf16.msra.mxu0 %v860
        %902 = vmatprep.subr.bf16.mxu0 0
        %903 = vmatpush1.bf16.msra.mxu0 %v861
        %904 = vmatprep.subr.bf16.mxu0 0
        %905 = vmatpush1.bf16.msra.mxu0 %v862
        %906 = vmatprep.subr.bf16.mxu0 0
        %907 = vmatpush1.bf16.msra.mxu0 %v863
        %908 = vmatprep.subr.bf16.mxu0 0
        %909 = vmatpush1.bf16.msra.mxu0 %v864
        %910 = vmatprep.subr.bf16.mxu0 0
        %911 = vmatpush1.bf16.msra.mxu0 %v865
        %912 = vmatprep.subr.bf16.mxu0 0
        %913 = vmatpush1.bf16.msra.mxu0 %v866
        %914 = vmatprep.subr.bf16.mxu0 0
        %915 = vmatpush1.bf16.msra.mxu0 %v867
        %916 = vmatprep.mubr.bf16.mxu0 %v785
        %917 = vmatmul.mubr.bf16.gmra.mrb[0].mxu0 %v778
        %v918 = vpop.f32.mrb[0].mxu0
        %v919 = vadd.f32 0.0, %v918
        %v920 = vpop.f32.mrb[0].mxu0
        %v921 = vpop.f32.mrb[0].mxu0
        %v922 = vpop.f32.mrb[0].mxu0
        %923 = vdwg.mxu0
        %v924 = vadd.f32 %v732, %v919
        %v926 = vlaneseq
        %v927 = vshrl.u32 %v926, 7
        %v928 = vsub.s32 0, %v927
        %v929 = vrot.slane %v172, %v928
        %v931 = vadd.f32 %v924, %v929
        %s932 = smul.u32 %s176, 4
        %s933 = scalar_lea.vmem [#allocation2], %s932
        %934 = vst [vmem:[%s933] sm:$0xf] %v931
        %v935 = vld [vmem:[#allocation3] sm:$0x1]
        %vm936 = vcmask 1043456
        %v937 = vsel %vm936, %v931, 0.0
        %v938 = vrot.slane %v937, 4
        %v939 = vadd.f32 %v937, %v938
        %v940 = vrot.slane %v939, 2
        %v941 = vadd.f32 %v939, %v940
        %v942 = vrot.slane %v941, 1
        %v943 = vadd.f32 %v941, %v942
        %v944 = vadd.f32 %v935, %v943
        %945 = vst [vmem:[#allocation3] sm:$0x1] %v944
        %v946 = vld [vmem:[#allocation4] sm:$0x1]
        %v947 = vmul.f32 %v931, %v931
        %v948 = vsel %vm936, %v947, 0.0
        %v949 = vrot.slane %v948, 4
        %v950 = vadd.f32 %v948, %v949
        %v951 = vrot.slane %v950, 2
        %v952 = vadd.f32 %v950, %v951
        %v953 = vrot.slane %v952, 1
        %v954 = vadd.f32 %v952, %v953
        %v955 = vadd.f32 %v946, %v954
        %956 = vst [vmem:[#allocation4] sm:$0x1] %v955
      $region37: #{discriminator_forward.6} parent=31 // loop_footer
        %s180 = sadd.s32 1, %s176
      $region38: #{discriminator_forward.6} parent=31 // loop_footer_branch
        %175 = sbr.rel target = $region34
      $region39: #{discriminator_forward.6} parent=31 // loop_exit
        _
      %v957 = vld [vmem:[#allocation3] sm:$0x1]
      %v958 = vmul.f32 %v957, 0.0625
      %v959 = vld [vmem:[#allocation4] sm:$0x1]
      %v960 = vmul.f32 %v959, 0.0625
      %v961 = vmul.f32 %v958, %v958
      %v962 = vsub.f32 %v960, %v961
      %v963 = vadd.f32 %v962, 1e-05
      %v964 = vrsqrt.pop %v963
      %v965 = vsub.f32 0.0, %v958
      %v966 = vmul.f32 %v965, %v964
      loop: start=0, step=1, limit=4
      $region40: #{discriminator_forward.6} parent=31 // loop_pre_header
        _
      $region41: #{discriminator_forward.6} parent=31 // loop_header
        %s968 = sphi 0, %s972
        %p969 = scmp.ge.s32.totalorder %s968, 4
      $region42: #{discriminator_forward.6} parent=31 // loop_header_branch
        %971 = sbr.rel (%p969) target = $region46
      $region43: #{discriminator_forward.6} parent=31 // loop_body
        %s973 = smul.u32 %s968, 4
        %s974 = scalar_lea.vmem [#allocation2], %s973
        %v975 = vld [vmem:[%s974] sm:$0xf]
        %v977 = vlaneseq
        %v978 = vshrl.u32 %v977, 7
        %v979 = vsub.s32 0, %v978
        %v980 = vrot.slane %v964, %v979
        %v982 = vmul.f32 %v975, %v980
        %v984 = vlaneseq
        %v985 = vshrl.u32 %v984, 7
        %v986 = vsub.s32 0, %v985
        %v987 = vrot.slane %v966, %v986
        %v989 = vadd.f32 %v982, %v987
        %vm990 = vcmp.gt.f32.partialorder %v989, 0.0
        %v991 = vmul.f32 %v989, 0.2
        %v992 = vsel %vm990, %v989, %v991
        %v993 = vpack.c.bf16 %v992, %v992
        %s994 = smul.addr %s968, 2
        %s995 = scalar_lea.vmem %s170, %s994
        %996 = vst [vmem:[%s995] sm:$0x3] %v993
      $region44: #{discriminator_forward.6} parent=31 // loop_footer
        %s972 = sadd.s32 1, %s968
      $region45: #{discriminator_forward.6} parent=31 // loop_footer_branch
        %967 = sbr.rel target = $region41
      $region46: #{discriminator_forward.6} parent=31 // loop_exit
        _
      %p997 = scmp.lt.s32.totalorder %s14, 1
      %s998 = scalar_select %p997, %s14, 1
      %s999 = smul.addr %s998, 4
      %s1000 = smul.addr %s999, 2
      %s1001 = scalar_lea.vmem %s3, %s1000
      // Predicated region
      $region47: #{discriminator_forward.6} parent=31 // pred_check
        %p1002 = pneg %p100
      $region48: #{discriminator_forward.6} parent=31 // pred_check_branch
        %1004 = sbr.rel (%p1002) target = $region50
      $region49: #{discriminator_forward.6} parent=31 // pred_region
        _
      $region50: #{discriminator_forward.6} parent=31 // pred_fallthru
        _
    $region32: #{discriminator_forward.6} parent=5 // pred_fallthru
      _
    %p1005 = scmp.le.s32.totalorder 2, %s9
    // Predicated region
    $region51: #{discriminator_forward.6} parent=5 // pred_check
      %p1006 = pneg %p1005
    $region52: #{discriminator_forward.6} parent=5 // pred_check_branch
      %1008 = sbr.rel (%p1006) target = $region54
    $region53: #{discriminator_forward.6} parent=5 // pred_region
      %s1009 = ssub.s32 %s9, 2
      // Predicated region
      $region55: #{discriminator_forward.6} parent=53 // pred_check
        %p1010 = pneg %p106
      $region56: #{discriminator_forward.6} parent=53 // pred_check_branch
        %1012 = sbr.rel (%p1010) target = $region58
      $region57: #{discriminator_forward.6} parent=53 // pred_region
        %p1013 = scmp.lt.s32.totalorder %s15, 1
        %s1014 = scalar_select %p1013, %s15, 1
        %s1015 = smul.addr %s1014, 4
        %s1016 = smul.addr %s1015, 2
        %s1017 = scalar_lea.vmem %s3, %s1016
      $region58: #{discriminator_forward.6} parent=53 // pred_fallthru
        _
    $region54: #{discriminator_forward.6} parent=5 // pred_fallthru
      _
  $region6: #{discriminator_forward.6} parent=0 // loop_footer
    %s13 = sadd.s32 1, %s9
  $region7: #{discriminator_forward.6} parent=0 // loop_footer_branch
    %8 = sbr.rel target = $region3
  $region8: #{discriminator_forward.6} parent=0 // loop_exit
    _

// kernel: discriminator_forward.7
$region0: #{discriminator_forward.7}
  #allocation0 [shape = 'u32[]', space=smem, size = 0x4, offset = 0x4, fixed_abs, tag = 'smem constant byte address 0x4 - core index']
  #allocation1 [shape = 'u32[144,128]{1,0:T(1,128)}', space=vmem, size = 0x12000, scoped, tag = 'internal scratch']
  #allocation2 [shape = 'f32[2,2,256]{2,1,0:T(2,128)}', space=vmem, size = 0x1000, scoped, tag = 'scratch operand']
  #allocation3 [shape = 'f32[1,256]{1,0:T(1,128)}', space=vmem, size = 0x400, scoped, tag = 'scratch operand']
  #allocation4 [shape = 'f32[1,256]{1,0:T(1,128)}', space=vmem, size = 0x400, scoped, tag = 'scratch operand']
  #allocation5 [shape = 'f32[5,5,256]{2,1,0:T(8,128)}', space=vmem, size = 0xa000, scoped, tag = 'scratch operand']
  %s0 = inlined_call_operand.vmem [shape: bf16[2,3,3,512], index: 0, kind: input, shape index: {}]
  %s1 = inlined_call_operand.vmem [shape: bf16[4,512,256], index: 1, kind: input, shape index: {}]
  %s2 = inlined_call_operand.vmem [shape: f32[1,256], index: 2, kind: input, shape index: {}]
  %s3 = inlined_call_operand.vmem [shape: bf16[16,256,128], index: 3, kind: input, shape index: {}]
  %s4 = inlined_call_operand.vmem [shape: f32[2,2,2,128], index: 4, kind: output, shape index: {}]
  %s5 = sld [smem:[#allocation0]]
  $region70: #{discriminator_forward.7} parent=0
    _
  %s7 = ssub.s32 1, %s5
  %s8 = scalar_select 0, %s7, %s5
  loop: start=0, step=1, limit=4
  $region2: #{discriminator_forward.7} parent=0 // loop_pre_header
    _
  $region3: #{discriminator_forward.7} parent=0 // loop_header
    %s10 = sphi 0, %s14
    %p11 = scmp.ge.s32.totalorder %s10, 4
    %s20 = sphi 0, %s22
    %s23 = sphi 0, %s20
    %s24 = sphi 0, %s23
    %s40 = sphi 0, %s24
    %s44 = sphi 0, %s44
    %s46 = sphi 0, %s44
    %s47 = sphi 0, %s46
    %s61 = sphi 0, %s47
    %s65 = sphi 0, %s65
    %s67 = sphi 0, %s65
    %s68 = sphi 0, %s67
    %s82 = sphi 0, %s68
    %s86 = sphi 0, %s86
    %s88 = sphi 0, %s86
    %s89 = sphi 0, %s88
    %s103 = sphi 0, %s89
    %s109 = sphi 0, %s111
    %s112 = sphi 0, %s109
    %s113 = sphi 0, %s112
    %s129 = sphi 0, %s113
  $region4: #{discriminator_forward.7} parent=0 // loop_header_branch
    %13 = sbr.rel (%p11) target = $region8
  $region5: #{discriminator_forward.7} parent=0 // loop_body
    %s15 = ssub.s32 %s10, 1
    %s16 = ssub.s32 %s10, 2
    %s17 = sadd.s32 %s10, 1
    %s18 = ssub.s32 %s10, %s17
    %p19 = scmp.eq.s32.totalorder %s18, 0
    %s21 = sadd.s32 %s20, 1
    %s22 = scalar_select %p19, %s20, %s21
    %p25 = pneg %p19
    %p26 = scmp.eq.s32.totalorder %s10, 1
    %p27 = por %p25, %p26
    %p28 = scmp.ne.s32.totalorder %s20, %s23
    %p29 = scmp.eq.s32.totalorder %s10, 0
    %p30 = por %p28, %p29
    %p31 = scmp.ne.s32.totalorder %s20, %s23
    %p32 = scmp.eq.s32.totalorder %s15, 1
    %p33 = por %p31, %p32
    %p34 = scmp.ne.s32.totalorder %s23, %s24
    %p35 = scmp.eq.s32.totalorder %s15, 0
    %p36 = por %p34, %p35
    %p37 = scmp.ne.s32.totalorder %s23, %s24
    %p38 = scmp.eq.s32.totalorder %s16, 1
    %p39 = por %p37, %p38
    %p41 = scmp.ne.s32.totalorder %s24, %s40
    %p42 = scmp.eq.s32.totalorder %s16, 0
    %p43 = por %p41, %p42
    %s45 = sadd.s32 %s44, 1
    %p48 = scmp.eq.s32.totalorder %s10, 1
    %p49 = scmp.ne.s32.totalorder %s44, %s46
    %p50 = scmp.eq.s32.totalorder %s10, 0
    %p51 = por %p49, %p50
    %p52 = scmp.ne.s32.totalorder %s44, %s46
    %p53 = scmp.eq.s32.totalorder %s15, 1
    %p54 = por %p52, %p53
    %p55 = scmp.ne.s32.totalorder %s46, %s47
    %p56 = scmp.eq.s32.totalorder %s15, 0
    %p57 = por %p55, %p56
    %p58 = scmp.ne.s32.totalorder %s46, %s47
    %p59 = scmp.eq.s32.totalorder %s16, 1
    %p60 = por %p58, %p59
    %p62 = scmp.ne.s32.totalorder %s47, %s61
    %p63 = scmp.eq.s32.totalorder %s16, 0
    %p64 = por %p62, %p63
    %s66 = sadd.s32 %s65, 1
    %p69 = scmp.eq.s32.totalorder %s10, 1
    %p70 = scmp.ne.s32.totalorder %s65, %s67
    %p71 = scmp.eq.s32.totalorder %s10, 0
    %p72 = por %p70, %p71
    %p73 = scmp.ne.s32.totalorder %s65, %s67
    %p74 = scmp.eq.s32.totalorder %s15, 1
    %p75 = por %p73, %p74
    %p76 = scmp.ne.s32.totalorder %s67, %s68
    %p77 = scmp.eq.s32.totalorder %s15, 0
    %p78 = por %p76, %p77
    %p79 = scmp.ne.s32.totalorder %s67, %s68
    %p80 = scmp.eq.s32.totalorder %s16, 1
    %p81 = por %p79, %p80
    %p83 = scmp.ne.s32.totalorder %s68, %s82
    %p84 = scmp.eq.s32.totalorder %s16, 0
    %p85 = por %p83, %p84
    %s87 = sadd.s32 %s86, 1
    %p90 = scmp.eq.s32.totalorder %s10, 1
    %p91 = scmp.ne.s32.totalorder %s86, %s88
    %p92 = scmp.eq.s32.totalorder %s10, 0
    %p93 = por %p91, %p92
    %p94 = scmp.ne.s32.totalorder %s86, %s88
    %p95 = scmp.eq.s32.totalorder %s15, 1
    %p96 = por %p94, %p95
    %p97 = scmp.ne.s32.totalorder %s88, %s89
    %p98 = scmp.eq.s32.totalorder %s15, 0
    %p99 = por %p97, %p98
    %p100 = scmp.ne.s32.totalorder %s88, %s89
    %p101 = scmp.eq.s32.totalorder %s16, 1
    %p102 = por %p100, %p101
    %p104 = scmp.ne.s32.totalorder %s89, %s103
    %p105 = scmp.eq.s32.totalorder %s16, 0
    %p106 = por %p104, %p105
    %s107 = ssub.s32 %s10, %s17
    %p108 = scmp.eq.s32.totalorder %s107, 0
    %s110 = sadd.s32 %s109, 1
    %s111 = scalar_select %p108, %s109, %s110
    %p114 = pneg %p108
    %p115 = scmp.eq.s32.totalorder %s10, 1
    %p116 = por %p114, %p115
    %p117 = scmp.ne.s32.totalorder %s109, %s112
    %p118 = scmp.eq.s32.totalorder %s10, 0
    %p119 = por %p117, %p118
    %p120 = scmp.ne.s32.totalorder %s109, %s112
    %p121 = scmp.eq.s32.totalorder %s15, 1
    %p122 = por %p120, %p121
    %p123 = scmp.ne.s32.totalorder %s112, %s113
    %p124 = scmp.eq.s32.totalorder %s15, 0
    %p125 = por %p123, %p124
    %p126 = scmp.ne.s32.totalorder %s112, %s113
    %p127 = scmp.eq.s32.totalorder %s16, 1
    %p128 = por %p126, %p127
    %p130 = scmp.ne.s32.totalorder %s113, %s129
    %p131 = scmp.eq.s32.totalorder %s16, 0
    %p132 = por %p130, %p131
    %p133 = scmp.le.s32.totalorder 1, %s10
    %p134 = scmp.lt.s32.totalorder %s10, 3
    %p135 = pnand %p133, %p134
    %p136 = pneg %p135
    // Predicated region
    $region9: #{discriminator_forward.7} parent=5 // pred_check
      _
    $region10: #{discriminator_forward.7} parent=5 // pred_check_branch
      %138 = sbr.rel (%p135) target = $region12
    $region11: #{discriminator_forward.7} parent=5 // pred_region
      %s139 = ssub.s32 %s10, 1
      // Predicated region
      $region13: #{discriminator_forward.7} parent=11 // pred_check
        %p140 = pneg %p57
      $region14: #{discriminator_forward.7} parent=11 // pred_check_branch
        %142 = sbr.rel (%p140) target = $region16
      $region15: #{discriminator_forward.7} parent=11 // pred_region
        _
      $region16: #{discriminator_forward.7} parent=11 // pred_fallthru
        _
      // Predicated region
      $region17: #{discriminator_forward.7} parent=11 // pred_check
        %p143 = pneg %p78
      $region18: #{discriminator_forward.7} parent=11 // pred_check_branch
        %145 = sbr.rel (%p143) target = $region20
      $region19: #{discriminator_forward.7} parent=11 // pred_region
        _
      $region20: #{discriminator_forward.7} parent=11 // pred_fallthru
        _
      // Predicated region
      $region21: #{discriminator_forward.7} parent=11 // pred_check
        %p146 = pneg %p99
      $region22: #{discriminator_forward.7} parent=11 // pred_check_branch
        %148 = sbr.rel (%p146) target = $region24
      $region23: #{discriminator_forward.7} parent=11 // pred_region
        _
      $region24: #{discriminator_forward.7} parent=11 // pred_fallthru
        _
    $region12: #{discriminator_forward.7} parent=5 // pred_fallthru
      _
    %p149 = scmp.lt.s32.totalorder %s10, 2
    // Predicated region
    $region25: #{discriminator_forward.7} parent=5 // pred_check
      %p150 = pneg %p149
    $region26: #{discriminator_forward.7} parent=5 // pred_check_branch
      %152 = sbr.rel (%p150) target = $region28
    $region27: #{discriminator_forward.7} parent=5 // pred_region
      // Predicated region
      $region29: #{discriminator_forward.7} parent=27 // pred_check
        %p153 = pneg %p30
      $region30: #{discriminator_forward.7} parent=27 // pred_check_branch
        %155 = sbr.rel (%p153) target = $region32
      $region31: #{discriminator_forward.7} parent=27 // pred_region
        %p156 = scmp.lt.s32.totalorder %s10, 1
        %s157 = scalar_select %p156, %s10, 1
        %s158 = smul.addr %s157, 12
        %s159 = smul.addr %s158, 2
        %s160 = scalar_lea.vmem %s0, %s159
      $region32: #{discriminator_forward.7} parent=27 // pred_fallthru
        _
    $region28: #{discriminator_forward.7} parent=5 // pred_fallthru
      _
    %p161 = scmp.le.s32.totalorder 1, %s10
    %p162 = scmp.lt.s32.totalorder %s10, 3
    %p163 = pnand %p161, %p162
    %p164 = pneg %p163
    // Predicated region
    $region33: #{discriminator_forward.7} parent=5 // pred_check
      _
    $region34: #{discriminator_forward.7} parent=5 // pred_check_branch
      %166 = sbr.rel (%p163) target = $region36
    $region35: #{discriminator_forward.7} parent=5 // pred_region
      %s167 = ssub.s32 %s10, 1
      %p168 = scmp.lt.s32.totalorder %s15, 1
      %s169 = scalar_select %p168, %s15, 1
      %s170 = smul.addr %s169, 12
      %s171 = smul.addr %s170, 2
      %s172 = scalar_lea.vmem %s0, %s171
      %p173 = pneg %p36
      %p174 = pneg %p33
      %p175 = pneg %p57
      %p176 = pneg %p54
      %p177 = pneg %p78
      %p178 = pneg %p75
      %p179 = pneg %p99
      %p180 = pneg %p96
      %p181 = pneg %p125
      %p182 = pneg %p122
      %p183 = scmp.lt.s32.totalorder %s15, 1
      %s184 = scalar_select %p183, %s15, 1
      %s185 = smul.addr %s184, 2
      %s186 = smul.addr %s185, 2
      %s187 = scalar_lea.vmem %s4, %s186
      %p188 = scmp.lt.s32.totalorder %s15, 1
      %s189 = scalar_select %p188, %s15, 1
      %s190 = smul.addr %s189, 12
      %s191 = smul.addr %s190, 2
      %s192 = scalar_lea.vmem %s0, %s191
      %p193 = scmp.lt.s32.totalorder %s15, 1
      %s194 = scalar_select %p193, %s15, 1
      %s195 = smul.addr %s194, 2
      %s196 = smul.addr %s195, 2
      %s197 = scalar_lea.vmem %s4, %s196
      %v199 = vld [vmem:[%s2] sm:$0x3]
      %v200 = vlaneseq
      %vm201 = vcmp.ge.s32.totalorder %v200, 0
      %vm202 = vcmp.lt.s32.totalorder %v200, 256
      %vm203 = vmand %vm201, %vm202
      %204 = vst.msk [vmem:[#allocation3] sm:$0x3] %vm203, 0.0
      %205 = vst.msk [vmem:[#allocation4] sm:$0x3] %vm203, 0.0
      loop: start=0, step=1, limit=2
      $region37: #{discriminator_forward.7} parent=35 // loop_pre_header
        _
      $region38: #{discriminator_forward.7} parent=35 // loop_header
        %s207 = sphi 0, %s211
        %p208 = scmp.ge.s32.totalorder %s207, 2
      $region39: #{discriminator_forward.7} parent=35 // loop_header_branch
        %210 = sbr.rel (%p208) target = $region43
      $region40: #{discriminator_forward.7} parent=35 // loop_body
        %s212 = smul.u32 %s207, 4
        %s213 = smul.addr %s212, 2
        %s214 = scalar_lea.vmem %s192, %s213
        %v215 = vld [vmem:[%s214] sm:$0x55]
        %v216 = vld [vmem:[%s1] sm:$0xff]
        %v217 = vld [vmem:[%s1 + $0x8] sm:$0xff]
        %v218 = vld [vmem:[%s1 + $0x10] sm:$0xff]
        %v219 = vld [vmem:[%s1 + $0x18] sm:$0xff]
        %v220 = vld [vmem:[%s1 + $0x20] sm:$0xff]
        %v221 = vld [vmem:[%s1 + $0x28] sm:$0xff]
        %v222 = vld [vmem:[%s1 + $0x30] sm:$0xff]
        %v223 = vld [vmem:[%s1 + $0x38] sm:$0xff]
        %v224 = vld [vmem:[%s1 + $0x40] sm:$0xff]
        %v225 = vld [vmem:[%s1 + $0x48] sm:$0xff]
        %v226 = vld [vmem:[%s1 + $0x50] sm:$0xff]
        %v227 = vld [vmem:[%s1 + $0x58] sm:$0xff]
        %v228 = vld [vmem:[%s1 + $0x60] sm:$0xff]
        %v229 = vld [vmem:[%s1 + $0x68] sm:$0xff]
        %v230 = vld [vmem:[%s1 + $0x70] sm:$0xff]
        %v231 = vld [vmem:[%s1 + $0x78] sm:$0xff]
        %v232 = vld [vmem:[%s1 + $0x80] sm:$0xff]
        %v233 = vld [vmem:[%s1 + $0x88] sm:$0xff]
        %v234 = vld [vmem:[%s1 + $0x90] sm:$0xff]
        %v235 = vld [vmem:[%s1 + $0x98] sm:$0xff]
        %v236 = vld [vmem:[%s1 + $0xa0] sm:$0xff]
        %v237 = vld [vmem:[%s1 + $0xa8] sm:$0xff]
        %v238 = vld [vmem:[%s1 + $0xb0] sm:$0xff]
        %v239 = vld [vmem:[%s1 + $0xb8] sm:$0xff]
        %v240 = vld [vmem:[%s1 + $0xc0] sm:$0xff]
        %v241 = vld [vmem:[%s1 + $0xc8] sm:$0xff]
        %v242 = vld [vmem:[%s1 + $0xd0] sm:$0xff]
        %v243 = vld [vmem:[%s1 + $0xd8] sm:$0xff]
        %v244 = vld [vmem:[%s1 + $0xe0] sm:$0xff]
        %v245 = vld [vmem:[%s1 + $0xe8] sm:$0xff]
        %v246 = vld [vmem:[%s1 + $0xf0] sm:$0xff]
        %v247 = vld [vmem:[%s1 + $0xf8] sm:$0xff]
        %v248 = vld [vmem:[%s1 + $0x100] sm:$0xff]
        %v249 = vld [vmem:[%s1 + $0x108] sm:$0xff]
        %v250 = vld [vmem:[%s1 + $0x110] sm:$0xff]
        %v251 = vld [vmem:[%s1 + $0x118] sm:$0xff]
        %v252 = vld [vmem:[%s1 + $0x120] sm:$0xff]
        %v253 = vld [vmem:[%s1 + $0x128] sm:$0xff]
        %v254 = vld [vmem:[%s1 + $0x130] sm:$0xff]
        %v255 = vld [vmem:[%s1 + $0x138] sm:$0xff]
        %v256 = vld [vmem:[%s1 + $0x140] sm:$0xff]
        %v257 = vld [vmem:[%s1 + $0x148] sm:$0xff]
        %v258 = vld [vmem:[%s1 + $0x150] sm:$0xff]
        %v259 = vld [vmem:[%s1 + $0x158] sm:$0xff]
        %v260 = vld [vmem:[%s1 + $0x160] sm:$0xff]
        %v261 = vld [vmem:[%s1 + $0x168] sm:$0xff]
        %v262 = vld [vmem:[%s1 + $0x170] sm:$0xff]
        %v263 = vld [vmem:[%s1 + $0x178] sm:$0xff]
        %v264 = vld [vmem:[%s1 + $0x180] sm:$0xff]
        %v265 = vld [vmem:[%s1 + $0x188] sm:$0xff]
        %v266 = vld [vmem:[%s1 + $0x190] sm:$0xff]
        %v267 = vld [vmem:[%s1 + $0x198] sm:$0xff]
        %v268 = vld [vmem:[%s1 + $0x1a0] sm:$0xff]
        %v269 = vld [vmem:[%s1 + $0x1a8] sm:$0xff]
        %v270 = vld [vmem:[%s1 + $0x1b0] sm:$0xff]
        %v271 = vld [vmem:[%s1 + $0x1b8] sm:$0xff]
        %v272 = vld [vmem:[%s1 + $0x1c0] sm:$0xff]
        %v273 = vld [vmem:[%s1 + $0x1c8] sm:$0xff]
        %v274 = vld [vmem:[%s1 + $0x1d0] sm:$0xff]
        %v275 = vld [vmem:[%s1 + $0x1d8] sm:$0xff]
        %v276 = vld [vmem:[%s1 + $0x1e0] sm:$0xff]
        %v277 = vld [vmem:[%s1 + $0x1e8] sm:$0xff]
        %v278 = vld [vmem:[%s1 + $0x1f0] sm:$0xff]
        %v279 = vld [vmem:[%s1 + $0x1f8] sm:$0xff]
        %v280 = vld [vmem:[%s214] sm:$0xff]
        %s281 = scalar_lea.vmem %s1, 512
        %v282 = vld [vmem:[%s281] sm:$0xff]
        %v283 = vld [vmem:[%s281 + $0x8] sm:$0xff]
        %v284 = vld [vmem:[%s281 + $0x10] sm:$0xff]
        %v285 = vld [vmem:[%s281 + $0x18] sm:$0xff]
        %v286 = vld [vmem:[%s281 + $0x20] sm:$0xff]
        %v287 = vld [vmem:[%s281 + $0x28] sm:$0xff]
        %v288 = vld [vmem:[%s281 + $0x30] sm:$0xff]
        %v289 = vld [vmem:[%s281 + $0x38] sm:$0xff]
        %v290 = vld [vmem:[%s281 + $0x40] sm:$0xff]
        %v291 = vld [vmem:[%s281 + $0x48] sm:$0xff]
        %v292 = vld [vmem:[%s281 + $0x50] sm:$0xff]
        %v293 = vld [vmem:[%s281 + $0x58] sm:$0xff]
        %v294 = vld [vmem:[%s281 + $0x60] sm:$0xff]
        %v295 = vld [vmem:[%s281 + $0x68] sm:$0xff]
        %v296 = vld [vmem:[%s281 + $0x70] sm:$0xff]
        %v297 = vld [vmem:[%s281 + $0x78] sm:$0xff]
        %v298 = vld [vmem:[%s281 + $0x80] sm:$0xff]
        %v299 = vld [vmem:[%s281 + $0x88] sm:$0xff]
        %v300 = vld [vmem:[%s281 + $0x90] sm:$0xff]
        %v301 = vld [vmem:[%s281 + $0x98] sm:$0xff]
        %v302 = vld [vmem:[%s281 + $0xa0] sm:$0xff]
        %v303 = vld [vmem:[%s281 + $0xa8] sm:$0xff]
        %v304 = vld [vmem:[%s281 + $0xb0] sm:$0xff]
        %v305 = vld [vmem:[%s281 + $0xb8] sm:$0xff]
        %v306 = vld [vmem:[%s281 + $0xc0] sm:$0xff]
        %v307 = vld [vmem:[%s281 + $0xc8] sm:$0xff]
        %v308 = vld [vmem:[%s281 + $0xd0] sm:$0xff]
        %v309 = vld [vmem:[%s281 + $0xd8] sm:$0xff]
        %v310 = vld [vmem:[%s281 + $0xe0] sm:$0xff]
        %v311 = vld [vmem:[%s281 + $0xe8] sm:$0xff]
        %v312 = vld [vmem:[%s281 + $0xf0] sm:$0xff]
        %v313 = vld [vmem:[%s281 + $0xf8] sm:$0xff]
        %v314 = vld [vmem:[%s281 + $0x100] sm:$0xff]
        %v315 = vld [vmem:[%s281 + $0x108] sm:$0xff]
        %v316 = vld [vmem:[%s281 + $0x110] sm:$0xff]
        %v317 = vld [vmem:[%s281 + $0x118] sm:$0xff]
        %v318 = vld [vmem:[%s281 + $0x120] sm:$0xff]
        %v319 = vld [vmem:[%s281 + $0x128] sm:$0xff]
        %v320 = vld [vmem:[%s281 + $0x130] sm:$0xff]
        %v321 = vld [vmem:[%s281 + $0x138] sm:$0xff]
        %v322 = vld [vmem:[%s281 + $0x140] sm:$0xff]
        %v323 = vld [vmem:[%s281 + $0x148] sm:$0xff]
        %v324 = vld [vmem:[%s281 + $0x150] sm:$0xff]
        %v325 = vld [vmem:[%s281 + $0x158] sm:$0xff]
        %v326 = vld [vmem:[%s281 + $0x160] sm:$0xff]
        %v327 = vld [vmem:[%s281 + $0x168] sm:$0xff]
        %v328 = vld [vmem:[%s281 + $0x170] sm:$0xff]
        %v329 = vld [vmem:[%s281 + $0x178] sm:$0xff]
        %v330 = vld [vmem:[%s281 + $0x180] sm:$0xff]
        %v331 = vld [vmem:[%s281 + $0x188] sm:$0xff]
        %v332 = vld [vmem:[%s281 + $0x190] sm:$0xff]
        %v333 = vld [vmem:[%s281 + $0x198] sm:$0xff]
        %v334 = vld [vmem:[%s281 + $0x1a0] sm:$0xff]
        %v335 = vld [vmem:[%s281 + $0x1a8] sm:$0xff]
        %v336 = vld [vmem:[%s281 + $0x1b0] sm:$0xff]
        %v337 = vld [vmem:[%s281 + $0x1b8] sm:$0xff]
        %v338 = vld [vmem:[%s281 + $0x1c0] sm:$0xff]
        %v339 = vld [vmem:[%s281 + $0x1c8] sm:$0xff]
        %v340 = vld [vmem:[%s281 + $0x1d0] sm:$0xff]
        %v341 = vld [vmem:[%s281 + $0x1d8] sm:$0xff]
        %v342 = vld [vmem:[%s281 + $0x1e0] sm:$0xff]
        %v343 = vld [vmem:[%s281 + $0x1e8] sm:$0xff]
        %v344 = vld [vmem:[%s281 + $0x1f0] sm:$0xff]
        %v345 = vld [vmem:[%s281 + $0x1f8] sm:$0xff]
        %v347 = vcombine.high %v280, %v280
        %v349 = vunpack.c.l.s4 1983009808
        %v350 = vunpack.c.0.s8 %v349
        %v351 = vlaneseq
        %v352 = vshrl.u32 %v351, 7
        %v353 = vsub.s32 %v350, %v352
        %v354 = vrot.slane %v280, %v353
        %v356 = vunpack.c.l.s4 1983009808
        %v357 = vunpack.c.0.s8 %v356
        %v358 = vlaneseq
        %v359 = vshrl.u32 %v358, 7
        %v360 = vsub.s32 %v357, %v359
        %v361 = vrot.slane %v347, %v360
        %v362 = vcombine.high %v354, %v354
        %v363 = vcombine.high %v361, %v361
        %v365 = vshrl.u32 %v354, 16
        %v367 = vshll.u32 %v354, 16
        %v369 = vrot.slane %v367, 1
        %v370 = vor.u32 %v365, %v369
        %v372 = vshrl.u32 %v362, 16
        %v374 = vshll.u32 %v362, 16
        %v376 = vrot.slane %v374, 1
        %v377 = vor.u32 %v372, %v376
        %v379 = vshrl.u32 %v361, 16
        %v381 = vshll.u32 %v361, 16
        %v383 = vrot.slane %v381, 1
        %v384 = vor.u32 %v379, %v383
        %v386 = vshrl.u32 %v363, 16
        %v388 = vshll.u32 %v363, 16
        %v390 = vrot.slane %v388, 1
        %v391 = vor.u32 %v386, %v390
        %v460 = vunpack.c.l.b16 %v282
        %v461 = vunpack.c.h.b16 %v282
        %v462 = vunpack.c.l.b16 %v283
        %v463 = vunpack.c.h.b16 %v283
        %v464 = vunpack.c.l.b16 %v284
        %v465 = vunpack.c.h.b16 %v284
        %v466 = vunpack.c.l.b16 %v285
        %v467 = vunpack.c.h.b16 %v285
        %v468 = vunpack.c.l.b16 %v286
        %v469 = vunpack.c.h.b16 %v286
        %v470 = vunpack.c.l.b16 %v287
        %v471 = vunpack.c.h.b16 %v287
        %v472 = vunpack.c.l.b16 %v288
        %v473 = vunpack.c.h.b16 %v288
        %v474 = vunpack.c.l.b16 %v289
        %v475 = vunpack.c.h.b16 %v289
        %v476 = vunpack.c.l.b16 %v290
        %v477 = vunpack.c.h.b16 %v290
        %v478 = vunpack.c.l.b16 %v291
        %v479 = vunpack.c.h.b16 %v291
        %v480 = vunpack.c.l.b16 %v292
        %v481 = vunpack.c.h.b16 %v292
        %v482 = vunpack.c.l.b16 %v293
        %v483 = vunpack.c.h.b16 %v293
        %v484 = vunpack.c.l.b16 %v294
        %v485 = vunpack.c.h.b16 %v294
        %v486 = vunpack.c.l.b16 %v295
        %v487 = vunpack.c.h.b16 %v295
        %v488 = vunpack.c.l.b16 %v296
        %v489 = vunpack.c.h.b16 %v296
        %v490 = vunpack.c.l.b16 %v297
        %v491 = vunpack.c.h.b16 %v297
        %v492 = vunpack.c.l.b16 %v298
        %v493 = vunpack.c.h.b16 %v298
        %v494 = vunpack.c.l.b16 %v299
        %v495 = vunpack.c.h.b16 %v299
        %v496 = vunpack.c.l.b16 %v300
        %v497 = vunpack.c.h.b16 %v300
        %v498 = vunpack.c.l.b16 %v301
        %v499 = vunpack.c.h.b16 %v301
        %v500 = vunpack.c.l.b16 %v302
        %v501 = vunpack.c.h.b16 %v302
        %v502 = vunpack.c.l.b16 %v303
        %v503 = vunpack.c.h.b16 %v303
        %v504 = vunpack.c.l.b16 %v304
        %v505 = vunpack.c.h.b16 %v304
        %v506 = vunpack.c.l.b16 %v305
        %v507 = vunpack.c.h.b16 %v305
        %v508 = vunpack.c.l.b16 %v306
        %v509 = vunpack.c.h.b16 %v306
        %v510 = vunpack.c.l.b16 %v307
        %v511 = vunpack.c.h.b16 %v307
        %v512 = vunpack.c.l.b16 %v308
        %v513 = vunpack.c.h.b16 %v308
        %v514 = vunpack.c.l.b16 %v309
        %v515 = vunpack.c.h.b16 %v309
        %v516 = vunpack.c.l.b16 %v310
        %v517 = vunpack.c.h.b16 %v310
        %v518 = vunpack.c.l.b16 %v311
        %v519 = vunpack.c.h.b16 %v311
        %v520 = vunpack.c.l.b16 %v312
        %v521 = vunpack.c.h.b16 %v312
        %v522 = vunpack.c.l.b16 %v313
        %v523 = vunpack.c.h.b16 %v313
        %v524 = vunpack.c.l.b16 %v314
        %v525 = vunpack.c.h.b16 %v314
        %v526 = vunpack.c.l.b16 %v315
        %v527 = vunpack.c.h.b16 %v315
        %v528 = vunpack.c.l.b16 %v316
        %v529 = vunpack.c.h.b16 %v316
        %v530 = vunpack.c.l.b16 %v317
        %v531 = vunpack.c.h.b16 %v317
        %v532 = vunpack.c.l.b16 %v318
        %v533 = vunpack.c.h.b16 %v318
        %v534 = vunpack.c.l.b16 %v319
        %v535 = vunpack.c.h.b16 %v319
        %v536 = vunpack.c.l.b16 %v320
        %v537 = vunpack.c.h.b16 %v320
        %v538 = vunpack.c.l.b16 %v321
        %v539 = vunpack.c.h.b16 %v321
        %v540 = vunpack.c.l.b16 %v322
        %v541 = vunpack.c.h.b16 %v322
        %v542 = vunpack.c.l.b16 %v323
        %v543 = vunpack.c.h.b16 %v323
        %v544 = vunpack.c.l.b16 %v324
        %v545 = vunpack.c.h.b16 %v324
        %v546 = vunpack.c.l.b16 %v325
        %v547 = vunpack.c.h.b16 %v325
        %v548 = vunpack.c.l.b16 %v326
        %v549 = vunpack.c.h.b16 %v326
        %v550 = vunpack.c.l.b16 %v327
        %v551 = vunpack.c.h.b16 %v327
        %v552 = vunpack.c.l.b16 %v328
        %v553 = vunpack.c.h.b16 %v328
        %v554 = vunpack.c.l.b16 %v329
        %v555 = vunpack.c.h.b16 %v329
        %v556 = vunpack.c.l.b16 %v330
        %v557 = vunpack.c.h.b16 %v330
        %v558 = vunpack.c.l.b16 %v331
        %v559 = vunpack.c.h.b16 %v331
        %v560 = vunpack.c.l.b16 %v332
        %v561 = vunpack.c.h.b16 %v332
        %v562 = vunpack.c.l.b16 %v333
        %v563 = vunpack.c.h.b16 %v333
        %v564 = vunpack.c.l.b16 %v334
        %v565 = vunpack.c.h.b16 %v334
        %v566 = vunpack.c.l.b16 %v335
        %v567 = vunpack.c.h.b16 %v335
        %v568 = vunpack.c.l.b16 %v336
        %v569 = vunpack.c.h.b16 %v336
        %v570 = vunpack.c.l.b16 %v337
        %v571 = vunpack.c.h.b16 %v337
        %v572 = vunpack.c.l.b16 %v338
        %v573 = vunpack.c.h.b16 %v338
        %v574 = vunpack.c.l.b16 %v339
        %v575 = vunpack.c.h.b16 %v339
        %v576 = vunpack.c.l.b16 %v340
        %v577 = vunpack.c.h.b16 %v340
        %v578 = vunpack.c.l.b16 %v341
        %v579 = vunpack.c.h.b16 %v341
        %v580 = vunpack.c.l.b16 %v342
        %v581 = vunpack.c.h.b16 %v342
        %v582 = vunpack.c.l.b16 %v343
        %v583 = vunpack.c.h.b16 %v343
        %v584 = vunpack.c.l.b16 %v344
        %v585 = vunpack.c.h.b16 %v344
        %v586 = vunpack.c.l.b16 %v345
        %v587 = vunpack.c.h.b16 %v345
        %v588 = vpack.c.b16 %v462, %v460
        %v589 = vpack.c.b16 %v463, %v461
        %v590 = vpack.c.b16 %v466, %v464
        %v591 = vpack.c.b16 %v467, %v465
        %v592 = vpack.c.b16 %v470, %v468
        %v593 = vpack.c.b16 %v471, %v469
        %v594 = vpack.c.b16 %v474, %v472
        %v595 = vpack.c.b16 %v475, %v473
        %v596 = vpack.c.b16 %v478, %v476
        %v597 = vpack.c.b16 %v479, %v477
        %v598 = vpack.c.b16 %v482, %v480
        %v599 = vpack.c.b16 %v483, %v481
        %v600 = vpack.c.b16 %v486, %v484
        %v601 = vpack.c.b16 %v487, %v485
        %v602 = vpack.c.b16 %v490, %v488
        %v603 = vpack.c.b16 %v491, %v489
        %v604 = vpack.c.b16 %v494, %v492
        %v605 = vpack.c.b16 %v495, %v493
        %v606 = vpack.c.b16 %v498, %v496
        %v607 = vpack.c.b16 %v499, %v497
        %v608 = vpack.c.b16 %v502, %v500
        %v609 = vpack.c.b16 %v503, %v501
        %v610 = vpack.c.b16 %v506, %v504
        %v611 = vpack.c.b16 %v507, %v505
        %v612 = vpack.c.b16 %v510, %v508
        %v613 = vpack.c.b16 %v511, %v509
        %v614 = vpack.c.b16 %v514, %v512
        %v615 = vpack.c.b16 %v515, %v513
        %v616 = vpack.c.b16 %v518, %v516
        %v617 = vpack.c.b16 %v519, %v517
        %v618 = vpack.c.b16 %v522, %v520
        %v619 = vpack.c.b16 %v523, %v521
        %v620 = vpack.c.b16 %v526, %v524
        %v621 = vpack.c.b16 %v527, %v525
        %v622 = vpack.c.b16 %v530, %v528
        %v623 = vpack.c.b16 %v531, %v529
        %v624 = vpack.c.b16 %v534, %v532
        %v625 = vpack.c.b16 %v535, %v533
        %v626 = vpack.c.b16 %v538, %v536
        %v627 = vpack.c.b16 %v539, %v537
        %v628 = vpack.c.b16 %v542, %v540
        %v629 = vpack.c.b16 %v543, %v541
        %v630 = vpack.c.b16 %v546, %v544
        %v631 = vpack.c.b16 %v547, %v545
        %v632 = vpack.c.b16 %v550, %v548
        %v633 = vpack.c.b16 %v551, %v549
        %v634 = vpack.c.b16 %v554, %v552
        %v635 = vpack.c.b16 %v555, %v553
        %v636 = vpack.c.b16 %v558, %v556
        %v637 = vpack.c.b16 %v559, %v557
        %v638 = vpack.c.b16 %v562, %v560
        %v639 = vpack.c.b16 %v563, %v561
        %v640 = vpack.c.b16 %v566, %v564
        %v641 = vpack.c.b16 %v567, %v565
        %v642 = vpack.c.b16 %v570, %v568
        %v643 = vpack.c.b16 %v571, %v569
        %v644 = vpack.c.b16 %v574, %v572
        %v645 = vpack.c.b16 %v575, %v573
        %v646 = vpack.c.b16 %v578, %v576
        %v647 = vpack.c.b16 %v579, %v577
        %v648 = vpack.c.b16 %v582, %v580
        %v649 = vpack.c.b16 %v583, %v581
        %v650 = vpack.c.b16 %v586, %v584
        %v651 = vpack.c.b16 %v587, %v585
        %716 = vmatprep.subr.bf16.mxu0 %v589
        %717 = vmatpush1.bf16.msra.mxu0 %v588
        %718 = vmatprep.subr.bf16.mxu0 %v591
        %719 = vmatpush1.bf16.msra.mxu0 %v590
        %720 = vmatprep.subr.bf16.mxu0 %v593
        %721 = vmatpush1.bf16.msra.mxu0 %v592
        %722 = vmatprep.subr.bf16.mxu0 %v595
        %723 = vmatpush1.bf16.msra.mxu0 %v594
        %724 = vmatprep.subr.bf16.mxu0 %v597
        %725 = vmatpush1.bf16.msra.mxu0 %v596
        %726 = vmatprep.subr.bf16.mxu0 %v599
        %727 = vmatpush1.bf16.msra.mxu0 %v598
        %728 = vmatprep.subr.bf16.mxu0 %v601
        %729 = vmatpush1.bf16.msra.mxu0 %v600
        %730 = vmatprep.subr.bf16.mxu0 %v603
        %731 = vmatpush1.bf16.msra.mxu0 %v602
        %732 = vmatprep.subr.bf16.mxu0 %v605
        %733 = vmatpush1.bf16.msra.mxu0 %v604
        %734 = vmatprep.subr.bf16.mxu0 %v607
        %735 = vmatpush1.bf16.msra.mxu0 %v606
        %736 = vmatprep.subr.bf16.mxu0 %v609
        %737 = vmatpush1.bf16.msra.mxu0 %v608
        %738 = vmatprep.subr.bf16.mxu0 %v611
        %739 = vmatpush1.bf16.msra.mxu0 %v610
        %740 = vmatprep.subr.bf16.mxu0 %v613
        %741 = vmatpush1.bf16.msra.mxu0 %v612
        %742 = vmatprep.subr.bf16.mxu0 %v615
        %743 = vmatpush1.bf16.msra.mxu0 %v614
        %744 = vmatprep.subr.bf16.mxu0 %v617
        %745 = vmatpush1.bf16.msra.mxu0 %v616
        %746 = vmatprep.subr.bf16.mxu0 %v619
        %747 = vmatpush1.bf16.msra.mxu0 %v618
        %748 = vmatprep.mubr.bf16.mxu0 %v377
        %749 = vmatmul.mubr.bf16.gmra.mrb[0].mxu0 %v370
        %v750 = vpop.f32.mrb[0].mxu0
        %v751 = vadd.f32 0.0, %v750
        %v752 = vpop.f32.mrb[0].mxu0
        %v753 = vadd.f32 0.0, %v752
        %v754 = vpop.f32.mrb[0].mxu0
        %v755 = vpop.f32.mrb[0].mxu0
        %756 = vdwg.mxu0
        %757 = vmatprep.subr.bf16.mxu0 %v621
        %758 = vmatpush1.bf16.msra.mxu0 %v620
        %759 = vmatprep.subr.bf16.mxu0 %v623
        %760 = vmatpush1.bf16.msra.mxu0 %v622
        %761 = vmatprep.subr.bf16.mxu0 %v625
        %762 = vmatpush1.bf16.msra.mxu0 %v624
        %763 = vmatprep.subr.bf16.mxu0 %v627
        %764 = vmatpush1.bf16.msra.mxu0 %v626
        %765 = vmatprep.subr.bf16.mxu0 %v629
        %766 = vmatpush1.bf16.msra.mxu0 %v628
        %767 = vmatprep.subr.bf16.mxu0 %v631
        %768 = vmatpush1.bf16.msra.mxu0 %v630
        %769 = vmatprep.subr.bf16.mxu0 %v633
        %770 = vmatpush1.bf16.msra.mxu0 %v632
        %771 = vmatprep.subr.bf16.mxu0 %v635
        %772 = vmatpush1.bf16.msra.mxu0 %v634
        %773 = vmatprep.subr.bf16.mxu0 %v637
        %774 = vmatpush1.bf16.msra.mxu0 %v636
        %775 = vmatprep.subr.bf16.mxu0 %v639
        %776 = vmatpush1.bf16.msra.mxu0 %v638
        %777 = vmatprep.subr.bf16.mxu0 %v641
        %778 = vmatpush1.bf16.msra.mxu0 %v640
        %779 = vmatprep.subr.bf16.mxu0 %v643
        %780 = vmatpush1.bf16.msra.mxu0 %v642
        %781 = vmatprep.subr.bf16.mxu0 %v645
        %782 = vmatpush1.bf16.msra.mxu0 %v644
        %783 = vmatprep.subr.bf16.mxu0 %v647
        %784 = vmatpush1.bf16.msra.mxu0 %v646
        %785 = vmatprep.subr.bf16.mxu0 %v649
        %786 = vmatpush1.bf16.msra.mxu0 %v648
        %787 = vmatprep.subr.bf16.mxu0 %v651
        %788 = vmatpush1.bf16.msra.mxu0 %v650
        %789 = vmatprep.mubr.bf16.mxu0 %v391
        %790 = vmatmul.mubr.bf16.gmra.mrb[0].mxu0 %v384
        %v791 = vpop.f32.mrb[0].mxu0
        %v792 = vadd.f32 %v751, %v791
        %v793 = vpop.f32.mrb[0].mxu0
        %v794 = vadd.f32 %v753, %v793
        %v795 = vpop.f32.mrb[0].mxu0
        %v796 = vpop.f32.mrb[0].mxu0
        %797 = vdwg.mxu0
        %v799 = vcombine.high %v215, %v215
        %v801 = vunpack.c.l.s4 1983009808
        %v802 = vunpack.c.0.s8 %v801
        %v803 = vlaneseq
        %v804 = vshrl.u32 %v803, 7
        %v805 = vsub.s32 %v802, %v804
        %v806 = vrot.slane %v215, %v805
        %v808 = vunpack.c.l.s4 1983009808
        %v809 = vunpack.c.0.s8 %v808
        %v810 = vlaneseq
        %v811 = vshrl.u32 %v810, 7
        %v812 = vsub.s32 %v809, %v811
        %v813 = vrot.slane %v799, %v812
        %v814 = vcombine.high %v806, %v806
        %v815 = vcombine.high %v813, %v813
        %v884 = vunpack.c.l.b16 %v216
        %v885 = vunpack.c.h.b16 %v216
        %v886 = vunpack.c.l.b16 %v217
        %v887 = vunpack.c.h.b16 %v217
        %v888 = vunpack.c.l.b16 %v218
        %v889 = vunpack.c.h.b16 %v218
        %v890 = vunpack.c.l.b16 %v219
        %v891 = vunpack.c.h.b16 %v219
        %v892 = vunpack.c.l.b16 %v220
        %v893 = vunpack.c.h.b16 %v220
        %v894 = vunpack.c.l.b16 %v221
        %v895 = vunpack.c.h.b16 %v221
        %v896 = vunpack.c.l.b16 %v222
        %v897 = vunpack.c.h.b16 %v222
        %v898 = vunpack.c.l.b16 %v223
        %v899 = vunpack.c.h.b16 %v223
        %v900 = vunpack.c.l.b16 %v224
        %v901 = vunpack.c.h.b16 %v224
        %v902 = vunpack.c.l.b16 %v225
        %v903 = vunpack.c.h.b16 %v225
        %v904 = vunpack.c.l.b16 %v226
        %v905 = vunpack.c.h.b16 %v226
        %v906 = vunpack.c.l.b16 %v227
        %v907 = vunpack.c.h.b16 %v227
        %v908 = vunpack.c.l.b16 %v228
        %v909 = vunpack.c.h.b16 %v228
        %v910 = vunpack.c.l.b16 %v229
        %v911 = vunpack.c.h.b16 %v229
        %v912 = vunpack.c.l.b16 %v230
        %v913 = vunpack.c.h.b16 %v230
        %v914 = vunpack.c.l.b16 %v231
        %v915 = vunpack.c.h.b16 %v231
        %v916 = vunpack.c.l.b16 %v232
        %v917 = vunpack.c.h.b16 %v232
        %v918 = vunpack.c.l.b16 %v233
        %v919 = vunpack.c.h.b16 %v233
        %v920 = vunpack.c.l.b16 %v234
        %v921 = vunpack.c.h.b16 %v234
        %v922 = vunpack.c.l.b16 %v235
        %v923 = vunpack.c.h.b16 %v235
        %v924 = vunpack.c.l.b16 %v236
        %v925 = vunpack.c.h.b16 %v236
        %v926 = vunpack.c.l.b16 %v237
        %v927 = vunpack.c.h.b16 %v237
        %v928 = vunpack.c.l.b16 %v238
        %v929 = vunpack.c.h.b16 %v238
        %v930 = vunpack.c.l.b16 %v239
        %v931 = vunpack.c.h.b16 %v239
        %v932 = vunpack.c.l.b16 %v240
        %v933 = vunpack.c.h.b16 %v240
        %v934 = vunpack.c.l.b16 %v241
        %v935 = vunpack.c.h.b16 %v241
        %v936 = vunpack.c.l.b16 %v242
        %v937 = vunpack.c.h.b16 %v242
        %v938 = vunpack.c.l.b16 %v243
        %v939 = vunpack.c.h.b16 %v243
        %v940 = vunpack.c.l.b16 %v244
        %v941 = vunpack.c.h.b16 %v244
        %v942 = vunpack.c.l.b16 %v245
        %v943 = vunpack.c.h.b16 %v245
        %v944 = vunpack.c.l.b16 %v246
        %v945 = vunpack.c.h.b16 %v246
        %v946 = vunpack.c.l.b16 %v247
        %v947 = vunpack.c.h.b16 %v247
        %v948 = vunpack.c.l.b16 %v248
        %v949 = vunpack.c.h.b16 %v248
        %v950 = vunpack.c.l.b16 %v249
        %v951 = vunpack.c.h.b16 %v249
        %v952 = vunpack.c.l.b16 %v250
        %v953 = vunpack.c.h.b16 %v250
        %v954 = vunpack.c.l.b16 %v251
        %v955 = vunpack.c.h.b16 %v251
        %v956 = vunpack.c.l.b16 %v252
        %v957 = vunpack.c.h.b16 %v252
        %v958 = vunpack.c.l.b16 %v253
        %v959 = vunpack.c.h.b16 %v253
        %v960 = vunpack.c.l.b16 %v254
        %v961 = vunpack.c.h.b16 %v254
        %v962 = vunpack.c.l.b16 %v255
        %v963 = vunpack.c.h.b16 %v255
        %v964 = vunpack.c.l.b16 %v256
        %v965 = vunpack.c.h.b16 %v256
        %v966 = vunpack.c.l.b16 %v257
        %v967 = vunpack.c.h.b16 %v257
        %v968 = vunpack.c.l.b16 %v258
        %v969 = vunpack.c.h.b16 %v258
        %v970 = vunpack.c.l.b16 %v259
        %v971 = vunpack.c.h.b16 %v259
        %v972 = vunpack.c.l.b16 %v260
        %v973 = vunpack.c.h.b16 %v260
        %v974 = vunpack.c.l.b16 %v261
        %v975 = vunpack.c.h.b16 %v261
        %v976 = vunpack.c.l.b16 %v262
        %v977 = vunpack.c.h.b16 %v262
        %v978 = vunpack.c.l.b16 %v263
        %v979 = vunpack.c.h.b16 %v263
        %v980 = vunpack.c.l.b16 %v264
        %v981 = vunpack.c.h.b16 %v264
        %v982 = vunpack.c.l.b16 %v265
        %v983 = vunpack.c.h.b16 %v265
        %v984 = vunpack.c.l.b16 %v266
        %v985 = vunpack.c.h.b16 %v266
        %v986 = vunpack.c.l.b16 %v267
        %v987 = vunpack.c.h.b16 %v267
        %v988 = vunpack.c.l.b16 %v268
        %v989 = vunpack.c.h.b16 %v268
        %v990 = vunpack.c.l.b16 %v269
        %v991 = vunpack.c.h.b16 %v269
        %v992 = vunpack.c.l.b16 %v270
        %v993 = vunpack.c.h.b16 %v270
        %v994 = vunpack.c.l.b16 %v271
        %v995 = vunpack.c.h.b16 %v271
        %v996 = vunpack.c.l.b16 %v272
        %v997 = vunpack.c.h.b16 %v272
        %v998 = vunpack.c.l.b16 %v273
        %v999 = vunpack.c.h.b16 %v273
        %v1000 = vunpack.c.l.b16 %v274
        %v1001 = vunpack.c.h.b16 %v274
        %v1002 = vunpack.c.l.b16 %v275
        %v1003 = vunpack.c.h.b16 %v275
        %v1004 = vunpack.c.l.b16 %v276
        %v1005 = vunpack.c.h.b16 %v276
        %v1006 = vunpack.c.l.b16 %v277
        %v1007 = vunpack.c.h.b16 %v277
        %v1008 = vunpack.c.l.b16 %v278
        %v1009 = vunpack.c.h.b16 %v278
        %v1010 = vunpack.c.l.b16 %v279
        %v1011 = vunpack.c.h.b16 %v279
        %v1012 = vpack.c.b16 %v886, %v884
        %v1013 = vpack.c.b16 %v887, %v885
        %v1014 = vpack.c.b16 %v890, %v888
        %v1015 = vpack.c.b16 %v891, %v889
        %v1016 = vpack.c.b16 %v894, %v892
        %v1017 = vpack.c.b16 %v895, %v893
        %v1018 = vpack.c.b16 %v898, %v896
        %v1019 = vpack.c.b16 %v899, %v897
        %v1020 = vpack.c.b16 %v902, %v900
        %v1021 = vpack.c.b16 %v903, %v901
        %v1022 = vpack.c.b16 %v906, %v904
        %v1023 = vpack.c.b16 %v907, %v905
        %v1024 = vpack.c.b16 %v910, %v908
        %v1025 = vpack.c.b16 %v911, %v909
        %v1026 = vpack.c.b16 %v914, %v912
        %v1027 = vpack.c.b16 %v915, %v913
        %v1028 = vpack.c.b16 %v918, %v916
        %v1029 = vpack.c.b16 %v919, %v917
        %v1030 = vpack.c.b16 %v922, %v920
        %v1031 = vpack.c.b16 %v923, %v921
        %v1032 = vpack.c.b16 %v926, %v924
        %v1033 = vpack.c.b16 %v927, %v925
        %v1034 = vpack.c.b16 %v930, %v928
        %v1035 = vpack.c.b16 %v931, %v929
        %v1036 = vpack.c.b16 %v934, %v932
        %v1037 = vpack.c.b16 %v935, %v933
        %v1038 = vpack.c.b16 %v938, %v936
        %v1039 = vpack.c.b16 %v939, %v937
        %v1040 = vpack.c.b16 %v942, %v940
        %v1041 = vpack.c.b16 %v943, %v941
        %v1042 = vpack.c.b16 %v946, %v944
        %v1043 = vpack.c.b16 %v947, %v945
        %v1044 = vpack.c.b16 %v950, %v948
        %v1045 = vpack.c.b16 %v951, %v949
        %v1046 = vpack.c.b16 %v954, %v952
        %v1047 = vpack.c.b16 %v955, %v953
        %v1048 = vpack.c.b16 %v958, %v956
        %v1049 = vpack.c.b16 %v959, %v957
        %v1050 = vpack.c.b16 %v962, %v960
        %v1051 = vpack.c.b16 %v963, %v961
        %v1052 = vpack.c.b16 %v966, %v964
        %v1053 = vpack.c.b16 %v967, %v965
        %v1054 = vpack.c.b16 %v970, %v968
        %v1055 = vpack.c.b16 %v971, %v969
        %v1056 = vpack.c.b16 %v974, %v972
        %v1057 = vpack.c.b16 %v975, %v973
        %v1058 = vpack.c.b16 %v978, %v976
        %v1059 = vpack.c.b16 %v979, %v977
        %v1060 = vpack.c.b16 %v982, %v980
        %v1061 = vpack.c.b16 %v983, %v981
        %v1062 = vpack.c.b16 %v986, %v984
        %v1063 = vpack.c.b16 %v987, %v985
        %v1064 = vpack.c.b16 %v990, %v988
        %v1065 = vpack.c.b16 %v991, %v989
        %v1066 = vpack.c.b16 %v994, %v992
        %v1067 = vpack.c.b16 %v995, %v993
        %v1068 = vpack.c.b16 %v998, %v996
        %v1069 = vpack.c.b16 %v999, %v997
        %v1070 = vpack.c.b16 %v1002, %v1000
        %v1071 = vpack.c.b16 %v1003, %v1001
        %v1072 = vpack.c.b16 %v1006, %v1004
        %v1073 = vpack.c.b16 %v1007, %v1005
        %v1074 = vpack.c.b16 %v1010, %v1008
        %v1075 = vpack.c.b16 %v1011, %v1009
        %1140 = vmatprep.subr.bf16.mxu0 %v1013
        %1141 = vmatpush1.bf16.msra.mxu0 %v1012
        %1142 = vmatprep.subr.bf16.mxu0 %v1015
        %1143 = vmatpush1.bf16.msra.mxu0 %v1014
        %1144 = vmatprep.subr.bf16.mxu0 %v1017
        %1145 = vmatpush1.bf16.msra.mxu0 %v1016
        %1146 = vmatprep.subr.bf16.mxu0 %v1019
        %1147 = vmatpush1.bf16.msra.mxu0 %v1018
        %1148 = vmatprep.subr.bf16.mxu0 %v1021
        %1149 = vmatpush1.bf16.msra.mxu0 %v1020
        %1150 = vmatprep.subr.bf16.mxu0 %v1023
        %1151 = vmatpush1.bf16.msra.mxu0 %v1022
        %1152 = vmatprep.subr.bf16.mxu0 %v1025
        %1153 = vmatpush1.bf16.msra.mxu0 %v1024
        %1154 = vmatprep.subr.bf16.mxu0 %v1027
        %1155 = vmatpush1.bf16.msra.mxu0 %v1026
        %1156 = vmatprep.subr.bf16.mxu0 %v1029
        %1157 = vmatpush1.bf16.msra.mxu0 %v1028
        %1158 = vmatprep.subr.bf16.mxu0 %v1031
        %1159 = vmatpush1.bf16.msra.mxu0 %v1030
        %1160 = vmatprep.subr.bf16.mxu0 %v1033
        %1161 = vmatpush1.bf16.msra.mxu0 %v1032
        %1162 = vmatprep.subr.bf16.mxu0 %v1035
        %1163 = vmatpush1.bf16.msra.mxu0 %v1034
        %1164 = vmatprep.subr.bf16.mxu0 %v1037
        %1165 = vmatpush1.bf16.msra.mxu0 %v1036
        %1166 = vmatprep.subr.bf16.mxu0 %v1039
        %1167 = vmatpush1.bf16.msra.mxu0 %v1038
        %1168 = vmatprep.subr.bf16.mxu0 %v1041
        %1169 = vmatpush1.bf16.msra.mxu0 %v1040
        %1170 = vmatprep.subr.bf16.mxu0 %v1043
        %1171 = vmatpush1.bf16.msra.mxu0 %v1042
        %1172 = vmatprep.mubr.bf16.mxu0 %v814
        %1173 = vmatmul.mubr.bf16.gmra.mrb[0].mxu0 %v806
        %v1174 = vpop.f32.mrb[0].mxu0
        %v1175 = vadd.f32 %v792, %v1174
        %v1176 = vpop.f32.mrb[0].mxu0
        %v1177 = vadd.f32 %v794, %v1176
        %v1178 = vpop.f32.mrb[0].mxu0
        %v1179 = vpop.f32.mrb[0].mxu0
        %1180 = vdwg.mxu0
        %1181 = vmatprep.subr.bf16.mxu0 %v1045
        %1182 = vmatpush1.bf16.msra.mxu0 %v1044
        %1183 = vmatprep.subr.bf16.mxu0 %v1047
        %1184 = vmatpush1.bf16.msra.mxu0 %v1046
        %1185 = vmatprep.subr.bf16.mxu0 %v1049
        %1186 = vmatpush1.bf16.msra.mxu0 %v1048
        %1187 = vmatprep.subr.bf16.mxu0 %v1051
        %1188 = vmatpush1.bf16.msra.mxu0 %v1050
        %1189 = vmatprep.subr.bf16.mxu0 %v1053
        %1190 = vmatpush1.bf16.msra.mxu0 %v1052
        %1191 = vmatprep.subr.bf16.mxu0 %v1055
        %1192 = vmatpush1.bf16.msra.mxu0 %v1054
        %1193 = vmatprep.subr.bf16.mxu0 %v1057
        %1194 = vmatpush1.bf16.msra.mxu0 %v1056
        %1195 = vmatprep.subr.bf16.mxu0 %v1059
        %1196 = vmatpush1.bf16.msra.mxu0 %v1058
        %1197 = vmatprep.subr.bf16.mxu0 %v1061
        %1198 = vmatpush1.bf16.msra.mxu0 %v1060
        %1199 = vmatprep.subr.bf16.mxu0 %v1063
        %1200 = vmatpush1.bf16.msra.mxu0 %v1062
        %1201 = vmatprep.subr.bf16.mxu0 %v1065
        %1202 = vmatpush1.bf16.msra.mxu0 %v1064
        %1203 = vmatprep.subr.bf16.mxu0 %v1067
        %1204 = vmatpush1.bf16.msra.mxu0 %v1066
        %1205 = vmatprep.subr.bf16.mxu0 %v1069
        %1206 = vmatpush1.bf16.msra.mxu0 %v1068
        %1207 = vmatprep.subr.bf16.mxu0 %v1071
        %1208 = vmatpush1.bf16.msra.mxu0 %v1070
        %1209 = vmatprep.subr.bf16.mxu0 %v1073
        %1210 = vmatpush1.bf16.msra.mxu0 %v1072
        %1211 = vmatprep.subr.bf16.mxu0 %v1075
        %1212 = vmatpush1.bf16.msra.mxu0 %v1074
        %1213 = vmatprep.mubr.bf16.mxu0 %v815
        %1214 = vmatmul.mubr.bf16.gmra.mrb[0].mxu0 %v813
        %v1215 = vpop.f32.mrb[0].mxu0
        %v1216 = vadd.f32 %v1175, %v1215
        %v1217 = vpop.f32.mrb[0].mxu0
        %v1218 = vadd.f32 %v1177, %v1217
        %v1219 = vpop.f32.mrb[0].mxu0
        %v1220 = vpop.f32.mrb[0].mxu0
        %1221 = vdwg.mxu0
        %s1222 = sadd.s32 %s207, 1
        %s1223 = smul.u32 %s1222, 4
        %s1224 = smul.addr %s1223, 2
        %s1225 = scalar_lea.vmem %s192, %s1224
        %v1226 = vld [vmem:[%s1225] sm:$0x55]
        %s1227 = scalar_lea.vmem %s1, 1024
        %v1228 = vld [vmem:[%s1227] sm:$0xff]
        %v1229 = vld [vmem:[%s1227 + $0x8] sm:$0xff]
        %v1230 = vld [vmem:[%s1227 + $0x10] sm:$0xff]
        %v1231 = vld [vmem:[%s1227 + $0x18] sm:$0xff]
        %v1232 = vld [vmem:[%s1227 + $0x20] sm:$0xff]
        %v1233 = vld [vmem:[%s1227 + $0x28] sm:$0xff]
        %v1234 = vld [vmem:[%s1227 + $0x30] sm:$0xff]
        %v1235 = vld [vmem:[%s1227 + $0x38] sm:$0xff]
        %v1236 = vld [vmem:[%s1227 + $0x40] sm:$0xff]
        %v1237 = vld [vmem:[%s1227 + $0x48] sm:$0xff]
        %v1238 = vld [vmem:[%s1227 + $0x50] sm:$0xff]
        %v1239 = vld [vmem:[%s1227 + $0x58] sm:$0xff]
        %v1240 = vld [vmem:[%s1227 + $0x60] sm:$0xff]
        %v1241 = vld [vmem:[%s1227 + $0x68] sm:$0xff]
        %v1242 = vld [vmem:[%s1227 + $0x70] sm:$0xff]
        %v1243 = vld [vmem:[%s1227 + $0x78] sm:$0xff]
        %v1244 = vld [vmem:[%s1227 + $0x80] sm:$0xff]
        %v1245 = vld [vmem:[%s1227 + $0x88] sm:$0xff]
        %v1246 = vld [vmem:[%s1227 + $0x90] sm:$0xff]
        %v1247 = vld [vmem:[%s1227 + $0x98] sm:$0xff]
        %v1248 = vld [vmem:[%s1227 + $0xa0] sm:$0xff]
        %v1249 = vld [vmem:[%s1227 + $0xa8] sm:$0xff]
        %v1250 = vld [vmem:[%s1227 + $0xb0] sm:$0xff]
        %v1251 = vld [vmem:[%s1227 + $0xb8] sm:$0xff]
        %v1252 = vld [vmem:[%s1227 + $0xc0] sm:$0xff]
        %v1253 = vld [vmem:[%s1227 + $0xc8] sm:$0xff]
        %v1254 = vld [vmem:[%s1227 + $0xd0] sm:$0xff]
        %v1255 = vld [vmem:[%s1227 + $0xd8] sm:$0xff]
        %v1256 = vld [vmem:[%s1227 + $0xe0] sm:$0xff]
        %v1257 = vld [vmem:[%s1227 + $0xe8] sm:$0xff]
        %v1258 = vld [vmem:[%s1227 + $0xf0] sm:$0xff]
        %v1259 = vld [vmem:[%s1227 + $0xf8] sm:$0xff]
        %v1260 = vld [vmem:[%s1227 + $0x100] sm:$0xff]
        %v1261 = vld [vmem:[%s1227 + $0x108] sm:$0xff]
        %v1262 = vld [vmem:[%s1227 + $0x110] sm:$0xff]
        %v1263 = vld [vmem:[%s1227 + $0x118] sm:$0xff]
        %v1264 = vld [vmem:[%s1227 + $0x120] sm:$0xff]
        %v1265 = vld [vmem:[%s1227 + $0x128] sm:$0xff]
        %v1266 = vld [vmem:[%s1227 + $0x130] sm:$0xff]
        %v1267 = vld [vmem:[%s1227 + $0x138] sm:$0xff]
        %v1268 = vld [vmem:[%s1227 + $0x140] sm:$0xff]
        %v1269 = vld [vmem:[%s1227 + $0x148] sm:$0xff]
        %v1270 = vld [vmem:[%s1227 + $0x150] sm:$0xff]
        %v1271 = vld [vmem:[%s1227 + $0x158] sm:$0xff]
        %v1272 = vld [vmem:[%s1227 + $0x160] sm:$0xff]
        %v1273 = vld [vmem:[%s1227 + $0x168] sm:$0xff]
        %v1274 = vld [vmem:[%s1227 + $0x170] sm:$0xff]
        %v1275 = vld [vmem:[%s1227 + $0x178] sm:$0xff]
        %v1276 = vld [vmem:[%s1227 + $0x180] sm:$0xff]
        %v1277 = vld [vmem:[%s1227 + $0x188] sm:$0xff]
        %v1278 = vld [vmem:[%s1227 + $0x190] sm:$0xff]
        %v1279 = vld [vmem:[%s1227 + $0x198] sm:$0xff]
        %v1280 = vld [vmem:[%s1227 + $0x1a0] sm:$0xff]
        %v1281 = vld [vmem:[%s1227 + $0x1a8] sm:$0xff]
        %v1282 = vld [vmem:[%s1227 + $0x1b0] sm:$0xff]
        %v1283 = vld [vmem:[%s1227 + $0x1b8] sm:$0xff]
        %v1284 = vld [vmem:[%s1227 + $0x1c0] sm:$0xff]
        %v1285 = vld [vmem:[%s1227 + $0x1c8] sm:$0xff]
        %v1286 = vld [vmem:[%s1227 + $0x1d0] sm:$0xff]
        %v1287 = vld [vmem:[%s1227 + $0x1d8] sm:$0xff]
        %v1288 = vld [vmem:[%s1227 + $0x1e0] sm:$0xff]
        %v1289 = vld [vmem:[%s1227 + $0x1e8] sm:$0xff]
        %v1290 = vld [vmem:[%s1227 + $0x1f0] sm:$0xff]
        %v1291 = vld [vmem:[%s1227 + $0x1f8] sm:$0xff]
        %v1293 = vcombine.high %v1226, %v1226
        %v1295 = vunpack.c.l.s4 1983009808
        %v1296 = vunpack.c.0.s8 %v1295
        %v1297 = vlaneseq
        %v1298 = vshrl.u32 %v1297, 7
        %v1299 = vsub.s32 %v1296, %v1298
        %v1300 = vrot.slane %v1226, %v1299
        %v1302 = vunpack.c.l.s4 1983009808
        %v1303 = vunpack.c.0.s8 %v1302
        %v1304 = vlaneseq
        %v1305 = vshrl.u32 %v1304, 7
        %v1306 = vsub.s32 %v1303, %v1305
        %v1307 = vrot.slane %v1293, %v1306
        %v1308 = vcombine.high %v1300, %v1300
        %v1309 = vcombine.high %v1307, %v1307
        %v1378 = vunpack.c.l.b16 %v1228
        %v1379 = vunpack.c.h.b16 %v1228
        %v1380 = vunpack.c.l.b16 %v1229
        %v1381 = vunpack.c.h.b16 %v1229
        %v1382 = vunpack.c.l.b16 %v1230
        %v1383 = vunpack.c.h.b16 %v1230
        %v1384 = vunpack.c.l.b16 %v1231
        %v1385 = vunpack.c.h.b16 %v1231
        %v1386 = vunpack.c.l.b16 %v1232
        %v1387 = vunpack.c.h.b16 %v1232
        %v1388 = vunpack.c.l.b16 %v1233
        %v1389 = vunpack.c.h.b16 %v1233
        %v1390 = vunpack.c.l.b16 %v1234
        %v1391 = vunpack.c.h.b16 %v1234
        %v1392 = vunpack.c.l.b16 %v1235
        %v1393 = vunpack.c.h.b16 %v1235
        %v1394 = vunpack.c.l.b16 %v1236
        %v1395 = vunpack.c.h.b16 %v1236
        %v1396 = vunpack.c.l.b16 %v1237
        %v1397 = vunpack.c.h.b16 %v1237
        %v1398 = vunpack.c.l.b16 %v1238
        %v1399 = vunpack.c.h.b16 %v1238
        %v1400 = vunpack.c.l.b16 %v1239
        %v1401 = vunpack.c.h.b16 %v1239
        %v1402 = vunpack.c.l.b16 %v1240
        %v1403 = vunpack.c.h.b16 %v1240
        %v1404 = vunpack.c.l.b16 %v1241
        %v1405 = vunpack.c.h.b16 %v1241
        %v1406 = vunpack.c.l.b16 %v1242
        %v1407 = vunpack.c.h.b16 %v1242
        %v1408 = vunpack.c.l.b16 %v1243
        %v1409 = vunpack.c.h.b16 %v1243
        %v1410 = vunpack.c.l.b16 %v1244
        %v1411 = vunpack.c.h.b16 %v1244
        %v1412 = vunpack.c.l.b16 %v1245
        %v1413 = vunpack.c.h.b16 %v1245
        %v1414 = vunpack.c.l.b16 %v1246
        %v1415 = vunpack.c.h.b16 %v1246
        %v1416 = vunpack.c.l.b16 %v1247
        %v1417 = vunpack.c.h.b16 %v1247
        %v1418 = vunpack.c.l.b16 %v1248
        %v1419 = vunpack.c.h.b16 %v1248
        %v1420 = vunpack.c.l.b16 %v1249
        %v1421 = vunpack.c.h.b16 %v1249
        %v1422 = vunpack.c.l.b16 %v1250
        %v1423 = vunpack.c.h.b16 %v1250
        %v1424 = vunpack.c.l.b16 %v1251
        %v1425 = vunpack.c.h.b16 %v1251
        %v1426 = vunpack.c.l.b16 %v1252
        %v1427 = vunpack.c.h.b16 %v1252
        %v1428 = vunpack.c.l.b16 %v1253
        %v1429 = vunpack.c.h.b16 %v1253
        %v1430 = vunpack.c.l.b16 %v1254
        %v1431 = vunpack.c.h.b16 %v1254
        %v1432 = vunpack.c.l.b16 %v1255
        %v1433 = vunpack.c.h.b16 %v1255
        %v1434 = vunpack.c.l.b16 %v1256
        %v1435 = vunpack.c.h.b16 %v1256
        %v1436 = vunpack.c.l.b16 %v1257
        %v1437 = vunpack.c.h.b16 %v1257
        %v1438 = vunpack.c.l.b16 %v1258
        %v1439 = vunpack.c.h.b16 %v1258
        %v1440 = vunpack.c.l.b16 %v1259
        %v1441 = vunpack.c.h.b16 %v1259
        %v1442 = vunpack.c.l.b16 %v1260
        %v1443 = vunpack.c.h.b16 %v1260
        %v1444 = vunpack.c.l.b16 %v1261
        %v1445 = vunpack.c.h.b16 %v1261
        %v1446 = vunpack.c.l.b16 %v1262
        %v1447 = vunpack.c.h.b16 %v1262
        %v1448 = vunpack.c.l.b16 %v1263
        %v1449 = vunpack.c.h.b16 %v1263
        %v1450 = vunpack.c.l.b16 %v1264
        %v1451 = vunpack.c.h.b16 %v1264
        %v1452 = vunpack.c.l.b16 %v1265
        %v1453 = vunpack.c.h.b16 %v1265
        %v1454 = vunpack.c.l.b16 %v1266
        %v1455 = vunpack.c.h.b16 %v1266
        %v1456 = vunpack.c.l.b16 %v1267
        %v1457 = vunpack.c.h.b16 %v1267
        %v1458 = vunpack.c.l.b16 %v1268
        %v1459 = vunpack.c.h.b16 %v1268
        %v1460 = vunpack.c.l.b16 %v1269
        %v1461 = vunpack.c.h.b16 %v1269
        %v1462 = vunpack.c.l.b16 %v1270
        %v1463 = vunpack.c.h.b16 %v1270
        %v1464 = vunpack.c.l.b16 %v1271
        %v1465 = vunpack.c.h.b16 %v1271
        %v1466 = vunpack.c.l.b16 %v1272
        %v1467 = vunpack.c.h.b16 %v1272
        %v1468 = vunpack.c.l.b16 %v1273
        %v1469 = vunpack.c.h.b16 %v1273
        %v1470 = vunpack.c.l.b16 %v1274
        %v1471 = vunpack.c.h.b16 %v1274
        %v1472 = vunpack.c.l.b16 %v1275
        %v1473 = vunpack.c.h.b16 %v1275
        %v1474 = vunpack.c.l.b16 %v1276
        %v1475 = vunpack.c.h.b16 %v1276
        %v1476 = vunpack.c.l.b16 %v1277
        %v1477 = vunpack.c.h.b16 %v1277
        %v1478 = vunpack.c.l.b16 %v1278
        %v1479 = vunpack.c.h.b16 %v1278
        %v1480 = vunpack.c.l.b16 %v1279
        %v1481 = vunpack.c.h.b16 %v1279
        %v1482 = vunpack.c.l.b16 %v1280
        %v1483 = vunpack.c.h.b16 %v1280
        %v1484 = vunpack.c.l.b16 %v1281
        %v1485 = vunpack.c.h.b16 %v1281
        %v1486 = vunpack.c.l.b16 %v1282
        %v1487 = vunpack.c.h.b16 %v1282
        %v1488 = vunpack.c.l.b16 %v1283
        %v1489 = vunpack.c.h.b16 %v1283
        %v1490 = vunpack.c.l.b16 %v1284
        %v1491 = vunpack.c.h.b16 %v1284
        %v1492 = vunpack.c.l.b16 %v1285
        %v1493 = vunpack.c.h.b16 %v1285
        %v1494 = vunpack.c.l.b16 %v1286
        %v1495 = vunpack.c.h.b16 %v1286
        %v1496 = vunpack.c.l.b16 %v1287
        %v1497 = vunpack.c.h.b16 %v1287
        %v1498 = vunpack.c.l.b16 %v1288
        %v1499 = vunpack.c.h.b16 %v1288
        %v1500 = vunpack.c.l.b16 %v1289
        %v1501 = vunpack.c.h.b16 %v1289
        %v1502 = vunpack.c.l.b16 %v1290
        %v1503 = vunpack.c.h.b16 %v1290
        %v1504 = vunpack.c.l.b16 %v1291
        %v1505 = vunpack.c.h.b16 %v1291
        %v1506 = vpack.c.b16 %v1380, %v1378
        %v1507 = vpack.c.b16 %v1381, %v1379
        %v1508 = vpack.c.b16 %v1384, %v1382
        %v1509 = vpack.c.b16 %v1385, %v1383
        %v1510 = vpack.c.b16 %v1388, %v1386
        %v1511 = vpack.c.b16 %v1389, %v1387
        %v1512 = vpack.c.b16 %v1392, %v1390
        %v1513 = vpack.c.b16 %v1393, %v1391
        %v1514 = vpack.c.b16 %v1396, %v1394
        %v1515 = vpack.c.b16 %v1397, %v1395
        %v1516 = vpack.c.b16 %v1400, %v1398
        %v1517 = vpack.c.b16 %v1401, %v1399
        %v1518 = vpack.c.b16 %v1404, %v1402
        %v1519 = vpack.c.b16 %v1405, %v1403
        %v1520 = vpack.c.b16 %v1408, %v1406
        %v1521 = vpack.c.b16 %v1409, %v1407
        %v1522 = vpack.c.b16 %v1412, %v1410
        %v1523 = vpack.c.b16 %v1413, %v1411
        %v1524 = vpack.c.b16 %v1416, %v1414
        %v1525 = vpack.c.b16 %v1417, %v1415
        %v1526 = vpack.c.b16 %v1420, %v1418
        %v1527 = vpack.c.b16 %v1421, %v1419
        %v1528 = vpack.c.b16 %v1424, %v1422
        %v1529 = vpack.c.b16 %v1425, %v1423
        %v1530 = vpack.c.b16 %v1428, %v1426
        %v1531 = vpack.c.b16 %v1429, %v1427
        %v1532 = vpack.c.b16 %v1432, %v1430
        %v1533 = vpack.c.b16 %v1433, %v1431
        %v1534 = vpack.c.b16 %v1436, %v1434
        %v1535 = vpack.c.b16 %v1437, %v1435
        %v1536 = vpack.c.b16 %v1440, %v1438
        %v1537 = vpack.c.b16 %v1441, %v1439
        %v1538 = vpack.c.b16 %v1444, %v1442
        %v1539 = vpack.c.b16 %v1445, %v1443
        %v1540 = vpack.c.b16 %v1448, %v1446
        %v1541 = vpack.c.b16 %v1449, %v1447
        %v1542 = vpack.c.b16 %v1452, %v1450
        %v1543 = vpack.c.b16 %v1453, %v1451
        %v1544 = vpack.c.b16 %v1456, %v1454
        %v1545 = vpack.c.b16 %v1457, %v1455
        %v1546 = vpack.c.b16 %v1460, %v1458
        %v1547 = vpack.c.b16 %v1461, %v1459
        %v1548 = vpack.c.b16 %v1464, %v1462
        %v1549 = vpack.c.b16 %v1465, %v1463
        %v1550 = vpack.c.b16 %v1468, %v1466
        %v1551 = vpack.c.b16 %v1469, %v1467
        %v1552 = vpack.c.b16 %v1472, %v1470
        %v1553 = vpack.c.b16 %v1473, %v1471
        %v1554 = vpack.c.b16 %v1476, %v1474
        %v1555 = vpack.c.b16 %v1477, %v1475
        %v1556 = vpack.c.b16 %v1480, %v1478
        %v1557 = vpack.c.b16 %v1481, %v1479
        %v1558 = vpack.c.b16 %v1484, %v1482
        %v1559 = vpack.c.b16 %v1485, %v1483
        %v1560 = vpack.c.b16 %v1488, %v1486
        %v1561 = vpack.c.b16 %v1489, %v1487
        %v1562 = vpack.c.b16 %v1492, %v1490
        %v1563 = vpack.c.b16 %v1493, %v1491
        %v1564 = vpack.c.b16 %v1496, %v1494
        %v1565 = vpack.c.b16 %v1497, %v1495
        %v1566 = vpack.c.b16 %v1500, %v1498
        %v1567 = vpack.c.b16 %v1501, %v1499
        %v1568 = vpack.c.b16 %v1504, %v1502
        %v1569 = vpack.c.b16 %v1505, %v1503
        %1634 = vmatprep.subr.bf16.mxu0 %v1507
        %1635 = vmatpush1.bf16.msra.mxu0 %v1506
        %1636 = vmatprep.subr.bf16.mxu0 %v1509
        %1637 = vmatpush1.bf16.msra.mxu0 %v1508
        %1638 = vmatprep.subr.bf16.mxu0 %v1511
        %1639 = vmatpush1.bf16.msra.mxu0 %v1510
        %1640 = vmatprep.subr.bf16.mxu0 %v1513
        %1641 = vmatpush1.bf16.msra.mxu0 %v1512
        %1642 = vmatprep.subr.bf16.mxu0 %v1515
        %1643 = vmatpush1.bf16.msra.mxu0 %v1514
        %1644 = vmatprep.subr.bf16.mxu0 %v1517
        %1645 = vmatpush1.bf16.msra.mxu0 %v1516
        %1646 = vmatprep.subr.bf16.mxu0 %v1519
        %1647 = vmatpush1.bf16.msra.mxu0 %v1518
        %1648 = vmatprep.subr.bf16.mxu0 %v1521
        %1649 = vmatpush1.bf16.msra.mxu0 %v1520
        %1650 = vmatprep.subr.bf16.mxu0 %v1523
        %1651 = vmatpush1.bf16.msra.mxu0 %v1522
        %1652 = vmatprep.subr.bf16.mxu0 %v1525
        %1653 = vmatpush1.bf16.msra.mxu0 %v1524
        %1654 = vmatprep.subr.bf16.mxu0 %v1527
        %1655 = vmatpush1.bf16.msra.mxu0 %v1526
        %1656 = vmatprep.subr.bf16.mxu0 %v1529
        %1657 = vmatpush1.bf16.msra.mxu0 %v1528
        %1658 = vmatprep.subr.bf16.mxu0 %v1531
        %1659 = vmatpush1.bf16.msra.mxu0 %v1530
        %1660 = vmatprep.subr.bf16.mxu0 %v1533
        %1661 = vmatpush1.bf16.msra.mxu0 %v1532
        %1662 = vmatprep.subr.bf16.mxu0 %v1535
        %1663 = vmatpush1.bf16.msra.mxu0 %v1534
        %1664 = vmatprep.subr.bf16.mxu0 %v1537
        %1665 = vmatpush1.bf16.msra.mxu0 %v1536
        %1666 = vmatprep.mubr.bf16.mxu0 %v1308
        %1667 = vmatmul.mubr.bf16.gmra.mrb[0].mxu0 %v1300
        %v1668 = vpop.f32.mrb[0].mxu0
        %v1669 = vadd.f32 0.0, %v1668
        %v1670 = vpop.f32.mrb[0].mxu0
        %v1671 = vadd.f32 0.0, %v1670
        %v1672 = vpop.f32.mrb[0].mxu0
        %v1673 = vpop.f32.mrb[0].mxu0
        %1674 = vdwg.mxu0
        %1675 = vmatprep.subr.bf16.mxu0 %v1539
        %1676 = vmatpush1.bf16.msra.mxu0 %v1538
        %1677 = vmatprep.subr.bf16.mxu0 %v1541
        %1678 = vmatpush1.bf16.msra.mxu0 %v1540
        %1679 = vmatprep.subr.bf16.mxu0 %v1543
        %1680 = vmatpush1.bf16.msra.mxu0 %v1542
        %1681 = vmatprep.subr.bf16.mxu0 %v1545
        %1682 = vmatpush1.bf16.msra.mxu0 %v1544
        %1683 = vmatprep.subr.bf16.mxu0 %v1547
        %1684 = vmatpush1.bf16.msra.mxu0 %v1546
        %1685 = vmatprep.subr.bf16.mxu0 %v1549
        %1686 = vmatpush1.bf16.msra.mxu0 %v1548
        %1687 = vmatprep.subr.bf16.mxu0 %v1551
        %1688 = vmatpush1.bf16.msra.mxu0 %v1550
        %1689 = vmatprep.subr.bf16.mxu0 %v1553
        %1690 = vmatpush1.bf16.msra.mxu0 %v1552
        %1691 = vmatprep.subr.bf16.mxu0 %v1555
        %1692 = vmatpush1.bf16.msra.mxu0 %v1554
        %1693 = vmatprep.subr.bf16.mxu0 %v1557
        %1694 = vmatpush1.bf16.msra.mxu0 %v1556
        %1695 = vmatprep.subr.bf16.mxu0 %v1559
        %1696 = vmatpush1.bf16.msra.mxu0 %v1558
        %1697 = vmatprep.subr.bf16.mxu0 %v1561
        %1698 = vmatpush1.bf16.msra.mxu0 %v1560
        %1699 = vmatprep.subr.bf16.mxu0 %v1563
        %1700 = vmatpush1.bf16.msra.mxu0 %v1562
        %1701 = vmatprep.subr.bf16.mxu0 %v1565
        %1702 = vmatpush1.bf16.msra.mxu0 %v1564
        %1703 = vmatprep.subr.bf16.mxu0 %v1567
        %1704 = vmatpush1.bf16.msra.mxu0 %v1566
        %1705 = vmatprep.subr.bf16.mxu0 %v1569
        %1706 = vmatpush1.bf16.msra.mxu0 %v1568
        %1707 = vmatprep.mubr.bf16.mxu0 %v1309
        %1708 = vmatmul.mubr.bf16.gmra.mrb[0].mxu0 %v1307
        %v1709 = vpop.f32.mrb[0].mxu0
        %v1710 = vadd.f32 %v1669, %v1709
        %v1711 = vpop.f32.mrb[0].mxu0
        %v1712 = vadd.f32 %v1671, %v1711
        %v1713 = vpop.f32.mrb[0].mxu0
        %v1714 = vpop.f32.mrb[0].mxu0
        %1715 = vdwg.mxu0
        %v1716 = vadd.f32 %v1216, %v1710
        %v1717 = vadd.f32 %v1218, %v1712
        %v1718 = vld [vmem:[%s1225] sm:$0xff]
        %s1719 = scalar_lea.vmem %s1, 1536
        %v1720 = vld [vmem:[%s1719] sm:$0xff]
        %v1721 = vld [vmem:[%s1719 + $0x8] sm:$0xff]
        %v1722 = vld [vmem:[%s1719 + $0x10] sm:$0xff]
        %v1723 = vld [vmem:[%s1719 + $0x18] sm:$0xff]
        %v1724 = vld [vmem:[%s1719 + $0x20] sm:$0xff]
        %v1725 = vld [vmem:[%s1719 + $0x28] sm:$0xff]
        %v1726 = vld [vmem:[%s1719 + $0x30] sm:$0xff]
        %v1727 = vld [vmem:[%s1719 + $0x38] sm:$0xff]
        %v1728 = vld [vmem:[%s1719 + $0x40] sm:$0xff]
        %v1729 = vld [vmem:[%s1719 + $0x48] sm:$0xff]
        %v1730 = vld [vmem:[%s1719 + $0x50] sm:$0xff]
        %v1731 = vld [vmem:[%s1719 + $0x58] sm:$0xff]
        %v1732 = vld [vmem:[%s1719 + $0x60] sm:$0xff]
        %v1733 = vld [vmem:[%s1719 + $0x68] sm:$0xff]
        %v1734 = vld [vmem:[%s1719 + $0x70] sm:$0xff]
        %v1735 = vld [vmem:[%s1719 + $0x78] sm:$0xff]
        %v1736 = vld [vmem:[%s1719 + $0x80] sm:$0xff]
        %v1737 = vld [vmem:[%s1719 + $0x88] sm:$0xff]
        %v1738 = vld [vmem:[%s1719 + $0x90] sm:$0xff]
        %v1739 = vld [vmem:[%s1719 + $0x98] sm:$0xff]
        %v1740 = vld [vmem:[%s1719 + $0xa0] sm:$0xff]
        %v1741 = vld [vmem:[%s1719 + $0xa8] sm:$0xff]
        %v1742 = vld [vmem:[%s1719 + $0xb0] sm:$0xff]
        %v1743 = vld [vmem:[%s1719 + $0xb8] sm:$0xff]
        %v1744 = vld [vmem:[%s1719 + $0xc0] sm:$0xff]
        %v1745 = vld [vmem:[%s1719 + $0xc8] sm:$0xff]
        %v1746 = vld [vmem:[%s1719 + $0xd0] sm:$0xff]
        %v1747 = vld [vmem:[%s1719 + $0xd8] sm:$0xff]
        %v1748 = vld [vmem:[%s1719 + $0xe0] sm:$0xff]
        %v1749 = vld [vmem:[%s1719 + $0xe8] sm:$0xff]
        %v1750 = vld [vmem:[%s1719 + $0xf0] sm:$0xff]
        %v1751 = vld [vmem:[%s1719 + $0xf8] sm:$0xff]
        %v1752 = vld [vmem:[%s1719 + $0x100] sm:$0xff]
        %v1753 = vld [vmem:[%s1719 + $0x108] sm:$0xff]
        %v1754 = vld [vmem:[%s1719 + $0x110] sm:$0xff]
        %v1755 = vld [vmem:[%s1719 + $0x118] sm:$0xff]
        %v1756 = vld [vmem:[%s1719 + $0x120] sm:$0xff]
        %v1757 = vld [vmem:[%s1719 + $0x128] sm:$0xff]
        %v1758 = vld [vmem:[%s1719 + $0x130] sm:$0xff]
        %v1759 = vld [vmem:[%s1719 + $0x138] sm:$0xff]
        %v1760 = vld [vmem:[%s1719 + $0x140] sm:$0xff]
        %v1761 = vld [vmem:[%s1719 + $0x148] sm:$0xff]
        %v1762 = vld [vmem:[%s1719 + $0x150] sm:$0xff]
        %v1763 = vld [vmem:[%s1719 + $0x158] sm:$0xff]
        %v1764 = vld [vmem:[%s1719 + $0x160] sm:$0xff]
        %v1765 = vld [vmem:[%s1719 + $0x168] sm:$0xff]
        %v1766 = vld [vmem:[%s1719 + $0x170] sm:$0xff]
        %v1767 = vld [vmem:[%s1719 + $0x178] sm:$0xff]
        %v1768 = vld [vmem:[%s1719 + $0x180] sm:$0xff]
        %v1769 = vld [vmem:[%s1719 + $0x188] sm:$0xff]
        %v1770 = vld [vmem:[%s1719 + $0x190] sm:$0xff]
        %v1771 = vld [vmem:[%s1719 + $0x198] sm:$0xff]
        %v1772 = vld [vmem:[%s1719 + $0x1a0] sm:$0xff]
        %v1773 = vld [vmem:[%s1719 + $0x1a8] sm:$0xff]
        %v1774 = vld [vmem:[%s1719 + $0x1b0] sm:$0xff]
        %v1775 = vld [vmem:[%s1719 + $0x1b8] sm:$0xff]
        %v1776 = vld [vmem:[%s1719 + $0x1c0] sm:$0xff]
        %v1777 = vld [vmem:[%s1719 + $0x1c8] sm:$0xff]
        %v1778 = vld [vmem:[%s1719 + $0x1d0] sm:$0xff]
        %v1779 = vld [vmem:[%s1719 + $0x1d8] sm:$0xff]
        %v1780 = vld [vmem:[%s1719 + $0x1e0] sm:$0xff]
        %v1781 = vld [vmem:[%s1719 + $0x1e8] sm:$0xff]
        %v1782 = vld [vmem:[%s1719 + $0x1f0] sm:$0xff]
        %v1783 = vld [vmem:[%s1719 + $0x1f8] sm:$0xff]
        %v1785 = vcombine.high %v1718, %v1718
        %v1787 = vunpack.c.l.s4 1983009808
        %v1788 = vunpack.c.0.s8 %v1787
        %v1789 = vlaneseq
        %v1790 = vshrl.u32 %v1789, 7
        %v1791 = vsub.s32 %v1788, %v1790
        %v1792 = vrot.slane %v1718, %v1791
        %v1794 = vunpack.c.l.s4 1983009808
        %v1795 = vunpack.c.0.s8 %v1794
        %v1796 = vlaneseq
        %v1797 = vshrl.u32 %v1796, 7
        %v1798 = vsub.s32 %v1795, %v1797
        %v1799 = vrot.slane %v1785, %v1798
        %v1800 = vcombine.high %v1792, %v1792
        %v1801 = vcombine.high %v1799, %v1799
        %v1803 = vshrl.u32 %v1792, 16
        %v1805 = vshll.u32 %v1792, 16
        %v1807 = vrot.slane %v1805, 1
        %v1808 = vor.u32 %v1803, %v1807
        %v1810 = vshrl.u32 %v1800, 16
        %v1812 = vshll.u32 %v1800, 16
        %v1814 = vrot.slane %v1812, 1
        %v1815 = vor.u32 %v1810, %v1814
        %v1817 = vshrl.u32 %v1799, 16
        %v1819 = vshll.u32 %v1799, 16
        %v1821 = vrot.slane %v1819, 1
        %v1822 = vor.u32 %v1817, %v1821
        %v1824 = vshrl.u32 %v1801, 16
        %v1826 = vshll.u32 %v1801, 16
        %v1828 = vrot.slane %v1826, 1
        %v1829 = vor.u32 %v1824, %v1828
        %v1898 = vunpack.c.l.b16 %v1720
        %v1899 = vunpack.c.h.b16 %v1720
        %v1900 = vunpack.c.l.b16 %v1721
        %v1901 = vunpack.c.h.b16 %v1721
        %v1902 = vunpack.c.l.b16 %v1722
        %v1903 = vunpack.c.h.b16 %v1722
        %v1904 = vunpack.c.l.b16 %v1723
        %v1905 = vunpack.c.h.b16 %v1723
        %v1906 = vunpack.c.l.b16 %v1724
        %v1907 = vunpack.c.h.b16 %v1724
        %v1908 = vunpack.c.l.b16 %v1725
        %v1909 = vunpack.c.h.b16 %v1725
        %v1910 = vunpack.c.l.b16 %v1726
        %v1911 = vunpack.c.h.b16 %v1726
        %v1912 = vunpack.c.l.b16 %v1727
        %v1913 = vunpack.c.h.b16 %v1727
        %v1914 = vunpack.c.l.b16 %v1728
        %v1915 = vunpack.c.h.b16 %v1728
        %v1916 = vunpack.c.l.b16 %v1729
        %v1917 = vunpack.c.h.b16 %v1729
        %v1918 = vunpack.c.l.b16 %v1730
        %v1919 = vunpack.c.h.b16 %v1730
        %v1920 = vunpack.c.l.b16 %v1731
        %v1921 = vunpack.c.h.b16 %v1731
        %v1922 = vunpack.c.l.b16 %v1732
        %v1923 = vunpack.c.h.b16 %v1732
        %v1924 = vunpack.c.l.b16 %v1733
        %v1925 = vunpack.c.h.b16 %v1733
        %v1926 = vunpack.c.l.b16 %v1734
        %v1927 = vunpack.c.h.b16 %v1734
        %v1928 = vunpack.c.l.b16 %v1735
        %v1929 = vunpack.c.h.b16 %v1735
        %v1930 = vunpack.c.l.b16 %v1736
        %v1931 = vunpack.c.h.b16 %v1736
        %v1932 = vunpack.c.l.b16 %v1737
        %v1933 = vunpack.c.h.b16 %v1737
        %v1934 = vunpack.c.l.b16 %v1738
        %v1935 = vunpack.c.h.b16 %v1738
        %v1936 = vunpack.c.l.b16 %v1739
        %v1937 = vunpack.c.h.b16 %v1739
        %v1938 = vunpack.c.l.b16 %v1740
        %v1939 = vunpack.c.h.b16 %v1740
        %v1940 = vunpack.c.l.b16 %v1741
        %v1941 = vunpack.c.h.b16 %v1741
        %v1942 = vunpack.c.l.b16 %v1742
        %v1943 = vunpack.c.h.b16 %v1742
        %v1944 = vunpack.c.l.b16 %v1743
        %v1945 = vunpack.c.h.b16 %v1743
        %v1946 = vunpack.c.l.b16 %v1744
        %v1947 = vunpack.c.h.b16 %v1744
        %v1948 = vunpack.c.l.b16 %v1745
        %v1949 = vunpack.c.h.b16 %v1745
        %v1950 = vunpack.c.l.b16 %v1746
        %v1951 = vunpack.c.h.b16 %v1746
        %v1952 = vunpack.c.l.b16 %v1747
        %v1953 = vunpack.c.h.b16 %v1747
        %v1954 = vunpack.c.l.b16 %v1748
        %v1955 = vunpack.c.h.b16 %v1748
        %v1956 = vunpack.c.l.b16 %v1749
        %v1957 = vunpack.c.h.b16 %v1749
        %v1958 = vunpack.c.l.b16 %v1750
        %v1959 = vunpack.c.h.b16 %v1750
        %v1960 = vunpack.c.l.b16 %v1751
        %v1961 = vunpack.c.h.b16 %v1751
        %v1962 = vunpack.c.l.b16 %v1752
        %v1963 = vunpack.c.h.b16 %v1752
        %v1964 = vunpack.c.l.b16 %v1753
        %v1965 = vunpack.c.h.b16 %v1753
        %v1966 = vunpack.c.l.b16 %v1754
        %v1967 = vunpack.c.h.b16 %v1754
        %v1968 = vunpack.c.l.b16 %v1755
        %v1969 = vunpack.c.h.b16 %v1755
        %v1970 = vunpack.c.l.b16 %v1756
        %v1971 = vunpack.c.h.b16 %v1756
        %v1972 = vunpack.c.l.b16 %v1757
        %v1973 = vunpack.c.h.b16 %v1757
        %v1974 = vunpack.c.l.b16 %v1758
        %v1975 = vunpack.c.h.b16 %v1758
        %v1976 = vunpack.c.l.b16 %v1759
        %v1977 = vunpack.c.h.b16 %v1759
        %v1978 = vunpack.c.l.b16 %v1760
        %v1979 = vunpack.c.h.b16 %v1760
        %v1980 = vunpack.c.l.b16 %v1761
        %v1981 = vunpack.c.h.b16 %v1761
        %v1982 = vunpack.c.l.b16 %v1762
        %v1983 = vunpack.c.h.b16 %v1762
        %v1984 = vunpack.c.l.b16 %v1763
        %v1985 = vunpack.c.h.b16 %v1763
        %v1986 = vunpack.c.l.b16 %v1764
        %v1987 = vunpack.c.h.b16 %v1764
        %v1988 = vunpack.c.l.b16 %v1765
        %v1989 = vunpack.c.h.b16 %v1765
        %v1990 = vunpack.c.l.b16 %v1766
        %v1991 = vunpack.c.h.b16 %v1766
        %v1992 = vunpack.c.l.b16 %v1767
        %v1993 = vunpack.c.h.b16 %v1767
        %v1994 = vunpack.c.l.b16 %v1768
        %v1995 = vunpack.c.h.b16 %v1768
        %v1996 = vunpack.c.l.b16 %v1769
        %v1997 = vunpack.c.h.b16 %v1769
        %v1998 = vunpack.c.l.b16 %v1770
        %v1999 = vunpack.c.h.b16 %v1770
        %v2000 = vunpack.c.l.b16 %v1771
        %v2001 = vunpack.c.h.b16 %v1771
        %v2002 = vunpack.c.l.b16 %v1772
        %v2003 = vunpack.c.h.b16 %v1772
        %v2004 = vunpack.c.l.b16 %v1773
        %v2005 = vunpack.c.h.b16 %v1773
        %v2006 = vunpack.c.l.b16 %v1774
        %v2007 = vunpack.c.h.b16 %v1774
        %v2008 = vunpack.c.l.b16 %v1775
        %v2009 = vunpack.c.h.b16 %v1775
        %v2010 = vunpack.c.l.b16 %v1776
        %v2011 = vunpack.c.h.b16 %v1776
        %v2012 = vunpack.c.l.b16 %v1777
        %v2013 = vunpack.c.h.b16 %v1777
        %v2014 = vunpack.c.l.b16 %v1778
        %v2015 = vunpack.c.h.b16 %v1778
        %v2016 = vunpack.c.l.b16 %v1779
        %v2017 = vunpack.c.h.b16 %v1779
        %v2018 = vunpack.c.l.b16 %v1780
        %v2019 = vunpack.c.h.b16 %v1780
        %v2020 = vunpack.c.l.b16 %v1781
        %v2021 = vunpack.c.h.b16 %v1781
        %v2022 = vunpack.c.l.b16 %v1782
        %v2023 = vunpack.c.h.b16 %v1782
        %v2024 = vunpack.c.l.b16 %v1783
        %v2025 = vunpack.c.h.b16 %v1783
        %v2026 = vpack.c.b16 %v1900, %v1898
        %v2027 = vpack.c.b16 %v1901, %v1899
        %v2028 = vpack.c.b16 %v1904, %v1902
        %v2029 = vpack.c.b16 %v1905, %v1903
        %v2030 = vpack.c.b16 %v1908, %v1906
        %v2031 = vpack.c.b16 %v1909, %v1907
        %v2032 = vpack.c.b16 %v1912, %v1910
        %v2033 = vpack.c.b16 %v1913, %v1911
        %v2034 = vpack.c.b16 %v1916, %v1914
        %v2035 = vpack.c.b16 %v1917, %v1915
        %v2036 = vpack.c.b16 %v1920, %v1918
        %v2037 = vpack.c.b16 %v1921, %v1919
        %v2038 = vpack.c.b16 %v1924, %v1922
        %v2039 = vpack.c.b16 %v1925, %v1923
        %v2040 = vpack.c.b16 %v1928, %v1926
        %v2041 = vpack.c.b16 %v1929, %v1927
        %v2042 = vpack.c.b16 %v1932, %v1930
        %v2043 = vpack.c.b16 %v1933, %v1931
        %v2044 = vpack.c.b16 %v1936, %v1934
        %v2045 = vpack.c.b16 %v1937, %v1935
        %v2046 = vpack.c.b16 %v1940, %v1938
        %v2047 = vpack.c.b16 %v1941, %v1939
        %v2048 = vpack.c.b16 %v1944, %v1942
        %v2049 = vpack.c.b16 %v1945, %v1943
        %v2050 = vpack.c.b16 %v1948, %v1946
        %v2051 = vpack.c.b16 %v1949, %v1947
        %v2052 = vpack.c.b16 %v1952, %v1950
        %v2053 = vpack.c.b16 %v1953, %v1951
        %v2054 = vpack.c.b16 %v1956, %v1954
        %v2055 = vpack.c.b16 %v1957, %v1955
        %v2056 = vpack.c.b16 %v1960, %v1958
        %v2057 = vpack.c.b16 %v1961, %v1959
        %v2058 = vpack.c.b16 %v1964, %v1962
        %v2059 = vpack.c.b16 %v1965, %v1963
        %v2060 = vpack.c.b16 %v1968, %v1966
        %v2061 = vpack.c.b16 %v1969, %v1967
        %v2062 = vpack.c.b16 %v1972, %v1970
        %v2063 = vpack.c.b16 %v1973, %v1971
        %v2064 = vpack.c.b16 %v1976, %v1974
        %v2065 = vpack.c.b16 %v1977, %v1975
        %v2066 = vpack.c.b16 %v1980, %v1978
        %v2067 = vpack.c.b16 %v1981, %v1979
        %v2068 = vpack.c.b16 %v1984, %v1982
        %v2069 = vpack.c.b16 %v1985, %v1983
        %v2070 = vpack.c.b16 %v1988, %v1986
        %v2071 = vpack.c.b16 %v1989, %v1987
        %v2072 = vpack.c.b16 %v1992, %v1990
        %v2073 = vpack.c.b16 %v1993, %v1991
        %v2074 = vpack.c.b16 %v1996, %v1994
        %v2075 = vpack.c.b16 %v1997, %v1995
        %v2076 = vpack.c.b16 %v2000, %v1998
        %v2077 = vpack.c.b16 %v2001, %v1999
        %v2078 = vpack.c.b16 %v2004, %v2002
        %v2079 = vpack.c.b16 %v2005, %v2003
        %v2080 = vpack.c.b16 %v2008, %v2006
        %v2081 = vpack.c.b16 %v2009, %v2007
        %v2082 = vpack.c.b16 %v2012, %v2010
        %v2083 = vpack.c.b16 %v2013, %v2011
        %v2084 = vpack.c.b16 %v2016, %v2014
        %v2085 = vpack.c.b16 %v2017, %v2015
        %v2086 = vpack.c.b16 %v2020, %v2018
        %v2087 = vpack.c.b16 %v2021, %v2019
        %v2088 = vpack.c.b16 %v2024, %v2022
        %v2089 = vpack.c.b16 %v2025, %v2023
        %2154 = vmatprep.subr.bf16.mxu0 %v2027
        %2155 = vmatpush1.bf16.msra.mxu0 %v2026
        %2156 = vmatprep.subr.bf16.mxu0 %v2029
        %2157 = vmatpush1.bf16.msra.mxu0 %v2028
        %2158 = vmatprep.subr.bf16.mxu0 %v2031
        %2159 = vmatpush1.bf16.msra.mxu0 %v2030
        %2160 = vmatprep.subr.bf16.mxu0 %v2033
        %2161 = vmatpush1.bf16.msra.mxu0 %v2032
        %2162 = vmatprep.subr.bf16.mxu0 %v2035
        %2163 = vmatpush1.bf16.msra.mxu0 %v2034
        %2164 = vmatprep.subr.bf16.mxu0 %v2037
        %2165 = vmatpush1.bf16.msra.mxu0 %v2036
        %2166 = vmatprep.subr.bf16.mxu0 %v2039
        %2167 = vmatpush1.bf16.msra.mxu0 %v2038
        %2168 = vmatprep.subr.bf16.mxu0 %v2041
        %2169 = vmatpush1.bf16.msra.mxu0 %v2040
        %2170 = vmatprep.subr.bf16.mxu0 %v2043
        %2171 = vmatpush1.bf16.msra.mxu0 %v2042
        %2172 = vmatprep.subr.bf16.mxu0 %v2045
        %2173 = vmatpush1.bf16.msra.mxu0 %v2044
        %2174 = vmatprep.subr.bf16.mxu0 %v2047
        %2175 = vmatpush1.bf16.msra.mxu0 %v2046
        %2176 = vmatprep.subr.bf16.mxu0 %v2049
        %2177 = vmatpush1.bf16.msra.mxu0 %v2048
        %2178 = vmatprep.subr.bf16.mxu0 %v2051
        %2179 = vmatpush1.bf16.msra.mxu0 %v2050
        %2180 = vmatprep.subr.bf16.mxu0 %v2053
        %2181 = vmatpush1.bf16.msra.mxu0 %v2052
        %2182 = vmatprep.subr.bf16.mxu0 %v2055
        %2183 = vmatpush1.bf16.msra.mxu0 %v2054
        %2184 = vmatprep.subr.bf16.mxu0 %v2057
        %2185 = vmatpush1.bf16.msra.mxu0 %v2056
        %2186 = vmatprep.mubr.bf16.mxu0 %v1815
        %2187 = vmatmul.mubr.bf16.gmra.mrb[0].mxu0 %v1808
        %v2188 = vpop.f32.mrb[0].mxu0
        %v2189 = vadd.f32 0.0, %v2188
        %v2190 = vpop.f32.mrb[0].mxu0
        %v2191 = vadd.f32 0.0, %v2190
        %v2192 = vpop.f32.mrb[0].mxu0
        %v2193 = vpop.f32.mrb[0].mxu0
        %2194 = vdwg.mxu0
        %2195 = vmatprep.subr.bf16.mxu0 %v2059
        %2196 = vmatpush1.bf16.msra.mxu0 %v2058
        %2197 = vmatprep.subr.bf16.mxu0 %v2061
        %2198 = vmatpush1.bf16.msra.mxu0 %v2060
        %2199 = vmatprep.subr.bf16.mxu0 %v2063
        %2200 = vmatpush1.bf16.msra.mxu0 %v2062
        %2201 = vmatprep.subr.bf16.mxu0 %v2065
        %2202 = vmatpush1.bf16.msra.mxu0 %v2064
        %2203 = vmatprep.subr.bf16.mxu0 %v2067
        %2204 = vmatpush1.bf16.msra.mxu0 %v2066
        %2205 = vmatprep.subr.bf16.mxu0 %v2069
        %2206 = vmatpush1.bf16.msra.mxu0 %v2068
        %2207 = vmatprep.subr.bf16.mxu0 %v2071
        %2208 = vmatpush1.bf16.msra.mxu0 %v2070
        %2209 = vmatprep.subr.bf16.mxu0 %v2073
        %2210 = vmatpush1.bf16.msra.mxu0 %v2072
        %2211 = vmatprep.subr.bf16.mxu0 %v2075
        %2212 = vmatpush1.bf16.msra.mxu0 %v2074
        %2213 = vmatprep.subr.bf16.mxu0 %v2077
        %2214 = vmatpush1.bf16.msra.mxu0 %v2076
        %2215 = vmatprep.subr.bf16.mxu0 %v2079
        %2216 = vmatpush1.bf16.msra.mxu0 %v2078
        %2217 = vmatprep.subr.bf16.mxu0 %v2081
        %2218 = vmatpush1.bf16.msra.mxu0 %v2080
        %2219 = vmatprep.subr.bf16.mxu0 %v2083
        %2220 = vmatpush1.bf16.msra.mxu0 %v2082
        %2221 = vmatprep.subr.bf16.mxu0 %v2085
        %2222 = vmatpush1.bf16.msra.mxu0 %v2084
        %2223 = vmatprep.subr.bf16.mxu0 %v2087
        %2224 = vmatpush1.bf16.msra.mxu0 %v2086
        %2225 = vmatprep.subr.bf16.mxu0 %v2089
        %2226 = vmatpush1.bf16.msra.mxu0 %v2088
        %2227 = vmatprep.mubr.bf16.mxu0 %v1829
        %2228 = vmatmul.mubr.bf16.gmra.mrb[0].mxu0 %v1822
        %v2229 = vpop.f32.mrb[0].mxu0
        %v2230 = vadd.f32 %v2189, %v2229
        %v2231 = vpop.f32.mrb[0].mxu0
        %v2232 = vadd.f32 %v2191, %v2231
        %v2233 = vpop.f32.mrb[0].mxu0
        %v2234 = vpop.f32.mrb[0].mxu0
        %2235 = vdwg.mxu0
        %v2236 = vadd.f32 %v1716, %v2230
        %v2237 = vadd.f32 %v1717, %v2232
        %v2239 = vlaneseq
        %v2240 = vshrl.u32 %v2239, 7
        %v2241 = vsub.s32 0, %v2240
        %v2242 = vrot.slane %v199, %v2241
        %v2243 = vlaneseq
        %v2244 = vshrl.u32 %v2243, 7
        %v2245 = vsub.s32 1, %v2244
        %v2246 = vrot.slane %v199, %v2245
        %v2249 = vadd.f32 %v2236, %v2242
        %v2250 = vadd.f32 %v2237, %v2246
        %v2253 = vcombine.low %v2249, %v2250
        %v2255 = vunpack.c.l.s4 1983009808
        %v2256 = vunpack.c.0.s8 %v2255
        %v2257 = vlaneseq
        %v2258 = vshrl.u32 %v2257, 7
        %v2259 = vsub.s32 %v2256, %v2258
        %v2260 = vrot.slane %v2253, %v2259
        %s2262 = smul.u32 %s207, 2
        %s2263 = smul.addr %s2262, 2
        %s2264 = scalar_lea.vmem [#allocation2], %s2263
        %2265 = vst [vmem:[%s2264] sm:$0xf] %v2260
        %v2266 = vld [vmem:[#allocation3] sm:$0x3]
        %vm2267 = vcmask 1041408
        %v2268 = vsel %vm2267, %v2249, 0.0
        %v2269 = vrot.slane %v2268, 4
        %v2270 = vadd.f32 %v2268, %v2269
        %v2271 = vrot.slane %v2270, 2
        %v2272 = vadd.f32 %v2270, %v2271
        %v2273 = vrot.slane %v2272, 1
        %v2274 = vadd.f32 %v2272, %v2273
        %v2275 = vsel %vm2267, %v2250, 0.0
        %v2276 = vrot.slane %v2275, 4
        %v2277 = vadd.f32 %v2275, %v2276
        %v2278 = vrot.slane %v2277, 2
        %v2279 = vadd.f32 %v2277, %v2278
        %v2280 = vrot.slane %v2279, 1
        %v2281 = vadd.f32 %v2279, %v2280
        %v2284 = vcombine.low %v2274, %v2281
        %v2286 = vunpack.c.l.s4 1966171168
        %v2287 = vunpack.c.0.s8 %v2286
        %v2288 = vlaneseq
        %v2289 = vshrl.u32 %v2288, 7
        %v2290 = vsub.s32 %v2287, %v2289
        %v2291 = vrot.slane %v2284, %v2290
        %v2293 = vunpack.c.l.s4 1966171168
        %v2294 = vunpack.c.0.s8 %v2293
        %v2295 = vlaneseq
        %v2296 = vshrl.u32 %v2295, 7
        %v2297 = vsub.s32 %v2294, %v2296
        %v2298 = vrot.slane %v2291, %v2297
        %v2300 = vadd.f32 %v2266, %v2298
        %2301 = vst.msk [vmem:[#allocation3] sm:$0x3] %vm203, %v2300
        %v2302 = vld [vmem:[#allocation4] sm:$0x3]
        %v2303 = vmul.f32 %v2249, %v2249
        %v2304 = vmul.f32 %v2250, %v2250
        %v2305 = vsel %vm2267, %v2303, 0.0
        %v2306 = vrot.slane %v2305, 4
        %v2307 = vadd.f32 %v2305, %v2306
        %v2308 = vrot.slane %v2307, 2
        %v2309 = vadd.f32 %v2307, %v2308
        %v2310 = vrot.slane %v2309, 1
        %v2311 = vadd.f32 %v2309, %v2310
        %v2312 = vsel %vm2267, %v2304, 0.0
        %v2313 = vrot.slane %v2312, 4
        %v2314 = vadd.f32 %v2312, %v2313
        %v2315 = vrot.slane %v2314, 2
        %v2316 = vadd.f32 %v2314, %v2315
        %v2317 = vrot.slane %v2316, 1
        %v2318 = vadd.f32 %v2316, %v2317
        %v2321 = vcombine.low %v2311, %v2318
        %v2323 = vunpack.c.l.s4 1966171168
        %v2324 = vunpack.c.0.s8 %v2323
        %v2325 = vlaneseq
        %v2326 = vshrl.u32 %v2325, 7
        %v2327 = vsub.s32 %v2324, %v2326
        %v2328 = vrot.slane %v2321, %v2327
        %v2330 = vunpack.c.l.s4 1966171168
        %v2331 = vunpack.c.0.s8 %v2330
        %v2332 = vlaneseq
        %v2333 = vshrl.u32 %v2332, 7
        %v2334 = vsub.s32 %v2331, %v2333
        %v2335 = vrot.slane %v2328, %v2334
        %v2337 = vadd.f32 %v2302, %v2335
        %2338 = vst.msk [vmem:[#allocation4] sm:$0x3] %vm203, %v2337
      $region41: #{discriminator_forward.7} parent=35 // loop_footer
        %s211 = sadd.s32 1, %s207
      $region42: #{discriminator_forward.7} parent=35 // loop_footer_branch
        %206 = sbr.rel target = $region38
      $region43: #{discriminator_forward.7} parent=35 // loop_exit
        _
      %v2339 = vld [vmem:[#allocation3] sm:$0x3]
      %v2340 = vmul.f32 %v2339, 0.25
      %v2341 = vld [vmem:[#allocation4] sm:$0x3]
      %v2342 = vmul.f32 %v2341, 0.25
      %v2343 = vmul.f32 %v2340, %v2340
      %v2344 = vsub.f32 %v2342, %v2343
      %v2345 = vadd.f32 %v2344, 1e-05
      %v2346 = vrsqrt.pop %v2345
      %v2347 = vsub.f32 0.0, %v2340
      %v2348 = vmul.f32 %v2347, %v2346
      %2349 = vst [vmem:[#allocation5] sm:$0x1f] 0.0
      %2350 = vst [vmem:[#allocation5 + $0x8] sm:$0x1f] 0.0
      %2351 = vst [vmem:[#allocation5 + $0x10] sm:$0x1f] 0.0
      %2352 = vst [vmem:[#allocation5 + $0x18] sm:$0x1f] 0.0
      %2353 = vst [vmem:[#allocation5 + $0x20] sm:$0x1f] 0.0
      %2354 = vst [vmem:[#allocation5 + $0x28] sm:$0x1f] 0.0
      %2355 = vst [vmem:[#allocation5 + $0x30] sm:$0x1f] 0.0
      %2356 = vst [vmem:[#allocation5 + $0x38] sm:$0x1f] 0.0
      %2357 = vst [vmem:[#allocation5 + $0x40] sm:$0x1f] 0.0
      %2358 = vst [vmem:[#allocation5 + $0x48] sm:$0x1f] 0.0
      loop: start=0, step=1, limit=2
      $region44: #{discriminator_forward.7} parent=35 // loop_pre_header
        _
      $region45: #{discriminator_forward.7} parent=35 // loop_header
        %s2360 = sphi 0, %s2364
        %p2361 = scmp.ge.s32.totalorder %s2360, 2
      $region46: #{discriminator_forward.7} parent=35 // loop_header_branch
        %2363 = sbr.rel (%p2361) target = $region50
      $region47: #{discriminator_forward.7} parent=35 // loop_body
        %s2365 = smul.u32 %s2360, 2
        %s2366 = smul.addr %s2365, 2
        %s2367 = scalar_lea.vmem [#allocation2], %s2366
        %v2368 = vld [vmem:[%s2367] sm:$0xf]
        %v2370 = vlaneseq
        %v2371 = vshrl.u32 %v2370, 7
        %v2372 = vsub.s32 0, %v2371
        %v2373 = vrot.slane %v2346, %v2372
        %v2374 = vlaneseq
        %v2375 = vshrl.u32 %v2374, 7
        %v2376 = vsub.s32 1, %v2375
        %v2377 = vrot.slane %v2346, %v2376
        %v2378 = vcombine.low %v2373, %v2377
        %v2380 = vunpack.c.l.s4 1983009808
        %v2381 = vunpack.c.0.s8 %v2380
        %v2382 = vlaneseq
        %v2383 = vshrl.u32 %v2382, 7
        %v2384 = vsub.s32 %v2381, %v2383
        %v2385 = vrot.slane %v2378, %v2384
        %v2387 = vmul.f32 %v2368, %v2385
        %v2389 = vlaneseq
        %v2390 = vshrl.u32 %v2389, 7
        %v2391 = vsub.s32 0, %v2390
        %v2392 = vrot.slane %v2348, %v2391
        %v2393 = vlaneseq
        %v2394 = vshrl.u32 %v2393, 7
        %v2395 = vsub.s32 1, %v2394
        %v2396 = vrot.slane %v2348, %v2395
        %v2397 = vcombine.low %v2392, %v2396
        %v2399 = vunpack.c.l.s4 1983009808
        %v2400 = vunpack.c.0.s8 %v2399
        %v2401 = vlaneseq
        %v2402 = vshrl.u32 %v2401, 7
        %v2403 = vsub.s32 %v2400, %v2402
        %v2404 = vrot.slane %v2397, %v2403
        %v2406 = vadd.f32 %v2387, %v2404
        %vm2407 = vcmp.gt.f32.partialorder %v2406, 0.0
        %v2408 = vmul.f32 %v2406, 0.2
        %v2409 = vsel %vm2407, %v2406, %v2408
        %s2410 = sadd.s32 %s2360, 2
        %v2412 = vcombine.low %v2409, %v2409
        %v2414 = vunpack.c.l.s4 1983009808
        %v2415 = vunpack.c.0.s8 %v2414
        %v2416 = vlaneseq
        %v2417 = vshrl.u32 %v2416, 7
        %v2418 = vsub.s32 %v2415, %v2417
        %v2419 = vrot.slane %v2412, %v2418
        %v2420 = vcombine.high %v2419, %v2419
        %s2423 = smul.u32 %s2410, 2
        %s2424 = smul.addr %s2423, 8
        %s2425 = scalar_lea.vmem [#allocation5], %s2424
        %2426 = vst [vmem:[%s2425] sm:$0xc] %v2419
        %2427 = vst [vmem:[%s2425 + $0x8] sm:$0xc] %v2420
      $region48: #{discriminator_forward.7} parent=35 // loop_footer
        %s2364 = sadd.s32 1, %s2360
      $region49: #{discriminator_forward.7} parent=35 // loop_footer_branch
        %2359 = sbr.rel target = $region45
      $region50: #{discriminator_forward.7} parent=35 // loop_exit
        _
      loop: start=0, step=1, limit=2
      $region51: #{discriminator_forward.7} parent=35 // loop_pre_header
        _
      $region52: #{discriminator_forward.7} parent=35 // loop_header
        %s2429 = sphi 0, %s2433
        %p2430 = scmp.ge.s32.totalorder %s2429, 2
      $region53: #{discriminator_forward.7} parent=35 // loop_header_branch
        %2432 = sbr.rel (%p2430) target = $region57
      $region54: #{discriminator_forward.7} parent=35 // loop_body
        %s2434 = smul.u32 %s2429, 2
        %s2435 = smul.addr %s2434, 8
        %s2436 = scalar_lea.vmem [#allocation5], %s2435
        %v2437 = vld [vmem:[%s2436] sm:$0x3]
        %v2438 = vld [vmem:[%s2436 + $0x8] sm:$0x3]
        %v2439 = vpack.c.bf16 %v2437, %v2437
        %v2440 = vpack.c.bf16 %v2438, %v2438
        %v2441 = vld [vmem:[%s3] sm:$0xf]
        %v2442 = vld [vmem:[%s3 + $0x4] sm:$0xf]
        %v2443 = vld [vmem:[%s3 + $0x8] sm:$0xf]
        %v2444 = vld [vmem:[%s3 + $0xc] sm:$0xf]
        %v2445 = vld [vmem:[%s3 + $0x10] sm:$0xf]
        %v2446 = vld [vmem:[%s3 + $0x14] sm:$0xf]
        %v2447 = vld [vmem:[%s3 + $0x18] sm:$0xf]
        %v2448 = vld [vmem:[%s3 + $0x1c] sm:$0xf]
        %v2449 = vld [vmem:[%s3 + $0x20] sm:$0xf]
        %v2450 = vld [vmem:[%s3 + $0x24] sm:$0xf]
        %v2451 = vld [vmem:[%s3 + $0x28] sm:$0xf]
        %v2452 = vld [vmem:[%s3 + $0x2c] sm:$0xf]
        %v2453 = vld [vmem:[%s3 + $0x30] sm:$0xf]
        %v2454 = vld [vmem:[%s3 + $0x34] sm:$0xf]
        %v2455 = vld [vmem:[%s3 + $0x38] sm:$0xf]
        %v2456 = vld [vmem:[%s3 + $0x3c] sm:$0xf]
        %v2457 = vld [vmem:[%s3 + $0x40] sm:$0xf]
        %v2458 = vld [vmem:[%s3 + $0x44] sm:$0xf]
        %v2459 = vld [vmem:[%s3 + $0x48] sm:$0xf]
        %v2460 = vld [vmem:[%s3 + $0x4c] sm:$0xf]
        %v2461 = vld [vmem:[%s3 + $0x50] sm:$0xf]
        %v2462 = vld [vmem:[%s3 + $0x54] sm:$0xf]
        %v2463 = vld [vmem:[%s3 + $0x58] sm:$0xf]
        %v2464 = vld [vmem:[%s3 + $0x5c] sm:$0xf]
        %v2465 = vld [vmem:[%s3 + $0x60] sm:$0xf]
        %v2466 = vld [vmem:[%s3 + $0x64] sm:$0xf]
        %v2467 = vld [vmem:[%s3 + $0x68] sm:$0xf]
        %v2468 = vld [vmem:[%s3 + $0x6c] sm:$0xf]
        %v2469 = vld [vmem:[%s3 + $0x70] sm:$0xf]
        %v2470 = vld [vmem:[%s3 + $0x74] sm:$0xf]
        %v2471 = vld [vmem:[%s3 + $0x78] sm:$0xf]
        %v2472 = vld [vmem:[%s3 + $0x7c] sm:$0xf]
        %v2473 = vld [vmem:[%s2436] sm:$0x6]
        %v2474 = vld [vmem:[%s2436 + $0x8] sm:$0x6]
        %v2475 = vpack.c.bf16 %v2473, %v2473
        %v2476 = vpack.c.bf16 %v2474, %v2474
        %s2477 = scalar_lea.vmem %s3, 128
        %v2478 = vld [vmem:[%s2477] sm:$0xf]
        %v2479 = vld [vmem:[%s2477 + $0x4] sm:$0xf]
        %v2480 = vld [vmem:[%s2477 + $0x8] sm:$0xf]
        %v2481 = vld [vmem:[%s2477 + $0xc] sm:$0xf]
        %v2482 = vld [vmem:[%s2477 + $0x10] sm:$0xf]
        %v2483 = vld [vmem:[%s2477 + $0x14] sm:$0xf]
        %v2484 = vld [vmem:[%s2477 + $0x18] sm:$0xf]
        %v2485 = vld [vmem:[%s2477 + $0x1c] sm:$0xf]
        %v2486 = vld [vmem:[%s2477 + $0x20] sm:$0xf]
        %v2487 = vld [vmem:[%s2477 + $0x24] sm:$0xf]
        %v2488 = vld [vmem:[%s2477 + $0x28] sm:$0xf]
        %v2489 = vld [vmem:[%s2477 + $0x2c] sm:$0xf]
        %v2490 = vld [vmem:[%s2477 + $0x30] sm:$0xf]
        %v2491 = vld [vmem:[%s2477 + $0x34] sm:$0xf]
        %v2492 = vld [vmem:[%s2477 + $0x38] sm:$0xf]
        %v2493 = vld [vmem:[%s2477 + $0x3c] sm:$0xf]
        %v2494 = vld [vmem:[%s2477 + $0x40] sm:$0xf]
        %v2495 = vld [vmem:[%s2477 + $0x44] sm:$0xf]
        %v2496 = vld [vmem:[%s2477 + $0x48] sm:$0xf]
        %v2497 = vld [vmem:[%s2477 + $0x4c] sm:$0xf]
        %v2498 = vld [vmem:[%s2477 + $0x50] sm:$0xf]
        %v2499 = vld [vmem:[%s2477 + $0x54] sm:$0xf]
        %v2500 = vld [vmem:[%s2477 + $0x58] sm:$0xf]
        %v2501 = vld [vmem:[%s2477 + $0x5c] sm:$0xf]
        %v2502 = vld [vmem:[%s2477 + $0x60] sm:$0xf]
        %v2503 = vld [vmem:[%s2477 + $0x64] sm:$0xf]
        %v2504 = vld [vmem:[%s2477 + $0x68] sm:$0xf]
        %v2505 = vld [vmem:[%s2477 + $0x6c] sm:$0xf]
        %v2506 = vld [vmem:[%s2477 + $0x70] sm:$0xf]
        %v2507 = vld [vmem:[%s2477 + $0x74] sm:$0xf]
        %v2508 = vld [vmem:[%s2477 + $0x78] sm:$0xf]
        %v2509 = vld [vmem:[%s2477 + $0x7c] sm:$0xf]
        %v2511 = vshrl.u32 %v2475, 16
        %v2513 = vshll.u32 %v2475, 16
        %v2515 = vrot.slane %v2513, 1
        %v2516 = vor.u32 %v2511, %v2515
        %v2518 = vshrl.u32 %v2476, 16
        %v2520 = vshll.u32 %v2476, 16
        %v2522 = vrot.slane %v2520, 1
        %v2523 = vor.u32 %v2518, %v2522
        %v2558 = vunpack.c.l.b16 %v2478
        %v2559 = vunpack.c.l.b16 %v2479
        %v2560 = vunpack.c.l.b16 %v2480
        %v2561 = vunpack.c.l.b16 %v2481
        %v2562 = vunpack.c.l.b16 %v2482
        %v2563 = vunpack.c.l.b16 %v2483
        %v2564 = vunpack.c.l.b16 %v2484
        %v2565 = vunpack.c.l.b16 %v2485
        %v2566 = vunpack.c.l.b16 %v2486
        %v2567 = vunpack.c.l.b16 %v2487
        %v2568 = vunpack.c.l.b16 %v2488
        %v2569 = vunpack.c.l.b16 %v2489
        %v2570 = vunpack.c.l.b16 %v2490
        %v2571 = vunpack.c.l.b16 %v2491
        %v2572 = vunpack.c.l.b16 %v2492
        %v2573 = vunpack.c.l.b16 %v2493
        %v2574 = vunpack.c.l.b16 %v2494
        %v2575 = vunpack.c.l.b16 %v2495
        %v2576 = vunpack.c.l.b16 %v2496
        %v2577 = vunpack.c.l.b16 %v2497
        %v2578 = vunpack.c.l.b16 %v2498
        %v2579 = vunpack.c.l.b16 %v2499
        %v2580 = vunpack.c.l.b16 %v2500
        %v2581 = vunpack.c.l.b16 %v2501
        %v2582 = vunpack.c.l.b16 %v2502
        %v2583 = vunpack.c.l.b16 %v2503
        %v2584 = vunpack.c.l.b16 %v2504
        %v2585 = vunpack.c.l.b16 %v2505
        %v2586 = vunpack.c.l.b16 %v2506
        %v2587 = vunpack.c.l.b16 %v2507
        %v2588 = vunpack.c.l.b16 %v2508
        %v2589 = vunpack.c.l.b16 %v2509
        %v2590 = vpack.c.b16 %v2559, %v2558
        %v2591 = vpack.c.b16 %v2561, %v2560
        %v2592 = vpack.c.b16 %v2563, %v2562
        %v2593 = vpack.c.b16 %v2565, %v2564
        %v2594 = vpack.c.b16 %v2567, %v2566
        %v2595 = vpack.c.b16 %v2569, %v2568
        %v2596 = vpack.c.b16 %v2571, %v2570
        %v2597 = vpack.c.b16 %v2573, %v2572
        %v2598 = vpack.c.b16 %v2575, %v2574
        %v2599 = vpack.c.b16 %v2577, %v2576
        %v2600 = vpack.c.b16 %v2579, %v2578
        %v2601 = vpack.c.b16 %v2581, %v2580
        %v2602 = vpack.c.b16 %v2583, %v2582
        %v2603 = vpack.c.b16 %v2585, %v2584
        %v2604 = vpack.c.b16 %v2587, %v2586
        %v2605 = vpack.c.b16 %v2589, %v2588
        %2622 = vmatprep.subr.bf16.mxu0 0
        %2623 = vmatpush1.bf16.msra.mxu0 %v2590
        %2624 = vmatprep.subr.bf16.mxu0 0
        %2625 = vmatpush1.bf16.msra.mxu0 %v2591
        %2626 = vmatprep.subr.bf16.mxu0 0
        %2627 = vmatpush1.bf16.msra.mxu0 %v2592
        %2628 = vmatprep.subr.bf16.mxu0 0
        %2629 = vmatpush1.bf16.msra.mxu0 %v2593
        %2630 = vmatprep.subr.bf16.mxu0 0
        %2631 = vmatpush1.bf16.msra.mxu0 %v2594
        %2632 = vmatprep.subr.bf16.mxu0 0
        %2633 = vmatpush1.bf16.msra.mxu0 %v2595
        %2634 = vmatprep.subr.bf16.mxu0 0
        %2635 = vmatpush1.bf16.msra.mxu0 %v2596
        %2636 = vmatprep.subr.bf16.mxu0 0
        %2637 = vmatpush1.bf16.msra.mxu0 %v2597
        %2638 = vmatprep.subr.bf16.mxu0 0
        %2639 = vmatpush1.bf16.msra.mxu0 %v2598
        %2640 = vmatprep.subr.bf16.mxu0 0
        %2641 = vmatpush1.bf16.msra.mxu0 %v2599
        %2642 = vmatprep.subr.bf16.mxu0 0
        %2643 = vmatpush1.bf16.msra.mxu0 %v2600
        %2644 = vmatprep.subr.bf16.mxu0 0
        %2645 = vmatpush1.bf16.msra.mxu0 %v2601
        %2646 = vmatprep.subr.bf16.mxu0 0
        %2647 = vmatpush1.bf16.msra.mxu0 %v2602
        %2648 = vmatprep.subr.bf16.mxu0 0
        %2649 = vmatpush1.bf16.msra.mxu0 %v2603
        %2650 = vmatprep.subr.bf16.mxu0 0
        %2651 = vmatpush1.bf16.msra.mxu0 %v2604
        %2652 = vmatprep.subr.bf16.mxu0 0
        %2653 = vmatpush1.bf16.msra.mxu0 %v2605
        %2654 = vmatprep.mubr.bf16.mxu0 %v2523
        %2655 = vmatmul.mubr.bf16.gmra.mrb[0].mxu0 %v2516
        %v2656 = vpop.f32.mrb[0].mxu0
        %v2657 = vadd.f32 0.0, %v2656
        %v2658 = vpop.f32.mrb[0].mxu0
        %v2659 = vpop.f32.mrb[0].mxu0
        %v2660 = vpop.f32.mrb[0].mxu0
        %2661 = vdwg.mxu0
        %v2694 = vunpack.c.l.b16 %v2441
        %v2695 = vunpack.c.l.b16 %v2442
        %v2696 = vunpack.c.l.b16 %v2443
        %v2697 = vunpack.c.l.b16 %v2444
        %v2698 = vunpack.c.l.b16 %v2445
        %v2699 = vunpack.c.l.b16 %v2446
        %v2700 = vunpack.c.l.b16 %v2447
        %v2701 = vunpack.c.l.b16 %v2448
        %v2702 = vunpack.c.l.b16 %v2449
        %v2703 = vunpack.c.l.b16 %v2450
        %v2704 = vunpack.c.l.b16 %v2451
        %v2705 = vunpack.c.l.b16 %v2452
        %v2706 = vunpack.c.l.b16 %v2453
        %v2707 = vunpack.c.l.b16 %v2454
        %v2708 = vunpack.c.l.b16 %v2455
        %v2709 = vunpack.c.l.b16 %v2456
        %v2710 = vunpack.c.l.b16 %v2457
        %v2711 = vunpack.c.l.b16 %v2458
        %v2712 = vunpack.c.l.b16 %v2459
        %v2713 = vunpack.c.l.b16 %v2460
        %v2714 = vunpack.c.l.b16 %v2461
        %v2715 = vunpack.c.l.b16 %v2462
        %v2716 = vunpack.c.l.b16 %v2463
        %v2717 = vunpack.c.l.b16 %v2464
        %v2718 = vunpack.c.l.b16 %v2465
        %v2719 = vunpack.c.l.b16 %v2466
        %v2720 = vunpack.c.l.b16 %v2467
        %v2721 = vunpack.c.l.b16 %v2468
        %v2722 = vunpack.c.l.b16 %v2469
        %v2723 = vunpack.c.l.b16 %v2470
        %v2724 = vunpack.c.l.b16 %v2471
        %v2725 = vunpack.c.l.b16 %v2472
        %v2726 = vpack.c.b16 %v2695, %v2694
        %v2727 = vpack.c.b16 %v2697, %v2696
        %v2728 = vpack.c.b16 %v2699, %v2698
        %v2729 = vpack.c.b16 %v2701, %v2700
        %v2730 = vpack.c.b16 %v2703, %v2702
        %v2731 = vpack.c.b16 %v2705, %v2704
        %v2732 = vpack.c.b16 %v2707, %v2706
        %v2733 = vpack.c.b16 %v2709, %v2708
        %v2734 = vpack.c.b16 %v2711, %v2710
        %v2735 = vpack.c.b16 %v2713, %v2712
        %v2736 = vpack.c.b16 %v2715, %v2714
        %v2737 = vpack.c.b16 %v2717, %v2716
        %v2738 = vpack.c.b16 %v2719, %v2718
        %v2739 = vpack.c.b16 %v2721, %v2720
        %v2740 = vpack.c.b16 %v2723, %v2722
        %v2741 = vpack.c.b16 %v2725, %v2724
        %2758 = vmatprep.subr.bf16.mxu0 0
        %2759 = vmatpush1.bf16.msra.mxu0 %v2726
        %2760 = vmatprep.subr.bf16.mxu0 0
        %2761 = vmatpush1.bf16.msra.mxu0 %v2727
        %2762 = vmatprep.subr.bf16.mxu0 0
        %2763 = vmatpush1.bf16.msra.mxu0 %v2728
        %2764 = vmatprep.subr.bf16.mxu0 0
        %2765 = vmatpush1.bf16.msra.mxu0 %v2729
        %2766 = vmatprep.subr.bf16.mxu0 0
        %2767 = vmatpush1.bf16.msra.mxu0 %v2730
        %2768 = vmatprep.subr.bf16.mxu0 0
        %2769 = vmatpush1.bf16.msra.mxu0 %v2731
        %2770 = vmatprep.subr.bf16.mxu0 0
        %2771 = vmatpush1.bf16.msra.mxu0 %v2732
        %2772 = vmatprep.subr.bf16.mxu0 0
        %2773 = vmatpush1.bf16.msra.mxu0 %v2733
        %2774 = vmatprep.subr.bf16.mxu0 0
        %2775 = vmatpush1.bf16.msra.mxu0 %v2734
        %2776 = vmatprep.subr.bf16.mxu0 0
        %2777 = vmatpush1.bf16.msra.mxu0 %v2735
        %2778 = vmatprep.subr.bf16.mxu0 0
        %2779 = vmatpush1.bf16.msra.mxu0 %v2736
        %2780 = vmatprep.subr.bf16.mxu0 0
        %2781 = vmatpush1.bf16.msra.mxu0 %v2737
        %2782 = vmatprep.subr.bf16.mxu0 0
        %2783 = vmatpush1.bf16.msra.mxu0 %v2738
        %2784 = vmatprep.subr.bf16.mxu0 0
        %2785 = vmatpush1.bf16.msra.mxu0 %v2739
        %2786 = vmatprep.subr.bf16.mxu0 0
        %2787 = vmatpush1.bf16.msra.mxu0 %v2740
        %2788 = vmatprep.subr.bf16.mxu0 0
        %2789 = vmatpush1.bf16.msra.mxu0 %v2741
        %2790 = vmatprep.mubr.bf16.mxu0 %v2440
        %2791 = vmatmul.mubr.bf16.gmra.mrb[0].mxu0 %v2439
        %v2792 = vpop.f32.mrb[0].mxu0
        %v2793 = vadd.f32 %v2657, %v2792
        %v2794 = vpop.f32.mrb[0].mxu0
        %v2795 = vpop.f32.mrb[0].mxu0
        %v2796 = vpop.f32.mrb[0].mxu0
        %2797 = vdwg.mxu0
        %v2798 = vld [vmem:[%s2436] sm:$0xc]
        %v2799 = vld [vmem:[%s2436 + $0x8] sm:$0xc]
        %v2800 = vpack.c.bf16 %v2798, %v2798
        %v2801 = vpack.c.bf16 %v2799, %v2799
        %s2802 = scalar_lea.vmem %s3, 256
        %v2803 = vld [vmem:[%s2802] sm:$0xf]
        %v2804 = vld [vmem:[%s2802 + $0x4] sm:$0xf]
        %v2805 = vld [vmem:[%s2802 + $0x8] sm:$0xf]
        %v2806 = vld [vmem:[%s2802 + $0xc] sm:$0xf]
        %v2807 = vld [vmem:[%s2802 + $0x10] sm:$0xf]
        %v2808 = vld [vmem:[%s2802 + $0x14] sm:$0xf]
        %v2809 = vld [vmem:[%s2802 + $0x18] sm:$0xf]
        %v2810 = vld [vmem:[%s2802 + $0x1c] sm:$0xf]
        %v2811 = vld [vmem:[%s2802 + $0x20] sm:$0xf]
        %v2812 = vld [vmem:[%s2802 + $0x24] sm:$0xf]
        %v2813 = vld [vmem:[%s2802 + $0x28] sm:$0xf]
        %v2814 = vld [vmem:[%s2802 + $0x2c] sm:$0xf]
        %v2815 = vld [vmem:[%s2802 + $0x30] sm:$0xf]
        %v2816 = vld [vmem:[%s2802 + $0x34] sm:$0xf]
        %v2817 = vld [vmem:[%s2802 + $0x38] sm:$0xf]
        %v2818 = vld [vmem:[%s2802 + $0x3c] sm:$0xf]
        %v2819 = vld [vmem:[%s2802 + $0x40] sm:$0xf]
        %v2820 = vld [vmem:[%s2802 + $0x44] sm:$0xf]
        %v2821 = vld [vmem:[%s2802 + $0x48] sm:$0xf]
        %v2822 = vld [vmem:[%s2802 + $0x4c] sm:$0xf]
        %v2823 = vld [vmem:[%s2802 + $0x50] sm:$0xf]
        %v2824 = vld [vmem:[%s2802 + $0x54] sm:$0xf]
        %v2825 = vld [vmem:[%s2802 + $0x58] sm:$0xf]
        %v2826 = vld [vmem:[%s2802 + $0x5c] sm:$0xf]
        %v2827 = vld [vmem:[%s2802 + $0x60] sm:$0xf]
        %v2828 = vld [vmem:[%s2802 + $0x64] sm:$0xf]
        %v2829 = vld [vmem:[%s2802 + $0x68] sm:$0xf]
        %v2830 = vld [vmem:[%s2802 + $0x6c] sm:$0xf]
        %v2831 = vld [vmem:[%s2802 + $0x70] sm:$0xf]
        %v2832 = vld [vmem:[%s2802 + $0x74] sm:$0xf]
        %v2833 = vld [vmem:[%s2802 + $0x78] sm:$0xf]
        %v2834 = vld [vmem:[%s2802 + $0x7c] sm:$0xf]
        %v2837 = vrot.slane %v2800, 1
        %v2838 = vrot.slane %v2801, 1
        %v2873 = vunpack.c.l.b16 %v2803
        %v2874 = vunpack.c.l.b16 %v2804
        %v2875 = vunpack.c.l.b16 %v2805
        %v2876 = vunpack.c.l.b16 %v2806
        %v2877 = vunpack.c.l.b16 %v2807
        %v2878 = vunpack.c.l.b16 %v2808
        %v2879 = vunpack.c.l.b16 %v2809
        %v2880 = vunpack.c.l.b16 %v2810
        %v2881 = vunpack.c.l.b16 %v2811
        %v2882 = vunpack.c.l.b16 %v2812
        %v2883 = vunpack.c.l.b16 %v2813
        %v2884 = vunpack.c.l.b16 %v2814
        %v2885 = vunpack.c.l.b16 %v2815
        %v2886 = vunpack.c.l.b16 %v2816
        %v2887 = vunpack.c.l.b16 %v2817
        %v2888 = vunpack.c.l.b16 %v2818
        %v2889 = vunpack.c.l.b16 %v2819
        %v2890 = vunpack.c.l.b16 %v2820
        %v2891 = vunpack.c.l.b16 %v2821
        %v2892 = vunpack.c.l.b16 %v2822
        %v2893 = vunpack.c.l.b16 %v2823
        %v2894 = vunpack.c.l.b16 %v2824
        %v2895 = vunpack.c.l.b16 %v2825
        %v2896 = vunpack.c.l.b16 %v2826
        %v2897 = vunpack.c.l.b16 %v2827
        %v2898 = vunpack.c.l.b16 %v2828
        %v2899 = vunpack.c.l.b16 %v2829
        %v2900 = vunpack.c.l.b16 %v2830
        %v2901 = vunpack.c.l.b16 %v2831
        %v2902 = vunpack.c.l.b16 %v2832
        %v2903 = vunpack.c.l.b16 %v2833
        %v2904 = vunpack.c.l.b16 %v2834
        %v2905 = vpack.c.b16 %v2874, %v2873
        %v2906 = vpack.c.b16 %v2876, %v2875
        %v2907 = vpack.c.b16 %v2878, %v2877
        %v2908 = vpack.c.b16 %v2880, %v2879
        %v2909 = vpack.c.b16 %v2882, %v2881
        %v2910 = vpack.c.b16 %v2884, %v2883
        %v2911 = vpack.c.b16 %v2886, %v2885
        %v2912 = vpack.c.b16 %v2888, %v2887
        %v2913 = vpack.c.b16 %v2890, %v2889
        %v2914 = vpack.c.b16 %v2892, %v2891
        %v2915 = vpack.c.b16 %v2894, %v2893
        %v2916 = vpack.c.b16 %v2896, %v2895
        %v2917 = vpack.c.b16 %v2898, %v2897
        %v2918 = vpack.c.b16 %v2900, %v2899
        %v2919 = vpack.c.b16 %v2902, %v2901
        %v2920 = vpack.c.b16 %v2904, %v2903
        %2937 = vmatprep.subr.bf16.mxu0 0
        %2938 = vmatpush1.bf16.msra.mxu0 %v2905
        %2939 = vmatprep.subr.bf16.mxu0 0
        %2940 = vmatpush1.bf16.msra.mxu0 %v2906
        %2941 = vmatprep.subr.bf16.mxu0 0
        %2942 = vmatpush1.bf16.msra.mxu0 %v2907
        %2943 = vmatprep.subr.bf16.mxu0 0
        %2944 = vmatpush1.bf16.msra.mxu0 %v2908
        %2945 = vmatprep.subr.bf16.mxu0 0
        %2946 = vmatpush1.bf16.msra.mxu0 %v2909
        %2947 = vmatprep.subr.bf16.mxu0 0
        %2948 = vmatpush1.bf16.msra.mxu0 %v2910
        %2949 = vmatprep.subr.bf16.mxu0 0
        %2950 = vmatpush1.bf16.msra.mxu0 %v2911
        %2951 = vmatprep.subr.bf16.mxu0 0
        %2952 = vmatpush1.bf16.msra.mxu0 %v2912
        %2953 = vmatprep.subr.bf16.mxu0 0
        %2954 = vmatpush1.bf16.msra.mxu0 %v2913
        %2955 = vmatprep.subr.bf16.mxu0 0
        %2956 = vmatpush1.bf16.msra.mxu0 %v2914
        %2957 = vmatprep.subr.bf16.mxu0 0
        %2958 = vmatpush1.bf16.msra.mxu0 %v2915
        %2959 = vmatprep.subr.bf16.mxu0 0
        %2960 = vmatpush1.bf16.msra.mxu0 %v2916
        %2961 = vmatprep.subr.bf16.mxu0 0
        %2962 = vmatpush1.bf16.msra.mxu0 %v2917
        %2963 = vmatprep.subr.bf16.mxu0 0
        %2964 = vmatpush1.bf16.msra.mxu0 %v2918
        %2965 = vmatprep.subr.bf16.mxu0 0
        %2966 = vmatpush1.bf16.msra.mxu0 %v2919
        %2967 = vmatprep.subr.bf16.mxu0 0
        %2968 = vmatpush1.bf16.msra.mxu0 %v2920
        %2969 = vmatprep.mubr.bf16.mxu0 %v2838
        %2970 = vmatmul.mubr.bf16.gmra.mrb[0].mxu0 %v2837
        %v2971 = vpop.f32.mrb[0].mxu0
        %v2972 = vadd.f32 0.0, %v2971
        %v2973 = vpop.f32.mrb[0].mxu0
        %v2974 = vpop.f32.mrb[0].mxu0
        %v2975 = vpop.f32.mrb[0].mxu0
        %2976 = vdwg.mxu0
        %v2977 = vadd.f32 %v2793, %v2972
        %v2978 = vld [vmem:[%s2436] sm:$0x18]
        %v2979 = vld [vmem:[%s2436 + $0x8] sm:$0x18]
        %v2980 = vpack.c.bf16 %v2978, %v2978
        %v2981 = vpack.c.bf16 %v2979, %v2979
        %s2982 = scalar_lea.vmem %s3, 384
        %v2983 = vld [vmem:[%s2982] sm:$0xf]
        %v2984 = vld [vmem:[%s2982 + $0x4] sm:$0xf]
        %v2985 = vld [vmem:[%s2982 + $0x8] sm:$0xf]
        %v2986 = vld [vmem:[%s2982 + $0xc] sm:$0xf]
        %v2987 = vld [vmem:[%s2982 + $0x10] sm:$0xf]
        %v2988 = vld [vmem:[%s2982 + $0x14] sm:$0xf]
        %v2989 = vld [vmem:[%s2982 + $0x18] sm:$0xf]
        %v2990 = vld [vmem:[%s2982 + $0x1c] sm:$0xf]
        %v2991 = vld [vmem:[%s2982 + $0x20] sm:$0xf]
        %v2992 = vld [vmem:[%s2982 + $0x24] sm:$0xf]
        %v2993 = vld [vmem:[%s2982 + $0x28] sm:$0xf]
        %v2994 = vld [vmem:[%s2982 + $0x2c] sm:$0xf]
        %v2995 = vld [vmem:[%s2982 + $0x30] sm:$0xf]
        %v2996 = vld [vmem:[%s2982 + $0x34] sm:$0xf]
        %v2997 = vld [vmem:[%s2982 + $0x38] sm:$0xf]
        %v2998 = vld [vmem:[%s2982 + $0x3c] sm:$0xf]
        %v2999 = vld [vmem:[%s2982 + $0x40] sm:$0xf]
        %v3000 = vld [vmem:[%s2982 + $0x44] sm:$0xf]
        %v3001 = vld [vmem:[%s2982 + $0x48] sm:$0xf]
        %v3002 = vld [vmem:[%s2982 + $0x4c] sm:$0xf]
        %v3003 = vld [vmem:[%s2982 + $0x50] sm:$0xf]
        %v3004 = vld [vmem:[%s2982 + $0x54] sm:$0xf]
        %v3005 = vld [vmem:[%s2982 + $0x58] sm:$0xf]
        %v3006 = vld [vmem:[%s2982 + $0x5c] sm:$0xf]
        %v3007 = vld [vmem:[%s2982 + $0x60] sm:$0xf]
        %v3008 = vld [vmem:[%s2982 + $0x64] sm:$0xf]
        %v3009 = vld [vmem:[%s2982 + $0x68] sm:$0xf]
        %v3010 = vld [vmem:[%s2982 + $0x6c] sm:$0xf]
        %v3011 = vld [vmem:[%s2982 + $0x70] sm:$0xf]
        %v3012 = vld [vmem:[%s2982 + $0x74] sm:$0xf]
        %v3013 = vld [vmem:[%s2982 + $0x78] sm:$0xf]
        %v3014 = vld [vmem:[%s2982 + $0x7c] sm:$0xf]
        %v3016 = vshrl.u32 %v2980, 16
        %v3018 = vrot.slane %v3016, 1
        %v3019 = vshll.u32 %v2980, 16
        %v3021 = vrot.slane %v3019, 2
        %v3022 = vor.u32 %v3018, %v3021
        %v3024 = vshrl.u32 %v2981, 16
        %v3026 = vrot.slane %v3024, 1
        %v3027 = vshll.u32 %v2981, 16
        %v3029 = vrot.slane %v3027, 2
        %v3030 = vor.u32 %v3026, %v3029
        %v3065 = vunpack.c.l.b16 %v2983
        %v3066 = vunpack.c.l.b16 %v2984
        %v3067 = vunpack.c.l.b16 %v2985
        %v3068 = vunpack.c.l.b16 %v2986
        %v3069 = vunpack.c.l.b16 %v2987
        %v3070 = vunpack.c.l.b16 %v2988
        %v3071 = vunpack.c.l.b16 %v2989
        %v3072 = vunpack.c.l.b16 %v2990
        %v3073 = vunpack.c.l.b16 %v2991
        %v3074 = vunpack.c.l.b16 %v2992
        %v3075 = vunpack.c.l.b16 %v2993
        %v3076 = vunpack.c.l.b16 %v2994
        %v3077 = vunpack.c.l.b16 %v2995
        %v3078 = vunpack.c.l.b16 %v2996
        %v3079 = vunpack.c.l.b16 %v2997
        %v3080 = vunpack.c.l.b16 %v2998
        %v3081 = vunpack.c.l.b16 %v2999
        %v3082 = vunpack.c.l.b16 %v3000
        %v3083 = vunpack.c.l.b16 %v3001
        %v3084 = vunpack.c.l.b16 %v3002
        %v3085 = vunpack.c.l.b16 %v3003
        %v3086 = vunpack.c.l.b16 %v3004
        %v3087 = vunpack.c.l.b16 %v3005
        %v3088 = vunpack.c.l.b16 %v3006
        %v3089 = vunpack.c.l.b16 %v3007
        %v3090 = vunpack.c.l.b16 %v3008
        %v3091 = vunpack.c.l.b16 %v3009
        %v3092 = vunpack.c.l.b16 %v3010
        %v3093 = vunpack.c.l.b16 %v3011
        %v3094 = vunpack.c.l.b16 %v3012
        %v3095 = vunpack.c.l.b16 %v3013
        %v3096 = vunpack.c.l.b16 %v3014
        %v3097 = vpack.c.b16 %v3066, %v3065
        %v3098 = vpack.c.b16 %v3068, %v3067
        %v3099 = vpack.c.b16 %v3070, %v3069
        %v3100 = vpack.c.b16 %v3072, %v3071
        %v3101 = vpack.c.b16 %v3074, %v3073
        %v3102 = vpack.c.b16 %v3076, %v3075
        %v3103 = vpack.c.b16 %v3078, %v3077
        %v3104 = vpack.c.b16 %v3080, %v3079
        %v3105 = vpack.c.b16 %v3082, %v3081
        %v3106 = vpack.c.b16 %v3084, %v3083
        %v3107 = vpack.c.b16 %v3086, %v3085
        %v3108 = vpack.c.b16 %v3088, %v3087
        %v3109 = vpack.c.b16 %v3090, %v3089
        %v3110 = vpack.c.b16 %v3092, %v3091
        %v3111 = vpack.c.b16 %v3094, %v3093
        %v3112 = vpack.c.b16 %v3096, %v3095
        %3129 = vmatprep.subr.bf16.mxu0 0
        %3130 = vmatpush1.bf16.msra.mxu0 %v3097
        %3131 = vmatprep.subr.bf16.mxu0 0
        %3132 = vmatpush1.bf16.msra.mxu0 %v3098
        %3133 = vmatprep.subr.bf16.mxu0 0
        %3134 = vmatpush1.bf16.msra.mxu0 %v3099
        %3135 = vmatprep.subr.bf16.mxu0 0
        %3136 = vmatpush1.bf16.msra.mxu0 %v3100
        %3137 = vmatprep.subr.bf16.mxu0 0
        %3138 = vmatpush1.bf16.msra.mxu0 %v3101
        %3139 = vmatprep.subr.bf16.mxu0 0
        %3140 = vmatpush1.bf16.msra.mxu0 %v3102
        %3141 = vmatprep.subr.bf16.mxu0 0
        %3142 = vmatpush1.bf16.msra.mxu0 %v3103
        %3143 = vmatprep.subr.bf16.mxu0 0
        %3144 = vmatpush1.bf16.msra.mxu0 %v3104
        %3145 = vmatprep.subr.bf16.mxu0 0
        %3146 = vmatpush1.bf16.msra.mxu0 %v3105
        %3147 = vmatprep.subr.bf16.mxu0 0
        %3148 = vmatpush1.bf16.msra.mxu0 %v3106
        %3149 = vmatprep.subr.bf16.mxu0 0
        %3150 = vmatpush1.bf16.msra.mxu0 %v3107
        %3151 = vmatprep.subr.bf16.mxu0 0
        %3152 = vmatpush1.bf16.msra.mxu0 %v3108
        %3153 = vmatprep.subr.bf16.mxu0 0
        %3154 = vmatpush1.bf16.msra.mxu0 %v3109
        %3155 = vmatprep.subr.bf16.mxu0 0
        %3156 = vmatpush1.bf16.msra.mxu0 %v3110
        %3157 = vmatprep.subr.bf16.mxu0 0
        %3158 = vmatpush1.bf16.msra.mxu0 %v3111
        %3159 = vmatprep.subr.bf16.mxu0 0
        %3160 = vmatpush1.bf16.msra.mxu0 %v3112
        %3161 = vmatprep.mubr.bf16.mxu0 %v3030
        %3162 = vmatmul.mubr.bf16.gmra.mrb[0].mxu0 %v3022
        %v3163 = vpop.f32.mrb[0].mxu0
        %v3164 = vadd.f32 0.0, %v3163
        %v3165 = vpop.f32.mrb[0].mxu0
        %v3166 = vpop.f32.mrb[0].mxu0
        %v3167 = vpop.f32.mrb[0].mxu0
        %3168 = vdwg.mxu0
        %v3169 = vadd.f32 %v2977, %v3164
        %s3170 = sadd.s32 %s2429, 1
        %s3171 = smul.u32 %s3170, 2
        %s3172 = smul.addr %s3171, 8
        %s3173 = scalar_lea.vmem [#allocation5], %s3172
        %v3174 = vld [vmem:[%s3173] sm:$0x3]
        %v3175 = vld [vmem:[%s3173 + $0x8] sm:$0x3]
        %v3176 = vpack.c.bf16 %v3174, %v3174
        %v3177 = vpack.c.bf16 %v3175, %v3175
        %s3178 = scalar_lea.vmem %s3, 512
        %v3179 = vld [vmem:[%s3178] sm:$0xf]
        %v3180 = vld [vmem:[%s3178 + $0x4] sm:$0xf]
        %v3181 = vld [vmem:[%s3178 + $0x8] sm:$0xf]
        %v3182 = vld [vmem:[%s3178 + $0xc] sm:$0xf]
        %v3183 = vld [vmem:[%s3178 + $0x10] sm:$0xf]
        %v3184 = vld [vmem:[%s3178 + $0x14] sm:$0xf]
        %v3185 = vld [vmem:[%s3178 + $0x18] sm:$0xf]
        %v3186 = vld [vmem:[%s3178 + $0x1c] sm:$0xf]
        %v3187 = vld [vmem:[%s3178 + $0x20] sm:$0xf]
        %v3188 = vld [vmem:[%s3178 + $0x24] sm:$0xf]
        %v3189 = vld [vmem:[%s3178 + $0x28] sm:$0xf]
        %v3190 = vld [vmem:[%s3178 + $0x2c] sm:$0xf]
        %v3191 = vld [vmem:[%s3178 + $0x30] sm:$0xf]
        %v3192 = vld [vmem:[%s3178 + $0x34] sm:$0xf]
        %v3193 = vld [vmem:[%s3178 + $0x38] sm:$0xf]
        %v3194 = vld [vmem:[%s3178 + $0x3c] sm:$0xf]
        %v3195 = vld [vmem:[%s3178 + $0x40] sm:$0xf]
        %v3196 = vld [vmem:[%s3178 + $0x44] sm:$0xf]
        %v3197 = vld [vmem:[%s3178 + $0x48] sm:$0xf]
        %v3198 = vld [vmem:[%s3178 + $0x4c] sm:$0xf]
        %v3199 = vld [vmem:[%s3178 + $0x50] sm:$0xf]
        %v3200 = vld [vmem:[%s3178 + $0x54] sm:$0xf]
        %v3201 = vld [vmem:[%s3178 + $0x58] sm:$0xf]
        %v3202 = vld [vmem:[%s3178 + $0x5c] sm:$0xf]
        %v3203 = vld [vmem:[%s3178 + $0x60] sm:$0xf]
        %v3204 = vld [vmem:[%s3178 + $0x64] sm:$0xf]
        %v3205 = vld [vmem:[%s3178 + $0x68] sm:$0xf]
        %v3206 = vld [vmem:[%s3178 + $0x6c] sm:$0xf]
        %v3207 = vld [vmem:[%s3178 + $0x70] sm:$0xf]
        %v3208 = vld [vmem:[%s3178 + $0x74] sm:$0xf]
        %v3209 = vld [vmem:[%s3178 + $0x78] sm:$0xf]
        %v3210 = vld [vmem:[%s3178 + $0x7c] sm:$0xf]
        %v3243 = vunpack.c.l.b16 %v3179
        %v3244 = vunpack.c.l.b16 %v3180
        %v3245 = vunpack.c.l.b16 %v3181
        %v3246 = vunpack.c.l.b16 %v3182
        %v3247 = vunpack.c.l.b16 %v3183
        %v3248 = vunpack.c.l.b16 %v3184
        %v3249 = vunpack.c.l.b16 %v3185
        %v3250 = vunpack.c.l.b16 %v3186
        %v3251 = vunpack.c.l.b16 %v3187
        %v3252 = vunpack.c.l.b16 %v3188
        %v3253 = vunpack.c.l.b16 %v3189
        %v3254 = vunpack.c.l.b16 %v3190
        %v3255 = vunpack.c.l.b16 %v3191
        %v3256 = vunpack.c.l.b16 %v3192
        %v3257 = vunpack.c.l.b16 %v3193
        %v3258 = vunpack.c.l.b16 %v3194
        %v3259 = vunpack.c.l.b16 %v3195
        %v3260 = vunpack.c.l.b16 %v3196
        %v3261 = vunpack.c.l.b16 %v3197
        %v3262 = vunpack.c.l.b16 %v3198
        %v3263 = vunpack.c.l.b16 %v3199
        %v3264 = vunpack.c.l.b16 %v3200
        %v3265 = vunpack.c.l.b16 %v3201
        %v3266 = vunpack.c.l.b16 %v3202
        %v3267 = vunpack.c.l.b16 %v3203
        %v3268 = vunpack.c.l.b16 %v3204
        %v3269 = vunpack.c.l.b16 %v3205
        %v3270 = vunpack.c.l.b16 %v3206
        %v3271 = vunpack.c.l.b16 %v3207
        %v3272 = vunpack.c.l.b16 %v3208
        %v3273 = vunpack.c.l.b16 %v3209
        %v3274 = vunpack.c.l.b16 %v3210
        %v3275 = vpack.c.b16 %v3244, %v3243
        %v3276 = vpack.c.b16 %v3246, %v3245
        %v3277 = vpack.c.b16 %v3248, %v3247
        %v3278 = vpack.c.b16 %v3250, %v3249
        %v3279 = vpack.c.b16 %v3252, %v3251
        %v3280 = vpack.c.b16 %v3254, %v3253
        %v3281 = vpack.c.b16 %v3256, %v3255
        %v3282 = vpack.c.b16 %v3258, %v3257
        %v3283 = vpack.c.b16 %v3260, %v3259
        %v3284 = vpack.c.b16 %v3262, %v3261
        %v3285 = vpack.c.b16 %v3264, %v3263
        %v3286 = vpack.c.b16 %v3266, %v3265
        %v3287 = vpack.c.b16 %v3268, %v3267
        %v3288 = vpack.c.b16 %v3270, %v3269
        %v3289 = vpack.c.b16 %v3272, %v3271
        %v3290 = vpack.c.b16 %v3274, %v3273
        %3307 = vmatprep.subr.bf16.mxu0 0
        %3308 = vmatpush1.bf16.msra.mxu0 %v3275
        %3309 = vmatprep.subr.bf16.mxu0 0
        %3310 = vmatpush1.bf16.msra.mxu0 %v3276
        %3311 = vmatprep.subr.bf16.mxu0 0
        %3312 = vmatpush1.bf16.msra.mxu0 %v3277
        %3313 = vmatprep.subr.bf16.mxu0 0
        %3314 = vmatpush1.bf16.msra.mxu0 %v3278
        %3315 = vmatprep.subr.bf16.mxu0 0
        %3316 = vmatpush1.bf16.msra.mxu0 %v3279
        %3317 = vmatprep.subr.bf16.mxu0 0
        %3318 = vmatpush1.bf16.msra.mxu0 %v3280
        %3319 = vmatprep.subr.bf16.mxu0 0
        %3320 = vmatpush1.bf16.msra.mxu0 %v3281
        %3321 = vmatprep.subr.bf16.mxu0 0
        %3322 = vmatpush1.bf16.msra.mxu0 %v3282
        %3323 = vmatprep.subr.bf16.mxu0 0
        %3324 = vmatpush1.bf16.msra.mxu0 %v3283
        %3325 = vmatprep.subr.bf16.mxu0 0
        %3326 = vmatpush1.bf16.msra.mxu0 %v3284
        %3327 = vmatprep.subr.bf16.mxu0 0
        %3328 = vmatpush1.bf16.msra.mxu0 %v3285
        %3329 = vmatprep.subr.bf16.mxu0 0
        %3330 = vmatpush1.bf16.msra.mxu0 %v3286
        %3331 = vmatprep.subr.bf16.mxu0 0
        %3332 = vmatpush1.bf16.msra.mxu0 %v3287
        %3333 = vmatprep.subr.bf16.mxu0 0
        %3334 = vmatpush1.bf16.msra.mxu0 %v3288
        %3335 = vmatprep.subr.bf16.mxu0 0
        %3336 = vmatpush1.bf16.msra.mxu0 %v3289
        %3337 = vmatprep.subr.bf16.mxu0 0
        %3338 = vmatpush1.bf16.msra.mxu0 %v3290
        %3339 = vmatprep.mubr.bf16.mxu0 %v3177
        %3340 = vmatmul.mubr.bf16.gmra.mrb[0].mxu0 %v3176
        %v3341 = vpop.f32.mrb[0].mxu0
        %v3342 = vadd.f32 0.0, %v3341
        %v3343 = vpop.f32.mrb[0].mxu0
        %v3344 = vpop.f32.mrb[0].mxu0
        %v3345 = vpop.f32.mrb[0].mxu0
        %3346 = vdwg.mxu0
        %v3347 = vadd.f32 %v3169, %v3342
        %v3348 = vld [vmem:[%s3173] sm:$0x6]
        %v3349 = vld [vmem:[%s3173 + $0x8] sm:$0x6]
        %v3350 = vpack.c.bf16 %v3348, %v3348
        %v3351 = vpack.c.bf16 %v3349, %v3349
        %s3352 = scalar_lea.vmem %s3, 640
        %v3353 = vld [vmem:[%s3352] sm:$0xf]
        %v3354 = vld [vmem:[%s3352 + $0x4] sm:$0xf]
        %v3355 = vld [vmem:[%s3352 + $0x8] sm:$0xf]
        %v3356 = vld [vmem:[%s3352 + $0xc] sm:$0xf]
        %v3357 = vld [vmem:[%s3352 + $0x10] sm:$0xf]
        %v3358 = vld [vmem:[%s3352 + $0x14] sm:$0xf]
        %v3359 = vld [vmem:[%s3352 + $0x18] sm:$0xf]
        %v3360 = vld [vmem:[%s3352 + $0x1c] sm:$0xf]
        %v3361 = vld [vmem:[%s3352 + $0x20] sm:$0xf]
        %v3362 = vld [vmem:[%s3352 + $0x24] sm:$0xf]
        %v3363 = vld [vmem:[%s3352 + $0x28] sm:$0xf]
        %v3364 = vld [vmem:[%s3352 + $0x2c] sm:$0xf]
        %v3365 = vld [vmem:[%s3352 + $0x30] sm:$0xf]
        %v3366 = vld [vmem:[%s3352 + $0x34] sm:$0xf]
        %v3367 = vld [vmem:[%s3352 + $0x38] sm:$0xf]
        %v3368 = vld [vmem:[%s3352 + $0x3c] sm:$0xf]
        %v3369 = vld [vmem:[%s3352 + $0x40] sm:$0xf]
        %v3370 = vld [vmem:[%s3352 + $0x44] sm:$0xf]
        %v3371 = vld [vmem:[%s3352 + $0x48] sm:$0xf]
        %v3372 = vld [vmem:[%s3352 + $0x4c] sm:$0xf]
        %v3373 = vld [vmem:[%s3352 + $0x50] sm:$0xf]
        %v3374 = vld [vmem:[%s3352 + $0x54] sm:$0xf]
        %v3375 = vld [vmem:[%s3352 + $0x58] sm:$0xf]
        %v3376 = vld [vmem:[%s3352 + $0x5c] sm:$0xf]
        %v3377 = vld [vmem:[%s3352 + $0x60] sm:$0xf]
        %v3378 = vld [vmem:[%s3352 + $0x64] sm:$0xf]
        %v3379 = vld [vmem:[%s3352 + $0x68] sm:$0xf]
        %v3380 = vld [vmem:[%s3352 + $0x6c] sm:$0xf]
        %v3381 = vld [vmem:[%s3352 + $0x70] sm:$0xf]
        %v3382 = vld [vmem:[%s3352 + $0x74] sm:$0xf]
        %v3383 = vld [vmem:[%s3352 + $0x78] sm:$0xf]
        %v3384 = vld [vmem:[%s3352 + $0x7c] sm:$0xf]
        %v3386 = vshrl.u32 %v3350, 16
        %v3388 = vshll.u32 %v3350, 16
        %v3390 = vrot.slane %v3388, 1
        %v3391 = vor.u32 %v3386, %v3390
        %v3393 = vshrl.u32 %v3351, 16
        %v3395 = vshll.u32 %v3351, 16
        %v3397 = vrot.slane %v3395, 1
        %v3398 = vor.u32 %v3393, %v3397
        %v3433 = vunpack.c.l.b16 %v3353
        %v3434 = vunpack.c.l.b16 %v3354
        %v3435 = vunpack.c.l.b16 %v3355
        %v3436 = vunpack.c.l.b16 %v3356
        %v3437 = vunpack.c.l.b16 %v3357
        %v3438 = vunpack.c.l.b16 %v3358
        %v3439 = vunpack.c.l.b16 %v3359
        %v3440 = vunpack.c.l.b16 %v3360
        %v3441 = vunpack.c.l.b16 %v3361
        %v3442 = vunpack.c.l.b16 %v3362
        %v3443 = vunpack.c.l.b16 %v3363
        %v3444 = vunpack.c.l.b16 %v3364
        %v3445 = vunpack.c.l.b16 %v3365
        %v3446 = vunpack.c.l.b16 %v3366
        %v3447 = vunpack.c.l.b16 %v3367
        %v3448 = vunpack.c.l.b16 %v3368
        %v3449 = vunpack.c.l.b16 %v3369
        %v3450 = vunpack.c.l.b16 %v3370
        %v3451 = vunpack.c.l.b16 %v3371
        %v3452 = vunpack.c.l.b16 %v3372
        %v3453 = vunpack.c.l.b16 %v3373
        %v3454 = vunpack.c.l.b16 %v3374
        %v3455 = vunpack.c.l.b16 %v3375
        %v3456 = vunpack.c.l.b16 %v3376
        %v3457 = vunpack.c.l.b16 %v3377
        %v3458 = vunpack.c.l.b16 %v3378
        %v3459 = vunpack.c.l.b16 %v3379
        %v3460 = vunpack.c.l.b16 %v3380
        %v3461 = vunpack.c.l.b16 %v3381
        %v3462 = vunpack.c.l.b16 %v3382
        %v3463 = vunpack.c.l.b16 %v3383
        %v3464 = vunpack.c.l.b16 %v3384
        %v3465 = vpack.c.b16 %v3434, %v3433
        %v3466 = vpack.c.b16 %v3436, %v3435
        %v3467 = vpack.c.b16 %v3438, %v3437
        %v3468 = vpack.c.b16 %v3440, %v3439
        %v3469 = vpack.c.b16 %v3442, %v3441
        %v3470 = vpack.c.b16 %v3444, %v3443
        %v3471 = vpack.c.b16 %v3446, %v3445
        %v3472 = vpack.c.b16 %v3448, %v3447
        %v3473 = vpack.c.b16 %v3450, %v3449
        %v3474 = vpack.c.b16 %v3452, %v3451
        %v3475 = vpack.c.b16 %v3454, %v3453
        %v3476 = vpack.c.b16 %v3456, %v3455
        %v3477 = vpack.c.b16 %v3458, %v3457
        %v3478 = vpack.c.b16 %v3460, %v3459
        %v3479 = vpack.c.b16 %v3462, %v3461
        %v3480 = vpack.c.b16 %v3464, %v3463
        %3497 = vmatprep.subr.bf16.mxu0 0
        %3498 = vmatpush1.bf16.msra.mxu0 %v3465
        %3499 = vmatprep.subr.bf16.mxu0 0
        %3500 = vmatpush1.bf16.msra.mxu0 %v3466
        %3501 = vmatprep.subr.bf16.mxu0 0
        %3502 = vmatpush1.bf16.msra.mxu0 %v3467
        %3503 = vmatprep.subr.bf16.mxu0 0
        %3504 = vmatpush1.bf16.msra.mxu0 %v3468
        %3505 = vmatprep.subr.bf16.mxu0 0
        %3506 = vmatpush1.bf16.msra.mxu0 %v3469
        %3507 = vmatprep.subr.bf16.mxu0 0
        %3508 = vmatpush1.bf16.msra.mxu0 %v3470
        %3509 = vmatprep.subr.bf16.mxu0 0
        %3510 = vmatpush1.bf16.msra.mxu0 %v3471
        %3511 = vmatprep.subr.bf16.mxu0 0
        %3512 = vmatpush1.bf16.msra.mxu0 %v3472
        %3513 = vmatprep.subr.bf16.mxu0 0
        %3514 = vmatpush1.bf16.msra.mxu0 %v3473
        %3515 = vmatprep.subr.bf16.mxu0 0
        %3516 = vmatpush1.bf16.msra.mxu0 %v3474
        %3517 = vmatprep.subr.bf16.mxu0 0
        %3518 = vmatpush1.bf16.msra.mxu0 %v3475
        %3519 = vmatprep.subr.bf16.mxu0 0
        %3520 = vmatpush1.bf16.msra.mxu0 %v3476
        %3521 = vmatprep.subr.bf16.mxu0 0
        %3522 = vmatpush1.bf16.msra.mxu0 %v3477
        %3523 = vmatprep.subr.bf16.mxu0 0
        %3524 = vmatpush1.bf16.msra.mxu0 %v3478
        %3525 = vmatprep.subr.bf16.mxu0 0
        %3526 = vmatpush1.bf16.msra.mxu0 %v3479
        %3527 = vmatprep.subr.bf16.mxu0 0
        %3528 = vmatpush1.bf16.msra.mxu0 %v3480
        %3529 = vmatprep.mubr.bf16.mxu0 %v3398
        %3530 = vmatmul.mubr.bf16.gmra.mrb[0].mxu0 %v3391
        %v3531 = vpop.f32.mrb[0].mxu0
        %v3532 = vadd.f32 0.0, %v3531
        %v3533 = vpop.f32.mrb[0].mxu0
        %v3534 = vpop.f32.mrb[0].mxu0
        %v3535 = vpop.f32.mrb[0].mxu0
        %3536 = vdwg.mxu0
        %v3537 = vadd.f32 %v3347, %v3532
        %v3538 = vld [vmem:[%s3173] sm:$0xc]
        %v3539 = vld [vmem:[%s3173 + $0x8] sm:$0xc]
        %v3540 = vpack.c.bf16 %v3538, %v3538
        %v3541 = vpack.c.bf16 %v3539, %v3539
        %s3542 = scalar_lea.vmem %s3, 768
        %v3543 = vld [vmem:[%s3542] sm:$0xf]
        %v3544 = vld [vmem:[%s3542 + $0x4] sm:$0xf]
        %v3545 = vld [vmem:[%s3542 + $0x8] sm:$0xf]
        %v3546 = vld [vmem:[%s3542 + $0xc] sm:$0xf]
        %v3547 = vld [vmem:[%s3542 + $0x10] sm:$0xf]
        %v3548 = vld [vmem:[%s3542 + $0x14] sm:$0xf]
        %v3549 = vld [vmem:[%s3542 + $0x18] sm:$0xf]
        %v3550 = vld [vmem:[%s3542 + $0x1c] sm:$0xf]
        %v3551 = vld [vmem:[%s3542 + $0x20] sm:$0xf]
        %v3552 = vld [vmem:[%s3542 + $0x24] sm:$0xf]
        %v3553 = vld [vmem:[%s3542 + $0x28] sm:$0xf]
        %v3554 = vld [vmem:[%s3542 + $0x2c] sm:$0xf]
        %v3555 = vld [vmem:[%s3542 + $0x30] sm:$0xf]
        %v3556 = vld [vmem:[%s3542 + $0x34] sm:$0xf]
        %v3557 = vld [vmem:[%s3542 + $0x38] sm:$0xf]
        %v3558 = vld [vmem:[%s3542 + $0x3c] sm:$0xf]
        %v3559 = vld [vmem:[%s3542 + $0x40] sm:$0xf]
        %v3560 = vld [vmem:[%s3542 + $0x44] sm:$0xf]
        %v3561 = vld [vmem:[%s3542 + $0x48] sm:$0xf]
        %v3562 = vld [vmem:[%s3542 + $0x4c] sm:$0xf]
        %v3563 = vld [vmem:[%s3542 + $0x50] sm:$0xf]
        %v3564 = vld [vmem:[%s3542 + $0x54] sm:$0xf]
        %v3565 = vld [vmem:[%s3542 + $0x58] sm:$0xf]
        %v3566 = vld [vmem:[%s3542 + $0x5c] sm:$0xf]
        %v3567 = vld [vmem:[%s3542 + $0x60] sm:$0xf]
        %v3568 = vld [vmem:[%s3542 + $0x64] sm:$0xf]
        %v3569 = vld [vmem:[%s3542 + $0x68] sm:$0xf]
        %v3570 = vld [vmem:[%s3542 + $0x6c] sm:$0xf]
        %v3571 = vld [vmem:[%s3542 + $0x70] sm:$0xf]
        %v3572 = vld [vmem:[%s3542 + $0x74] sm:$0xf]
        %v3573 = vld [vmem:[%s3542 + $0x78] sm:$0xf]
        %v3574 = vld [vmem:[%s3542 + $0x7c] sm:$0xf]
        %v3577 = vrot.slane %v3540, 1
        %v3578 = vrot.slane %v3541, 1
        %v3613 = vunpack.c.l.b16 %v3543
        %v3614 = vunpack.c.l.b16 %v3544
        %v3615 = vunpack.c.l.b16 %v3545
        %v3616 = vunpack.c.l.b16 %v3546
        %v3617 = vunpack.c.l.b16 %v3547
        %v3618 = vunpack.c.l.b16 %v3548
        %v3619 = vunpack.c.l.b16 %v3549
        %v3620 = vunpack.c.l.b16 %v3550
        %v3621 = vunpack.c.l.b16 %v3551
        %v3622 = vunpack.c.l.b16 %v3552
        %v3623 = vunpack.c.l.b16 %v3553
        %v3624 = vunpack.c.l.b16 %v3554
        %v3625 = vunpack.c.l.b16 %v3555
        %v3626 = vunpack.c.l.b16 %v3556
        %v3627 = vunpack.c.l.b16 %v3557
        %v3628 = vunpack.c.l.b16 %v3558
        %v3629 = vunpack.c.l.b16 %v3559
        %v3630 = vunpack.c.l.b16 %v3560
        %v3631 = vunpack.c.l.b16 %v3561
        %v3632 = vunpack.c.l.b16 %v3562
        %v3633 = vunpack.c.l.b16 %v3563
        %v3634 = vunpack.c.l.b16 %v3564
        %v3635 = vunpack.c.l.b16 %v3565
        %v3636 = vunpack.c.l.b16 %v3566
        %v3637 = vunpack.c.l.b16 %v3567
        %v3638 = vunpack.c.l.b16 %v3568
        %v3639 = vunpack.c.l.b16 %v3569
        %v3640 = vunpack.c.l.b16 %v3570
        %v3641 = vunpack.c.l.b16 %v3571
        %v3642 = vunpack.c.l.b16 %v3572
        %v3643 = vunpack.c.l.b16 %v3573
        %v3644 = vunpack.c.l.b16 %v3574
        %v3645 = vpack.c.b16 %v3614, %v3613
        %v3646 = vpack.c.b16 %v3616, %v3615
        %v3647 = vpack.c.b16 %v3618, %v3617
        %v3648 = vpack.c.b16 %v3620, %v3619
        %v3649 = vpack.c.b16 %v3622, %v3621
        %v3650 = vpack.c.b16 %v3624, %v3623
        %v3651 = vpack.c.b16 %v3626, %v3625
        %v3652 = vpack.c.b16 %v3628, %v3627
        %v3653 = vpack.c.b16 %v3630, %v3629
        %v3654 = vpack.c.b16 %v3632, %v3631
        %v3655 = vpack.c.b16 %v3634, %v3633
        %v3656 = vpack.c.b16 %v3636, %v3635
        %v3657 = vpack.c.b16 %v3638, %v3637
        %v3658 = vpack.c.b16 %v3640, %v3639
        %v3659 = vpack.c.b16 %v3642, %v3641
        %v3660 = vpack.c.b16 %v3644, %v3643
        %3677 = vmatprep.subr.bf16.mxu0 0
        %3678 = vmatpush1.bf16.msra.mxu0 %v3645
        %3679 = vmatprep.subr.bf16.mxu0 0
        %3680 = vmatpush1.bf16.msra.mxu0 %v3646
        %3681 = vmatprep.subr.bf16.mxu0 0
        %3682 = vmatpush1.bf16.msra.mxu0 %v3647
        %3683 = vmatprep.subr.bf16.mxu0 0
        %3684 = vmatpush1.bf16.msra.mxu0 %v3648
        %3685 = vmatprep.subr.bf16.mxu0 0
        %3686 = vmatpush1.bf16.msra.mxu0 %v3649
        %3687 = vmatprep.subr.bf16.mxu0 0
        %3688 = vmatpush1.bf16.msra.mxu0 %v3650
        %3689 = vmatprep.subr.bf16.mxu0 0
        %3690 = vmatpush1.bf16.msra.mxu0 %v3651
        %3691 = vmatprep.subr.bf16.mxu0 0
        %3692 = vmatpush1.bf16.msra.mxu0 %v3652
        %3693 = vmatprep.subr.bf16.mxu0 0
        %3694 = vmatpush1.bf16.msra.mxu0 %v3653
        %3695 = vmatprep.subr.bf16.mxu0 0
        %3696 = vmatpush1.bf16.msra.mxu0 %v3654
        %3697 = vmatprep.subr.bf16.mxu0 0
        %3698 = vmatpush1.bf16.msra.mxu0 %v3655
        %3699 = vmatprep.subr.bf16.mxu0 0
        %3700 = vmatpush1.bf16.msra.mxu0 %v3656
        %3701 = vmatprep.subr.bf16.mxu0 0
        %3702 = vmatpush1.bf16.msra.mxu0 %v3657
        %3703 = vmatprep.subr.bf16.mxu0 0
        %3704 = vmatpush1.bf16.msra.mxu0 %v3658
        %3705 = vmatprep.subr.bf16.mxu0 0
        %3706 = vmatpush1.bf16.msra.mxu0 %v3659
        %3707 = vmatprep.subr.bf16.mxu0 0
        %3708 = vmatpush1.bf16.msra.mxu0 %v3660
        %3709 = vmatprep.mubr.bf16.mxu0 %v3578
        %3710 = vmatmul.mubr.bf16.gmra.mrb[0].mxu0 %v3577
        %v3711 = vpop.f32.mrb[0].mxu0
        %v3712 = vadd.f32 0.0, %v3711
        %v3713 = vpop.f32.mrb[0].mxu0
        %v3714 = vpop.f32.mrb[0].mxu0
        %v3715 = vpop.f32.mrb[0].mxu0
        %3716 = vdwg.mxu0
        %v3717 = vadd.f32 %v3537, %v3712
        %v3718 = vld [vmem:[%s3173] sm:$0x18]
        %v3719 = vld [vmem:[%s3173 + $0x8] sm:$0x18]
        %v3720 = vpack.c.bf16 %v3718, %v3718
        %v3721 = vpack.c.bf16 %v3719, %v3719
        %s3722 = scalar_lea.vmem %s3, 896
        %v3723 = vld [vmem:[%s3722] sm:$0xf]
        %v3724 = vld [vmem:[%s3722 + $0x4] sm:$0xf]
        %v3725 = vld [vmem:[%s3722 + $0x8] sm:$0xf]
        %v3726 = vld [vmem:[%s3722 + $0xc] sm:$0xf]
        %v3727 = vld [vmem:[%s3722 + $0x10] sm:$0xf]
        %v3728 = vld [vmem:[%s3722 + $0x14] sm:$0xf]
        %v3729 = vld [vmem:[%s3722 + $0x18] sm:$0xf]
        %v3730 = vld [vmem:[%s3722 + $0x1c] sm:$0xf]
        %v3731 = vld [vmem:[%s3722 + $0x20] sm:$0xf]
        %v3732 = vld [vmem:[%s3722 + $0x24] sm:$0xf]
        %v3733 = vld [vmem:[%s3722 + $0x28] sm:$0xf]
        %v3734 = vld [vmem:[%s3722 + $0x2c] sm:$0xf]
        %v3735 = vld [vmem:[%s3722 + $0x30] sm:$0xf]
        %v3736 = vld [vmem:[%s3722 + $0x34] sm:$0xf]
        %v3737 = vld [vmem:[%s3722 + $0x38] sm:$0xf]
        %v3738 = vld [vmem:[%s3722 + $0x3c] sm:$0xf]
        %v3739 = vld [vmem:[%s3722 + $0x40] sm:$0xf]
        %v3740 = vld [vmem:[%s3722 + $0x44] sm:$0xf]
        %v3741 = vld [vmem:[%s3722 + $0x48] sm:$0xf]
        %v3742 = vld [vmem:[%s3722 + $0x4c] sm:$0xf]
        %v3743 = vld [vmem:[%s3722 + $0x50] sm:$0xf]
        %v3744 = vld [vmem:[%s3722 + $0x54] sm:$0xf]
        %v3745 = vld [vmem:[%s3722 + $0x58] sm:$0xf]
        %v3746 = vld [vmem:[%s3722 + $0x5c] sm:$0xf]
        %v3747 = vld [vmem:[%s3722 + $0x60] sm:$0xf]
        %v3748 = vld [vmem:[%s3722 + $0x64] sm:$0xf]
        %v3749 = vld [vmem:[%s3722 + $0x68] sm:$0xf]
        %v3750 = vld [vmem:[%s3722 + $0x6c] sm:$0xf]
        %v3751 = vld [vmem:[%s3722 + $0x70] sm:$0xf]
        %v3752 = vld [vmem:[%s3722 + $0x74] sm:$0xf]
        %v3753 = vld [vmem:[%s3722 + $0x78] sm:$0xf]
        %v3754 = vld [vmem:[%s3722 + $0x7c] sm:$0xf]
        %v3756 = vshrl.u32 %v3720, 16
        %v3758 = vrot.slane %v3756, 1
        %v3759 = vshll.u32 %v3720, 16
        %v3761 = vrot.slane %v3759, 2
        %v3762 = vor.u32 %v3758, %v3761
        %v3764 = vshrl.u32 %v3721, 16
        %v3766 = vrot.slane %v3764, 1
        %v3767 = vshll.u32 %v3721, 16
        %v3769 = vrot.slane %v3767, 2
        %v3770 = vor.u32 %v3766, %v3769
        %v3805 = vunpack.c.l.b16 %v3723
        %v3806 = vunpack.c.l.b16 %v3724
        %v3807 = vunpack.c.l.b16 %v3725
        %v3808 = vunpack.c.l.b16 %v3726
        %v3809 = vunpack.c.l.b16 %v3727
        %v3810 = vunpack.c.l.b16 %v3728
        %v3811 = vunpack.c.l.b16 %v3729
        %v3812 = vunpack.c.l.b16 %v3730
        %v3813 = vunpack.c.l.b16 %v3731
        %v3814 = vunpack.c.l.b16 %v3732
        %v3815 = vunpack.c.l.b16 %v3733
        %v3816 = vunpack.c.l.b16 %v3734
        %v3817 = vunpack.c.l.b16 %v3735
        %v3818 = vunpack.c.l.b16 %v3736
        %v3819 = vunpack.c.l.b16 %v3737
        %v3820 = vunpack.c.l.b16 %v3738
        %v3821 = vunpack.c.l.b16 %v3739
        %v3822 = vunpack.c.l.b16 %v3740
        %v3823 = vunpack.c.l.b16 %v3741
        %v3824 = vunpack.c.l.b16 %v3742
        %v3825 = vunpack.c.l.b16 %v3743
        %v3826 = vunpack.c.l.b16 %v3744
        %v3827 = vunpack.c.l.b16 %v3745
        %v3828 = vunpack.c.l.b16 %v3746
        %v3829 = vunpack.c.l.b16 %v3747
        %v3830 = vunpack.c.l.b16 %v3748
        %v3831 = vunpack.c.l.b16 %v3749
        %v3832 = vunpack.c.l.b16 %v3750
        %v3833 = vunpack.c.l.b16 %v3751
        %v3834 = vunpack.c.l.b16 %v3752
        %v3835 = vunpack.c.l.b16 %v3753
        %v3836 = vunpack.c.l.b16 %v3754
        %v3837 = vpack.c.b16 %v3806, %v3805
        %v3838 = vpack.c.b16 %v3808, %v3807
        %v3839 = vpack.c.b16 %v3810, %v3809
        %v3840 = vpack.c.b16 %v3812, %v3811
        %v3841 = vpack.c.b16 %v3814, %v3813
        %v3842 = vpack.c.b16 %v3816, %v3815
        %v3843 = vpack.c.b16 %v3818, %v3817
        %v3844 = vpack.c.b16 %v3820, %v3819
        %v3845 = vpack.c.b16 %v3822, %v3821
        %v3846 = vpack.c.b16 %v3824, %v3823
        %v3847 = vpack.c.b16 %v3826, %v3825
        %v3848 = vpack.c.b16 %v3828, %v3827
        %v3849 = vpack.c.b16 %v3830, %v3829
        %v3850 = vpack.c.b16 %v3832, %v3831
        %v3851 = vpack.c.b16 %v3834, %v3833
        %v3852 = vpack.c.b16 %v3836, %v3835
        %3869 = vmatprep.subr.bf16.mxu0 0
        %3870 = vmatpush1.bf16.msra.mxu0 %v3837
        %3871 = vmatprep.subr.bf16.mxu0 0
        %3872 = vmatpush1.bf16.msra.mxu0 %v3838
        %3873 = vmatprep.subr.bf16.mxu0 0
        %3874 = vmatpush1.bf16.msra.mxu0 %v3839
        %3875 = vmatprep.subr.bf16.mxu0 0
        %3876 = vmatpush1.bf16.msra.mxu0 %v3840
        %3877 = vmatprep.subr.bf16.mxu0 0
        %3878 = vmatpush1.bf16.msra.mxu0 %v3841
        %3879 = vmatprep.subr.bf16.mxu0 0
        %3880 = vmatpush1.bf16.msra.mxu0 %v3842
        %3881 = vmatprep.subr.bf16.mxu0 0
        %3882 = vmatpush1.bf16.msra.mxu0 %v3843
        %3883 = vmatprep.subr.bf16.mxu0 0
        %3884 = vmatpush1.bf16.msra.mxu0 %v3844
        %3885 = vmatprep.subr.bf16.mxu0 0
        %3886 = vmatpush1.bf16.msra.mxu0 %v3845
        %3887 = vmatprep.subr.bf16.mxu0 0
        %3888 = vmatpush1.bf16.msra.mxu0 %v3846
        %3889 = vmatprep.subr.bf16.mxu0 0
        %3890 = vmatpush1.bf16.msra.mxu0 %v3847
        %3891 = vmatprep.subr.bf16.mxu0 0
        %3892 = vmatpush1.bf16.msra.mxu0 %v3848
        %3893 = vmatprep.subr.bf16.mxu0 0
        %3894 = vmatpush1.bf16.msra.mxu0 %v3849
        %3895 = vmatprep.subr.bf16.mxu0 0
        %3896 = vmatpush1.bf16.msra.mxu0 %v3850
        %3897 = vmatprep.subr.bf16.mxu0 0
        %3898 = vmatpush1.bf16.msra.mxu0 %v3851
        %3899 = vmatprep.subr.bf16.mxu0 0
        %3900 = vmatpush1.bf16.msra.mxu0 %v3852
        %3901 = vmatprep.mubr.bf16.mxu0 %v3770
        %3902 = vmatmul.mubr.bf16.gmra.mrb[0].mxu0 %v3762
        %v3903 = vpop.f32.mrb[0].mxu0
        %v3904 = vadd.f32 0.0, %v3903
        %v3905 = vpop.f32.mrb[0].mxu0
        %v3906 = vpop.f32.mrb[0].mxu0
        %v3907 = vpop.f32.mrb[0].mxu0
        %3908 = vdwg.mxu0
        %v3909 = vadd.f32 %v3717, %v3904
        %s3910 = sadd.s32 %s2429, 2
        %s3911 = smul.u32 %s3910, 2
        %s3912 = smul.addr %s3911, 8
        %s3913 = scalar_lea.vmem [#allocation5], %s3912
        %v3914 = vld [vmem:[%s3913] sm:$0x3]
        %v3915 = vld [vmem:[%s3913 + $0x8] sm:$0x3]
        %v3916 = vpack.c.bf16 %v3914, %v3914
        %v3917 = vpack.c.bf16 %v3915, %v3915
        %s3918 = scalar_lea.vmem %s3, 1024
        %v3919 = vld [vmem:[%s3918] sm:$0xf]
        %v3920 = vld [vmem:[%s3918 + $0x4] sm:$0xf]
        %v3921 = vld [vmem:[%s3918 + $0x8] sm:$0xf]
        %v3922 = vld [vmem:[%s3918 + $0xc] sm:$0xf]
        %v3923 = vld [vmem:[%s3918 + $0x10] sm:$0xf]
        %v3924 = vld [vmem:[%s3918 + $0x14] sm:$0xf]
        %v3925 = vld [vmem:[%s3918 + $0x18] sm:$0xf]
        %v3926 = vld [vmem:[%s3918 + $0x1c] sm:$0xf]
        %v3927 = vld [vmem:[%s3918 + $0x20] sm:$0xf]
        %v3928 = vld [vmem:[%s3918 + $0x24] sm:$0xf]
        %v3929 = vld [vmem:[%s3918 + $0x28] sm:$0xf]
        %v3930 = vld [vmem:[%s3918 + $0x2c] sm:$0xf]
        %v3931 = vld [vmem:[%s3918 + $0x30] sm:$0xf]
        %v3932 = vld [vmem:[%s3918 + $0x34] sm:$0xf]
        %v3933 = vld [vmem:[%s3918 + $0x38] sm:$0xf]
        %v3934 = vld [vmem:[%s3918 + $0x3c] sm:$0xf]
        %v3935 = vld [vmem:[%s3918 + $0x40] sm:$0xf]
        %v3936 = vld [vmem:[%s3918 + $0x44] sm:$0xf]
        %v3937 = vld [vmem:[%s3918 + $0x48] sm:$0xf]
        %v3938 = vld [vmem:[%s3918 + $0x4c] sm:$0xf]
        %v3939 = vld [vmem:[%s3918 + $0x50] sm:$0xf]
        %v3940 = vld [vmem:[%s3918 + $0x54] sm:$0xf]
        %v3941 = vld [vmem:[%s3918 + $0x58] sm:$0xf]
        %v3942 = vld [vmem:[%s3918 + $0x5c] sm:$0xf]
        %v3943 = vld [vmem:[%s3918 + $0x60] sm:$0xf]
        %v3944 = vld [vmem:[%s3918 + $0x64] sm:$0xf]
        %v3945 = vld [vmem:[%s3918 + $0x68] sm:$0xf]
        %v3946 = vld [vmem:[%s3918 + $0x6c] sm:$0xf]
        %v3947 = vld [vmem:[%s3918 + $0x70] sm:$0xf]
        %v3948 = vld [vmem:[%s3918 + $0x74] sm:$0xf]
        %v3949 = vld [vmem:[%s3918 + $0x78] sm:$0xf]
        %v3950 = vld [vmem:[%s3918 + $0x7c] sm:$0xf]
        %v3983 = vunpack.c.l.b16 %v3919
        %v3984 = vunpack.c.l.b16 %v3920
        %v3985 = vunpack.c.l.b16 %v3921
        %v3986 = vunpack.c.l.b16 %v3922
        %v3987 = vunpack.c.l.b16 %v3923
        %v3988 = vunpack.c.l.b16 %v3924
        %v3989 = vunpack.c.l.b16 %v3925
        %v3990 = vunpack.c.l.b16 %v3926
        %v3991 = vunpack.c.l.b16 %v3927
        %v3992 = vunpack.c.l.b16 %v3928
        %v3993 = vunpack.c.l.b16 %v3929
        %v3994 = vunpack.c.l.b16 %v3930
        %v3995 = vunpack.c.l.b16 %v3931
        %v3996 = vunpack.c.l.b16 %v3932
        %v3997 = vunpack.c.l.b16 %v3933
        %v3998 = vunpack.c.l.b16 %v3934
        %v3999 = vunpack.c.l.b16 %v3935
        %v4000 = vunpack.c.l.b16 %v3936
        %v4001 = vunpack.c.l.b16 %v3937
        %v4002 = vunpack.c.l.b16 %v3938
        %v4003 = vunpack.c.l.b16 %v3939
        %v4004 = vunpack.c.l.b16 %v3940
        %v4005 = vunpack.c.l.b16 %v3941
        %v4006 = vunpack.c.l.b16 %v3942
        %v4007 = vunpack.c.l.b16 %v3943
        %v4008 = vunpack.c.l.b16 %v3944
        %v4009 = vunpack.c.l.b16 %v3945
        %v4010 = vunpack.c.l.b16 %v3946
        %v4011 = vunpack.c.l.b16 %v3947
        %v4012 = vunpack.c.l.b16 %v3948
        %v4013 = vunpack.c.l.b16 %v3949
        %v4014 = vunpack.c.l.b16 %v3950
        %v4015 = vpack.c.b16 %v3984, %v3983
        %v4016 = vpack.c.b16 %v3986, %v3985
        %v4017 = vpack.c.b16 %v3988, %v3987
        %v4018 = vpack.c.b16 %v3990, %v3989
        %v4019 = vpack.c.b16 %v3992, %v3991
        %v4020 = vpack.c.b16 %v3994, %v3993
        %v4021 = vpack.c.b16 %v3996, %v3995
        %v4022 = vpack.c.b16 %v3998, %v3997
        %v4023 = vpack.c.b16 %v4000, %v3999
        %v4024 = vpack.c.b16 %v4002, %v4001
        %v4025 = vpack.c.b16 %v4004, %v4003
        %v4026 = vpack.c.b16 %v4006, %v4005
        %v4027 = vpack.c.b16 %v4008, %v4007
        %v4028 = vpack.c.b16 %v4010, %v4009
        %v4029 = vpack.c.b16 %v4012, %v4011
        %v4030 = vpack.c.b16 %v4014, %v4013
        %4047 = vmatprep.subr.bf16.mxu0 0
        %4048 = vmatpush1.bf16.msra.mxu0 %v4015
        %4049 = vmatprep.subr.bf16.mxu0 0
        %4050 = vmatpush1.bf16.msra.mxu0 %v4016
        %4051 = vmatprep.subr.bf16.mxu0 0
        %4052 = vmatpush1.bf16.msra.mxu0 %v4017
        %4053 = vmatprep.subr.bf16.mxu0 0
        %4054 = vmatpush1.bf16.msra.mxu0 %v4018
        %4055 = vmatprep.subr.bf16.mxu0 0
        %4056 = vmatpush1.bf16.msra.mxu0 %v4019
        %4057 = vmatprep.subr.bf16.mxu0 0
        %4058 = vmatpush1.bf16.msra.mxu0 %v4020
        %4059 = vmatprep.subr.bf16.mxu0 0
        %4060 = vmatpush1.bf16.msra.mxu0 %v4021
        %4061 = vmatprep.subr.bf16.mxu0 0
        %4062 = vmatpush1.bf16.msra.mxu0 %v4022
        %4063 = vmatprep.subr.bf16.mxu0 0
        %4064 = vmatpush1.bf16.msra.mxu0 %v4023
        %4065 = vmatprep.subr.bf16.mxu0 0
        %4066 = vmatpush1.bf16.msra.mxu0 %v4024
        %4067 = vmatprep.subr.bf16.mxu0 0
        %4068 = vmatpush1.bf16.msra.mxu0 %v4025
        %4069 = vmatprep.subr.bf16.mxu0 0
        %4070 = vmatpush1.bf16.msra.mxu0 %v4026
        %4071 = vmatprep.subr.bf16.mxu0 0
        %4072 = vmatpush1.bf16.msra.mxu0 %v4027
        %4073 = vmatprep.subr.bf16.mxu0 0
        %4074 = vmatpush1.bf16.msra.mxu0 %v4028
        %4075 = vmatprep.subr.bf16.mxu0 0
        %4076 = vmatpush1.bf16.msra.mxu0 %v4029
        %4077 = vmatprep.subr.bf16.mxu0 0
        %4078 = vmatpush1.bf16.msra.mxu0 %v4030
        %4079 = vmatprep.mubr.bf16.mxu0 %v3917
        %4080 = vmatmul.mubr.bf16.gmra.mrb[0].mxu0 %v3916
        %v4081 = vpop.f32.mrb[0].mxu0
        %v4082 = vadd.f32 0.0, %v4081
        %v4083 = vpop.f32.mrb[0].mxu0
        %v4084 = vpop.f32.mrb[0].mxu0
        %v4085 = vpop.f32.mrb[0].mxu0
        %4086 = vdwg.mxu0
        %v4087 = vadd.f32 %v3909, %v4082
        %v4088 = vld [vmem:[%s3913] sm:$0x6]
        %v4089 = vld [vmem:[%s3913 + $0x8] sm:$0x6]
        %v4090 = vpack.c.bf16 %v4088, %v4088
        %v4091 = vpack.c.bf16 %v4089, %v4089
        %s4092 = scalar_lea.vmem %s3, 1152
        %v4093 = vld [vmem:[%s4092] sm:$0xf]
        %v4094 = vld [vmem:[%s4092 + $0x4] sm:$0xf]
        %v4095 = vld [vmem:[%s4092 + $0x8] sm:$0xf]
        %v4096 = vld [vmem:[%s4092 + $0xc] sm:$0xf]
        %v4097 = vld [vmem:[%s4092 + $0x10] sm:$0xf]
        %v4098 = vld [vmem:[%s4092 + $0x14] sm:$0xf]
        %v4099 = vld [vmem:[%s4092 + $0x18] sm:$0xf]
        %v4100 = vld [vmem:[%s4092 + $0x1c] sm:$0xf]
        %v4101 = vld [vmem:[%s4092 + $0x20] sm:$0xf]
        %v4102 = vld [vmem:[%s4092 + $0x24] sm:$0xf]
        %v4103 = vld [vmem:[%s4092 + $0x28] sm:$0xf]
        %v4104 = vld [vmem:[%s4092 + $0x2c] sm:$0xf]
        %v4105 = vld [vmem:[%s4092 + $0x30] sm:$0xf]
        %v4106 = vld [vmem:[%s4092 + $0x34] sm:$0xf]
        %v4107 = vld [vmem:[%s4092 + $0x38] sm:$0xf]
        %v4108 = vld [vmem:[%s4092 + $0x3c] sm:$0xf]
        %v4109 = vld [vmem:[%s4092 + $0x40] sm:$0xf]
        %v4110 = vld [vmem:[%s4092 + $0x44] sm:$0xf]
        %v4111 = vld [vmem:[%s4092 + $0x48] sm:$0xf]
        %v4112 = vld [vmem:[%s4092 + $0x4c] sm:$0xf]
        %v4113 = vld [vmem:[%s4092 + $0x50] sm:$0xf]
        %v4114 = vld [vmem:[%s4092 + $0x54] sm:$0xf]
        %v4115 = vld [vmem:[%s4092 + $0x58] sm:$0xf]
        %v4116 = vld [vmem:[%s4092 + $0x5c] sm:$0xf]
        %v4117 = vld [vmem:[%s4092 + $0x60] sm:$0xf]
        %v4118 = vld [vmem:[%s4092 + $0x64] sm:$0xf]
        %v4119 = vld [vmem:[%s4092 + $0x68] sm:$0xf]
        %v4120 = vld [vmem:[%s4092 + $0x6c] sm:$0xf]
        %v4121 = vld [vmem:[%s4092 + $0x70] sm:$0xf]
        %v4122 = vld [vmem:[%s4092 + $0x74] sm:$0xf]
        %v4123 = vld [vmem:[%s4092 + $0x78] sm:$0xf]
        %v4124 = vld [vmem:[%s4092 + $0x7c] sm:$0xf]
        %v4126 = vshrl.u32 %v4090, 16
        %v4128 = vshll.u32 %v4090, 16
        %v4130 = vrot.slane %v4128, 1
        %v4131 = vor.u32 %v4126, %v4130
        %v4133 = vshrl.u32 %v4091, 16
        %v4135 = vshll.u32 %v4091, 16
        %v4137 = vrot.slane %v4135, 1
        %v4138 = vor.u32 %v4133, %v4137
        %v4173 = vunpack.c.l.b16 %v4093
        %v4174 = vunpack.c.l.b16 %v4094
        %v4175 = vunpack.c.l.b16 %v4095
        %v4176 = vunpack.c.l.b16 %v4096
        %v4177 = vunpack.c.l.b16 %v4097
        %v4178 = vunpack.c.l.b16 %v4098
        %v4179 = vunpack.c.l.b16 %v4099
        %v4180 = vunpack.c.l.b16 %v4100
        %v4181 = vunpack.c.l.b16 %v4101
        %v4182 = vunpack.c.l.b16 %v4102
        %v4183 = vunpack.c.l.b16 %v4103
        %v4184 = vunpack.c.l.b16 %v4104
        %v4185 = vunpack.c.l.b16 %v4105
        %v4186 = vunpack.c.l.b16 %v4106
        %v4187 = vunpack.c.l.b16 %v4107
        %v4188 = vunpack.c.l.b16 %v4108
        %v4189 = vunpack.c.l.b16 %v4109
        %v4190 = vunpack.c.l.b16 %v4110
        %v4191 = vunpack.c.l.b16 %v4111
        %v4192 = vunpack.c.l.b16 %v4112
        %v4193 = vunpack.c.l.b16 %v4113
        %v4194 = vunpack.c.l.b16 %v4114
        %v4195 = vunpack.c.l.b16 %v4115
        %v4196 = vunpack.c.l.b16 %v4116
        %v4197 = vunpack.c.l.b16 %v4117
        %v4198 = vunpack.c.l.b16 %v4118
        %v4199 = vunpack.c.l.b16 %v4119
        %v4200 = vunpack.c.l.b16 %v4120
        %v4201 = vunpack.c.l.b16 %v4121
        %v4202 = vunpack.c.l.b16 %v4122
        %v4203 = vunpack.c.l.b16 %v4123
        %v4204 = vunpack.c.l.b16 %v4124
        %v4205 = vpack.c.b16 %v4174, %v4173
        %v4206 = vpack.c.b16 %v4176, %v4175
        %v4207 = vpack.c.b16 %v4178, %v4177
        %v4208 = vpack.c.b16 %v4180, %v4179
        %v4209 = vpack.c.b16 %v4182, %v4181
        %v4210 = vpack.c.b16 %v4184, %v4183
        %v4211 = vpack.c.b16 %v4186, %v4185
        %v4212 = vpack.c.b16 %v4188, %v4187
        %v4213 = vpack.c.b16 %v4190, %v4189
        %v4214 = vpack.c.b16 %v4192, %v4191
        %v4215 = vpack.c.b16 %v4194, %v4193
        %v4216 = vpack.c.b16 %v4196, %v4195
        %v4217 = vpack.c.b16 %v4198, %v4197
        %v4218 = vpack.c.b16 %v4200, %v4199
        %v4219 = vpack.c.b16 %v4202, %v4201
        %v4220 = vpack.c.b16 %v4204, %v4203
        %4237 = vmatprep.subr.bf16.mxu0 0
        %4238 = vmatpush1.bf16.msra.mxu0 %v4205
        %4239 = vmatprep.subr.bf16.mxu0 0
        %4240 = vmatpush1.bf16.msra.mxu0 %v4206
        %4241 = vmatprep.subr.bf16.mxu0 0
        %4242 = vmatpush1.bf16.msra.mxu0 %v4207
        %4243 = vmatprep.subr.bf16.mxu0 0
        %4244 = vmatpush1.bf16.msra.mxu0 %v4208
        %4245 = vmatprep.subr.bf16.mxu0 0
        %4246 = vmatpush1.bf16.msra.mxu0 %v4209
        %4247 = vmatprep.subr.bf16.mxu0 0
        %4248 = vmatpush1.bf16.msra.mxu0 %v4210
        %4249 = vmatprep.subr.bf16.mxu0 0
        %4250 = vmatpush1.bf16.msra.mxu0 %v4211
        %4251 = vmatprep.subr.bf16.mxu0 0
        %4252 = vmatpush1.bf16.msra.mxu0 %v4212
        %4253 = vmatprep.subr.bf16.mxu0 0
        %4254 = vmatpush1.bf16.msra.mxu0 %v4213
        %4255 = vmatprep.subr.bf16.mxu0 0
        %4256 = vmatpush1.bf16.msra.mxu0 %v4214
        %4257 = vmatprep.subr.bf16.mxu0 0
        %4258 = vmatpush1.bf16.msra.mxu0 %v4215
        %4259 = vmatprep.subr.bf16.mxu0 0
        %4260 = vmatpush1.bf16.msra.mxu0 %v4216
        %4261 = vmatprep.subr.bf16.mxu0 0
        %4262 = vmatpush1.bf16.msra.mxu0 %v4217
        %4263 = vmatprep.subr.bf16.mxu0 0
        %4264 = vmatpush1.bf16.msra.mxu0 %v4218
        %4265 = vmatprep.subr.bf16.mxu0 0
        %4266 = vmatpush1.bf16.msra.mxu0 %v4219
        %4267 = vmatprep.subr.bf16.mxu0 0
        %4268 = vmatpush1.bf16.msra.mxu0 %v4220
        %4269 = vmatprep.mubr.bf16.mxu0 %v4138
        %4270 = vmatmul.mubr.bf16.gmra.mrb[0].mxu0 %v4131
        %v4271 = vpop.f32.mrb[0].mxu0
        %v4272 = vadd.f32 0.0, %v4271
        %v4273 = vpop.f32.mrb[0].mxu0
        %v4274 = vpop.f32.mrb[0].mxu0
        %v4275 = vpop.f32.mrb[0].mxu0
        %4276 = vdwg.mxu0
        %v4277 = vadd.f32 %v4087, %v4272
        %v4278 = vld [vmem:[%s3913] sm:$0xc]
        %v4279 = vld [vmem:[%s3913 + $0x8] sm:$0xc]
        %v4280 = vpack.c.bf16 %v4278, %v4278
        %v4281 = vpack.c.bf16 %v4279, %v4279
        %s4282 = scalar_lea.vmem %s3, 1280
        %v4283 = vld [vmem:[%s4282] sm:$0xf]
        %v4284 = vld [vmem:[%s4282 + $0x4] sm:$0xf]
        %v4285 = vld [vmem:[%s4282 + $0x8] sm:$0xf]
        %v4286 = vld [vmem:[%s4282 + $0xc] sm:$0xf]
        %v4287 = vld [vmem:[%s4282 + $0x10] sm:$0xf]
        %v4288 = vld [vmem:[%s4282 + $0x14] sm:$0xf]
        %v4289 = vld [vmem:[%s4282 + $0x18] sm:$0xf]
        %v4290 = vld [vmem:[%s4282 + $0x1c] sm:$0xf]
        %v4291 = vld [vmem:[%s4282 + $0x20] sm:$0xf]
        %v4292 = vld [vmem:[%s4282 + $0x24] sm:$0xf]
        %v4293 = vld [vmem:[%s4282 + $0x28] sm:$0xf]
        %v4294 = vld [vmem:[%s4282 + $0x2c] sm:$0xf]
        %v4295 = vld [vmem:[%s4282 + $0x30] sm:$0xf]
        %v4296 = vld [vmem:[%s4282 + $0x34] sm:$0xf]
        %v4297 = vld [vmem:[%s4282 + $0x38] sm:$0xf]
        %v4298 = vld [vmem:[%s4282 + $0x3c] sm:$0xf]
        %v4299 = vld [vmem:[%s4282 + $0x40] sm:$0xf]
        %v4300 = vld [vmem:[%s4282 + $0x44] sm:$0xf]
        %v4301 = vld [vmem:[%s4282 + $0x48] sm:$0xf]
        %v4302 = vld [vmem:[%s4282 + $0x4c] sm:$0xf]
        %v4303 = vld [vmem:[%s4282 + $0x50] sm:$0xf]
        %v4304 = vld [vmem:[%s4282 + $0x54] sm:$0xf]
        %v4305 = vld [vmem:[%s4282 + $0x58] sm:$0xf]
        %v4306 = vld [vmem:[%s4282 + $0x5c] sm:$0xf]
        %v4307 = vld [vmem:[%s4282 + $0x60] sm:$0xf]
        %v4308 = vld [vmem:[%s4282 + $0x64] sm:$0xf]
        %v4309 = vld [vmem:[%s4282 + $0x68] sm:$0xf]
        %v4310 = vld [vmem:[%s4282 + $0x6c] sm:$0xf]
        %v4311 = vld [vmem:[%s4282 + $0x70] sm:$0xf]
        %v4312 = vld [vmem:[%s4282 + $0x74] sm:$0xf]
        %v4313 = vld [vmem:[%s4282 + $0x78] sm:$0xf]
        %v4314 = vld [vmem:[%s4282 + $0x7c] sm:$0xf]
        %v4317 = vrot.slane %v4280, 1
        %v4318 = vrot.slane %v4281, 1
        %v4353 = vunpack.c.l.b16 %v4283
        %v4354 = vunpack.c.l.b16 %v4284
        %v4355 = vunpack.c.l.b16 %v4285
        %v4356 = vunpack.c.l.b16 %v4286
        %v4357 = vunpack.c.l.b16 %v4287
        %v4358 = vunpack.c.l.b16 %v4288
        %v4359 = vunpack.c.l.b16 %v4289
        %v4360 = vunpack.c.l.b16 %v4290
        %v4361 = vunpack.c.l.b16 %v4291
        %v4362 = vunpack.c.l.b16 %v4292
        %v4363 = vunpack.c.l.b16 %v4293
        %v4364 = vunpack.c.l.b16 %v4294
        %v4365 = vunpack.c.l.b16 %v4295
        %v4366 = vunpack.c.l.b16 %v4296
        %v4367 = vunpack.c.l.b16 %v4297
        %v4368 = vunpack.c.l.b16 %v4298
        %v4369 = vunpack.c.l.b16 %v4299
        %v4370 = vunpack.c.l.b16 %v4300
        %v4371 = vunpack.c.l.b16 %v4301
        %v4372 = vunpack.c.l.b16 %v4302
        %v4373 = vunpack.c.l.b16 %v4303
        %v4374 = vunpack.c.l.b16 %v4304
        %v4375 = vunpack.c.l.b16 %v4305
        %v4376 = vunpack.c.l.b16 %v4306
        %v4377 = vunpack.c.l.b16 %v4307
        %v4378 = vunpack.c.l.b16 %v4308
        %v4379 = vunpack.c.l.b16 %v4309
        %v4380 = vunpack.c.l.b16 %v4310
        %v4381 = vunpack.c.l.b16 %v4311
        %v4382 = vunpack.c.l.b16 %v4312
        %v4383 = vunpack.c.l.b16 %v4313
        %v4384 = vunpack.c.l.b16 %v4314
        %v4385 = vpack.c.b16 %v4354, %v4353
        %v4386 = vpack.c.b16 %v4356, %v4355
        %v4387 = vpack.c.b16 %v4358, %v4357
        %v4388 = vpack.c.b16 %v4360, %v4359
        %v4389 = vpack.c.b16 %v4362, %v4361
        %v4390 = vpack.c.b16 %v4364, %v4363
        %v4391 = vpack.c.b16 %v4366, %v4365
        %v4392 = vpack.c.b16 %v4368, %v4367
        %v4393 = vpack.c.b16 %v4370, %v4369
        %v4394 = vpack.c.b16 %v4372, %v4371
        %v4395 = vpack.c.b16 %v4374, %v4373
        %v4396 = vpack.c.b16 %v4376, %v4375
        %v4397 = vpack.c.b16 %v4378, %v4377
        %v4398 = vpack.c.b16 %v4380, %v4379
        %v4399 = vpack.c.b16 %v4382, %v4381
        %v4400 = vpack.c.b16 %v4384, %v4383
        %4417 = vmatprep.subr.bf16.mxu0 0
        %4418 = vmatpush1.bf16.msra.mxu0 %v4385
        %4419 = vmatprep.subr.bf16.mxu0 0
        %4420 = vmatpush1.bf16.msra.mxu0 %v4386
        %4421 = vmatprep.subr.bf16.mxu0 0
        %4422 = vmatpush1.bf16.msra.mxu0 %v4387
        %4423 = vmatprep.subr.bf16.mxu0 0
        %4424 = vmatpush1.bf16.msra.mxu0 %v4388
        %4425 = vmatprep.subr.bf16.mxu0 0
        %4426 = vmatpush1.bf16.msra.mxu0 %v4389
        %4427 = vmatprep.subr.bf16.mxu0 0
        %4428 = vmatpush1.bf16.msra.mxu0 %v4390
        %4429 = vmatprep.subr.bf16.mxu0 0
        %4430 = vmatpush1.bf16.msra.mxu0 %v4391
        %4431 = vmatprep.subr.bf16.mxu0 0
        %4432 = vmatpush1.bf16.msra.mxu0 %v4392
        %4433 = vmatprep.subr.bf16.mxu0 0
        %4434 = vmatpush1.bf16.msra.mxu0 %v4393
        %4435 = vmatprep.subr.bf16.mxu0 0
        %4436 = vmatpush1.bf16.msra.mxu0 %v4394
        %4437 = vmatprep.subr.bf16.mxu0 0
        %4438 = vmatpush1.bf16.msra.mxu0 %v4395
        %4439 = vmatprep.subr.bf16.mxu0 0
        %4440 = vmatpush1.bf16.msra.mxu0 %v4396
        %4441 = vmatprep.subr.bf16.mxu0 0
        %4442 = vmatpush1.bf16.msra.mxu0 %v4397
        %4443 = vmatprep.subr.bf16.mxu0 0
        %4444 = vmatpush1.bf16.msra.mxu0 %v4398
        %4445 = vmatprep.subr.bf16.mxu0 0
        %4446 = vmatpush1.bf16.msra.mxu0 %v4399
        %4447 = vmatprep.subr.bf16.mxu0 0
        %4448 = vmatpush1.bf16.msra.mxu0 %v4400
        %4449 = vmatprep.mubr.bf16.mxu0 %v4318
        %4450 = vmatmul.mubr.bf16.gmra.mrb[0].mxu0 %v4317
        %v4451 = vpop.f32.mrb[0].mxu0
        %v4452 = vadd.f32 0.0, %v4451
        %v4453 = vpop.f32.mrb[0].mxu0
        %v4454 = vpop.f32.mrb[0].mxu0
        %v4455 = vpop.f32.mrb[0].mxu0
        %4456 = vdwg.mxu0
        %v4457 = vadd.f32 %v4277, %v4452
        %v4458 = vld [vmem:[%s3913] sm:$0x18]
        %v4459 = vld [vmem:[%s3913 + $0x8] sm:$0x18]
        %v4460 = vpack.c.bf16 %v4458, %v4458
        %v4461 = vpack.c.bf16 %v4459, %v4459
        %s4462 = scalar_lea.vmem %s3, 1408
        %v4463 = vld [vmem:[%s4462] sm:$0xf]
        %v4464 = vld [vmem:[%s4462 + $0x4] sm:$0xf]
        %v4465 = vld [vmem:[%s4462 + $0x8] sm:$0xf]
        %v4466 = vld [vmem:[%s4462 + $0xc] sm:$0xf]
        %v4467 = vld [vmem:[%s4462 + $0x10] sm:$0xf]
        %v4468 = vld [vmem:[%s4462 + $0x14] sm:$0xf]
        %v4469 = vld [vmem:[%s4462 + $0x18] sm:$0xf]
        %v4470 = vld [vmem:[%s4462 + $0x1c] sm:$0xf]
        %v4471 = vld [vmem:[%s4462 + $0x20] sm:$0xf]
        %v4472 = vld [vmem:[%s4462 + $0x24] sm:$0xf]
        %v4473 = vld [vmem:[%s4462 + $0x28] sm:$0xf]
        %v4474 = vld [vmem:[%s4462 + $0x2c] sm:$0xf]
        %v4475 = vld [vmem:[%s4462 + $0x30] sm:$0xf]
        %v4476 = vld [vmem:[%s4462 + $0x34] sm:$0xf]
        %v4477 = vld [vmem:[%s4462 + $0x38] sm:$0xf]
        %v4478 = vld [vmem:[%s4462 + $0x3c] sm:$0xf]
        %v4479 = vld [vmem:[%s4462 + $0x40] sm:$0xf]
        %v4480 = vld [vmem:[%s4462 + $0x44] sm:$0xf]
        %v4481 = vld [vmem:[%s4462 + $0x48] sm:$0xf]
        %v4482 = vld [vmem:[%s4462 + $0x4c] sm:$0xf]
        %v4483 = vld [vmem:[%s4462 + $0x50] sm:$0xf]
        %v4484 = vld [vmem:[%s4462 + $0x54] sm:$0xf]
        %v4485 = vld [vmem:[%s4462 + $0x58] sm:$0xf]
        %v4486 = vld [vmem:[%s4462 + $0x5c] sm:$0xf]
        %v4487 = vld [vmem:[%s4462 + $0x60] sm:$0xf]
        %v4488 = vld [vmem:[%s4462 + $0x64] sm:$0xf]
        %v4489 = vld [vmem:[%s4462 + $0x68] sm:$0xf]
        %v4490 = vld [vmem:[%s4462 + $0x6c] sm:$0xf]
        %v4491 = vld [vmem:[%s4462 + $0x70] sm:$0xf]
        %v4492 = vld [vmem:[%s4462 + $0x74] sm:$0xf]
        %v4493 = vld [vmem:[%s4462 + $0x78] sm:$0xf]
        %v4494 = vld [vmem:[%s4462 + $0x7c] sm:$0xf]
        %v4496 = vshrl.u32 %v4460, 16
        %v4498 = vrot.slane %v4496, 1
        %v4499 = vshll.u32 %v4460, 16
        %v4501 = vrot.slane %v4499, 2
        %v4502 = vor.u32 %v4498, %v4501
        %v4504 = vshrl.u32 %v4461, 16
        %v4506 = vrot.slane %v4504, 1
        %v4507 = vshll.u32 %v4461, 16
        %v4509 = vrot.slane %v4507, 2
        %v4510 = vor.u32 %v4506, %v4509
        %v4545 = vunpack.c.l.b16 %v4463
        %v4546 = vunpack.c.l.b16 %v4464
        %v4547 = vunpack.c.l.b16 %v4465
        %v4548 = vunpack.c.l.b16 %v4466
        %v4549 = vunpack.c.l.b16 %v4467
        %v4550 = vunpack.c.l.b16 %v4468
        %v4551 = vunpack.c.l.b16 %v4469
        %v4552 = vunpack.c.l.b16 %v4470
        %v4553 = vunpack.c.l.b16 %v4471
        %v4554 = vunpack.c.l.b16 %v4472
        %v4555 = vunpack.c.l.b16 %v4473
        %v4556 = vunpack.c.l.b16 %v4474
        %v4557 = vunpack.c.l.b16 %v4475
        %v4558 = vunpack.c.l.b16 %v4476
        %v4559 = vunpack.c.l.b16 %v4477
        %v4560 = vunpack.c.l.b16 %v4478
        %v4561 = vunpack.c.l.b16 %v4479
        %v4562 = vunpack.c.l.b16 %v4480
        %v4563 = vunpack.c.l.b16 %v4481
        %v4564 = vunpack.c.l.b16 %v4482
        %v4565 = vunpack.c.l.b16 %v4483
        %v4566 = vunpack.c.l.b16 %v4484
        %v4567 = vunpack.c.l.b16 %v4485
        %v4568 = vunpack.c.l.b16 %v4486
        %v4569 = vunpack.c.l.b16 %v4487
        %v4570 = vunpack.c.l.b16 %v4488
        %v4571 = vunpack.c.l.b16 %v4489
        %v4572 = vunpack.c.l.b16 %v4490
        %v4573 = vunpack.c.l.b16 %v4491
        %v4574 = vunpack.c.l.b16 %v4492
        %v4575 = vunpack.c.l.b16 %v4493
        %v4576 = vunpack.c.l.b16 %v4494
        %v4577 = vpack.c.b16 %v4546, %v4545
        %v4578 = vpack.c.b16 %v4548, %v4547
        %v4579 = vpack.c.b16 %v4550, %v4549
        %v4580 = vpack.c.b16 %v4552, %v4551
        %v4581 = vpack.c.b16 %v4554, %v4553
        %v4582 = vpack.c.b16 %v4556, %v4555
        %v4583 = vpack.c.b16 %v4558, %v4557
        %v4584 = vpack.c.b16 %v4560, %v4559
        %v4585 = vpack.c.b16 %v4562, %v4561
        %v4586 = vpack.c.b16 %v4564, %v4563
        %v4587 = vpack.c.b16 %v4566, %v4565
        %v4588 = vpack.c.b16 %v4568, %v4567
        %v4589 = vpack.c.b16 %v4570, %v4569
        %v4590 = vpack.c.b16 %v4572, %v4571
        %v4591 = vpack.c.b16 %v4574, %v4573
        %v4592 = vpack.c.b16 %v4576, %v4575
        %4609 = vmatprep.subr.bf16.mxu0 0
        %4610 = vmatpush1.bf16.msra.mxu0 %v4577
        %4611 = vmatprep.subr.bf16.mxu0 0
        %4612 = vmatpush1.bf16.msra.mxu0 %v4578
        %4613 = vmatprep.subr.bf16.mxu0 0
        %4614 = vmatpush1.bf16.msra.mxu0 %v4579
        %4615 = vmatprep.subr.bf16.mxu0 0
        %4616 = vmatpush1.bf16.msra.mxu0 %v4580
        %4617 = vmatprep.subr.bf16.mxu0 0
        %4618 = vmatpush1.bf16.msra.mxu0 %v4581
        %4619 = vmatprep.subr.bf16.mxu0 0
        %4620 = vmatpush1.bf16.msra.mxu0 %v4582
        %4621 = vmatprep.subr.bf16.mxu0 0
        %4622 = vmatpush1.bf16.msra.mxu0 %v4583
        %4623 = vmatprep.subr.bf16.mxu0 0
        %4624 = vmatpush1.bf16.msra.mxu0 %v4584
        %4625 = vmatprep.subr.bf16.mxu0 0
        %4626 = vmatpush1.bf16.msra.mxu0 %v4585
        %4627 = vmatprep.subr.bf16.mxu0 0
        %4628 = vmatpush1.bf16.msra.mxu0 %v4586
        %4629 = vmatprep.subr.bf16.mxu0 0
        %4630 = vmatpush1.bf16.msra.mxu0 %v4587
        %4631 = vmatprep.subr.bf16.mxu0 0
        %4632 = vmatpush1.bf16.msra.mxu0 %v4588
        %4633 = vmatprep.subr.bf16.mxu0 0
        %4634 = vmatpush1.bf16.msra.mxu0 %v4589
        %4635 = vmatprep.subr.bf16.mxu0 0
        %4636 = vmatpush1.bf16.msra.mxu0 %v4590
        %4637 = vmatprep.subr.bf16.mxu0 0
        %4638 = vmatpush1.bf16.msra.mxu0 %v4591
        %4639 = vmatprep.subr.bf16.mxu0 0
        %4640 = vmatpush1.bf16.msra.mxu0 %v4592
        %4641 = vmatprep.mubr.bf16.mxu0 %v4510
        %4642 = vmatmul.mubr.bf16.gmra.mrb[0].mxu0 %v4502
        %v4643 = vpop.f32.mrb[0].mxu0
        %v4644 = vadd.f32 0.0, %v4643
        %v4645 = vpop.f32.mrb[0].mxu0
        %v4646 = vpop.f32.mrb[0].mxu0
        %v4647 = vpop.f32.mrb[0].mxu0
        %4648 = vdwg.mxu0
        %v4649 = vadd.f32 %v4457, %v4644
        %s4650 = sadd.s32 %s2429, 3
        %s4651 = smul.u32 %s4650, 2
        %s4652 = smul.addr %s4651, 8
        %s4653 = scalar_lea.vmem [#allocation5], %s4652
        %v4654 = vld [vmem:[%s4653] sm:$0x3]
        %v4655 = vld [vmem:[%s4653 + $0x8] sm:$0x3]
        %v4656 = vpack.c.bf16 %v4654, %v4654
        %v4657 = vpack.c.bf16 %v4655, %v4655
        %s4658 = scalar_lea.vmem %s3, 1536
        %v4659 = vld [vmem:[%s4658] sm:$0xf]
        %v4660 = vld [vmem:[%s4658 + $0x4] sm:$0xf]
        %v4661 = vld [vmem:[%s4658 + $0x8] sm:$0xf]
        %v4662 = vld [vmem:[%s4658 + $0xc] sm:$0xf]
        %v4663 = vld [vmem:[%s4658 + $0x10] sm:$0xf]
        %v4664 = vld [vmem:[%s4658 + $0x14] sm:$0xf]
        %v4665 = vld [vmem:[%s4658 + $0x18] sm:$0xf]
        %v4666 = vld [vmem:[%s4658 + $0x1c] sm:$0xf]
        %v4667 = vld [vmem:[%s4658 + $0x20] sm:$0xf]
        %v4668 = vld [vmem:[%s4658 + $0x24] sm:$0xf]
        %v4669 = vld [vmem:[%s4658 + $0x28] sm:$0xf]
        %v4670 = vld [vmem:[%s4658 + $0x2c] sm:$0xf]
        %v4671 = vld [vmem:[%s4658 + $0x30] sm:$0xf]
        %v4672 = vld [vmem:[%s4658 + $0x34] sm:$0xf]
        %v4673 = vld [vmem:[%s4658 + $0x38] sm:$0xf]
        %v4674 = vld [vmem:[%s4658 + $0x3c] sm:$0xf]
        %v4675 = vld [vmem:[%s4658 + $0x40] sm:$0xf]
        %v4676 = vld [vmem:[%s4658 + $0x44] sm:$0xf]
        %v4677 = vld [vmem:[%s4658 + $0x48] sm:$0xf]
        %v4678 = vld [vmem:[%s4658 + $0x4c] sm:$0xf]
        %v4679 = vld [vmem:[%s4658 + $0x50] sm:$0xf]
        %v4680 = vld [vmem:[%s4658 + $0x54] sm:$0xf]
        %v4681 = vld [vmem:[%s4658 + $0x58] sm:$0xf]
        %v4682 = vld [vmem:[%s4658 + $0x5c] sm:$0xf]
        %v4683 = vld [vmem:[%s4658 + $0x60] sm:$0xf]
        %v4684 = vld [vmem:[%s4658 + $0x64] sm:$0xf]
        %v4685 = vld [vmem:[%s4658 + $0x68] sm:$0xf]
        %v4686 = vld [vmem:[%s4658 + $0x6c] sm:$0xf]
        %v4687 = vld [vmem:[%s4658 + $0x70] sm:$0xf]
        %v4688 = vld [vmem:[%s4658 + $0x74] sm:$0xf]
        %v4689 = vld [vmem:[%s4658 + $0x78] sm:$0xf]
        %v4690 = vld [vmem:[%s4658 + $0x7c] sm:$0xf]
        %v4723 = vunpack.c.l.b16 %v4659
        %v4724 = vunpack.c.l.b16 %v4660
        %v4725 = vunpack.c.l.b16 %v4661
        %v4726 = vunpack.c.l.b16 %v4662
        %v4727 = vunpack.c.l.b16 %v4663
        %v4728 = vunpack.c.l.b16 %v4664
        %v4729 = vunpack.c.l.b16 %v4665
        %v4730 = vunpack.c.l.b16 %v4666
        %v4731 = vunpack.c.l.b16 %v4667
        %v4732 = vunpack.c.l.b16 %v4668
        %v4733 = vunpack.c.l.b16 %v4669
        %v4734 = vunpack.c.l.b16 %v4670
        %v4735 = vunpack.c.l.b16 %v4671
        %v4736 = vunpack.c.l.b16 %v4672
        %v4737 = vunpack.c.l.b16 %v4673
        %v4738 = vunpack.c.l.b16 %v4674
        %v4739 = vunpack.c.l.b16 %v4675
        %v4740 = vunpack.c.l.b16 %v4676
        %v4741 = vunpack.c.l.b16 %v4677
        %v4742 = vunpack.c.l.b16 %v4678
        %v4743 = vunpack.c.l.b16 %v4679
        %v4744 = vunpack.c.l.b16 %v4680
        %v4745 = vunpack.c.l.b16 %v4681
        %v4746 = vunpack.c.l.b16 %v4682
        %v4747 = vunpack.c.l.b16 %v4683
        %v4748 = vunpack.c.l.b16 %v4684
        %v4749 = vunpack.c.l.b16 %v4685
        %v4750 = vunpack.c.l.b16 %v4686
        %v4751 = vunpack.c.l.b16 %v4687
        %v4752 = vunpack.c.l.b16 %v4688
        %v4753 = vunpack.c.l.b16 %v4689
        %v4754 = vunpack.c.l.b16 %v4690
        %v4755 = vpack.c.b16 %v4724, %v4723
        %v4756 = vpack.c.b16 %v4726, %v4725
        %v4757 = vpack.c.b16 %v4728, %v4727
        %v4758 = vpack.c.b16 %v4730, %v4729
        %v4759 = vpack.c.b16 %v4732, %v4731
        %v4760 = vpack.c.b16 %v4734, %v4733
        %v4761 = vpack.c.b16 %v4736, %v4735
        %v4762 = vpack.c.b16 %v4738, %v4737
        %v4763 = vpack.c.b16 %v4740, %v4739
        %v4764 = vpack.c.b16 %v4742, %v4741
        %v4765 = vpack.c.b16 %v4744, %v4743
        %v4766 = vpack.c.b16 %v4746, %v4745
        %v4767 = vpack.c.b16 %v4748, %v4747
        %v4768 = vpack.c.b16 %v4750, %v4749
        %v4769 = vpack.c.b16 %v4752, %v4751
        %v4770 = vpack.c.b16 %v4754, %v4753
        %4787 = vmatprep.subr.bf16.mxu0 0
        %4788 = vmatpush1.bf16.msra.mxu0 %v4755
        %4789 = vmatprep.subr.bf16.mxu0 0
        %4790 = vmatpush1.bf16.msra.mxu0 %v4756
        %4791 = vmatprep.subr.bf16.mxu0 0
        %4792 = vmatpush1.bf16.msra.mxu0 %v4757
        %4793 = vmatprep.subr.bf16.mxu0 0
        %4794 = vmatpush1.bf16.msra.mxu0 %v4758
        %4795 = vmatprep.subr.bf16.mxu0 0
        %4796 = vmatpush1.bf16.msra.mxu0 %v4759
        %4797 = vmatprep.subr.bf16.mxu0 0
        %4798 = vmatpush1.bf16.msra.mxu0 %v4760
        %4799 = vmatprep.subr.bf16.mxu0 0
        %4800 = vmatpush1.bf16.msra.mxu0 %v4761
        %4801 = vmatprep.subr.bf16.mxu0 0
        %4802 = vmatpush1.bf16.msra.mxu0 %v4762
        %4803 = vmatprep.subr.bf16.mxu0 0
        %4804 = vmatpush1.bf16.msra.mxu0 %v4763
        %4805 = vmatprep.subr.bf16.mxu0 0
        %4806 = vmatpush1.bf16.msra.mxu0 %v4764
        %4807 = vmatprep.subr.bf16.mxu0 0
        %4808 = vmatpush1.bf16.msra.mxu0 %v4765
        %4809 = vmatprep.subr.bf16.mxu0 0
        %4810 = vmatpush1.bf16.msra.mxu0 %v4766
        %4811 = vmatprep.subr.bf16.mxu0 0
        %4812 = vmatpush1.bf16.msra.mxu0 %v4767
        %4813 = vmatprep.subr.bf16.mxu0 0
        %4814 = vmatpush1.bf16.msra.mxu0 %v4768
        %4815 = vmatprep.subr.bf16.mxu0 0
        %4816 = vmatpush1.bf16.msra.mxu0 %v4769
        %4817 = vmatprep.subr.bf16.mxu0 0
        %4818 = vmatpush1.bf16.msra.mxu0 %v4770
        %4819 = vmatprep.mubr.bf16.mxu0 %v4657
        %4820 = vmatmul.mubr.bf16.gmra.mrb[0].mxu0 %v4656
        %v4821 = vpop.f32.mrb[0].mxu0
        %v4822 = vadd.f32 0.0, %v4821
        %v4823 = vpop.f32.mrb[0].mxu0
        %v4824 = vpop.f32.mrb[0].mxu0
        %v4825 = vpop.f32.mrb[0].mxu0
        %4826 = vdwg.mxu0
        %v4827 = vadd.f32 %v4649, %v4822
        %v4828 = vld [vmem:[%s4653] sm:$0x6]
        %v4829 = vld [vmem:[%s4653 + $0x8] sm:$0x6]
        %v4830 = vpack.c.bf16 %v4828, %v4828
        %v4831 = vpack.c.bf16 %v4829, %v4829
        %s4832 = scalar_lea.vmem %s3, 1664
        %v4833 = vld [vmem:[%s4832] sm:$0xf]
        %v4834 = vld [vmem:[%s4832 + $0x4] sm:$0xf]
        %v4835 = vld [vmem:[%s4832 + $0x8] sm:$0xf]
        %v4836 = vld [vmem:[%s4832 + $0xc] sm:$0xf]
        %v4837 = vld [vmem:[%s4832 + $0x10] sm:$0xf]
        %v4838 = vld [vmem:[%s4832 + $0x14] sm:$0xf]
        %v4839 = vld [vmem:[%s4832 + $0x18] sm:$0xf]
        %v4840 = vld [vmem:[%s4832 + $0x1c] sm:$0xf]
        %v4841 = vld [vmem:[%s4832 + $0x20] sm:$0xf]
        %v4842 = vld [vmem:[%s4832 + $0x24] sm:$0xf]
        %v4843 = vld [vmem:[%s4832 + $0x28] sm:$0xf]
        %v4844 = vld [vmem:[%s4832 + $0x2c] sm:$0xf]
        %v4845 = vld [vmem:[%s4832 + $0x30] sm:$0xf]
        %v4846 = vld [vmem:[%s4832 + $0x34] sm:$0xf]
        %v4847 = vld [vmem:[%s4832 + $0x38] sm:$0xf]
        %v4848 = vld [vmem:[%s4832 + $0x3c] sm:$0xf]
        %v4849 = vld [vmem:[%s4832 + $0x40] sm:$0xf]
        %v4850 = vld [vmem:[%s4832 + $0x44] sm:$0xf]
        %v4851 = vld [vmem:[%s4832 + $0x48] sm:$0xf]
        %v4852 = vld [vmem:[%s4832 + $0x4c] sm:$0xf]
        %v4853 = vld [vmem:[%s4832 + $0x50] sm:$0xf]
        %v4854 = vld [vmem:[%s4832 + $0x54] sm:$0xf]
        %v4855 = vld [vmem:[%s4832 + $0x58] sm:$0xf]
        %v4856 = vld [vmem:[%s4832 + $0x5c] sm:$0xf]
        %v4857 = vld [vmem:[%s4832 + $0x60] sm:$0xf]
        %v4858 = vld [vmem:[%s4832 + $0x64] sm:$0xf]
        %v4859 = vld [vmem:[%s4832 + $0x68] sm:$0xf]
        %v4860 = vld [vmem:[%s4832 + $0x6c] sm:$0xf]
        %v4861 = vld [vmem:[%s4832 + $0x70] sm:$0xf]
        %v4862 = vld [vmem:[%s4832 + $0x74] sm:$0xf]
        %v4863 = vld [vmem:[%s4832 + $0x78] sm:$0xf]
        %v4864 = vld [vmem:[%s4832 + $0x7c] sm:$0xf]
        %v4866 = vshrl.u32 %v4830, 16
        %v4868 = vshll.u32 %v4830, 16
        %v4870 = vrot.slane %v4868, 1
        %v4871 = vor.u32 %v4866, %v4870
        %v4873 = vshrl.u32 %v4831, 16
        %v4875 = vshll.u32 %v4831, 16
        %v4877 = vrot.slane %v4875, 1
        %v4878 = vor.u32 %v4873, %v4877
        %v4913 = vunpack.c.l.b16 %v4833
        %v4914 = vunpack.c.l.b16 %v4834
        %v4915 = vunpack.c.l.b16 %v4835
        %v4916 = vunpack.c.l.b16 %v4836
        %v4917 = vunpack.c.l.b16 %v4837
        %v4918 = vunpack.c.l.b16 %v4838
        %v4919 = vunpack.c.l.b16 %v4839
        %v4920 = vunpack.c.l.b16 %v4840
        %v4921 = vunpack.c.l.b16 %v4841
        %v4922 = vunpack.c.l.b16 %v4842
        %v4923 = vunpack.c.l.b16 %v4843
        %v4924 = vunpack.c.l.b16 %v4844
        %v4925 = vunpack.c.l.b16 %v4845
        %v4926 = vunpack.c.l.b16 %v4846
        %v4927 = vunpack.c.l.b16 %v4847
        %v4928 = vunpack.c.l.b16 %v4848
        %v4929 = vunpack.c.l.b16 %v4849
        %v4930 = vunpack.c.l.b16 %v4850
        %v4931 = vunpack.c.l.b16 %v4851
        %v4932 = vunpack.c.l.b16 %v4852
        %v4933 = vunpack.c.l.b16 %v4853
        %v4934 = vunpack.c.l.b16 %v4854
        %v4935 = vunpack.c.l.b16 %v4855
        %v4936 = vunpack.c.l.b16 %v4856
        %v4937 = vunpack.c.l.b16 %v4857
        %v4938 = vunpack.c.l.b16 %v4858
        %v4939 = vunpack.c.l.b16 %v4859
        %v4940 = vunpack.c.l.b16 %v4860
        %v4941 = vunpack.c.l.b16 %v4861
        %v4942 = vunpack.c.l.b16 %v4862
        %v4943 = vunpack.c.l.b16 %v4863
        %v4944 = vunpack.c.l.b16 %v4864
        %v4945 = vpack.c.b16 %v4914, %v4913
        %v4946 = vpack.c.b16 %v4916, %v4915
        %v4947 = vpack.c.b16 %v4918, %v4917
        %v4948 = vpack.c.b16 %v4920, %v4919
        %v4949 = vpack.c.b16 %v4922, %v4921
        %v4950 = vpack.c.b16 %v4924, %v4923
        %v4951 = vpack.c.b16 %v4926, %v4925
        %v4952 = vpack.c.b16 %v4928, %v4927
        %v4953 = vpack.c.b16 %v4930, %v4929
        %v4954 = vpack.c.b16 %v4932, %v4931
        %v4955 = vpack.c.b16 %v4934, %v4933
        %v4956 = vpack.c.b16 %v4936, %v4935
        %v4957 = vpack.c.b16 %v4938, %v4937
        %v4958 = vpack.c.b16 %v4940, %v4939
        %v4959 = vpack.c.b16 %v4942, %v4941
        %v4960 = vpack.c.b16 %v4944, %v4943
        %4977 = vmatprep.subr.bf16.mxu0 0
        %4978 = vmatpush1.bf16.msra.mxu0 %v4945
        %4979 = vmatprep.subr.bf16.mxu0 0
        %4980 = vmatpush1.bf16.msra.mxu0 %v4946
        %4981 = vmatprep.subr.bf16.mxu0 0
        %4982 = vmatpush1.bf16.msra.mxu0 %v4947
        %4983 = vmatprep.subr.bf16.mxu0 0
        %4984 = vmatpush1.bf16.msra.mxu0 %v4948
        %4985 = vmatprep.subr.bf16.mxu0 0
        %4986 = vmatpush1.bf16.msra.mxu0 %v4949
        %4987 = vmatprep.subr.bf16.mxu0 0
        %4988 = vmatpush1.bf16.msra.mxu0 %v4950
        %4989 = vmatprep.subr.bf16.mxu0 0
        %4990 = vmatpush1.bf16.msra.mxu0 %v4951
        %4991 = vmatprep.subr.bf16.mxu0 0
        %4992 = vmatpush1.bf16.msra.mxu0 %v4952
        %4993 = vmatprep.subr.bf16.mxu0 0
        %4994 = vmatpush1.bf16.msra.mxu0 %v4953
        %4995 = vmatprep.subr.bf16.mxu0 0
        %4996 = vmatpush1.bf16.msra.mxu0 %v4954
        %4997 = vmatprep.subr.bf16.mxu0 0
        %4998 = vmatpush1.bf16.msra.mxu0 %v4955
        %4999 = vmatprep.subr.bf16.mxu0 0
        %5000 = vmatpush1.bf16.msra.mxu0 %v4956
        %5001 = vmatprep.subr.bf16.mxu0 0
        %5002 = vmatpush1.bf16.msra.mxu0 %v4957
        %5003 = vmatprep.subr.bf16.mxu0 0
        %5004 = vmatpush1.bf16.msra.mxu0 %v4958
        %5005 = vmatprep.subr.bf16.mxu0 0
        %5006 = vmatpush1.bf16.msra.mxu0 %v4959
        %5007 = vmatprep.subr.bf16.mxu0 0
        %5008 = vmatpush1.bf16.msra.mxu0 %v4960
        %5009 = vmatprep.mubr.bf16.mxu0 %v4878
        %5010 = vmatmul.mubr.bf16.gmra.mrb[0].mxu0 %v4871
        %v5011 = vpop.f32.mrb[0].mxu0
        %v5012 = vadd.f32 0.0, %v5011
        %v5013 = vpop.f32.mrb[0].mxu0
        %v5014 = vpop.f32.mrb[0].mxu0
        %v5015 = vpop.f32.mrb[0].mxu0
        %5016 = vdwg.mxu0
        %v5017 = vadd.f32 %v4827, %v5012
        %v5018 = vld [vmem:[%s4653] sm:$0xc]
        %v5019 = vld [vmem:[%s4653 + $0x8] sm:$0xc]
        %v5020 = vpack.c.bf16 %v5018, %v5018
        %v5021 = vpack.c.bf16 %v5019, %v5019
        %s5022 = scalar_lea.vmem %s3, 1792
        %v5023 = vld [vmem:[%s5022] sm:$0xf]
        %v5024 = vld [vmem:[%s5022 + $0x4] sm:$0xf]
        %v5025 = vld [vmem:[%s5022 + $0x8] sm:$0xf]
        %v5026 = vld [vmem:[%s5022 + $0xc] sm:$0xf]
        %v5027 = vld [vmem:[%s5022 + $0x10] sm:$0xf]
        %v5028 = vld [vmem:[%s5022 + $0x14] sm:$0xf]
        %v5029 = vld [vmem:[%s5022 + $0x18] sm:$0xf]
        %v5030 = vld [vmem:[%s5022 + $0x1c] sm:$0xf]
        %v5031 = vld [vmem:[%s5022 + $0x20] sm:$0xf]
        %v5032 = vld [vmem:[%s5022 + $0x24] sm:$0xf]
        %v5033 = vld [vmem:[%s5022 + $0x28] sm:$0xf]
        %v5034 = vld [vmem:[%s5022 + $0x2c] sm:$0xf]
        %v5035 = vld [vmem:[%s5022 + $0x30] sm:$0xf]
        %v5036 = vld [vmem:[%s5022 + $0x34] sm:$0xf]
        %v5037 = vld [vmem:[%s5022 + $0x38] sm:$0xf]
        %v5038 = vld [vmem:[%s5022 + $0x3c] sm:$0xf]
        %v5039 = vld [vmem:[%s5022 + $0x40] sm:$0xf]
        %v5040 = vld [vmem:[%s5022 + $0x44] sm:$0xf]
        %v5041 = vld [vmem:[%s5022 + $0x48] sm:$0xf]
        %v5042 = vld [vmem:[%s5022 + $0x4c] sm:$0xf]
        %v5043 = vld [vmem:[%s5022 + $0x50] sm:$0xf]
        %v5044 = vld [vmem:[%s5022 + $0x54] sm:$0xf]
        %v5045 = vld [vmem:[%s5022 + $0x58] sm:$0xf]
        %v5046 = vld [vmem:[%s5022 + $0x5c] sm:$0xf]
        %v5047 = vld [vmem:[%s5022 + $0x60] sm:$0xf]
        %v5048 = vld [vmem:[%s5022 + $0x64] sm:$0xf]
        %v5049 = vld [vmem:[%s5022 + $0x68] sm:$0xf]
        %v5050 = vld [vmem:[%s5022 + $0x6c] sm:$0xf]
        %v5051 = vld [vmem:[%s5022 + $0x70] sm:$0xf]
        %v5052 = vld [vmem:[%s5022 + $0x74] sm:$0xf]
        %v5053 = vld [vmem:[%s5022 + $0x78] sm:$0xf]
        %v5054 = vld [vmem:[%s5022 + $0x7c] sm:$0xf]
        %v5057 = vrot.slane %v5020, 1
        %v5058 = vrot.slane %v5021, 1
        %v5093 = vunpack.c.l.b16 %v5023
        %v5094 = vunpack.c.l.b16 %v5024
        %v5095 = vunpack.c.l.b16 %v5025
        %v5096 = vunpack.c.l.b16 %v5026
        %v5097 = vunpack.c.l.b16 %v5027
        %v5098 = vunpack.c.l.b16 %v5028
        %v5099 = vunpack.c.l.b16 %v5029
        %v5100 = vunpack.c.l.b16 %v5030
        %v5101 = vunpack.c.l.b16 %v5031
        %v5102 = vunpack.c.l.b16 %v5032
        %v5103 = vunpack.c.l.b16 %v5033
        %v5104 = vunpack.c.l.b16 %v5034
        %v5105 = vunpack.c.l.b16 %v5035
        %v5106 = vunpack.c.l.b16 %v5036
        %v5107 = vunpack.c.l.b16 %v5037
        %v5108 = vunpack.c.l.b16 %v5038
        %v5109 = vunpack.c.l.b16 %v5039
        %v5110 = vunpack.c.l.b16 %v5040
        %v5111 = vunpack.c.l.b16 %v5041
        %v5112 = vunpack.c.l.b16 %v5042
        %v5113 = vunpack.c.l.b16 %v5043
        %v5114 = vunpack.c.l.b16 %v5044
        %v5115 = vunpack.c.l.b16 %v5045
        %v5116 = vunpack.c.l.b16 %v5046
        %v5117 = vunpack.c.l.b16 %v5047
        %v5118 = vunpack.c.l.b16 %v5048
        %v5119 = vunpack.c.l.b16 %v5049
        %v5120 = vunpack.c.l.b16 %v5050
        %v5121 = vunpack.c.l.b16 %v5051
        %v5122 = vunpack.c.l.b16 %v5052
        %v5123 = vunpack.c.l.b16 %v5053
        %v5124 = vunpack.c.l.b16 %v5054
        %v5125 = vpack.c.b16 %v5094, %v5093
        %v5126 = vpack.c.b16 %v5096, %v5095
        %v5127 = vpack.c.b16 %v5098, %v5097
        %v5128 = vpack.c.b16 %v5100, %v5099
        %v5129 = vpack.c.b16 %v5102, %v5101
        %v5130 = vpack.c.b16 %v5104, %v5103
        %v5131 = vpack.c.b16 %v5106, %v5105
        %v5132 = vpack.c.b16 %v5108, %v5107
        %v5133 = vpack.c.b16 %v5110, %v5109
        %v5134 = vpack.c.b16 %v5112, %v5111
        %v5135 = vpack.c.b16 %v5114, %v5113
        %v5136 = vpack.c.b16 %v5116, %v5115
        %v5137 = vpack.c.b16 %v5118, %v5117
        %v5138 = vpack.c.b16 %v5120, %v5119
        %v5139 = vpack.c.b16 %v5122, %v5121
        %v5140 = vpack.c.b16 %v5124, %v5123
        %5157 = vmatprep.subr.bf16.mxu0 0
        %5158 = vmatpush1.bf16.msra.mxu0 %v5125
        %5159 = vmatprep.subr.bf16.mxu0 0
        %5160 = vmatpush1.bf16.msra.mxu0 %v5126
        %5161 = vmatprep.subr.bf16.mxu0 0
        %5162 = vmatpush1.bf16.msra.mxu0 %v5127
        %5163 = vmatprep.subr.bf16.mxu0 0
        %5164 = vmatpush1.bf16.msra.mxu0 %v5128
        %5165 = vmatprep.subr.bf16.mxu0 0
        %5166 = vmatpush1.bf16.msra.mxu0 %v5129
        %5167 = vmatprep.subr.bf16.mxu0 0
        %5168 = vmatpush1.bf16.msra.mxu0 %v5130
        %5169 = vmatprep.subr.bf16.mxu0 0
        %5170 = vmatpush1.bf16.msra.mxu0 %v5131
        %5171 = vmatprep.subr.bf16.mxu0 0
        %5172 = vmatpush1.bf16.msra.mxu0 %v5132
        %5173 = vmatprep.subr.bf16.mxu0 0
        %5174 = vmatpush1.bf16.msra.mxu0 %v5133
        %5175 = vmatprep.subr.bf16.mxu0 0
        %5176 = vmatpush1.bf16.msra.mxu0 %v5134
        %5177 = vmatprep.subr.bf16.mxu0 0
        %5178 = vmatpush1.bf16.msra.mxu0 %v5135
        %5179 = vmatprep.subr.bf16.mxu0 0
        %5180 = vmatpush1.bf16.msra.mxu0 %v5136
        %5181 = vmatprep.subr.bf16.mxu0 0
        %5182 = vmatpush1.bf16.msra.mxu0 %v5137
        %5183 = vmatprep.subr.bf16.mxu0 0
        %5184 = vmatpush1.bf16.msra.mxu0 %v5138
        %5185 = vmatprep.subr.bf16.mxu0 0
        %5186 = vmatpush1.bf16.msra.mxu0 %v5139
        %5187 = vmatprep.subr.bf16.mxu0 0
        %5188 = vmatpush1.bf16.msra.mxu0 %v5140
        %5189 = vmatprep.mubr.bf16.mxu0 %v5058
        %5190 = vmatmul.mubr.bf16.gmra.mrb[0].mxu0 %v5057
        %v5191 = vpop.f32.mrb[0].mxu0
        %v5192 = vadd.f32 0.0, %v5191
        %v5193 = vpop.f32.mrb[0].mxu0
        %v5194 = vpop.f32.mrb[0].mxu0
        %v5195 = vpop.f32.mrb[0].mxu0
        %5196 = vdwg.mxu0
        %v5197 = vadd.f32 %v5017, %v5192
        %v5198 = vld [vmem:[%s4653] sm:$0x18]
        %v5199 = vld [vmem:[%s4653 + $0x8] sm:$0x18]
        %v5200 = vpack.c.bf16 %v5198, %v5198
        %v5201 = vpack.c.bf16 %v5199, %v5199
        %s5202 = scalar_lea.vmem %s3, 1920
        %v5203 = vld [vmem:[%s5202] sm:$0xf]
        %v5204 = vld [vmem:[%s5202 + $0x4] sm:$0xf]
        %v5205 = vld [vmem:[%s5202 + $0x8] sm:$0xf]
        %v5206 = vld [vmem:[%s5202 + $0xc] sm:$0xf]
        %v5207 = vld [vmem:[%s5202 + $0x10] sm:$0xf]
        %v5208 = vld [vmem:[%s5202 + $0x14] sm:$0xf]
        %v5209 = vld [vmem:[%s5202 + $0x18] sm:$0xf]
        %v5210 = vld [vmem:[%s5202 + $0x1c] sm:$0xf]
        %v5211 = vld [vmem:[%s5202 + $0x20] sm:$0xf]
        %v5212 = vld [vmem:[%s5202 + $0x24] sm:$0xf]
        %v5213 = vld [vmem:[%s5202 + $0x28] sm:$0xf]
        %v5214 = vld [vmem:[%s5202 + $0x2c] sm:$0xf]
        %v5215 = vld [vmem:[%s5202 + $0x30] sm:$0xf]
        %v5216 = vld [vmem:[%s5202 + $0x34] sm:$0xf]
        %v5217 = vld [vmem:[%s5202 + $0x38] sm:$0xf]
        %v5218 = vld [vmem:[%s5202 + $0x3c] sm:$0xf]
        %v5219 = vld [vmem:[%s5202 + $0x40] sm:$0xf]
        %v5220 = vld [vmem:[%s5202 + $0x44] sm:$0xf]
        %v5221 = vld [vmem:[%s5202 + $0x48] sm:$0xf]
        %v5222 = vld [vmem:[%s5202 + $0x4c] sm:$0xf]
        %v5223 = vld [vmem:[%s5202 + $0x50] sm:$0xf]
        %v5224 = vld [vmem:[%s5202 + $0x54] sm:$0xf]
        %v5225 = vld [vmem:[%s5202 + $0x58] sm:$0xf]
        %v5226 = vld [vmem:[%s5202 + $0x5c] sm:$0xf]
        %v5227 = vld [vmem:[%s5202 + $0x60] sm:$0xf]
        %v5228 = vld [vmem:[%s5202 + $0x64] sm:$0xf]
        %v5229 = vld [vmem:[%s5202 + $0x68] sm:$0xf]
        %v5230 = vld [vmem:[%s5202 + $0x6c] sm:$0xf]
        %v5231 = vld [vmem:[%s5202 + $0x70] sm:$0xf]
        %v5232 = vld [vmem:[%s5202 + $0x74] sm:$0xf]
        %v5233 = vld [vmem:[%s5202 + $0x78] sm:$0xf]
        %v5234 = vld [vmem:[%s5202 + $0x7c] sm:$0xf]
        %v5236 = vshrl.u32 %v5200, 16
        %v5238 = vrot.slane %v5236, 1
        %v5239 = vshll.u32 %v5200, 16
        %v5241 = vrot.slane %v5239, 2
        %v5242 = vor.u32 %v5238, %v5241
        %v5244 = vshrl.u32 %v5201, 16
        %v5246 = vrot.slane %v5244, 1
        %v5247 = vshll.u32 %v5201, 16
        %v5249 = vrot.slane %v5247, 2
        %v5250 = vor.u32 %v5246, %v5249
        %v5285 = vunpack.c.l.b16 %v5203
        %v5286 = vunpack.c.l.b16 %v5204
        %v5287 = vunpack.c.l.b16 %v5205
        %v5288 = vunpack.c.l.b16 %v5206
        %v5289 = vunpack.c.l.b16 %v5207
        %v5290 = vunpack.c.l.b16 %v5208
        %v5291 = vunpack.c.l.b16 %v5209
        %v5292 = vunpack.c.l.b16 %v5210
        %v5293 = vunpack.c.l.b16 %v5211
        %v5294 = vunpack.c.l.b16 %v5212
        %v5295 = vunpack.c.l.b16 %v5213
        %v5296 = vunpack.c.l.b16 %v5214
        %v5297 = vunpack.c.l.b16 %v5215
        %v5298 = vunpack.c.l.b16 %v5216
        %v5299 = vunpack.c.l.b16 %v5217
        %v5300 = vunpack.c.l.b16 %v5218
        %v5301 = vunpack.c.l.b16 %v5219
        %v5302 = vunpack.c.l.b16 %v5220
        %v5303 = vunpack.c.l.b16 %v5221
        %v5304 = vunpack.c.l.b16 %v5222
        %v5305 = vunpack.c.l.b16 %v5223
        %v5306 = vunpack.c.l.b16 %v5224
        %v5307 = vunpack.c.l.b16 %v5225
        %v5308 = vunpack.c.l.b16 %v5226
        %v5309 = vunpack.c.l.b16 %v5227
        %v5310 = vunpack.c.l.b16 %v5228
        %v5311 = vunpack.c.l.b16 %v5229
        %v5312 = vunpack.c.l.b16 %v5230
        %v5313 = vunpack.c.l.b16 %v5231
        %v5314 = vunpack.c.l.b16 %v5232
        %v5315 = vunpack.c.l.b16 %v5233
        %v5316 = vunpack.c.l.b16 %v5234
        %v5317 = vpack.c.b16 %v5286, %v5285
        %v5318 = vpack.c.b16 %v5288, %v5287
        %v5319 = vpack.c.b16 %v5290, %v5289
        %v5320 = vpack.c.b16 %v5292, %v5291
        %v5321 = vpack.c.b16 %v5294, %v5293
        %v5322 = vpack.c.b16 %v5296, %v5295
        %v5323 = vpack.c.b16 %v5298, %v5297
        %v5324 = vpack.c.b16 %v5300, %v5299
        %v5325 = vpack.c.b16 %v5302, %v5301
        %v5326 = vpack.c.b16 %v5304, %v5303
        %v5327 = vpack.c.b16 %v5306, %v5305
        %v5328 = vpack.c.b16 %v5308, %v5307
        %v5329 = vpack.c.b16 %v5310, %v5309
        %v5330 = vpack.c.b16 %v5312, %v5311
        %v5331 = vpack.c.b16 %v5314, %v5313
        %v5332 = vpack.c.b16 %v5316, %v5315
        %5349 = vmatprep.subr.bf16.mxu0 0
        %5350 = vmatpush1.bf16.msra.mxu0 %v5317
        %5351 = vmatprep.subr.bf16.mxu0 0
        %5352 = vmatpush1.bf16.msra.mxu0 %v5318
        %5353 = vmatprep.subr.bf16.mxu0 0
        %5354 = vmatpush1.bf16.msra.mxu0 %v5319
        %5355 = vmatprep.subr.bf16.mxu0 0
        %5356 = vmatpush1.bf16.msra.mxu0 %v5320
        %5357 = vmatprep.subr.bf16.mxu0 0
        %5358 = vmatpush1.bf16.msra.mxu0 %v5321
        %5359 = vmatprep.subr.bf16.mxu0 0
        %5360 = vmatpush1.bf16.msra.mxu0 %v5322
        %5361 = vmatprep.subr.bf16.mxu0 0
        %5362 = vmatpush1.bf16.msra.mxu0 %v5323
        %5363 = vmatprep.subr.bf16.mxu0 0
        %5364 = vmatpush1.bf16.msra.mxu0 %v5324
        %5365 = vmatprep.subr.bf16.mxu0 0
        %5366 = vmatpush1.bf16.msra.mxu0 %v5325
        %5367 = vmatprep.subr.bf16.mxu0 0
        %5368 = vmatpush1.bf16.msra.mxu0 %v5326
        %5369 = vmatprep.subr.bf16.mxu0 0
        %5370 = vmatpush1.bf16.msra.mxu0 %v5327
        %5371 = vmatprep.subr.bf16.mxu0 0
        %5372 = vmatpush1.bf16.msra.mxu0 %v5328
        %5373 = vmatprep.subr.bf16.mxu0 0
        %5374 = vmatpush1.bf16.msra.mxu0 %v5329
        %5375 = vmatprep.subr.bf16.mxu0 0
        %5376 = vmatpush1.bf16.msra.mxu0 %v5330
        %5377 = vmatprep.subr.bf16.mxu0 0
        %5378 = vmatpush1.bf16.msra.mxu0 %v5331
        %5379 = vmatprep.subr.bf16.mxu0 0
        %5380 = vmatpush1.bf16.msra.mxu0 %v5332
        %5381 = vmatprep.mubr.bf16.mxu0 %v5250
        %5382 = vmatmul.mubr.bf16.gmra.mrb[0].mxu0 %v5242
        %v5383 = vpop.f32.mrb[0].mxu0
        %v5384 = vadd.f32 0.0, %v5383
        %v5385 = vpop.f32.mrb[0].mxu0
        %v5386 = vpop.f32.mrb[0].mxu0
        %v5387 = vpop.f32.mrb[0].mxu0
        %5388 = vdwg.mxu0
        %v5389 = vadd.f32 %v5197, %v5384
        %s5390 = scalar_lea.vmem %s197, %s2434
        %5391 = vst [vmem:[%s5390] sm:$0x3] %v5389
      $region55: #{discriminator_forward.7} parent=35 // loop_footer
        %s2433 = sadd.s32 1, %s2429
      $region56: #{discriminator_forward.7} parent=35 // loop_footer_branch
        %2428 = sbr.rel target = $region52
      $region57: #{discriminator_forward.7} parent=35 // loop_exit
        _
      %p5392 = scmp.lt.s32.totalorder %s15, 1
      %s5393 = scalar_select %p5392, %s15, 1
      %s5394 = smul.addr %s5393, 2
      %s5395 = smul.addr %s5394, 2
      %s5396 = scalar_lea.vmem %s4, %s5395
      // Predicated region
      $region58: #{discriminator_forward.7} parent=35 // pred_check
        %p5397 = pneg %p122
      $region59: #{discriminator_forward.7} parent=35 // pred_check_branch
        %5399 = sbr.rel (%p5397) target = $region61
      $region60: #{discriminator_forward.7} parent=35 // pred_region
        _
      $region61: #{discriminator_forward.7} parent=35 // pred_fallthru
        _
    $region36: #{discriminator_forward.7} parent=5 // pred_fallthru
      _
    %p5400 = scmp.le.s32.totalorder 2, %s10
    // Predicated region
    $region62: #{discriminator_forward.7} parent=5 // pred_check
      %p5401 = pneg %p5400
    $region63: #{discriminator_forward.7} parent=5 // pred_check_branch
      %5403 = sbr.rel (%p5401) target = $region65
    $region64: #{discriminator_forward.7} parent=5 // pred_region
      %s5404 = ssub.s32 %s10, 2
      // Predicated region
      $region66: #{discriminator_forward.7} parent=64 // pred_check
        %p5405 = pneg %p128
      $region67: #{discriminator_forward.7} parent=64 // pred_check_branch
        %5407 = sbr.rel (%p5405) target = $region69
      $region68: #{discriminator_forward.7} parent=64 // pred_region
        %p5408 = scmp.lt.s32.totalorder %s16, 1
        %s5409 = scalar_select %p5408, %s16, 1
        %s5410 = smul.addr %s5409, 2
        %s5411 = smul.addr %s5410, 2
        %s5412 = scalar_lea.vmem %s4, %s5411
      $region69: #{discriminator_forward.7} parent=64 // pred_fallthru
        _
    $region65: #{discriminator_forward.7} parent=5 // pred_fallthru
      _
  $region6: #{discriminator_forward.7} parent=0 // loop_footer
    %s14 = sadd.s32 1, %s10
  $region7: #{discriminator_forward.7} parent=0 // loop_footer_branch
    %9 = sbr.rel target = $region3
  $region8: #{discriminator_forward.7} parent=0 // loop_exit
    _

</llo_original>
